<compile_context>
chip_gen: v6e
topology: v6e:2x2x1
jax: 0.10.0
libtpu: 0.0.40
codegen_flags: <defaults>
</compile_context>

<pallas_src>
import math

import jax
import jax.numpy as jnp
from jax.experimental import pallas as pl
from jax.experimental.pallas import tpu as pltpu

EPS = 1e-5
LANE = 128


def _round_up(v, m):
    return (v + m - 1) // m * m


def _bn_fold(bn, conv_bias=None):
    gamma, beta, mean, var = bn
    s = gamma / jnp.sqrt(var + EPS)
    b = beta - mean * s
    if conv_bias is not None:
        b = conv_bias * s + b
    return s, b


def _pad_vec(v, cp, pad_value=0.0):
    return jnp.pad(v, (0, cp - v.shape[0]),
                   constant_values=pad_value).reshape(1, cp).astype(jnp.float32)


def _pack_conv_weight(w, cp_in, cp_out):
    """(Cout, Cin, 3, 3) torch layout -> (9, cp_in, cp_out) tap-major bf16, zero padded."""
    cout, cin = w.shape[0], w.shape[1]
    wt = jnp.transpose(w, (2, 3, 1, 0))                         # (3, 3, Cin, Cout)
    wt = jnp.pad(wt, ((0, 0), (0, 0), (0, cp_in - cin), (0, cp_out - cout)))
    return wt.reshape(9, cp_in, cp_out).astype(jnp.bfloat16)


# ---------------------------------------------------------------------------
# Fused kernel: lead BN+ReLU -> conv1+BN+ReLU -> conv2+BN+ReLU (all in VMEM)
# ---------------------------------------------------------------------------
def _make_kernel(Wp, Mext):
    """Wp = padded width (W+2); Mext = H*Wp extended conv-output rows."""

    def kernel(x_ref, mask_ref, s0_ref, b0_ref, w1_ref, s1_ref, b1_ref,
               w2_ref, s2_ref, b2_ref, o_ref, a0_ref, a1_ref, acc_ref):
        # ---- stage 0: leading BatchNorm affine + ReLU (prologue, f32) --------
        # mask zeroes the padding ring (ReLU(bias) on padded pixels must not leak)
        # and the tail rows used only for tap over-read.
        x = x_ref[0]                                            # (R, Cp_in) f32
        mask = mask_ref[...]                                    # (R, 1) f32
        a0_ref[...] = jnp.maximum(x * s0_ref[...] + b0_ref[...], 0.0) * mask

        def conv3x3(src_ref, w_ref, s_ref, b_ref):
            # 3x3 conv as 9 shifted MXU matmuls over the flat padded layout:
            # extended output row m' reads padded-input row m' + di*Wp + dj.
            for t in range(9):
                di, dj = divmod(t, 3)
                off = di * Wp + dj
                lhs = src_ref[off:off + Mext, :].astype(jnp.bfloat16)
                part = jnp.dot(lhs, w_ref[t], preferred_element_type=jnp.float32)
                if t == 0:
                    acc_ref[...] = part
                else:
                    acc_ref[...] += part
            # fused BN affine (conv bias folded in) + ReLU epilogue, f32
            return jnp.maximum(acc_ref[...] * s_ref[...] + b_ref[...], 0.0)

        # ---- conv1 + BN + ReLU, re-padded into the second activation buffer --
        y1 = conv3x3(a0_ref, w1_ref, s1_ref, b1_ref)
        # mask[m'+Wp+1] == 1 exactly for the valid (non-junk) extended rows.
        y1 = y1 * mask_ref[Wp + 1:Wp + 1 + Mext, :]
        a1_ref[...] = jnp.zeros_like(a1_ref)                    # zero padding ring
        a1_ref[Wp + 1:Wp + 1 + Mext, :] = y1                    # interior (shift by +Wp+1)

        # ---- conv2 + BN + ReLU -> f32 output (extended layout) ---------------
        o_ref[0] = conv3x3(a1_ref, w2_ref, s2_ref, b2_ref)

    return kernel


# ---------------------------------------------------------------------------
# decoder_block forward
# ---------------------------------------------------------------------------
def decoder_block_forward(params, x_nchw):
    """decoder_block: BN -> ReLU -> (Conv3x3 + BN + ReLU) x 2.  x: NCHW f32."""
    N, Cin, H, W = x_nchw.shape
    Cout = params["c1"]["w"].shape[0]
    Hp, Wp = H + 2, W + 2
    Mext = H * Wp                                   # extended conv-output rows
    R = _round_up(Hp * Wp + 2, 8)                   # padded rows (+2 tap over-read)
    Cp_in = _round_up(Cin, LANE)
    Cp_out = _round_up(Cout, LANE)

    # --- one-time XLA-side layout prep (single transpose + pad; NO im2col) ---
    x = jnp.transpose(x_nchw, (0, 2, 3, 1)).astype(jnp.float32)        # NHWC
    x = jnp.pad(x, ((0, 0), (1, 1), (1, 1), (0, Cp_in - Cin)))         # zero ring + chan pad
    x = x.reshape(N, Hp * Wp, Cp_in)
    x = jnp.pad(x, ((0, 0), (0, R - Hp * Wp), (0, 0)))                 # tail rows

    # interior mask over the flat padded layout (1 = real pixel, 0 = padding/tail)
    r = jnp.arange(R)
    hh, ww = r // Wp, r % Wp
    mask = ((r < Hp * Wp) & (hh >= 1) & (hh <= H) & (ww >= 1) & (ww <= W))
    mask = mask.astype(jnp.float32).reshape(R, 1)

    s0, b0 = _bn_fold(params["bn_i"])
    s1, b1 = _bn_fold(params["bn1"], params["c1"]["b"])
    s2, b2 = _bn_fold(params["bn2"], params["c2"]["b"])
    w1 = _pack_conv_weight(params["c1"]["w"], Cp_in, Cp_out)
    w2 = _pack_conv_weight(params["c2"]["w"], Cp_out, Cp_out)

    flops = int(2 * N * 9 * Mext * Cp_out * (Cp_in + Cp_out))
    bytes_accessed = int(x.size * 4 + mask.size * 4 + w1.size * 2 + w2.size * 2
                         + N * Mext * Cp_out * 4)

    out = pl.pallas_call(
        _make_kernel(Wp, Mext),
        grid=(N,),
        in_specs=[
            pl.BlockSpec((1, R, Cp_in), lambda b: (b, 0, 0)),            # x (per image)
            pl.BlockSpec((R, 1), lambda b: (0, 0)),                      # interior mask
            pl.BlockSpec((1, Cp_in), lambda b: (0, 0)),                  # s0
            pl.BlockSpec((1, Cp_in), lambda b: (0, 0)),                  # b0
            pl.BlockSpec((9, Cp_in, Cp_out), lambda b: (0, 0, 0)),       # w1 (tap-major)
            pl.BlockSpec((1, Cp_out), lambda b: (0, 0)),                 # s1
            pl.BlockSpec((1, Cp_out), lambda b: (0, 0)),                 # b1
            pl.BlockSpec((9, Cp_out, Cp_out), lambda b: (0, 0, 0)),      # w2 (tap-major)
            pl.BlockSpec((1, Cp_out), lambda b: (0, 0)),                 # s2
            pl.BlockSpec((1, Cp_out), lambda b: (0, 0)),                 # b2
        ],
        out_specs=pl.BlockSpec((1, Mext, Cp_out), lambda b: (b, 0, 0)),
        out_shape=jax.ShapeDtypeStruct((N, Mext, Cp_out), jnp.float32),
        scratch_shapes=[
            pltpu.VMEM((R, Cp_in), jnp.float32),        # a0: padded lead activations
            pltpu.VMEM((R, Cp_out), jnp.float32),       # a1: padded conv1 activations
            pltpu.VMEM((Mext, Cp_out), jnp.float32),    # shared matmul accumulator
        ],
        compiler_params=pltpu.CompilerParams(
            dimension_semantics=("parallel",),          # batch splits across TCs on v7x
            vmem_limit_bytes=32 * 1024 * 1024,          # footprint ~2 MiB; fits all gens
        ),
        cost_estimate=pl.CostEstimate(flops=flops, transcendentals=0,
                                      bytes_accessed=bytes_accessed),
    )(x, mask,
      _pad_vec(s0, Cp_in, 1.0), _pad_vec(b0, Cp_in),
      w1, _pad_vec(s1, Cp_out, 1.0), _pad_vec(b1, Cp_out),
      w2, _pad_vec(s2, Cp_out, 1.0), _pad_vec(b2, Cp_out))

    # drop junk columns / padded channels, single transpose back to NCHW
    out = out.reshape(N, H, Wp, Cp_out)[:, :, :W, :Cout]
    return jnp.transpose(out, (0, 3, 1, 2))


# ---------------------------------------------------------------------------
# Deterministic parameter init
# ---------------------------------------------------------------------------
class _ParamGen:
    def __init__(self, key):
        self.key = key

    def _next(self):
        self.key, sub = jax.random.split(self.key)
        return sub

    def conv(self, cout, cin, kh, kw):
        fan = cin * kh * kw
        w = jax.random.normal(self._next(), (cout, cin, kh, kw), jnp.float32) / math.sqrt(fan)
        b = 0.01 * jax.random.normal(self._next(), (cout,), jnp.float32)
        return {"w": w, "b": b}

    def bn(self, c):
        gamma = 1.0 + 0.1 * jax.random.normal(self._next(), (c,), jnp.float32)
        beta = 0.1 * jax.random.normal(self._next(), (c,), jnp.float32)
        mean = 0.05 * jax.random.normal(self._next(), (c,), jnp.float32)
        var = jnp.abs(1.0 + 0.1 * jax.random.normal(self._next(), (c,), jnp.float32))
        return (gamma, beta, mean, var)


def init_params(key, in_channels, out_channels):
    pg = _ParamGen(key)
    return {
        "bn_i": pg.bn(in_channels),
        "c1": pg.conv(out_channels, in_channels, 3, 3), "bn1": pg.bn(out_channels),
        "c2": pg.conv(out_channels, out_channels, 3, 3), "bn2": pg.bn(out_channels),
    }


# ---------------------------------------------------------------------------
# Pure-JAX reference (same bf16 conv-operand rounding as the kernel path)
# ---------------------------------------------------------------------------
def reference_forward(params, x_nchw):
    s0, b0 = _bn_fold(params["bn_i"])
    y = jnp.maximum(x_nchw * s0[None, :, None, None] + b0[None, :, None, None], 0.0)

    def conv_bn_relu(y, conv, bn):
        out = jax.lax.conv_general_dilated(
            y.astype(jnp.bfloat16), conv["w"].astype(jnp.bfloat16),
            window_strides=(1, 1), padding=((1, 1), (1, 1)),
            dimension_numbers=("NCHW", "OIHW", "NCHW"),
            preferred_element_type=jnp.float32)
        s, b = _bn_fold(bn, conv["b"])
        return jnp.maximum(out * s[None, :, None, None] + b[None, :, None, None], 0.0)

    y = conv_bn_relu(y, params["c1"], params["bn1"])
    y = conv_bn_relu(y, params["c2"], params["bn2"])
    return y


if __name__ == "__main__":
    key = jax.random.PRNGKey(0)
    pkey, xkey = jax.random.split(key)

    IN_CH, OUT_CH = 128, 64                 # the dec1 configuration of BRRNet_BE
    N, H, W = 2, 16, 16
    params = init_params(pkey, IN_CH, OUT_CH)
    x = jax.random.normal(xkey, (N, IN_CH, H, W), jnp.float32)

    fwd = jax.jit(decoder_block_forward)
    out = jax.block_until_ready(fwd(params, x))

    assert out.shape == (N, OUT_CH, H, W), out.shape
    assert bool(jnp.all(jnp.isfinite(out)))

    ref = reference_forward(params, x)
    max_err = float(jnp.max(jnp.abs(out - ref)))
    assert bool(jnp.allclose(out, ref, rtol=2e-2, atol=2e-2)), f"max|err|={max_err}"

    print("KERNEL_OK")
</pallas_src>

<mosaic_0001>
module attributes {stable_mosaic.version = 11 : i64} {
  func.func @kernel(%arg0: i32, %arg1: memref<1x328x128xf32, #tpu.memory_space<vmem>>, %arg2: memref<328x1xf32, #tpu.memory_space<vmem>>, %arg3: memref<1x128xf32, #tpu.memory_space<vmem>>, %arg4: memref<1x128xf32, #tpu.memory_space<vmem>>, %arg5: memref<9x128x128xbf16, #tpu.memory_space<vmem>>, %arg6: memref<1x128xf32, #tpu.memory_space<vmem>>, %arg7: memref<1x128xf32, #tpu.memory_space<vmem>>, %arg8: memref<9x128x128xbf16, #tpu.memory_space<vmem>>, %arg9: memref<1x128xf32, #tpu.memory_space<vmem>>, %arg10: memref<1x128xf32, #tpu.memory_space<vmem>>, %arg11: memref<1x288x128xf32, #tpu.memory_space<vmem>>, %arg12: memref<328x128xf32, #tpu.memory_space<vmem>>, %arg13: memref<328x128xf32, #tpu.memory_space<vmem>>, %arg14: memref<288x128xf32, #tpu.memory_space<vmem>>) attributes {dimension_semantics = [#tpu.dimension_semantics<parallel>], iteration_bounds = array<i64: 2>, scalar_prefetch = 0 : i64, scratch_operands = 3 : i64, tpu.core_type = #tpu.core_type<tc>, window_params = [{transform_indices = @transform_0, window_bounds = array<i64: 1, 328, 128>}, {pipeline_mode = #tpu.pipeline_mode<synchronous>, transform_indices = @transform_1, window_bounds = array<i64: 328, 1>}, {pipeline_mode = #tpu.pipeline_mode<synchronous>, transform_indices = @transform_2, window_bounds = array<i64: 1, 128>}, {pipeline_mode = #tpu.pipeline_mode<synchronous>, transform_indices = @transform_3, window_bounds = array<i64: 1, 128>}, {pipeline_mode = #tpu.pipeline_mode<synchronous>, transform_indices = @transform_4, window_bounds = array<i64: 9, 128, 128>}, {pipeline_mode = #tpu.pipeline_mode<synchronous>, transform_indices = @transform_5, window_bounds = array<i64: 1, 128>}, {pipeline_mode = #tpu.pipeline_mode<synchronous>, transform_indices = @transform_6, window_bounds = array<i64: 1, 128>}, {pipeline_mode = #tpu.pipeline_mode<synchronous>, transform_indices = @transform_7, window_bounds = array<i64: 9, 128, 128>}, {pipeline_mode = #tpu.pipeline_mode<synchronous>, transform_indices = @transform_8, window_bounds = array<i64: 1, 128>}, {pipeline_mode = #tpu.pipeline_mode<synchronous>, transform_indices = @transform_9, window_bounds = array<i64: 1, 128>}, {transform_indices = @transform_10, window_bounds = array<i64: 1, 288, 128>}]} {
    %c0 = arith.constant 0 : index
    %c0_0 = arith.constant 0 : index
    %c0_1 = arith.constant 0 : index
    %0 = vector.load %arg1[%c0, %c0_0, %c0_1] : memref<1x328x128xf32, #tpu.memory_space<vmem>>, vector<1x328x128xf32>
    %1 = vector.shape_cast %0 : vector<1x328x128xf32> to vector<328x128xf32>
    %c0_2 = arith.constant 0 : index
    %c0_3 = arith.constant 0 : index
    %2 = vector.load %arg2[%c0_2, %c0_3] : memref<328x1xf32, #tpu.memory_space<vmem>>, vector<328x1xf32>
    %c0_4 = arith.constant 0 : index
    %c0_5 = arith.constant 0 : index
    %3 = vector.load %arg3[%c0_4, %c0_5] : memref<1x128xf32, #tpu.memory_space<vmem>>, vector<1x128xf32>
    %4 = vector.broadcast %3 : vector<1x128xf32> to vector<328x128xf32>
    %5 = arith.mulf %1, %4 : vector<328x128xf32>
    %c0_6 = arith.constant 0 : index
    %c0_7 = arith.constant 0 : index
    %6 = vector.load %arg4[%c0_6, %c0_7] : memref<1x128xf32, #tpu.memory_space<vmem>>, vector<1x128xf32>
    %7 = vector.broadcast %6 : vector<1x128xf32> to vector<328x128xf32>
    %8 = arith.addf %5, %7 : vector<328x128xf32>
    %cst = arith.constant 0.000000e+00 : f32
    %9 = vector.broadcast %cst : f32 to vector<328x128xf32>
    %10 = arith.maximumf %8, %9 : vector<328x128xf32>
    %11 = vector.broadcast %2 : vector<328x1xf32> to vector<328x128xf32>
    %12 = arith.mulf %10, %11 : vector<328x128xf32>
    %c0_8 = arith.constant 0 : index
    %c0_9 = arith.constant 0 : index
    %13 = vector.load %arg12[%c0_8, %c0_9] : memref<328x128xf32, #tpu.memory_space<vmem>>, vector<328x128xf32>
    tpu.vector_store %arg12[%c0_8, %c0_9], %12 {strides = array<i32>} : memref<328x128xf32, #tpu.memory_space<vmem>>, vector<328x128xf32>,
    %c0_10 = arith.constant 0 : index
    %c0_11 = arith.constant 0 : index
    %14 = vector.load %arg12[%c0_10, %c0_11] : memref<328x128xf32, #tpu.memory_space<vmem>>, vector<288x128xf32>
    %15 = arith.truncf %14 : vector<288x128xf32> to vector<288x128xbf16>
    %c0_12 = arith.constant 0 : index
    %c0_13 = arith.constant 0 : index
    %c0_14 = arith.constant 0 : index
    %16 = vector.load %arg5[%c0_12, %c0_13, %c0_14] : memref<9x128x128xbf16, #tpu.memory_space<vmem>>, vector<1x128x128xbf16>
    %17 = vector.shape_cast %16 : vector<1x128x128xbf16> to vector<128x128xbf16>
    %cst_15 = arith.constant dense<0.000000e+00> : vector<288x128xf32>
    %18 = tpu.matmul %15, %17, %cst_15 {dimension_numbers = #tpu.dot_dimension_numbers<[1], [0], [0], [1], [0, 0, 1, 1], [], []>} : vector<288x128xbf16>, vector<128x128xbf16>, vector<288x128xf32> -> vector<288x128xf32>
    %c0_16 = arith.constant 0 : index
    %c0_17 = arith.constant 0 : index
    %19 = vector.load %arg14[%c0_16, %c0_17] : memref<288x128xf32, #tpu.memory_space<vmem>>, vector<288x128xf32>
    tpu.vector_store %arg14[%c0_16, %c0_17], %18 {strides = array<i32>} : memref<288x128xf32, #tpu.memory_space<vmem>>, vector<288x128xf32>,
    %c1 = arith.constant 1 : index
    %c0_18 = arith.constant 0 : index
    %20 = vector.load %arg12[%c1, %c0_18] : memref<328x128xf32, #tpu.memory_space<vmem>>, vector<288x128xf32>
    %21 = arith.truncf %20 : vector<288x128xf32> to vector<288x128xbf16>
    %c1_19 = arith.constant 1 : index
    %c0_20 = arith.constant 0 : index
    %c0_21 = arith.constant 0 : index
    %22 = vector.load %arg5[%c1_19, %c0_20, %c0_21] : memref<9x128x128xbf16, #tpu.memory_space<vmem>>, vector<1x128x128xbf16>
    %23 = vector.shape_cast %22 : vector<1x128x128xbf16> to vector<128x128xbf16>
    %cst_22 = arith.constant dense<0.000000e+00> : vector<288x128xf32>
    %24 = tpu.matmul %21, %23, %cst_22 {dimension_numbers = #tpu.dot_dimension_numbers<[1], [0], [0], [1], [0, 0, 1, 1], [], []>} : vector<288x128xbf16>, vector<128x128xbf16>, vector<288x128xf32> -> vector<288x128xf32>
    %c0_23 = arith.constant 0 : index
    %c0_24 = arith.constant 0 : index
    %25 = vector.load %arg14[%c0_23, %c0_24] : memref<288x128xf32, #tpu.memory_space<vmem>>, vector<288x128xf32>
    %26 = arith.addf %25, %24 : vector<288x128xf32>
    %c0_25 = arith.constant 0 : index
    %c0_26 = arith.constant 0 : index
    %27 = vector.load %arg14[%c0_25, %c0_26] : memref<288x128xf32, #tpu.memory_space<vmem>>, vector<288x128xf32>
    tpu.vector_store %arg14[%c0_25, %c0_26], %26 {strides = array<i32>} : memref<288x128xf32, #tpu.memory_space<vmem>>, vector<288x128xf32>,
    %c2 = arith.constant 2 : index
    %c0_27 = arith.constant 0 : index
    %28 = vector.load %arg12[%c2, %c0_27] : memref<328x128xf32, #tpu.memory_space<vmem>>, vector<288x128xf32>
    %29 = arith.truncf %28 : vector<288x128xf32> to vector<288x128xbf16>
    %c2_28 = arith.constant 2 : index
    %c0_29 = arith.constant 0 : index
    %c0_30 = arith.constant 0 : index
    %30 = vector.load %arg5[%c2_28, %c0_29, %c0_30] : memref<9x128x128xbf16, #tpu.memory_space<vmem>>, vector<1x128x128xbf16>
    %31 = vector.shape_cast %30 : vector<1x128x128xbf16> to vector<128x128xbf16>
    %cst_31 = arith.constant dense<0.000000e+00> : vector<288x128xf32>
    %32 = tpu.matmul %29, %31, %cst_31 {dimension_numbers = #tpu.dot_dimension_numbers<[1], [0], [0], [1], [0, 0, 1, 1], [], []>} : vector<288x128xbf16>, vector<128x128xbf16>, vector<288x128xf32> -> vector<288x128xf32>
    %c0_32 = arith.constant 0 : index
    %c0_33 = arith.constant 0 : index
    %33 = vector.load %arg14[%c0_32, %c0_33] : memref<288x128xf32, #tpu.memory_space<vmem>>, vector<288x128xf32>
    %34 = arith.addf %33, %32 : vector<288x128xf32>
    %c0_34 = arith.constant 0 : index
    %c0_35 = arith.constant 0 : index
    %35 = vector.load %arg14[%c0_34, %c0_35] : memref<288x128xf32, #tpu.memory_space<vmem>>, vector<288x128xf32>
    tpu.vector_store %arg14[%c0_34, %c0_35], %34 {strides = array<i32>} : memref<288x128xf32, #tpu.memory_space<vmem>>, vector<288x128xf32>,
    %c18 = arith.constant 18 : index
    %c0_36 = arith.constant 0 : index
    %36 = vector.load %arg12[%c18, %c0_36] : memref<328x128xf32, #tpu.memory_space<vmem>>, vector<288x128xf32>
    %37 = arith.truncf %36 : vector<288x128xf32> to vector<288x128xbf16>
    %c3 = arith.constant 3 : index
    %c0_37 = arith.constant 0 : index
    %c0_38 = arith.constant 0 : index
    %38 = vector.load %arg5[%c3, %c0_37, %c0_38] : memref<9x128x128xbf16, #tpu.memory_space<vmem>>, vector<1x128x128xbf16>
    %39 = vector.shape_cast %38 : vector<1x128x128xbf16> to vector<128x128xbf16>
    %cst_39 = arith.constant dense<0.000000e+00> : vector<288x128xf32>
    %40 = tpu.matmul %37, %39, %cst_39 {dimension_numbers = #tpu.dot_dimension_numbers<[1], [0], [0], [1], [0, 0, 1, 1], [], []>} : vector<288x128xbf16>, vector<128x128xbf16>, vector<288x128xf32> -> vector<288x128xf32>
    %c0_40 = arith.constant 0 : index
    %c0_41 = arith.constant 0 : index
    %41 = vector.load %arg14[%c0_40, %c0_41] : memref<288x128xf32, #tpu.memory_space<vmem>>, vector<288x128xf32>
    %42 = arith.addf %41, %40 : vector<288x128xf32>
    %c0_42 = arith.constant 0 : index
    %c0_43 = arith.constant 0 : index
    %43 = vector.load %arg14[%c0_42, %c0_43] : memref<288x128xf32, #tpu.memory_space<vmem>>, vector<288x128xf32>
    tpu.vector_store %arg14[%c0_42, %c0_43], %42 {strides = array<i32>} : memref<288x128xf32, #tpu.memory_space<vmem>>, vector<288x128xf32>,
    %c19 = arith.constant 19 : index
    %c0_44 = arith.constant 0 : index
    %44 = vector.load %arg12[%c19, %c0_44] : memref<328x128xf32, #tpu.memory_space<vmem>>, vector<288x128xf32>
    %45 = arith.truncf %44 : vector<288x128xf32> to vector<288x128xbf16>
    %c4 = arith.constant 4 : index
    %c0_45 = arith.constant 0 : index
    %c0_46 = arith.constant 0 : index
    %46 = vector.load %arg5[%c4, %c0_45, %c0_46] : memref<9x128x128xbf16, #tpu.memory_space<vmem>>, vector<1x128x128xbf16>
    %47 = vector.shape_cast %46 : vector<1x128x128xbf16> to vector<128x128xbf16>
    %cst_47 = arith.constant dense<0.000000e+00> : vector<288x128xf32>
    %48 = tpu.matmul %45, %47, %cst_47 {dimension_numbers = #tpu.dot_dimension_numbers<[1], [0], [0], [1], [0, 0, 1, 1], [], []>} : vector<288x128xbf16>, vector<128x128xbf16>, vector<288x128xf32> -> vector<288x128xf32>
    %c0_48 = arith.constant 0 : index
    %c0_49 = arith.constant 0 : index
    %49 = vector.load %arg14[%c0_48, %c0_49] : memref<288x128xf32, #tpu.memory_space<vmem>>, vector<288x128xf32>
    %50 = arith.addf %49, %48 : vector<288x128xf32>
    %c0_50 = arith.constant 0 : index
    %c0_51 = arith.constant 0 : index
    %51 = vector.load %arg14[%c0_50, %c0_51] : memref<288x128xf32, #tpu.memory_space<vmem>>, vector<288x128xf32>
    tpu.vector_store %arg14[%c0_50, %c0_51], %50 {strides = array<i32>} : memref<288x128xf32, #tpu.memory_space<vmem>>, vector<288x128xf32>,
    %c20 = arith.constant 20 : index
    %c0_52 = arith.constant 0 : index
    %52 = vector.load %arg12[%c20, %c0_52] : memref<328x128xf32, #tpu.memory_space<vmem>>, vector<288x128xf32>
    %53 = arith.truncf %52 : vector<288x128xf32> to vector<288x128xbf16>
    %c5 = arith.constant 5 : index
    %c0_53 = arith.constant 0 : index
    %c0_54 = arith.constant 0 : index
    %54 = vector.load %arg5[%c5, %c0_53, %c0_54] : memref<9x128x128xbf16, #tpu.memory_space<vmem>>, vector<1x128x128xbf16>
    %55 = vector.shape_cast %54 : vector<1x128x128xbf16> to vector<128x128xbf16>
    %cst_55 = arith.constant dense<0.000000e+00> : vector<288x128xf32>
    %56 = tpu.matmul %53, %55, %cst_55 {dimension_numbers = #tpu.dot_dimension_numbers<[1], [0], [0], [1], [0, 0, 1, 1], [], []>} : vector<288x128xbf16>, vector<128x128xbf16>, vector<288x128xf32> -> vector<288x128xf32>
    %c0_56 = arith.constant 0 : index
    %c0_57 = arith.constant 0 : index
    %57 = vector.load %arg14[%c0_56, %c0_57] : memref<288x128xf32, #tpu.memory_space<vmem>>, vector<288x128xf32>
    %58 = arith.addf %57, %56 : vector<288x128xf32>
    %c0_58 = arith.constant 0 : index
    %c0_59 = arith.constant 0 : index
    %59 = vector.load %arg14[%c0_58, %c0_59] : memref<288x128xf32, #tpu.memory_space<vmem>>, vector<288x128xf32>
    tpu.vector_store %arg14[%c0_58, %c0_59], %58 {strides = array<i32>} : memref<288x128xf32, #tpu.memory_space<vmem>>, vector<288x128xf32>,
    %c36 = arith.constant 36 : index
    %c0_60 = arith.constant 0 : index
    %60 = vector.load %arg12[%c36, %c0_60] : memref<328x128xf32, #tpu.memory_space<vmem>>, vector<288x128xf32>
    %61 = arith.truncf %60 : vector<288x128xf32> to vector<288x128xbf16>
    %c6 = arith.constant 6 : index
    %c0_61 = arith.constant 0 : index
    %c0_62 = arith.constant 0 : index
    %62 = vector.load %arg5[%c6, %c0_61, %c0_62] : memref<9x128x128xbf16, #tpu.memory_space<vmem>>, vector<1x128x128xbf16>
    %63 = vector.shape_cast %62 : vector<1x128x128xbf16> to vector<128x128xbf16>
    %cst_63 = arith.constant dense<0.000000e+00> : vector<288x128xf32>
    %64 = tpu.matmul %61, %63, %cst_63 {dimension_numbers = #tpu.dot_dimension_numbers<[1], [0], [0], [1], [0, 0, 1, 1], [], []>} : vector<288x128xbf16>, vector<128x128xbf16>, vector<288x128xf32> -> vector<288x128xf32>
    %c0_64 = arith.constant 0 : index
    %c0_65 = arith.constant 0 : index
    %65 = vector.load %arg14[%c0_64, %c0_65] : memref<288x128xf32, #tpu.memory_space<vmem>>, vector<288x128xf32>
    %66 = arith.addf %65, %64 : vector<288x128xf32>
    %c0_66 = arith.constant 0 : index
    %c0_67 = arith.constant 0 : index
    %67 = vector.load %arg14[%c0_66, %c0_67] : memref<288x128xf32, #tpu.memory_space<vmem>>, vector<288x128xf32>
    tpu.vector_store %arg14[%c0_66, %c0_67], %66 {strides = array<i32>} : memref<288x128xf32, #tpu.memory_space<vmem>>, vector<288x128xf32>,
    %c37 = arith.constant 37 : index
    %c0_68 = arith.constant 0 : index
    %68 = vector.load %arg12[%c37, %c0_68] : memref<328x128xf32, #tpu.memory_space<vmem>>, vector<288x128xf32>
    %69 = arith.truncf %68 : vector<288x128xf32> to vector<288x128xbf16>
    %c7 = arith.constant 7 : index
    %c0_69 = arith.constant 0 : index
    %c0_70 = arith.constant 0 : index
    %70 = vector.load %arg5[%c7, %c0_69, %c0_70] : memref<9x128x128xbf16, #tpu.memory_space<vmem>>, vector<1x128x128xbf16>
    %71 = vector.shape_cast %70 : vector<1x128x128xbf16> to vector<128x128xbf16>
    %cst_71 = arith.constant dense<0.000000e+00> : vector<288x128xf32>
    %72 = tpu.matmul %69, %71, %cst_71 {dimension_numbers = #tpu.dot_dimension_numbers<[1], [0], [0], [1], [0, 0, 1, 1], [], []>} : vector<288x128xbf16>, vector<128x128xbf16>, vector<288x128xf32> -> vector<288x128xf32>
    %c0_72 = arith.constant 0 : index
    %c0_73 = arith.constant 0 : index
    %73 = vector.load %arg14[%c0_72, %c0_73] : memref<288x128xf32, #tpu.memory_space<vmem>>, vector<288x128xf32>
    %74 = arith.addf %73, %72 : vector<288x128xf32>
    %c0_74 = arith.constant 0 : index
    %c0_75 = arith.constant 0 : index
    %75 = vector.load %arg14[%c0_74, %c0_75] : memref<288x128xf32, #tpu.memory_space<vmem>>, vector<288x128xf32>
    tpu.vector_store %arg14[%c0_74, %c0_75], %74 {strides = array<i32>} : memref<288x128xf32, #tpu.memory_space<vmem>>, vector<288x128xf32>,
    %c38 = arith.constant 38 : index
    %c0_76 = arith.constant 0 : index
    %76 = vector.load %arg12[%c38, %c0_76] : memref<328x128xf32, #tpu.memory_space<vmem>>, vector<288x128xf32>
    %77 = arith.truncf %76 : vector<288x128xf32> to vector<288x128xbf16>
    %c8 = arith.constant 8 : index
    %c0_77 = arith.constant 0 : index
    %c0_78 = arith.constant 0 : index
    %78 = vector.load %arg5[%c8, %c0_77, %c0_78] : memref<9x128x128xbf16, #tpu.memory_space<vmem>>, vector<1x128x128xbf16>
    %79 = vector.shape_cast %78 : vector<1x128x128xbf16> to vector<128x128xbf16>
    %cst_79 = arith.constant dense<0.000000e+00> : vector<288x128xf32>
    %80 = tpu.matmul %77, %79, %cst_79 {dimension_numbers = #tpu.dot_dimension_numbers<[1], [0], [0], [1], [0, 0, 1, 1], [], []>} : vector<288x128xbf16>, vector<128x128xbf16>, vector<288x128xf32> -> vector<288x128xf32>
    %c0_80 = arith.constant 0 : index
    %c0_81 = arith.constant 0 : index
    %81 = vector.load %arg14[%c0_80, %c0_81] : memref<288x128xf32, #tpu.memory_space<vmem>>, vector<288x128xf32>
    %82 = arith.addf %81, %80 : vector<288x128xf32>
    %c0_82 = arith.constant 0 : index
    %c0_83 = arith.constant 0 : index
    %83 = vector.load %arg14[%c0_82, %c0_83] : memref<288x128xf32, #tpu.memory_space<vmem>>, vector<288x128xf32>
    tpu.vector_store %arg14[%c0_82, %c0_83], %82 {strides = array<i32>} : memref<288x128xf32, #tpu.memory_space<vmem>>, vector<288x128xf32>,
    %c0_84 = arith.constant 0 : index
    %c0_85 = arith.constant 0 : index
    %84 = vector.load %arg14[%c0_84, %c0_85] : memref<288x128xf32, #tpu.memory_space<vmem>>, vector<288x128xf32>
    %c0_86 = arith.constant 0 : index
    %c0_87 = arith.constant 0 : index
    %85 = vector.load %arg6[%c0_86, %c0_87] : memref<1x128xf32, #tpu.memory_space<vmem>>, vector<1x128xf32>
    %86 = vector.broadcast %85 : vector<1x128xf32> to vector<288x128xf32>
    %87 = arith.mulf %84, %86 : vector<288x128xf32>
    %c0_88 = arith.constant 0 : index
    %c0_89 = arith.constant 0 : index
    %88 = vector.load %arg7[%c0_88, %c0_89] : memref<1x128xf32, #tpu.memory_space<vmem>>, vector<1x128xf32>
    %89 = vector.broadcast %88 : vector<1x128xf32> to vector<288x128xf32>
    %90 = arith.addf %87, %89 : vector<288x128xf32>
    %cst_90 = arith.constant 0.000000e+00 : f32
    %91 = vector.broadcast %cst_90 : f32 to vector<288x128xf32>
    %92 = arith.maximumf %90, %91 : vector<288x128xf32>
    %c19_91 = arith.constant 19 : index
    %c0_92 = arith.constant 0 : index
    %93 = vector.load %arg2[%c19_91, %c0_92] : memref<328x1xf32, #tpu.memory_space<vmem>>, vector<288x1xf32>
    %94 = vector.broadcast %93 : vector<288x1xf32> to vector<288x128xf32>
    %95 = arith.mulf %92, %94 : vector<288x128xf32>
    %cst_93 = arith.constant 0.000000e+00 : f32
    %96 = vector.broadcast %cst_93 : f32 to vector<328x128xf32>
    %c0_94 = arith.constant 0 : index
    %c0_95 = arith.constant 0 : index
    %97 = vector.load %arg13[%c0_94, %c0_95] : memref<328x128xf32, #tpu.memory_space<vmem>>, vector<328x128xf32>
    tpu.vector_store %arg13[%c0_94, %c0_95], %96 {strides = array<i32>} : memref<328x128xf32, #tpu.memory_space<vmem>>, vector<328x128xf32>,
    %c19_96 = arith.constant 19 : index
    %c0_97 = arith.constant 0 : index
    %98 = vector.load %arg13[%c19_96, %c0_97] : memref<328x128xf32, #tpu.memory_space<vmem>>, vector<288x128xf32>
    tpu.vector_store %arg13[%c19_96, %c0_97], %95 {strides = array<i32>} : memref<328x128xf32, #tpu.memory_space<vmem>>, vector<288x128xf32>,
    %c0_98 = arith.constant 0 : index
    %c0_99 = arith.constant 0 : index
    %99 = vector.load %arg13[%c0_98, %c0_99] : memref<328x128xf32, #tpu.memory_space<vmem>>, vector<288x128xf32>
    %100 = arith.truncf %99 : vector<288x128xf32> to vector<288x128xbf16>
    %c0_100 = arith.constant 0 : index
    %c0_101 = arith.constant 0 : index
    %c0_102 = arith.constant 0 : index
    %101 = vector.load %arg8[%c0_100, %c0_101, %c0_102] : memref<9x128x128xbf16, #tpu.memory_space<vmem>>, vector<1x128x128xbf16>
    %102 = vector.shape_cast %101 : vector<1x128x128xbf16> to vector<128x128xbf16>
    %cst_103 = arith.constant dense<0.000000e+00> : vector<288x128xf32>
    %103 = tpu.matmul %100, %102, %cst_103 {dimension_numbers = #tpu.dot_dimension_numbers<[1], [0], [0], [1], [0, 0, 1, 1], [], []>} : vector<288x128xbf16>, vector<128x128xbf16>, vector<288x128xf32> -> vector<288x128xf32>
    %c0_104 = arith.constant 0 : index
    %c0_105 = arith.constant 0 : index
    %104 = vector.load %arg14[%c0_104, %c0_105] : memref<288x128xf32, #tpu.memory_space<vmem>>, vector<288x128xf32>
    tpu.vector_store %arg14[%c0_104, %c0_105], %103 {strides = array<i32>} : memref<288x128xf32, #tpu.memory_space<vmem>>, vector<288x128xf32>,
    %c1_106 = arith.constant 1 : index
    %c0_107 = arith.constant 0 : index
    %105 = vector.load %arg13[%c1_106, %c0_107] : memref<328x128xf32, #tpu.memory_space<vmem>>, vector<288x128xf32>
    %106 = arith.truncf %105 : vector<288x128xf32> to vector<288x128xbf16>
    %c1_108 = arith.constant 1 : index
    %c0_109 = arith.constant 0 : index
    %c0_110 = arith.constant 0 : index
    %107 = vector.load %arg8[%c1_108, %c0_109, %c0_110] : memref<9x128x128xbf16, #tpu.memory_space<vmem>>, vector<1x128x128xbf16>
    %108 = vector.shape_cast %107 : vector<1x128x128xbf16> to vector<128x128xbf16>
    %cst_111 = arith.constant dense<0.000000e+00> : vector<288x128xf32>
    %109 = tpu.matmul %106, %108, %cst_111 {dimension_numbers = #tpu.dot_dimension_numbers<[1], [0], [0], [1], [0, 0, 1, 1], [], []>} : vector<288x128xbf16>, vector<128x128xbf16>, vector<288x128xf32> -> vector<288x128xf32>
    %c0_112 = arith.constant 0 : index
    %c0_113 = arith.constant 0 : index
    %110 = vector.load %arg14[%c0_112, %c0_113] : memref<288x128xf32, #tpu.memory_space<vmem>>, vector<288x128xf32>
    %111 = arith.addf %110, %109 : vector<288x128xf32>
    %c0_114 = arith.constant 0 : index
    %c0_115 = arith.constant 0 : index
    %112 = vector.load %arg14[%c0_114, %c0_115] : memref<288x128xf32, #tpu.memory_space<vmem>>, vector<288x128xf32>
    tpu.vector_store %arg14[%c0_114, %c0_115], %111 {strides = array<i32>} : memref<288x128xf32, #tpu.memory_space<vmem>>, vector<288x128xf32>,
    %c2_116 = arith.constant 2 : index
    %c0_117 = arith.constant 0 : index
    %113 = vector.load %arg13[%c2_116, %c0_117] : memref<328x128xf32, #tpu.memory_space<vmem>>, vector<288x128xf32>
    %114 = arith.truncf %113 : vector<288x128xf32> to vector<288x128xbf16>
    %c2_118 = arith.constant 2 : index
    %c0_119 = arith.constant 0 : index
    %c0_120 = arith.constant 0 : index
    %115 = vector.load %arg8[%c2_118, %c0_119, %c0_120] : memref<9x128x128xbf16, #tpu.memory_space<vmem>>, vector<1x128x128xbf16>
    %116 = vector.shape_cast %115 : vector<1x128x128xbf16> to vector<128x128xbf16>
    %cst_121 = arith.constant dense<0.000000e+00> : vector<288x128xf32>
    %117 = tpu.matmul %114, %116, %cst_121 {dimension_numbers = #tpu.dot_dimension_numbers<[1], [0], [0], [1], [0, 0, 1, 1], [], []>} : vector<288x128xbf16>, vector<128x128xbf16>, vector<288x128xf32> -> vector<288x128xf32>
    %c0_122 = arith.constant 0 : index
    %c0_123 = arith.constant 0 : index
    %118 = vector.load %arg14[%c0_122, %c0_123] : memref<288x128xf32, #tpu.memory_space<vmem>>, vector<288x128xf32>
    %119 = arith.addf %118, %117 : vector<288x128xf32>
    %c0_124 = arith.constant 0 : index
    %c0_125 = arith.constant 0 : index
    %120 = vector.load %arg14[%c0_124, %c0_125] : memref<288x128xf32, #tpu.memory_space<vmem>>, vector<288x128xf32>
    tpu.vector_store %arg14[%c0_124, %c0_125], %119 {strides = array<i32>} : memref<288x128xf32, #tpu.memory_space<vmem>>, vector<288x128xf32>,
    %c18_126 = arith.constant 18 : index
    %c0_127 = arith.constant 0 : index
    %121 = vector.load %arg13[%c18_126, %c0_127] : memref<328x128xf32, #tpu.memory_space<vmem>>, vector<288x128xf32>
    %122 = arith.truncf %121 : vector<288x128xf32> to vector<288x128xbf16>
    %c3_128 = arith.constant 3 : index
    %c0_129 = arith.constant 0 : index
    %c0_130 = arith.constant 0 : index
    %123 = vector.load %arg8[%c3_128, %c0_129, %c0_130] : memref<9x128x128xbf16, #tpu.memory_space<vmem>>, vector<1x128x128xbf16>
    %124 = vector.shape_cast %123 : vector<1x128x128xbf16> to vector<128x128xbf16>
    %cst_131 = arith.constant dense<0.000000e+00> : vector<288x128xf32>
    %125 = tpu.matmul %122, %124, %cst_131 {dimension_numbers = #tpu.dot_dimension_numbers<[1], [0], [0], [1], [0, 0, 1, 1], [], []>} : vector<288x128xbf16>, vector<128x128xbf16>, vector<288x128xf32> -> vector<288x128xf32>
    %c0_132 = arith.constant 0 : index
    %c0_133 = arith.constant 0 : index
    %126 = vector.load %arg14[%c0_132, %c0_133] : memref<288x128xf32, #tpu.memory_space<vmem>>, vector<288x128xf32>
    %127 = arith.addf %126, %125 : vector<288x128xf32>
    %c0_134 = arith.constant 0 : index
    %c0_135 = arith.constant 0 : index
    %128 = vector.load %arg14[%c0_134, %c0_135] : memref<288x128xf32, #tpu.memory_space<vmem>>, vector<288x128xf32>
    tpu.vector_store %arg14[%c0_134, %c0_135], %127 {strides = array<i32>} : memref<288x128xf32, #tpu.memory_space<vmem>>, vector<288x128xf32>,
    %c19_136 = arith.constant 19 : index
    %c0_137 = arith.constant 0 : index
    %129 = vector.load %arg13[%c19_136, %c0_137] : memref<328x128xf32, #tpu.memory_space<vmem>>, vector<288x128xf32>
    %130 = arith.truncf %129 : vector<288x128xf32> to vector<288x128xbf16>
    %c4_138 = arith.constant 4 : index
    %c0_139 = arith.constant 0 : index
    %c0_140 = arith.constant 0 : index
    %131 = vector.load %arg8[%c4_138, %c0_139, %c0_140] : memref<9x128x128xbf16, #tpu.memory_space<vmem>>, vector<1x128x128xbf16>
    %132 = vector.shape_cast %131 : vector<1x128x128xbf16> to vector<128x128xbf16>
    %cst_141 = arith.constant dense<0.000000e+00> : vector<288x128xf32>
    %133 = tpu.matmul %130, %132, %cst_141 {dimension_numbers = #tpu.dot_dimension_numbers<[1], [0], [0], [1], [0, 0, 1, 1], [], []>} : vector<288x128xbf16>, vector<128x128xbf16>, vector<288x128xf32> -> vector<288x128xf32>
    %c0_142 = arith.constant 0 : index
    %c0_143 = arith.constant 0 : index
    %134 = vector.load %arg14[%c0_142, %c0_143] : memref<288x128xf32, #tpu.memory_space<vmem>>, vector<288x128xf32>
    %135 = arith.addf %134, %133 : vector<288x128xf32>
    %c0_144 = arith.constant 0 : index
    %c0_145 = arith.constant 0 : index
    %136 = vector.load %arg14[%c0_144, %c0_145] : memref<288x128xf32, #tpu.memory_space<vmem>>, vector<288x128xf32>
    tpu.vector_store %arg14[%c0_144, %c0_145], %135 {strides = array<i32>} : memref<288x128xf32, #tpu.memory_space<vmem>>, vector<288x128xf32>,
    %c20_146 = arith.constant 20 : index
    %c0_147 = arith.constant 0 : index
    %137 = vector.load %arg13[%c20_146, %c0_147] : memref<328x128xf32, #tpu.memory_space<vmem>>, vector<288x128xf32>
    %138 = arith.truncf %137 : vector<288x128xf32> to vector<288x128xbf16>
    %c5_148 = arith.constant 5 : index
    %c0_149 = arith.constant 0 : index
    %c0_150 = arith.constant 0 : index
    %139 = vector.load %arg8[%c5_148, %c0_149, %c0_150] : memref<9x128x128xbf16, #tpu.memory_space<vmem>>, vector<1x128x128xbf16>
    %140 = vector.shape_cast %139 : vector<1x128x128xbf16> to vector<128x128xbf16>
    %cst_151 = arith.constant dense<0.000000e+00> : vector<288x128xf32>
    %141 = tpu.matmul %138, %140, %cst_151 {dimension_numbers = #tpu.dot_dimension_numbers<[1], [0], [0], [1], [0, 0, 1, 1], [], []>} : vector<288x128xbf16>, vector<128x128xbf16>, vector<288x128xf32> -> vector<288x128xf32>
    %c0_152 = arith.constant 0 : index
    %c0_153 = arith.constant 0 : index
    %142 = vector.load %arg14[%c0_152, %c0_153] : memref<288x128xf32, #tpu.memory_space<vmem>>, vector<288x128xf32>
    %143 = arith.addf %142, %141 : vector<288x128xf32>
    %c0_154 = arith.constant 0 : index
    %c0_155 = arith.constant 0 : index
    %144 = vector.load %arg14[%c0_154, %c0_155] : memref<288x128xf32, #tpu.memory_space<vmem>>, vector<288x128xf32>
    tpu.vector_store %arg14[%c0_154, %c0_155], %143 {strides = array<i32>} : memref<288x128xf32, #tpu.memory_space<vmem>>, vector<288x128xf32>,
    %c36_156 = arith.constant 36 : index
    %c0_157 = arith.constant 0 : index
    %145 = vector.load %arg13[%c36_156, %c0_157] : memref<328x128xf32, #tpu.memory_space<vmem>>, vector<288x128xf32>
    %146 = arith.truncf %145 : vector<288x128xf32> to vector<288x128xbf16>
    %c6_158 = arith.constant 6 : index
    %c0_159 = arith.constant 0 : index
    %c0_160 = arith.constant 0 : index
    %147 = vector.load %arg8[%c6_158, %c0_159, %c0_160] : memref<9x128x128xbf16, #tpu.memory_space<vmem>>, vector<1x128x128xbf16>
    %148 = vector.shape_cast %147 : vector<1x128x128xbf16> to vector<128x128xbf16>
    %cst_161 = arith.constant dense<0.000000e+00> : vector<288x128xf32>
    %149 = tpu.matmul %146, %148, %cst_161 {dimension_numbers = #tpu.dot_dimension_numbers<[1], [0], [0], [1], [0, 0, 1, 1], [], []>} : vector<288x128xbf16>, vector<128x128xbf16>, vector<288x128xf32> -> vector<288x128xf32>
    %c0_162 = arith.constant 0 : index
    %c0_163 = arith.constant 0 : index
    %150 = vector.load %arg14[%c0_162, %c0_163] : memref<288x128xf32, #tpu.memory_space<vmem>>, vector<288x128xf32>
    %151 = arith.addf %150, %149 : vector<288x128xf32>
    %c0_164 = arith.constant 0 : index
    %c0_165 = arith.constant 0 : index
    %152 = vector.load %arg14[%c0_164, %c0_165] : memref<288x128xf32, #tpu.memory_space<vmem>>, vector<288x128xf32>
    tpu.vector_store %arg14[%c0_164, %c0_165], %151 {strides = array<i32>} : memref<288x128xf32, #tpu.memory_space<vmem>>, vector<288x128xf32>,
    %c37_166 = arith.constant 37 : index
    %c0_167 = arith.constant 0 : index
    %153 = vector.load %arg13[%c37_166, %c0_167] : memref<328x128xf32, #tpu.memory_space<vmem>>, vector<288x128xf32>
    %154 = arith.truncf %153 : vector<288x128xf32> to vector<288x128xbf16>
    %c7_168 = arith.constant 7 : index
    %c0_169 = arith.constant 0 : index
    %c0_170 = arith.constant 0 : index
    %155 = vector.load %arg8[%c7_168, %c0_169, %c0_170] : memref<9x128x128xbf16, #tpu.memory_space<vmem>>, vector<1x128x128xbf16>
    %156 = vector.shape_cast %155 : vector<1x128x128xbf16> to vector<128x128xbf16>
    %cst_171 = arith.constant dense<0.000000e+00> : vector<288x128xf32>
    %157 = tpu.matmul %154, %156, %cst_171 {dimension_numbers = #tpu.dot_dimension_numbers<[1], [0], [0], [1], [0, 0, 1, 1], [], []>} : vector<288x128xbf16>, vector<128x128xbf16>, vector<288x128xf32> -> vector<288x128xf32>
    %c0_172 = arith.constant 0 : index
    %c0_173 = arith.constant 0 : index
    %158 = vector.load %arg14[%c0_172, %c0_173] : memref<288x128xf32, #tpu.memory_space<vmem>>, vector<288x128xf32>
    %159 = arith.addf %158, %157 : vector<288x128xf32>
    %c0_174 = arith.constant 0 : index
    %c0_175 = arith.constant 0 : index
    %160 = vector.load %arg14[%c0_174, %c0_175] : memref<288x128xf32, #tpu.memory_space<vmem>>, vector<288x128xf32>
    tpu.vector_store %arg14[%c0_174, %c0_175], %159 {strides = array<i32>} : memref<288x128xf32, #tpu.memory_space<vmem>>, vector<288x128xf32>,
    %c38_176 = arith.constant 38 : index
    %c0_177 = arith.constant 0 : index
    %161 = vector.load %arg13[%c38_176, %c0_177] : memref<328x128xf32, #tpu.memory_space<vmem>>, vector<288x128xf32>
    %162 = arith.truncf %161 : vector<288x128xf32> to vector<288x128xbf16>
    %c8_178 = arith.constant 8 : index
    %c0_179 = arith.constant 0 : index
    %c0_180 = arith.constant 0 : index
    %163 = vector.load %arg8[%c8_178, %c0_179, %c0_180] : memref<9x128x128xbf16, #tpu.memory_space<vmem>>, vector<1x128x128xbf16>
    %164 = vector.shape_cast %163 : vector<1x128x128xbf16> to vector<128x128xbf16>
    %cst_181 = arith.constant dense<0.000000e+00> : vector<288x128xf32>
    %165 = tpu.matmul %162, %164, %cst_181 {dimension_numbers = #tpu.dot_dimension_numbers<[1], [0], [0], [1], [0, 0, 1, 1], [], []>} : vector<288x128xbf16>, vector<128x128xbf16>, vector<288x128xf32> -> vector<288x128xf32>
    %c0_182 = arith.constant 0 : index
    %c0_183 = arith.constant 0 : index
    %166 = vector.load %arg14[%c0_182, %c0_183] : memref<288x128xf32, #tpu.memory_space<vmem>>, vector<288x128xf32>
    %167 = arith.addf %166, %165 : vector<288x128xf32>
    %c0_184 = arith.constant 0 : index
    %c0_185 = arith.constant 0 : index
    %168 = vector.load %arg14[%c0_184, %c0_185] : memref<288x128xf32, #tpu.memory_space<vmem>>, vector<288x128xf32>
    tpu.vector_store %arg14[%c0_184, %c0_185], %167 {strides = array<i32>} : memref<288x128xf32, #tpu.memory_space<vmem>>, vector<288x128xf32>,
    %c0_186 = arith.constant 0 : index
    %c0_187 = arith.constant 0 : index
    %169 = vector.load %arg14[%c0_186, %c0_187] : memref<288x128xf32, #tpu.memory_space<vmem>>, vector<288x128xf32>
    %c0_188 = arith.constant 0 : index
    %c0_189 = arith.constant 0 : index
    %170 = vector.load %arg9[%c0_188, %c0_189] : memref<1x128xf32, #tpu.memory_space<vmem>>, vector<1x128xf32>
    %171 = vector.broadcast %170 : vector<1x128xf32> to vector<288x128xf32>
    %172 = arith.mulf %169, %171 : vector<288x128xf32>
    %c0_190 = arith.constant 0 : index
    %c0_191 = arith.constant 0 : index
    %173 = vector.load %arg10[%c0_190, %c0_191] : memref<1x128xf32, #tpu.memory_space<vmem>>, vector<1x128xf32>
    %174 = vector.broadcast %173 : vector<1x128xf32> to vector<288x128xf32>
    %175 = arith.addf %172, %174 : vector<288x128xf32>
    %cst_192 = arith.constant 0.000000e+00 : f32
    %176 = vector.broadcast %cst_192 : f32 to vector<288x128xf32>
    %177 = arith.maximumf %175, %176 : vector<288x128xf32>
    %c0_193 = arith.constant 0 : index
    %c0_194 = arith.constant 0 : index
    %c0_195 = arith.constant 0 : index
    %178 = vector.load %arg11[%c0_193, %c0_194, %c0_195] : memref<1x288x128xf32, #tpu.memory_space<vmem>>, vector<1x288x128xf32>
    %179 = vector.shape_cast %178 : vector<1x288x128xf32> to vector<288x128xf32>
    %180 = vector.shape_cast %177 : vector<288x128xf32> to vector<1x288x128xf32>
    tpu.vector_store %arg11[%c0_193, %c0_194, %c0_195], %180 {strides = array<i32>} : memref<1x288x128xf32, #tpu.memory_space<vmem>>, vector<1x288x128xf32>,
    return
  }
  func.func @transform_0(%arg0: i32) -> (i32, i32, i32) {
    %c0_i32 = arith.constant 0 : i32
    %c0_i32_0 = arith.constant 0 : i32
    %c0_i32_1 = arith.constant 0 : i32
    return %arg0, %c0_i32, %c0_i32_0 : i32, i32, i32
  }
  func.func @transform_1(%arg0: i32) -> (i32, i32) {
    %c0_i32 = arith.constant 0 : i32
    %c0_i32_0 = arith.constant 0 : i32
    %c0_i32_1 = arith.constant 0 : i32
    return %c0_i32, %c0_i32_0 : i32, i32
  }
  func.func @transform_2(%arg0: i32) -> (i32, i32) {
    %c0_i32 = arith.constant 0 : i32
    %c0_i32_0 = arith.constant 0 : i32
    %c0_i32_1 = arith.constant 0 : i32
    return %c0_i32, %c0_i32_0 : i32, i32
  }
  func.func @transform_3(%arg0: i32) -> (i32, i32) {
    %c0_i32 = arith.constant 0 : i32
    %c0_i32_0 = arith.constant 0 : i32
    %c0_i32_1 = arith.constant 0 : i32
    return %c0_i32, %c0_i32_0 : i32, i32
  }
  func.func @transform_4(%arg0: i32) -> (i32, i32, i32) {
    %c0_i32 = arith.constant 0 : i32
    %c0_i32_0 = arith.constant 0 : i32
    %c0_i32_1 = arith.constant 0 : i32
    %c0_i32_2 = arith.constant 0 : i32
    return %c0_i32, %c0_i32_0, %c0_i32_1 : i32, i32, i32
  }
  func.func @transform_5(%arg0: i32) -> (i32, i32) {
    %c0_i32 = arith.constant 0 : i32
    %c0_i32_0 = arith.constant 0 : i32
    %c0_i32_1 = arith.constant 0 : i32
    return %c0_i32, %c0_i32_0 : i32, i32
  }
  func.func @transform_6(%arg0: i32) -> (i32, i32) {
    %c0_i32 = arith.constant 0 : i32
    %c0_i32_0 = arith.constant 0 : i32
    %c0_i32_1 = arith.constant 0 : i32
    return %c0_i32, %c0_i32_0 : i32, i32
  }
  func.func @transform_7(%arg0: i32) -> (i32, i32, i32) {
    %c0_i32 = arith.constant 0 : i32
    %c0_i32_0 = arith.constant 0 : i32
    %c0_i32_1 = arith.constant 0 : i32
    %c0_i32_2 = arith.constant 0 : i32
    return %c0_i32, %c0_i32_0, %c0_i32_1 : i32, i32, i32
  }
  func.func @transform_8(%arg0: i32) -> (i32, i32) {
    %c0_i32 = arith.constant 0 : i32
    %c0_i32_0 = arith.constant 0 : i32
    %c0_i32_1 = arith.constant 0 : i32
    return %c0_i32, %c0_i32_0 : i32, i32
  }
  func.func @transform_9(%arg0: i32) -> (i32, i32) {
    %c0_i32 = arith.constant 0 : i32
    %c0_i32_0 = arith.constant 0 : i32
    %c0_i32_1 = arith.constant 0 : i32
    return %c0_i32, %c0_i32_0 : i32, i32
  }
  func.func @transform_10(%arg0: i32) -> (i32, i32, i32) {
    %c0_i32 = arith.constant 0 : i32
    %c0_i32_0 = arith.constant 0 : i32
    %c0_i32_1 = arith.constant 0 : i32
    return %arg0, %c0_i32, %c0_i32_0 : i32, i32, i32
  }
}

</mosaic_0001>

<llo_original>
// kernel: decoder_block_forward.1
$region0: #{decoder_block_forward.1}
  #allocation0 [shape = 'u32[]', space=smem, size = 0x4, offset = 0x4, fixed_abs, tag = 'smem constant byte address 0x4 - core index']
  #allocation1 [shape = 'u32[144,128]{1,0:T(1,128)}', space=vmem, size = 0x12000, scoped, tag = 'internal scratch']
  #allocation2 [shape = 'f32[328,128]{1,0:T(8,128)}', space=vmem, size = 0x29000, scoped, tag = 'scratch operand']
  #allocation3 [shape = 'f32[328,128]{1,0:T(8,128)}', space=vmem, size = 0x29000, scoped, tag = 'scratch operand']
  #allocation4 [shape = 'f32[288,128]{1,0:T(8,128)}', space=vmem, size = 0x24000, scoped, tag = 'scratch operand']
  %s0 = inlined_call_operand.vmem [shape: f32[2,328,128], index: 0, kind: input, shape index: {}]
  %s1 = inlined_call_operand.vmem [shape: f32[328,1], index: 1, kind: input, shape index: {}]
  %s2 = inlined_call_operand.vmem [shape: f32[1,128], index: 2, kind: input, shape index: {}]
  %s3 = inlined_call_operand.vmem [shape: f32[1,128], index: 3, kind: input, shape index: {}]
  %s4 = inlined_call_operand.vmem [shape: bf16[9,128,128], index: 4, kind: input, shape index: {}]
  %s5 = inlined_call_operand.vmem [shape: f32[1,128], index: 5, kind: input, shape index: {}]
  %s6 = inlined_call_operand.vmem [shape: f32[1,128], index: 6, kind: input, shape index: {}]
  %s7 = inlined_call_operand.vmem [shape: bf16[9,128,128], index: 7, kind: input, shape index: {}]
  %s8 = inlined_call_operand.vmem [shape: f32[1,128], index: 8, kind: input, shape index: {}]
  %s9 = inlined_call_operand.vmem [shape: f32[1,128], index: 9, kind: input, shape index: {}]
  %s10 = inlined_call_operand.vmem [shape: f32[2,288,128], index: 10, kind: output, shape index: {}]
  %s11 = sld [smem:[#allocation0]]
  $region73: #{decoder_block_forward.1} parent=0
    _
  %s13 = ssub.s32 1, %s11
  %s14 = scalar_select 0, %s13, %s11
  loop: start=0, step=1, limit=4
  $region2: #{decoder_block_forward.1} parent=0 // loop_pre_header
    _
  $region3: #{decoder_block_forward.1} parent=0 // loop_header
    %s16 = sphi 0, %s20
    %p17 = scmp.ge.s32.totalorder %s16, 4
    %s26 = sphi 0, %s28
    %s29 = sphi 0, %s26
    %s30 = sphi 0, %s29
    %s46 = sphi 0, %s30
    %s50 = sphi 0, %s50
    %s52 = sphi 0, %s50
    %s53 = sphi 0, %s52
    %s67 = sphi 0, %s53
    %s71 = sphi 0, %s71
    %s73 = sphi 0, %s71
    %s74 = sphi 0, %s73
    %s88 = sphi 0, %s74
    %s92 = sphi 0, %s92
    %s94 = sphi 0, %s92
    %s95 = sphi 0, %s94
    %s109 = sphi 0, %s95
    %s113 = sphi 0, %s113
    %s115 = sphi 0, %s113
    %s116 = sphi 0, %s115
    %s130 = sphi 0, %s116
    %s134 = sphi 0, %s134
    %s136 = sphi 0, %s134
    %s137 = sphi 0, %s136
    %s151 = sphi 0, %s137
    %s155 = sphi 0, %s155
    %s157 = sphi 0, %s155
    %s158 = sphi 0, %s157
    %s172 = sphi 0, %s158
    %s176 = sphi 0, %s176
    %s178 = sphi 0, %s176
    %s179 = sphi 0, %s178
    %s193 = sphi 0, %s179
    %s197 = sphi 0, %s197
    %s199 = sphi 0, %s197
    %s200 = sphi 0, %s199
    %s214 = sphi 0, %s200
    %s218 = sphi 0, %s218
    %s220 = sphi 0, %s218
    %s221 = sphi 0, %s220
    %s235 = sphi 0, %s221
    %s241 = sphi 0, %s243
    %s244 = sphi 0, %s241
    %s245 = sphi 0, %s244
    %s261 = sphi 0, %s245
  $region4: #{decoder_block_forward.1} parent=0 // loop_header_branch
    %19 = sbr.rel (%p17) target = $region8
  $region5: #{decoder_block_forward.1} parent=0 // loop_body
    %s21 = ssub.s32 %s16, 1
    %s22 = ssub.s32 %s16, 2
    %s23 = sadd.s32 %s16, 1
    %s24 = ssub.s32 %s16, %s23
    %p25 = scmp.eq.s32.totalorder %s24, 0
    %s27 = sadd.s32 %s26, 1
    %s28 = scalar_select %p25, %s26, %s27
    %p31 = pneg %p25
    %p32 = scmp.eq.s32.totalorder %s16, 1
    %p33 = por %p31, %p32
    %p34 = scmp.ne.s32.totalorder %s26, %s29
    %p35 = scmp.eq.s32.totalorder %s16, 0
    %p36 = por %p34, %p35
    %p37 = scmp.ne.s32.totalorder %s26, %s29
    %p38 = scmp.eq.s32.totalorder %s21, 1
    %p39 = por %p37, %p38
    %p40 = scmp.ne.s32.totalorder %s29, %s30
    %p41 = scmp.eq.s32.totalorder %s21, 0
    %p42 = por %p40, %p41
    %p43 = scmp.ne.s32.totalorder %s29, %s30
    %p44 = scmp.eq.s32.totalorder %s22, 1
    %p45 = por %p43, %p44
    %p47 = scmp.ne.s32.totalorder %s30, %s46
    %p48 = scmp.eq.s32.totalorder %s22, 0
    %p49 = por %p47, %p48
    %s51 = sadd.s32 %s50, 1
    %p54 = scmp.eq.s32.totalorder %s16, 1
    %p55 = scmp.ne.s32.totalorder %s50, %s52
    %p56 = scmp.eq.s32.totalorder %s16, 0
    %p57 = por %p55, %p56
    %p58 = scmp.ne.s32.totalorder %s50, %s52
    %p59 = scmp.eq.s32.totalorder %s21, 1
    %p60 = por %p58, %p59
    %p61 = scmp.ne.s32.totalorder %s52, %s53
    %p62 = scmp.eq.s32.totalorder %s21, 0
    %p63 = por %p61, %p62
    %p64 = scmp.ne.s32.totalorder %s52, %s53
    %p65 = scmp.eq.s32.totalorder %s22, 1
    %p66 = por %p64, %p65
    %p68 = scmp.ne.s32.totalorder %s53, %s67
    %p69 = scmp.eq.s32.totalorder %s22, 0
    %p70 = por %p68, %p69
    %s72 = sadd.s32 %s71, 1
    %p75 = scmp.eq.s32.totalorder %s16, 1
    %p76 = scmp.ne.s32.totalorder %s71, %s73
    %p77 = scmp.eq.s32.totalorder %s16, 0
    %p78 = por %p76, %p77
    %p79 = scmp.ne.s32.totalorder %s71, %s73
    %p80 = scmp.eq.s32.totalorder %s21, 1
    %p81 = por %p79, %p80
    %p82 = scmp.ne.s32.totalorder %s73, %s74
    %p83 = scmp.eq.s32.totalorder %s21, 0
    %p84 = por %p82, %p83
    %p85 = scmp.ne.s32.totalorder %s73, %s74
    %p86 = scmp.eq.s32.totalorder %s22, 1
    %p87 = por %p85, %p86
    %p89 = scmp.ne.s32.totalorder %s74, %s88
    %p90 = scmp.eq.s32.totalorder %s22, 0
    %p91 = por %p89, %p90
    %s93 = sadd.s32 %s92, 1
    %p96 = scmp.eq.s32.totalorder %s16, 1
    %p97 = scmp.ne.s32.totalorder %s92, %s94
    %p98 = scmp.eq.s32.totalorder %s16, 0
    %p99 = por %p97, %p98
    %p100 = scmp.ne.s32.totalorder %s92, %s94
    %p101 = scmp.eq.s32.totalorder %s21, 1
    %p102 = por %p100, %p101
    %p103 = scmp.ne.s32.totalorder %s94, %s95
    %p104 = scmp.eq.s32.totalorder %s21, 0
    %p105 = por %p103, %p104
    %p106 = scmp.ne.s32.totalorder %s94, %s95
    %p107 = scmp.eq.s32.totalorder %s22, 1
    %p108 = por %p106, %p107
    %p110 = scmp.ne.s32.totalorder %s95, %s109
    %p111 = scmp.eq.s32.totalorder %s22, 0
    %p112 = por %p110, %p111
    %s114 = sadd.s32 %s113, 1
    %p117 = scmp.eq.s32.totalorder %s16, 1
    %p118 = scmp.ne.s32.totalorder %s113, %s115
    %p119 = scmp.eq.s32.totalorder %s16, 0
    %p120 = por %p118, %p119
    %p121 = scmp.ne.s32.totalorder %s113, %s115
    %p122 = scmp.eq.s32.totalorder %s21, 1
    %p123 = por %p121, %p122
    %p124 = scmp.ne.s32.totalorder %s115, %s116
    %p125 = scmp.eq.s32.totalorder %s21, 0
    %p126 = por %p124, %p125
    %p127 = scmp.ne.s32.totalorder %s115, %s116
    %p128 = scmp.eq.s32.totalorder %s22, 1
    %p129 = por %p127, %p128
    %p131 = scmp.ne.s32.totalorder %s116, %s130
    %p132 = scmp.eq.s32.totalorder %s22, 0
    %p133 = por %p131, %p132
    %s135 = sadd.s32 %s134, 1
    %p138 = scmp.eq.s32.totalorder %s16, 1
    %p139 = scmp.ne.s32.totalorder %s134, %s136
    %p140 = scmp.eq.s32.totalorder %s16, 0
    %p141 = por %p139, %p140
    %p142 = scmp.ne.s32.totalorder %s134, %s136
    %p143 = scmp.eq.s32.totalorder %s21, 1
    %p144 = por %p142, %p143
    %p145 = scmp.ne.s32.totalorder %s136, %s137
    %p146 = scmp.eq.s32.totalorder %s21, 0
    %p147 = por %p145, %p146
    %p148 = scmp.ne.s32.totalorder %s136, %s137
    %p149 = scmp.eq.s32.totalorder %s22, 1
    %p150 = por %p148, %p149
    %p152 = scmp.ne.s32.totalorder %s137, %s151
    %p153 = scmp.eq.s32.totalorder %s22, 0
    %p154 = por %p152, %p153
    %s156 = sadd.s32 %s155, 1
    %p159 = scmp.eq.s32.totalorder %s16, 1
    %p160 = scmp.ne.s32.totalorder %s155, %s157
    %p161 = scmp.eq.s32.totalorder %s16, 0
    %p162 = por %p160, %p161
    %p163 = scmp.ne.s32.totalorder %s155, %s157
    %p164 = scmp.eq.s32.totalorder %s21, 1
    %p165 = por %p163, %p164
    %p166 = scmp.ne.s32.totalorder %s157, %s158
    %p167 = scmp.eq.s32.totalorder %s21, 0
    %p168 = por %p166, %p167
    %p169 = scmp.ne.s32.totalorder %s157, %s158
    %p170 = scmp.eq.s32.totalorder %s22, 1
    %p171 = por %p169, %p170
    %p173 = scmp.ne.s32.totalorder %s158, %s172
    %p174 = scmp.eq.s32.totalorder %s22, 0
    %p175 = por %p173, %p174
    %s177 = sadd.s32 %s176, 1
    %p180 = scmp.eq.s32.totalorder %s16, 1
    %p181 = scmp.ne.s32.totalorder %s176, %s178
    %p182 = scmp.eq.s32.totalorder %s16, 0
    %p183 = por %p181, %p182
    %p184 = scmp.ne.s32.totalorder %s176, %s178
    %p185 = scmp.eq.s32.totalorder %s21, 1
    %p186 = por %p184, %p185
    %p187 = scmp.ne.s32.totalorder %s178, %s179
    %p188 = scmp.eq.s32.totalorder %s21, 0
    %p189 = por %p187, %p188
    %p190 = scmp.ne.s32.totalorder %s178, %s179
    %p191 = scmp.eq.s32.totalorder %s22, 1
    %p192 = por %p190, %p191
    %p194 = scmp.ne.s32.totalorder %s179, %s193
    %p195 = scmp.eq.s32.totalorder %s22, 0
    %p196 = por %p194, %p195
    %s198 = sadd.s32 %s197, 1
    %p201 = scmp.eq.s32.totalorder %s16, 1
    %p202 = scmp.ne.s32.totalorder %s197, %s199
    %p203 = scmp.eq.s32.totalorder %s16, 0
    %p204 = por %p202, %p203
    %p205 = scmp.ne.s32.totalorder %s197, %s199
    %p206 = scmp.eq.s32.totalorder %s21, 1
    %p207 = por %p205, %p206
    %p208 = scmp.ne.s32.totalorder %s199, %s200
    %p209 = scmp.eq.s32.totalorder %s21, 0
    %p210 = por %p208, %p209
    %p211 = scmp.ne.s32.totalorder %s199, %s200
    %p212 = scmp.eq.s32.totalorder %s22, 1
    %p213 = por %p211, %p212
    %p215 = scmp.ne.s32.totalorder %s200, %s214
    %p216 = scmp.eq.s32.totalorder %s22, 0
    %p217 = por %p215, %p216
    %s219 = sadd.s32 %s218, 1
    %p222 = scmp.eq.s32.totalorder %s16, 1
    %p223 = scmp.ne.s32.totalorder %s218, %s220
    %p224 = scmp.eq.s32.totalorder %s16, 0
    %p225 = por %p223, %p224
    %p226 = scmp.ne.s32.totalorder %s218, %s220
    %p227 = scmp.eq.s32.totalorder %s21, 1
    %p228 = por %p226, %p227
    %p229 = scmp.ne.s32.totalorder %s220, %s221
    %p230 = scmp.eq.s32.totalorder %s21, 0
    %p231 = por %p229, %p230
    %p232 = scmp.ne.s32.totalorder %s220, %s221
    %p233 = scmp.eq.s32.totalorder %s22, 1
    %p234 = por %p232, %p233
    %p236 = scmp.ne.s32.totalorder %s221, %s235
    %p237 = scmp.eq.s32.totalorder %s22, 0
    %p238 = por %p236, %p237
    %s239 = ssub.s32 %s16, %s23
    %p240 = scmp.eq.s32.totalorder %s239, 0
    %s242 = sadd.s32 %s241, 1
    %s243 = scalar_select %p240, %s241, %s242
    %p246 = pneg %p240
    %p247 = scmp.eq.s32.totalorder %s16, 1
    %p248 = por %p246, %p247
    %p249 = scmp.ne.s32.totalorder %s241, %s244
    %p250 = scmp.eq.s32.totalorder %s16, 0
    %p251 = por %p249, %p250
    %p252 = scmp.ne.s32.totalorder %s241, %s244
    %p253 = scmp.eq.s32.totalorder %s21, 1
    %p254 = por %p252, %p253
    %p255 = scmp.ne.s32.totalorder %s244, %s245
    %p256 = scmp.eq.s32.totalorder %s21, 0
    %p257 = por %p255, %p256
    %p258 = scmp.ne.s32.totalorder %s244, %s245
    %p259 = scmp.eq.s32.totalorder %s22, 1
    %p260 = por %p258, %p259
    %p262 = scmp.ne.s32.totalorder %s245, %s261
    %p263 = scmp.eq.s32.totalorder %s22, 0
    %p264 = por %p262, %p263
    %p265 = scmp.le.s32.totalorder 1, %s16
    %p266 = scmp.lt.s32.totalorder %s16, 3
    %p267 = pnand %p265, %p266
    %p268 = pneg %p267
    // Predicated region
    $region9: #{decoder_block_forward.1} parent=5 // pred_check
      _
    $region10: #{decoder_block_forward.1} parent=5 // pred_check_branch
      %270 = sbr.rel (%p267) target = $region12
    $region11: #{decoder_block_forward.1} parent=5 // pred_region
      %s271 = ssub.s32 %s16, 1
      // Predicated region
      $region13: #{decoder_block_forward.1} parent=11 // pred_check
        %p272 = pneg %p63
      $region14: #{decoder_block_forward.1} parent=11 // pred_check_branch
        %274 = sbr.rel (%p272) target = $region16
      $region15: #{decoder_block_forward.1} parent=11 // pred_region
        _
      $region16: #{decoder_block_forward.1} parent=11 // pred_fallthru
        _
      // Predicated region
      $region17: #{decoder_block_forward.1} parent=11 // pred_check
        %p275 = pneg %p84
      $region18: #{decoder_block_forward.1} parent=11 // pred_check_branch
        %277 = sbr.rel (%p275) target = $region20
      $region19: #{decoder_block_forward.1} parent=11 // pred_region
        _
      $region20: #{decoder_block_forward.1} parent=11 // pred_fallthru
        _
      // Predicated region
      $region21: #{decoder_block_forward.1} parent=11 // pred_check
        %p278 = pneg %p105
      $region22: #{decoder_block_forward.1} parent=11 // pred_check_branch
        %280 = sbr.rel (%p278) target = $region24
      $region23: #{decoder_block_forward.1} parent=11 // pred_region
        _
      $region24: #{decoder_block_forward.1} parent=11 // pred_fallthru
        _
      // Predicated region
      $region25: #{decoder_block_forward.1} parent=11 // pred_check
        %p281 = pneg %p126
      $region26: #{decoder_block_forward.1} parent=11 // pred_check_branch
        %283 = sbr.rel (%p281) target = $region28
      $region27: #{decoder_block_forward.1} parent=11 // pred_region
        _
      $region28: #{decoder_block_forward.1} parent=11 // pred_fallthru
        _
      // Predicated region
      $region29: #{decoder_block_forward.1} parent=11 // pred_check
        %p284 = pneg %p147
      $region30: #{decoder_block_forward.1} parent=11 // pred_check_branch
        %286 = sbr.rel (%p284) target = $region32
      $region31: #{decoder_block_forward.1} parent=11 // pred_region
        _
      $region32: #{decoder_block_forward.1} parent=11 // pred_fallthru
        _
      // Predicated region
      $region33: #{decoder_block_forward.1} parent=11 // pred_check
        %p287 = pneg %p168
      $region34: #{decoder_block_forward.1} parent=11 // pred_check_branch
        %289 = sbr.rel (%p287) target = $region36
      $region35: #{decoder_block_forward.1} parent=11 // pred_region
        _
      $region36: #{decoder_block_forward.1} parent=11 // pred_fallthru
        _
      // Predicated region
      $region37: #{decoder_block_forward.1} parent=11 // pred_check
        %p290 = pneg %p189
      $region38: #{decoder_block_forward.1} parent=11 // pred_check_branch
        %292 = sbr.rel (%p290) target = $region40
      $region39: #{decoder_block_forward.1} parent=11 // pred_region
        _
      $region40: #{decoder_block_forward.1} parent=11 // pred_fallthru
        _
      // Predicated region
      $region41: #{decoder_block_forward.1} parent=11 // pred_check
        %p293 = pneg %p210
      $region42: #{decoder_block_forward.1} parent=11 // pred_check_branch
        %295 = sbr.rel (%p293) target = $region44
      $region43: #{decoder_block_forward.1} parent=11 // pred_region
        _
      $region44: #{decoder_block_forward.1} parent=11 // pred_fallthru
        _
      // Predicated region
      $region45: #{decoder_block_forward.1} parent=11 // pred_check
        %p296 = pneg %p231
      $region46: #{decoder_block_forward.1} parent=11 // pred_check_branch
        %298 = sbr.rel (%p296) target = $region48
      $region47: #{decoder_block_forward.1} parent=11 // pred_region
        _
      $region48: #{decoder_block_forward.1} parent=11 // pred_fallthru
        _
    $region12: #{decoder_block_forward.1} parent=5 // pred_fallthru
      _
    %p299 = scmp.lt.s32.totalorder %s16, 2
    // Predicated region
    $region49: #{decoder_block_forward.1} parent=5 // pred_check
      %p300 = pneg %p299
    $region50: #{decoder_block_forward.1} parent=5 // pred_check_branch
      %302 = sbr.rel (%p300) target = $region52
    $region51: #{decoder_block_forward.1} parent=5 // pred_region
      // Predicated region
      $region53: #{decoder_block_forward.1} parent=51 // pred_check
        %p303 = pneg %p36
      $region54: #{decoder_block_forward.1} parent=51 // pred_check_branch
        %305 = sbr.rel (%p303) target = $region56
      $region55: #{decoder_block_forward.1} parent=51 // pred_region
        %p306 = scmp.lt.s32.totalorder %s16, 1
        %s307 = scalar_select %p306, %s16, 1
        %s308 = smul.addr %s307, 41
        %s309 = smul.addr %s308, 8
        %s310 = scalar_lea.vmem %s0, %s309
      $region56: #{decoder_block_forward.1} parent=51 // pred_fallthru
        _
    $region52: #{decoder_block_forward.1} parent=5 // pred_fallthru
      _
    %p311 = scmp.le.s32.totalorder 1, %s16
    %p312 = scmp.lt.s32.totalorder %s16, 3
    %p313 = pnand %p311, %p312
    %p314 = pneg %p313
    // Predicated region
    $region57: #{decoder_block_forward.1} parent=5 // pred_check
      _
    $region58: #{decoder_block_forward.1} parent=5 // pred_check_branch
      %316 = sbr.rel (%p313) target = $region60
    $region59: #{decoder_block_forward.1} parent=5 // pred_region
      %s317 = ssub.s32 %s16, 1
      %p318 = scmp.lt.s32.totalorder %s21, 1
      %s319 = scalar_select %p318, %s21, 1
      %s320 = smul.addr %s319, 41
      %s321 = smul.addr %s320, 8
      %s322 = scalar_lea.vmem %s0, %s321
      %p323 = pneg %p42
      %p324 = pneg %p39
      %p325 = pneg %p63
      %p326 = pneg %p60
      %p327 = pneg %p84
      %p328 = pneg %p81
      %p329 = pneg %p105
      %p330 = pneg %p102
      %p331 = pneg %p126
      %p332 = pneg %p123
      %p333 = pneg %p147
      %p334 = pneg %p144
      %p335 = pneg %p168
      %p336 = pneg %p165
      %p337 = pneg %p189
      %p338 = pneg %p186
      %p339 = pneg %p210
      %p340 = pneg %p207
      %p341 = pneg %p231
      %p342 = pneg %p228
      %p343 = pneg %p257
      %p344 = pneg %p254
      %p345 = scmp.lt.s32.totalorder %s21, 1
      %s346 = scalar_select %p345, %s21, 1
      %s347 = smul.addr %s346, 36
      %s348 = smul.addr %s347, 8
      %s349 = scalar_lea.vmem %s10, %s348
      %p350 = scmp.lt.s32.totalorder %s21, 1
      %s351 = scalar_select %p350, %s21, 1
      %s352 = smul.addr %s351, 41
      %s353 = smul.addr %s352, 8
      %s354 = scalar_lea.vmem %s0, %s353
      %p355 = scmp.lt.s32.totalorder %s21, 1
      %s356 = scalar_select %p355, %s21, 1
      %s357 = smul.addr %s356, 36
      %s358 = smul.addr %s357, 8
      %s359 = scalar_lea.vmem %s10, %s358
      %v361 = vld [vmem:[%s354] sm:$0xff]
      %v362 = vld [vmem:[%s354 + $0x8] sm:$0xff]
      %v363 = vld [vmem:[%s354 + $0x10] sm:$0xff]
      %v364 = vld [vmem:[%s354 + $0x18] sm:$0xff]
      %v365 = vld [vmem:[%s354 + $0x20] sm:$0xff]
      %v366 = vld [vmem:[%s354 + $0x28] sm:$0xff]
      %v367 = vld [vmem:[%s354 + $0x30] sm:$0xff]
      %v368 = vld [vmem:[%s354 + $0x38] sm:$0xff]
      %v369 = vld [vmem:[%s354 + $0x40] sm:$0xff]
      %v370 = vld [vmem:[%s354 + $0x48] sm:$0xff]
      %v371 = vld [vmem:[%s354 + $0x50] sm:$0xff]
      %v372 = vld [vmem:[%s354 + $0x58] sm:$0xff]
      %v373 = vld [vmem:[%s354 + $0x60] sm:$0xff]
      %v374 = vld [vmem:[%s354 + $0x68] sm:$0xff]
      %v375 = vld [vmem:[%s354 + $0x70] sm:$0xff]
      %v376 = vld [vmem:[%s354 + $0x78] sm:$0xff]
      %v377 = vld [vmem:[%s354 + $0x80] sm:$0xff]
      %v378 = vld [vmem:[%s354 + $0x88] sm:$0xff]
      %v379 = vld [vmem:[%s354 + $0x90] sm:$0xff]
      %v380 = vld [vmem:[%s354 + $0x98] sm:$0xff]
      %v381 = vld [vmem:[%s354 + $0xa0] sm:$0xff]
      %v382 = vld [vmem:[%s354 + $0xa8] sm:$0xff]
      %v383 = vld [vmem:[%s354 + $0xb0] sm:$0xff]
      %v384 = vld [vmem:[%s354 + $0xb8] sm:$0xff]
      %v385 = vld [vmem:[%s354 + $0xc0] sm:$0xff]
      %v386 = vld [vmem:[%s354 + $0xc8] sm:$0xff]
      %v387 = vld [vmem:[%s354 + $0xd0] sm:$0xff]
      %v388 = vld [vmem:[%s354 + $0xd8] sm:$0xff]
      %v389 = vld [vmem:[%s354 + $0xe0] sm:$0xff]
      %v390 = vld [vmem:[%s354 + $0xe8] sm:$0xff]
      %v391 = vld [vmem:[%s354 + $0xf0] sm:$0xff]
      %v392 = vld [vmem:[%s354 + $0xf8] sm:$0xff]
      %v393 = vld [vmem:[%s354 + $0x100] sm:$0xff]
      %v394 = vld [vmem:[%s354 + $0x108] sm:$0xff]
      %v395 = vld [vmem:[%s354 + $0x110] sm:$0xff]
      %v396 = vld [vmem:[%s354 + $0x118] sm:$0xff]
      %v397 = vld [vmem:[%s354 + $0x120] sm:$0xff]
      %v398 = vld [vmem:[%s354 + $0x128] sm:$0xff]
      %v399 = vld [vmem:[%s354 + $0x130] sm:$0xff]
      %v400 = vld [vmem:[%s354 + $0x138] sm:$0xff]
      %v401 = vld [vmem:[%s354 + $0x140] sm:$0xff]
      %v402 = vld [vmem:[%s1] sm:$0xff]
      %v403 = vld [vmem:[%s1 + $0x8] sm:$0xff]
      %v404 = vld [vmem:[%s1 + $0x10] sm:$0xff]
      %v405 = vld [vmem:[%s1 + $0x18] sm:$0xff]
      %v406 = vld [vmem:[%s1 + $0x20] sm:$0xff]
      %v407 = vld [vmem:[%s1 + $0x28] sm:$0xff]
      %v408 = vld [vmem:[%s1 + $0x30] sm:$0xff]
      %v409 = vld [vmem:[%s1 + $0x38] sm:$0xff]
      %v410 = vld [vmem:[%s1 + $0x40] sm:$0xff]
      %v411 = vld [vmem:[%s1 + $0x48] sm:$0xff]
      %v412 = vld [vmem:[%s1 + $0x50] sm:$0xff]
      %v413 = vld [vmem:[%s1 + $0x58] sm:$0xff]
      %v414 = vld [vmem:[%s1 + $0x60] sm:$0xff]
      %v415 = vld [vmem:[%s1 + $0x68] sm:$0xff]
      %v416 = vld [vmem:[%s1 + $0x70] sm:$0xff]
      %v417 = vld [vmem:[%s1 + $0x78] sm:$0xff]
      %v418 = vld [vmem:[%s1 + $0x80] sm:$0xff]
      %v419 = vld [vmem:[%s1 + $0x88] sm:$0xff]
      %v420 = vld [vmem:[%s1 + $0x90] sm:$0xff]
      %v421 = vld [vmem:[%s1 + $0x98] sm:$0xff]
      %v422 = vld [vmem:[%s1 + $0xa0] sm:$0xff]
      %v423 = vld [vmem:[%s1 + $0xa8] sm:$0xff]
      %v424 = vld [vmem:[%s1 + $0xb0] sm:$0xff]
      %v425 = vld [vmem:[%s1 + $0xb8] sm:$0xff]
      %v426 = vld [vmem:[%s1 + $0xc0] sm:$0xff]
      %v427 = vld [vmem:[%s1 + $0xc8] sm:$0xff]
      %v428 = vld [vmem:[%s1 + $0xd0] sm:$0xff]
      %v429 = vld [vmem:[%s1 + $0xd8] sm:$0xff]
      %v430 = vld [vmem:[%s1 + $0xe0] sm:$0xff]
      %v431 = vld [vmem:[%s1 + $0xe8] sm:$0xff]
      %v432 = vld [vmem:[%s1 + $0xf0] sm:$0xff]
      %v433 = vld [vmem:[%s1 + $0xf8] sm:$0xff]
      %v434 = vld [vmem:[%s1 + $0x100] sm:$0xff]
      %v435 = vld [vmem:[%s1 + $0x108] sm:$0xff]
      %v436 = vld [vmem:[%s1 + $0x110] sm:$0xff]
      %v437 = vld [vmem:[%s1 + $0x118] sm:$0xff]
      %v438 = vld [vmem:[%s1 + $0x120] sm:$0xff]
      %v439 = vld [vmem:[%s1 + $0x128] sm:$0xff]
      %v440 = vld [vmem:[%s1 + $0x130] sm:$0xff]
      %v441 = vld [vmem:[%s1 + $0x138] sm:$0xff]
      %v442 = vld [vmem:[%s1 + $0x140] sm:$0xff]
      %v443 = vld [vmem:[%s2] sm:$0x1]
      %v445 = vlaneseq
      %v446 = vshrl.u32 %v445, 7
      %v447 = vsub.s32 0, %v446
      %v448 = vrot.slane %v443, %v447
      %v450 = vmul.f32 %v361, %v448
      %v451 = vmul.f32 %v362, %v448
      %v452 = vmul.f32 %v363, %v448
      %v453 = vmul.f32 %v364, %v448
      %v454 = vmul.f32 %v365, %v448
      %v455 = vmul.f32 %v366, %v448
      %v456 = vmul.f32 %v367, %v448
      %v457 = vmul.f32 %v368, %v448
      %v458 = vmul.f32 %v369, %v448
      %v459 = vmul.f32 %v370, %v448
      %v460 = vmul.f32 %v371, %v448
      %v461 = vmul.f32 %v372, %v448
      %v462 = vmul.f32 %v373, %v448
      %v463 = vmul.f32 %v374, %v448
      %v464 = vmul.f32 %v375, %v448
      %v465 = vmul.f32 %v376, %v448
      %v466 = vmul.f32 %v377, %v448
      %v467 = vmul.f32 %v378, %v448
      %v468 = vmul.f32 %v379, %v448
      %v469 = vmul.f32 %v380, %v448
      %v470 = vmul.f32 %v381, %v448
      %v471 = vmul.f32 %v382, %v448
      %v472 = vmul.f32 %v383, %v448
      %v473 = vmul.f32 %v384, %v448
      %v474 = vmul.f32 %v385, %v448
      %v475 = vmul.f32 %v386, %v448
      %v476 = vmul.f32 %v387, %v448
      %v477 = vmul.f32 %v388, %v448
      %v478 = vmul.f32 %v389, %v448
      %v479 = vmul.f32 %v390, %v448
      %v480 = vmul.f32 %v391, %v448
      %v481 = vmul.f32 %v392, %v448
      %v482 = vmul.f32 %v393, %v448
      %v483 = vmul.f32 %v394, %v448
      %v484 = vmul.f32 %v395, %v448
      %v485 = vmul.f32 %v396, %v448
      %v486 = vmul.f32 %v397, %v448
      %v487 = vmul.f32 %v398, %v448
      %v488 = vmul.f32 %v399, %v448
      %v489 = vmul.f32 %v400, %v448
      %v490 = vmul.f32 %v401, %v448
      %v491 = vld [vmem:[%s3] sm:$0x1]
      %v493 = vlaneseq
      %v494 = vshrl.u32 %v493, 7
      %v495 = vsub.s32 0, %v494
      %v496 = vrot.slane %v491, %v495
      %v498 = vadd.f32 %v450, %v496
      %v499 = vadd.f32 %v451, %v496
      %v500 = vadd.f32 %v452, %v496
      %v501 = vadd.f32 %v453, %v496
      %v502 = vadd.f32 %v454, %v496
      %v503 = vadd.f32 %v455, %v496
      %v504 = vadd.f32 %v456, %v496
      %v505 = vadd.f32 %v457, %v496
      %v506 = vadd.f32 %v458, %v496
      %v507 = vadd.f32 %v459, %v496
      %v508 = vadd.f32 %v460, %v496
      %v509 = vadd.f32 %v461, %v496
      %v510 = vadd.f32 %v462, %v496
      %v511 = vadd.f32 %v463, %v496
      %v512 = vadd.f32 %v464, %v496
      %v513 = vadd.f32 %v465, %v496
      %v514 = vadd.f32 %v466, %v496
      %v515 = vadd.f32 %v467, %v496
      %v516 = vadd.f32 %v468, %v496
      %v517 = vadd.f32 %v469, %v496
      %v518 = vadd.f32 %v470, %v496
      %v519 = vadd.f32 %v471, %v496
      %v520 = vadd.f32 %v472, %v496
      %v521 = vadd.f32 %v473, %v496
      %v522 = vadd.f32 %v474, %v496
      %v523 = vadd.f32 %v475, %v496
      %v524 = vadd.f32 %v476, %v496
      %v525 = vadd.f32 %v477, %v496
      %v526 = vadd.f32 %v478, %v496
      %v527 = vadd.f32 %v479, %v496
      %v528 = vadd.f32 %v480, %v496
      %v529 = vadd.f32 %v481, %v496
      %v530 = vadd.f32 %v482, %v496
      %v531 = vadd.f32 %v483, %v496
      %v532 = vadd.f32 %v484, %v496
      %v533 = vadd.f32 %v485, %v496
      %v534 = vadd.f32 %v486, %v496
      %v535 = vadd.f32 %v487, %v496
      %v536 = vadd.f32 %v488, %v496
      %v537 = vadd.f32 %v489, %v496
      %v538 = vadd.f32 %v490, %v496
      %v539 = vmax.f32 %v498, 0.0
      %v540 = vmax.f32 %v499, 0.0
      %v541 = vmax.f32 %v500, 0.0
      %v542 = vmax.f32 %v501, 0.0
      %v543 = vmax.f32 %v502, 0.0
      %v544 = vmax.f32 %v503, 0.0
      %v545 = vmax.f32 %v504, 0.0
      %v546 = vmax.f32 %v505, 0.0
      %v547 = vmax.f32 %v506, 0.0
      %v548 = vmax.f32 %v507, 0.0
      %v549 = vmax.f32 %v508, 0.0
      %v550 = vmax.f32 %v509, 0.0
      %v551 = vmax.f32 %v510, 0.0
      %v552 = vmax.f32 %v511, 0.0
      %v553 = vmax.f32 %v512, 0.0
      %v554 = vmax.f32 %v513, 0.0
      %v555 = vmax.f32 %v514, 0.0
      %v556 = vmax.f32 %v515, 0.0
      %v557 = vmax.f32 %v516, 0.0
      %v558 = vmax.f32 %v517, 0.0
      %v559 = vmax.f32 %v518, 0.0
      %v560 = vmax.f32 %v519, 0.0
      %v561 = vmax.f32 %v520, 0.0
      %v562 = vmax.f32 %v521, 0.0
      %v563 = vmax.f32 %v522, 0.0
      %v564 = vmax.f32 %v523, 0.0
      %v565 = vmax.f32 %v524, 0.0
      %v566 = vmax.f32 %v525, 0.0
      %v567 = vmax.f32 %v526, 0.0
      %v568 = vmax.f32 %v527, 0.0
      %v569 = vmax.f32 %v528, 0.0
      %v570 = vmax.f32 %v529, 0.0
      %v571 = vmax.f32 %v530, 0.0
      %v572 = vmax.f32 %v531, 0.0
      %v573 = vmax.f32 %v532, 0.0
      %v574 = vmax.f32 %v533, 0.0
      %v575 = vmax.f32 %v534, 0.0
      %v576 = vmax.f32 %v535, 0.0
      %v577 = vmax.f32 %v536, 0.0
      %v578 = vmax.f32 %v537, 0.0
      %v579 = vmax.f32 %v538, 0.0
      %581 = vset.pattern.permute.xlu0 0
      %582 = vperm.xlu0 %581, %v402
      %v583 = vpop.permute.xlu0 %582
      %586 = vset.pattern.permute.xlu0 0
      %587 = vperm.xlu0 %586, %v403
      %v588 = vpop.permute.xlu0 %587
      %591 = vset.pattern.permute.xlu0 0
      %592 = vperm.xlu0 %591, %v404
      %v593 = vpop.permute.xlu0 %592
      %596 = vset.pattern.permute.xlu0 0
      %597 = vperm.xlu0 %596, %v405
      %v598 = vpop.permute.xlu0 %597
      %601 = vset.pattern.permute.xlu0 0
      %602 = vperm.xlu0 %601, %v406
      %v603 = vpop.permute.xlu0 %602
      %606 = vset.pattern.permute.xlu0 0
      %607 = vperm.xlu0 %606, %v407
      %v608 = vpop.permute.xlu0 %607
      %611 = vset.pattern.permute.xlu0 0
      %612 = vperm.xlu0 %611, %v408
      %v613 = vpop.permute.xlu0 %612
      %616 = vset.pattern.permute.xlu0 0
      %617 = vperm.xlu0 %616, %v409
      %v618 = vpop.permute.xlu0 %617
      %621 = vset.pattern.permute.xlu0 0
      %622 = vperm.xlu0 %621, %v410
      %v623 = vpop.permute.xlu0 %622
      %626 = vset.pattern.permute.xlu0 0
      %627 = vperm.xlu0 %626, %v411
      %v628 = vpop.permute.xlu0 %627
      %631 = vset.pattern.permute.xlu0 0
      %632 = vperm.xlu0 %631, %v412
      %v633 = vpop.permute.xlu0 %632
      %636 = vset.pattern.permute.xlu0 0
      %637 = vperm.xlu0 %636, %v413
      %v638 = vpop.permute.xlu0 %637
      %641 = vset.pattern.permute.xlu0 0
      %642 = vperm.xlu0 %641, %v414
      %v643 = vpop.permute.xlu0 %642
      %646 = vset.pattern.permute.xlu0 0
      %647 = vperm.xlu0 %646, %v415
      %v648 = vpop.permute.xlu0 %647
      %651 = vset.pattern.permute.xlu0 0
      %652 = vperm.xlu0 %651, %v416
      %v653 = vpop.permute.xlu0 %652
      %656 = vset.pattern.permute.xlu0 0
      %657 = vperm.xlu0 %656, %v417
      %v658 = vpop.permute.xlu0 %657
      %661 = vset.pattern.permute.xlu0 0
      %662 = vperm.xlu0 %661, %v418
      %v663 = vpop.permute.xlu0 %662
      %666 = vset.pattern.permute.xlu0 0
      %667 = vperm.xlu0 %666, %v419
      %v668 = vpop.permute.xlu0 %667
      %671 = vset.pattern.permute.xlu0 0
      %672 = vperm.xlu0 %671, %v420
      %v673 = vpop.permute.xlu0 %672
      %676 = vset.pattern.permute.xlu0 0
      %677 = vperm.xlu0 %676, %v421
      %v678 = vpop.permute.xlu0 %677
      %681 = vset.pattern.permute.xlu0 0
      %682 = vperm.xlu0 %681, %v422
      %v683 = vpop.permute.xlu0 %682
      %686 = vset.pattern.permute.xlu0 0
      %687 = vperm.xlu0 %686, %v423
      %v688 = vpop.permute.xlu0 %687
      %691 = vset.pattern.permute.xlu0 0
      %692 = vperm.xlu0 %691, %v424
      %v693 = vpop.permute.xlu0 %692
      %696 = vset.pattern.permute.xlu0 0
      %697 = vperm.xlu0 %696, %v425
      %v698 = vpop.permute.xlu0 %697
      %701 = vset.pattern.permute.xlu0 0
      %702 = vperm.xlu0 %701, %v426
      %v703 = vpop.permute.xlu0 %702
      %706 = vset.pattern.permute.xlu0 0
      %707 = vperm.xlu0 %706, %v427
      %v708 = vpop.permute.xlu0 %707
      %711 = vset.pattern.permute.xlu0 0
      %712 = vperm.xlu0 %711, %v428
      %v713 = vpop.permute.xlu0 %712
      %716 = vset.pattern.permute.xlu0 0
      %717 = vperm.xlu0 %716, %v429
      %v718 = vpop.permute.xlu0 %717
      %721 = vset.pattern.permute.xlu0 0
      %722 = vperm.xlu0 %721, %v430
      %v723 = vpop.permute.xlu0 %722
      %726 = vset.pattern.permute.xlu0 0
      %727 = vperm.xlu0 %726, %v431
      %v728 = vpop.permute.xlu0 %727
      %731 = vset.pattern.permute.xlu0 0
      %732 = vperm.xlu0 %731, %v432
      %v733 = vpop.permute.xlu0 %732
      %736 = vset.pattern.permute.xlu0 0
      %737 = vperm.xlu0 %736, %v433
      %v738 = vpop.permute.xlu0 %737
      %741 = vset.pattern.permute.xlu0 0
      %742 = vperm.xlu0 %741, %v434
      %v743 = vpop.permute.xlu0 %742
      %746 = vset.pattern.permute.xlu0 0
      %747 = vperm.xlu0 %746, %v435
      %v748 = vpop.permute.xlu0 %747
      %751 = vset.pattern.permute.xlu0 0
      %752 = vperm.xlu0 %751, %v436
      %v753 = vpop.permute.xlu0 %752
      %756 = vset.pattern.permute.xlu0 0
      %757 = vperm.xlu0 %756, %v437
      %v758 = vpop.permute.xlu0 %757
      %761 = vset.pattern.permute.xlu0 0
      %762 = vperm.xlu0 %761, %v438
      %v763 = vpop.permute.xlu0 %762
      %766 = vset.pattern.permute.xlu0 0
      %767 = vperm.xlu0 %766, %v439
      %v768 = vpop.permute.xlu0 %767
      %771 = vset.pattern.permute.xlu0 0
      %772 = vperm.xlu0 %771, %v440
      %v773 = vpop.permute.xlu0 %772
      %776 = vset.pattern.permute.xlu0 0
      %777 = vperm.xlu0 %776, %v441
      %v778 = vpop.permute.xlu0 %777
      %781 = vset.pattern.permute.xlu0 0
      %782 = vperm.xlu0 %781, %v442
      %v783 = vpop.permute.xlu0 %782
      %v785 = vmul.f32 %v539, %v583
      %v786 = vmul.f32 %v540, %v588
      %v787 = vmul.f32 %v541, %v593
      %v788 = vmul.f32 %v542, %v598
      %v789 = vmul.f32 %v543, %v603
      %v790 = vmul.f32 %v544, %v608
      %v791 = vmul.f32 %v545, %v613
      %v792 = vmul.f32 %v546, %v618
      %v793 = vmul.f32 %v547, %v623
      %v794 = vmul.f32 %v548, %v628
      %v795 = vmul.f32 %v549, %v633
      %v796 = vmul.f32 %v550, %v638
      %v797 = vmul.f32 %v551, %v643
      %v798 = vmul.f32 %v552, %v648
      %v799 = vmul.f32 %v553, %v653
      %v800 = vmul.f32 %v554, %v658
      %v801 = vmul.f32 %v555, %v663
      %v802 = vmul.f32 %v556, %v668
      %v803 = vmul.f32 %v557, %v673
      %v804 = vmul.f32 %v558, %v678
      %v805 = vmul.f32 %v559, %v683
      %v806 = vmul.f32 %v560, %v688
      %v807 = vmul.f32 %v561, %v693
      %v808 = vmul.f32 %v562, %v698
      %v809 = vmul.f32 %v563, %v703
      %v810 = vmul.f32 %v564, %v708
      %v811 = vmul.f32 %v565, %v713
      %v812 = vmul.f32 %v566, %v718
      %v813 = vmul.f32 %v567, %v723
      %v814 = vmul.f32 %v568, %v728
      %v815 = vmul.f32 %v569, %v733
      %v816 = vmul.f32 %v570, %v738
      %v817 = vmul.f32 %v571, %v743
      %v818 = vmul.f32 %v572, %v748
      %v819 = vmul.f32 %v573, %v753
      %v820 = vmul.f32 %v574, %v758
      %v821 = vmul.f32 %v575, %v763
      %v822 = vmul.f32 %v576, %v768
      %v823 = vmul.f32 %v577, %v773
      %v824 = vmul.f32 %v578, %v778
      %v825 = vmul.f32 %v579, %v783
      %826 = vst [vmem:[#allocation2] sm:$0xff] %v785
      %827 = vst [vmem:[#allocation2 + $0x8] sm:$0xff] %v786
      %828 = vst [vmem:[#allocation2 + $0x10] sm:$0xff] %v787
      %829 = vst [vmem:[#allocation2 + $0x18] sm:$0xff] %v788
      %830 = vst [vmem:[#allocation2 + $0x20] sm:$0xff] %v789
      %831 = vst [vmem:[#allocation2 + $0x28] sm:$0xff] %v790
      %832 = vst [vmem:[#allocation2 + $0x30] sm:$0xff] %v791
      %833 = vst [vmem:[#allocation2 + $0x38] sm:$0xff] %v792
      %834 = vst [vmem:[#allocation2 + $0x40] sm:$0xff] %v793
      %835 = vst [vmem:[#allocation2 + $0x48] sm:$0xff] %v794
      %836 = vst [vmem:[#allocation2 + $0x50] sm:$0xff] %v795
      %837 = vst [vmem:[#allocation2 + $0x58] sm:$0xff] %v796
      %838 = vst [vmem:[#allocation2 + $0x60] sm:$0xff] %v797
      %839 = vst [vmem:[#allocation2 + $0x68] sm:$0xff] %v798
      %840 = vst [vmem:[#allocation2 + $0x70] sm:$0xff] %v799
      %841 = vst [vmem:[#allocation2 + $0x78] sm:$0xff] %v800
      %842 = vst [vmem:[#allocation2 + $0x80] sm:$0xff] %v801
      %843 = vst [vmem:[#allocation2 + $0x88] sm:$0xff] %v802
      %844 = vst [vmem:[#allocation2 + $0x90] sm:$0xff] %v803
      %845 = vst [vmem:[#allocation2 + $0x98] sm:$0xff] %v804
      %846 = vst [vmem:[#allocation2 + $0xa0] sm:$0xff] %v805
      %847 = vst [vmem:[#allocation2 + $0xa8] sm:$0xff] %v806
      %848 = vst [vmem:[#allocation2 + $0xb0] sm:$0xff] %v807
      %849 = vst [vmem:[#allocation2 + $0xb8] sm:$0xff] %v808
      %850 = vst [vmem:[#allocation2 + $0xc0] sm:$0xff] %v809
      %851 = vst [vmem:[#allocation2 + $0xc8] sm:$0xff] %v810
      %852 = vst [vmem:[#allocation2 + $0xd0] sm:$0xff] %v811
      %853 = vst [vmem:[#allocation2 + $0xd8] sm:$0xff] %v812
      %854 = vst [vmem:[#allocation2 + $0xe0] sm:$0xff] %v813
      %855 = vst [vmem:[#allocation2 + $0xe8] sm:$0xff] %v814
      %856 = vst [vmem:[#allocation2 + $0xf0] sm:$0xff] %v815
      %857 = vst [vmem:[#allocation2 + $0xf8] sm:$0xff] %v816
      %858 = vst [vmem:[#allocation2 + $0x100] sm:$0xff] %v817
      %859 = vst [vmem:[#allocation2 + $0x108] sm:$0xff] %v818
      %860 = vst [vmem:[#allocation2 + $0x110] sm:$0xff] %v819
      %861 = vst [vmem:[#allocation2 + $0x118] sm:$0xff] %v820
      %862 = vst [vmem:[#allocation2 + $0x120] sm:$0xff] %v821
      %863 = vst [vmem:[#allocation2 + $0x128] sm:$0xff] %v822
      %864 = vst [vmem:[#allocation2 + $0x130] sm:$0xff] %v823
      %865 = vst [vmem:[#allocation2 + $0x138] sm:$0xff] %v824
      %866 = vst [vmem:[#allocation2 + $0x140] sm:$0xff] %v825
      %v867 = vld [vmem:[#allocation2] sm:$0xff]
      %v868 = vld [vmem:[#allocation2 + $0x8] sm:$0xff]
      %v869 = vld [vmem:[#allocation2 + $0x10] sm:$0xff]
      %v870 = vld [vmem:[#allocation2 + $0x18] sm:$0xff]
      %v871 = vld [vmem:[#allocation2 + $0x20] sm:$0xff]
      %v872 = vld [vmem:[#allocation2 + $0x28] sm:$0xff]
      %v873 = vld [vmem:[#allocation2 + $0x30] sm:$0xff]
      %v874 = vld [vmem:[#allocation2 + $0x38] sm:$0xff]
      %v875 = vld [vmem:[#allocation2 + $0x40] sm:$0xff]
      %v876 = vld [vmem:[#allocation2 + $0x48] sm:$0xff]
      %v877 = vld [vmem:[#allocation2 + $0x50] sm:$0xff]
      %v878 = vld [vmem:[#allocation2 + $0x58] sm:$0xff]
      %v879 = vld [vmem:[#allocation2 + $0x60] sm:$0xff]
      %v880 = vld [vmem:[#allocation2 + $0x68] sm:$0xff]
      %v881 = vld [vmem:[#allocation2 + $0x70] sm:$0xff]
      %v882 = vld [vmem:[#allocation2 + $0x78] sm:$0xff]
      %v883 = vld [vmem:[#allocation2 + $0x80] sm:$0xff]
      %v884 = vld [vmem:[#allocation2 + $0x88] sm:$0xff]
      %v885 = vld [vmem:[#allocation2 + $0x90] sm:$0xff]
      %v886 = vld [vmem:[#allocation2 + $0x98] sm:$0xff]
      %v887 = vld [vmem:[#allocation2 + $0xa0] sm:$0xff]
      %v888 = vld [vmem:[#allocation2 + $0xa8] sm:$0xff]
      %v889 = vld [vmem:[#allocation2 + $0xb0] sm:$0xff]
      %v890 = vld [vmem:[#allocation2 + $0xb8] sm:$0xff]
      %v891 = vld [vmem:[#allocation2 + $0xc0] sm:$0xff]
      %v892 = vld [vmem:[#allocation2 + $0xc8] sm:$0xff]
      %v893 = vld [vmem:[#allocation2 + $0xd0] sm:$0xff]
      %v894 = vld [vmem:[#allocation2 + $0xd8] sm:$0xff]
      %v895 = vld [vmem:[#allocation2 + $0xe0] sm:$0xff]
      %v896 = vld [vmem:[#allocation2 + $0xe8] sm:$0xff]
      %v897 = vld [vmem:[#allocation2 + $0xf0] sm:$0xff]
      %v898 = vld [vmem:[#allocation2 + $0xf8] sm:$0xff]
      %v899 = vld [vmem:[#allocation2 + $0x100] sm:$0xff]
      %v900 = vld [vmem:[#allocation2 + $0x108] sm:$0xff]
      %v901 = vld [vmem:[#allocation2 + $0x110] sm:$0xff]
      %v902 = vld [vmem:[#allocation2 + $0x118] sm:$0xff]
      %v903 = vpack.c.bf16 %v868, %v867
      %v904 = vpack.c.bf16 %v870, %v869
      %v905 = vpack.c.bf16 %v872, %v871
      %v906 = vpack.c.bf16 %v874, %v873
      %v907 = vpack.c.bf16 %v876, %v875
      %v908 = vpack.c.bf16 %v878, %v877
      %v909 = vpack.c.bf16 %v880, %v879
      %v910 = vpack.c.bf16 %v882, %v881
      %v911 = vpack.c.bf16 %v884, %v883
      %v912 = vpack.c.bf16 %v886, %v885
      %v913 = vpack.c.bf16 %v888, %v887
      %v914 = vpack.c.bf16 %v890, %v889
      %v915 = vpack.c.bf16 %v892, %v891
      %v916 = vpack.c.bf16 %v894, %v893
      %v917 = vpack.c.bf16 %v896, %v895
      %v918 = vpack.c.bf16 %v898, %v897
      %v919 = vpack.c.bf16 %v900, %v899
      %v920 = vpack.c.bf16 %v902, %v901
      %v921 = vld [vmem:[%s4] sm:$0xf]
      %v922 = vld [vmem:[%s4 + $0x4] sm:$0xf]
      %v923 = vld [vmem:[%s4 + $0x8] sm:$0xf]
      %v924 = vld [vmem:[%s4 + $0xc] sm:$0xf]
      %v925 = vld [vmem:[%s4 + $0x10] sm:$0xf]
      %v926 = vld [vmem:[%s4 + $0x14] sm:$0xf]
      %v927 = vld [vmem:[%s4 + $0x18] sm:$0xf]
      %v928 = vld [vmem:[%s4 + $0x1c] sm:$0xf]
      %v929 = vld [vmem:[%s4 + $0x20] sm:$0xf]
      %v930 = vld [vmem:[%s4 + $0x24] sm:$0xf]
      %v931 = vld [vmem:[%s4 + $0x28] sm:$0xf]
      %v932 = vld [vmem:[%s4 + $0x2c] sm:$0xf]
      %v933 = vld [vmem:[%s4 + $0x30] sm:$0xf]
      %v934 = vld [vmem:[%s4 + $0x34] sm:$0xf]
      %v935 = vld [vmem:[%s4 + $0x38] sm:$0xf]
      %v936 = vld [vmem:[%s4 + $0x3c] sm:$0xf]
      %v953 = vunpack.c.l.b16 %v921
      %v954 = vunpack.c.l.b16 %v922
      %v955 = vunpack.c.l.b16 %v923
      %v956 = vunpack.c.l.b16 %v924
      %v957 = vunpack.c.l.b16 %v925
      %v958 = vunpack.c.l.b16 %v926
      %v959 = vunpack.c.l.b16 %v927
      %v960 = vunpack.c.l.b16 %v928
      %v961 = vunpack.c.l.b16 %v929
      %v962 = vunpack.c.l.b16 %v930
      %v963 = vunpack.c.l.b16 %v931
      %v964 = vunpack.c.l.b16 %v932
      %v965 = vunpack.c.l.b16 %v933
      %v966 = vunpack.c.l.b16 %v934
      %v967 = vunpack.c.l.b16 %v935
      %v968 = vunpack.c.l.b16 %v936
      %v969 = vpack.c.b16 %v954, %v953
      %v970 = vpack.c.b16 %v956, %v955
      %v971 = vpack.c.b16 %v958, %v957
      %v972 = vpack.c.b16 %v960, %v959
      %v973 = vpack.c.b16 %v962, %v961
      %v974 = vpack.c.b16 %v964, %v963
      %v975 = vpack.c.b16 %v966, %v965
      %v976 = vpack.c.b16 %v968, %v967
      %985 = vmatprep.subr.bf16.mxu0 0
      %986 = vmatpush1.bf16.msra.mxu0 %v976
      %987 = vmatprep.subr.bf16.mxu0 0
      %988 = vmatpush1.bf16.msra.mxu0 %v975
      %989 = vmatprep.subr.bf16.mxu0 0
      %990 = vmatpush1.bf16.msra.mxu0 %v974
      %991 = vmatprep.subr.bf16.mxu0 0
      %992 = vmatpush1.bf16.msra.mxu0 %v973
      %993 = vmatprep.subr.bf16.mxu0 0
      %994 = vmatpush1.bf16.msra.mxu0 %v972
      %995 = vmatprep.subr.bf16.mxu0 0
      %996 = vmatpush1.bf16.msra.mxu0 %v971
      %997 = vmatprep.subr.bf16.mxu0 0
      %998 = vmatpush1.bf16.msra.mxu0 %v970
      %999 = vmatprep.subr.bf16.mxu0 0
      %1000 = vmatpush1.bf16.msra.mxu0 %v969
      %1001 = vmatprep.subr.bf16.mxu0 0
      %1002 = vmatpush2.bf16.msra.mxu0 0
      %1003 = vmatprep.subr.bf16.mxu0 0
      %1004 = vmatpush2.bf16.msra.mxu0 0
      %1005 = vmatprep.subr.bf16.mxu0 0
      %1006 = vmatpush2.bf16.msra.mxu0 0
      %1007 = vmatprep.subr.bf16.mxu0 0
      %1008 = vmatpush2.bf16.msra.mxu0 0
      %1009 = vmatprep.subr.bf16.mxu0 0
      %1010 = vmatpush2.bf16.msra.mxu0 0
      %1011 = vmatprep.subr.bf16.mxu0 0
      %1012 = vmatpush2.bf16.msra.mxu0 0
      %1013 = vmatprep.subr.bf16.mxu0 0
      %1014 = vmatpush2.bf16.msra.mxu0 0
      %1015 = vmatprep.subr.bf16.mxu0 0
      %1016 = vmatpush2.bf16.msra.mxu0 0
      %1017 = vmatprep.mubr.bf16.mxu0 0
      %1018 = vmatmul.mubr.bf16.gmra.mxu0 %v903
      %v1019 = vpop.f32.mrf.mxu0
      %v1020 = vadd.f32 0.0, %v1019
      %v1021 = vpop.f32.mrf.mxu0
      %v1022 = vpop.f32.mrf.mxu0
      %v1023 = vadd.f32 0.0, %v1022
      %v1024 = vpop.f32.mrf.mxu0
      %1025 = vmatprep.mubr.bf16.mxu0 0
      %1026 = vmatmul.mubr.bf16.gmra.mxu0 %v904
      %v1027 = vpop.f32.mrf.mxu0
      %v1028 = vadd.f32 0.0, %v1027
      %v1029 = vpop.f32.mrf.mxu0
      %v1030 = vpop.f32.mrf.mxu0
      %v1031 = vadd.f32 0.0, %v1030
      %v1032 = vpop.f32.mrf.mxu0
      %1033 = vmatprep.mubr.bf16.mxu0 0
      %1034 = vmatmul.mubr.bf16.gmra.mxu0 %v905
      %v1035 = vpop.f32.mrf.mxu0
      %v1036 = vadd.f32 0.0, %v1035
      %v1037 = vpop.f32.mrf.mxu0
      %v1038 = vpop.f32.mrf.mxu0
      %v1039 = vadd.f32 0.0, %v1038
      %v1040 = vpop.f32.mrf.mxu0
      %1041 = vmatprep.mubr.bf16.mxu0 0
      %1042 = vmatmul.mubr.bf16.gmra.mxu0 %v906
      %v1043 = vpop.f32.mrf.mxu0
      %v1044 = vadd.f32 0.0, %v1043
      %v1045 = vpop.f32.mrf.mxu0
      %v1046 = vpop.f32.mrf.mxu0
      %v1047 = vadd.f32 0.0, %v1046
      %v1048 = vpop.f32.mrf.mxu0
      %1049 = vmatprep.mubr.bf16.mxu0 0
      %1050 = vmatmul.mubr.bf16.gmra.mxu0 %v907
      %v1051 = vpop.f32.mrf.mxu0
      %v1052 = vadd.f32 0.0, %v1051
      %v1053 = vpop.f32.mrf.mxu0
      %v1054 = vpop.f32.mrf.mxu0
      %v1055 = vadd.f32 0.0, %v1054
      %v1056 = vpop.f32.mrf.mxu0
      %1057 = vmatprep.mubr.bf16.mxu0 0
      %1058 = vmatmul.mubr.bf16.gmra.mxu0 %v908
      %v1059 = vpop.f32.mrf.mxu0
      %v1060 = vadd.f32 0.0, %v1059
      %v1061 = vpop.f32.mrf.mxu0
      %v1062 = vpop.f32.mrf.mxu0
      %v1063 = vadd.f32 0.0, %v1062
      %v1064 = vpop.f32.mrf.mxu0
      %1065 = vmatprep.mubr.bf16.mxu0 0
      %1066 = vmatmul.mubr.bf16.gmra.mxu0 %v909
      %v1067 = vpop.f32.mrf.mxu0
      %v1068 = vadd.f32 0.0, %v1067
      %v1069 = vpop.f32.mrf.mxu0
      %v1070 = vpop.f32.mrf.mxu0
      %v1071 = vadd.f32 0.0, %v1070
      %v1072 = vpop.f32.mrf.mxu0
      %1073 = vmatprep.mubr.bf16.mxu0 0
      %1074 = vmatmul.mubr.bf16.gmra.mxu0 %v910
      %v1075 = vpop.f32.mrf.mxu0
      %v1076 = vadd.f32 0.0, %v1075
      %v1077 = vpop.f32.mrf.mxu0
      %v1078 = vpop.f32.mrf.mxu0
      %v1079 = vadd.f32 0.0, %v1078
      %v1080 = vpop.f32.mrf.mxu0
      %1081 = vmatprep.mubr.bf16.mxu0 0
      %1082 = vmatmul.mubr.bf16.gmra.mxu0 %v911
      %v1083 = vpop.f32.mrf.mxu0
      %v1084 = vadd.f32 0.0, %v1083
      %v1085 = vpop.f32.mrf.mxu0
      %v1086 = vpop.f32.mrf.mxu0
      %v1087 = vadd.f32 0.0, %v1086
      %v1088 = vpop.f32.mrf.mxu0
      %1089 = vmatprep.mubr.bf16.mxu0 0
      %1090 = vmatmul.mubr.bf16.gmra.mxu0 %v912
      %v1091 = vpop.f32.mrf.mxu0
      %v1092 = vadd.f32 0.0, %v1091
      %v1093 = vpop.f32.mrf.mxu0
      %v1094 = vpop.f32.mrf.mxu0
      %v1095 = vadd.f32 0.0, %v1094
      %v1096 = vpop.f32.mrf.mxu0
      %1097 = vmatprep.mubr.bf16.mxu0 0
      %1098 = vmatmul.mubr.bf16.gmra.mxu0 %v913
      %v1099 = vpop.f32.mrf.mxu0
      %v1100 = vadd.f32 0.0, %v1099
      %v1101 = vpop.f32.mrf.mxu0
      %v1102 = vpop.f32.mrf.mxu0
      %v1103 = vadd.f32 0.0, %v1102
      %v1104 = vpop.f32.mrf.mxu0
      %1105 = vmatprep.mubr.bf16.mxu0 0
      %1106 = vmatmul.mubr.bf16.gmra.mxu0 %v914
      %v1107 = vpop.f32.mrf.mxu0
      %v1108 = vadd.f32 0.0, %v1107
      %v1109 = vpop.f32.mrf.mxu0
      %v1110 = vpop.f32.mrf.mxu0
      %v1111 = vadd.f32 0.0, %v1110
      %v1112 = vpop.f32.mrf.mxu0
      %1113 = vmatprep.mubr.bf16.mxu0 0
      %1114 = vmatmul.mubr.bf16.gmra.mxu0 %v915
      %v1115 = vpop.f32.mrf.mxu0
      %v1116 = vadd.f32 0.0, %v1115
      %v1117 = vpop.f32.mrf.mxu0
      %v1118 = vpop.f32.mrf.mxu0
      %v1119 = vadd.f32 0.0, %v1118
      %v1120 = vpop.f32.mrf.mxu0
      %1121 = vmatprep.mubr.bf16.mxu0 0
      %1122 = vmatmul.mubr.bf16.gmra.mxu0 %v916
      %v1123 = vpop.f32.mrf.mxu0
      %v1124 = vadd.f32 0.0, %v1123
      %v1125 = vpop.f32.mrf.mxu0
      %v1126 = vpop.f32.mrf.mxu0
      %v1127 = vadd.f32 0.0, %v1126
      %v1128 = vpop.f32.mrf.mxu0
      %1129 = vmatprep.mubr.bf16.mxu0 0
      %1130 = vmatmul.mubr.bf16.gmra.mxu0 %v917
      %v1131 = vpop.f32.mrf.mxu0
      %v1132 = vadd.f32 0.0, %v1131
      %v1133 = vpop.f32.mrf.mxu0
      %v1134 = vpop.f32.mrf.mxu0
      %v1135 = vadd.f32 0.0, %v1134
      %v1136 = vpop.f32.mrf.mxu0
      %1137 = vmatprep.mubr.bf16.mxu0 0
      %1138 = vmatmul.mubr.bf16.gmra.mxu0 %v918
      %v1139 = vpop.f32.mrf.mxu0
      %v1140 = vadd.f32 0.0, %v1139
      %v1141 = vpop.f32.mrf.mxu0
      %v1142 = vpop.f32.mrf.mxu0
      %v1143 = vadd.f32 0.0, %v1142
      %v1144 = vpop.f32.mrf.mxu0
      %1145 = vmatprep.mubr.bf16.mxu0 0
      %1146 = vmatmul.mubr.bf16.gmra.mxu0 %v919
      %v1147 = vpop.f32.mrf.mxu0
      %v1148 = vadd.f32 0.0, %v1147
      %v1149 = vpop.f32.mrf.mxu0
      %v1150 = vpop.f32.mrf.mxu0
      %v1151 = vadd.f32 0.0, %v1150
      %v1152 = vpop.f32.mrf.mxu0
      %1153 = vmatprep.mubr.bf16.mxu0 0
      %1154 = vmatmul.mubr.bf16.gmra.mxu0 %v920
      %v1155 = vpop.f32.mrf.mxu0
      %v1156 = vadd.f32 0.0, %v1155
      %v1157 = vpop.f32.mrf.mxu0
      %v1158 = vpop.f32.mrf.mxu0
      %v1159 = vadd.f32 0.0, %v1158
      %v1160 = vpop.f32.mrf.mxu0
      %1161 = vdwg.mxu0
      %1162 = vst [vmem:[#allocation4] sm:$0xff] %v1020
      %1163 = vst [vmem:[#allocation4 + $0x8] sm:$0xff] %v1023
      %1164 = vst [vmem:[#allocation4 + $0x10] sm:$0xff] %v1028
      %1165 = vst [vmem:[#allocation4 + $0x18] sm:$0xff] %v1031
      %1166 = vst [vmem:[#allocation4 + $0x20] sm:$0xff] %v1036
      %1167 = vst [vmem:[#allocation4 + $0x28] sm:$0xff] %v1039
      %1168 = vst [vmem:[#allocation4 + $0x30] sm:$0xff] %v1044
      %1169 = vst [vmem:[#allocation4 + $0x38] sm:$0xff] %v1047
      %1170 = vst [vmem:[#allocation4 + $0x40] sm:$0xff] %v1052
      %1171 = vst [vmem:[#allocation4 + $0x48] sm:$0xff] %v1055
      %1172 = vst [vmem:[#allocation4 + $0x50] sm:$0xff] %v1060
      %1173 = vst [vmem:[#allocation4 + $0x58] sm:$0xff] %v1063
      %1174 = vst [vmem:[#allocation4 + $0x60] sm:$0xff] %v1068
      %1175 = vst [vmem:[#allocation4 + $0x68] sm:$0xff] %v1071
      %1176 = vst [vmem:[#allocation4 + $0x70] sm:$0xff] %v1076
      %1177 = vst [vmem:[#allocation4 + $0x78] sm:$0xff] %v1079
      %1178 = vst [vmem:[#allocation4 + $0x80] sm:$0xff] %v1084
      %1179 = vst [vmem:[#allocation4 + $0x88] sm:$0xff] %v1087
      %1180 = vst [vmem:[#allocation4 + $0x90] sm:$0xff] %v1092
      %1181 = vst [vmem:[#allocation4 + $0x98] sm:$0xff] %v1095
      %1182 = vst [vmem:[#allocation4 + $0xa0] sm:$0xff] %v1100
      %1183 = vst [vmem:[#allocation4 + $0xa8] sm:$0xff] %v1103
      %1184 = vst [vmem:[#allocation4 + $0xb0] sm:$0xff] %v1108
      %1185 = vst [vmem:[#allocation4 + $0xb8] sm:$0xff] %v1111
      %1186 = vst [vmem:[#allocation4 + $0xc0] sm:$0xff] %v1116
      %1187 = vst [vmem:[#allocation4 + $0xc8] sm:$0xff] %v1119
      %1188 = vst [vmem:[#allocation4 + $0xd0] sm:$0xff] %v1124
      %1189 = vst [vmem:[#allocation4 + $0xd8] sm:$0xff] %v1127
      %1190 = vst [vmem:[#allocation4 + $0xe0] sm:$0xff] %v1132
      %1191 = vst [vmem:[#allocation4 + $0xe8] sm:$0xff] %v1135
      %1192 = vst [vmem:[#allocation4 + $0xf0] sm:$0xff] %v1140
      %1193 = vst [vmem:[#allocation4 + $0xf8] sm:$0xff] %v1143
      %1194 = vst [vmem:[#allocation4 + $0x100] sm:$0xff] %v1148
      %1195 = vst [vmem:[#allocation4 + $0x108] sm:$0xff] %v1151
      %1196 = vst [vmem:[#allocation4 + $0x110] sm:$0xff] %v1156
      %1197 = vst [vmem:[#allocation4 + $0x118] sm:$0xff] %v1159
      %v1198 = vld [vmem:[#allocation2 + $0x1] sm:$0xff]
      %v1199 = vld [vmem:[#allocation2 + $0x9] sm:$0xff]
      %v1200 = vld [vmem:[#allocation2 + $0x11] sm:$0xff]
      %v1201 = vld [vmem:[#allocation2 + $0x19] sm:$0xff]
      %v1202 = vld [vmem:[#allocation2 + $0x21] sm:$0xff]
      %v1203 = vld [vmem:[#allocation2 + $0x29] sm:$0xff]
      %v1204 = vld [vmem:[#allocation2 + $0x31] sm:$0xff]
      %v1205 = vld [vmem:[#allocation2 + $0x39] sm:$0xff]
      %v1206 = vld [vmem:[#allocation2 + $0x41] sm:$0xff]
      %v1207 = vld [vmem:[#allocation2 + $0x49] sm:$0xff]
      %v1208 = vld [vmem:[#allocation2 + $0x51] sm:$0xff]
      %v1209 = vld [vmem:[#allocation2 + $0x59] sm:$0xff]
      %v1210 = vld [vmem:[#allocation2 + $0x61] sm:$0xff]
      %v1211 = vld [vmem:[#allocation2 + $0x69] sm:$0xff]
      %v1212 = vld [vmem:[#allocation2 + $0x71] sm:$0xff]
      %v1213 = vld [vmem:[#allocation2 + $0x79] sm:$0xff]
      %v1214 = vld [vmem:[#allocation2 + $0x81] sm:$0xff]
      %v1215 = vld [vmem:[#allocation2 + $0x89] sm:$0xff]
      %v1216 = vld [vmem:[#allocation2 + $0x91] sm:$0xff]
      %v1217 = vld [vmem:[#allocation2 + $0x99] sm:$0xff]
      %v1218 = vld [vmem:[#allocation2 + $0xa1] sm:$0xff]
      %v1219 = vld [vmem:[#allocation2 + $0xa9] sm:$0xff]
      %v1220 = vld [vmem:[#allocation2 + $0xb1] sm:$0xff]
      %v1221 = vld [vmem:[#allocation2 + $0xb9] sm:$0xff]
      %v1222 = vld [vmem:[#allocation2 + $0xc1] sm:$0xff]
      %v1223 = vld [vmem:[#allocation2 + $0xc9] sm:$0xff]
      %v1224 = vld [vmem:[#allocation2 + $0xd1] sm:$0xff]
      %v1225 = vld [vmem:[#allocation2 + $0xd9] sm:$0xff]
      %v1226 = vld [vmem:[#allocation2 + $0xe1] sm:$0xff]
      %v1227 = vld [vmem:[#allocation2 + $0xe9] sm:$0xff]
      %v1228 = vld [vmem:[#allocation2 + $0xf1] sm:$0xff]
      %v1229 = vld [vmem:[#allocation2 + $0xf9] sm:$0xff]
      %v1230 = vld [vmem:[#allocation2 + $0x101] sm:$0xff]
      %v1231 = vld [vmem:[#allocation2 + $0x109] sm:$0xff]
      %v1232 = vld [vmem:[#allocation2 + $0x111] sm:$0xff]
      %v1233 = vld [vmem:[#allocation2 + $0x119] sm:$0xff]
      %v1234 = vpack.c.bf16 %v1199, %v1198
      %v1235 = vpack.c.bf16 %v1201, %v1200
      %v1236 = vpack.c.bf16 %v1203, %v1202
      %v1237 = vpack.c.bf16 %v1205, %v1204
      %v1238 = vpack.c.bf16 %v1207, %v1206
      %v1239 = vpack.c.bf16 %v1209, %v1208
      %v1240 = vpack.c.bf16 %v1211, %v1210
      %v1241 = vpack.c.bf16 %v1213, %v1212
      %v1242 = vpack.c.bf16 %v1215, %v1214
      %v1243 = vpack.c.bf16 %v1217, %v1216
      %v1244 = vpack.c.bf16 %v1219, %v1218
      %v1245 = vpack.c.bf16 %v1221, %v1220
      %v1246 = vpack.c.bf16 %v1223, %v1222
      %v1247 = vpack.c.bf16 %v1225, %v1224
      %v1248 = vpack.c.bf16 %v1227, %v1226
      %v1249 = vpack.c.bf16 %v1229, %v1228
      %v1250 = vpack.c.bf16 %v1231, %v1230
      %v1251 = vpack.c.bf16 %v1233, %v1232
      %s1252 = scalar_lea.vmem %s4, 64
      %v1253 = vld [vmem:[%s1252] sm:$0xf]
      %v1254 = vld [vmem:[%s1252 + $0x4] sm:$0xf]
      %v1255 = vld [vmem:[%s1252 + $0x8] sm:$0xf]
      %v1256 = vld [vmem:[%s1252 + $0xc] sm:$0xf]
      %v1257 = vld [vmem:[%s1252 + $0x10] sm:$0xf]
      %v1258 = vld [vmem:[%s1252 + $0x14] sm:$0xf]
      %v1259 = vld [vmem:[%s1252 + $0x18] sm:$0xf]
      %v1260 = vld [vmem:[%s1252 + $0x1c] sm:$0xf]
      %v1261 = vld [vmem:[%s1252 + $0x20] sm:$0xf]
      %v1262 = vld [vmem:[%s1252 + $0x24] sm:$0xf]
      %v1263 = vld [vmem:[%s1252 + $0x28] sm:$0xf]
      %v1264 = vld [vmem:[%s1252 + $0x2c] sm:$0xf]
      %v1265 = vld [vmem:[%s1252 + $0x30] sm:$0xf]
      %v1266 = vld [vmem:[%s1252 + $0x34] sm:$0xf]
      %v1267 = vld [vmem:[%s1252 + $0x38] sm:$0xf]
      %v1268 = vld [vmem:[%s1252 + $0x3c] sm:$0xf]
      %v1285 = vunpack.c.l.b16 %v1253
      %v1286 = vunpack.c.l.b16 %v1254
      %v1287 = vunpack.c.l.b16 %v1255
      %v1288 = vunpack.c.l.b16 %v1256
      %v1289 = vunpack.c.l.b16 %v1257
      %v1290 = vunpack.c.l.b16 %v1258
      %v1291 = vunpack.c.l.b16 %v1259
      %v1292 = vunpack.c.l.b16 %v1260
      %v1293 = vunpack.c.l.b16 %v1261
      %v1294 = vunpack.c.l.b16 %v1262
      %v1295 = vunpack.c.l.b16 %v1263
      %v1296 = vunpack.c.l.b16 %v1264
      %v1297 = vunpack.c.l.b16 %v1265
      %v1298 = vunpack.c.l.b16 %v1266
      %v1299 = vunpack.c.l.b16 %v1267
      %v1300 = vunpack.c.l.b16 %v1268
      %v1301 = vpack.c.b16 %v1286, %v1285
      %v1302 = vpack.c.b16 %v1288, %v1287
      %v1303 = vpack.c.b16 %v1290, %v1289
      %v1304 = vpack.c.b16 %v1292, %v1291
      %v1305 = vpack.c.b16 %v1294, %v1293
      %v1306 = vpack.c.b16 %v1296, %v1295
      %v1307 = vpack.c.b16 %v1298, %v1297
      %v1308 = vpack.c.b16 %v1300, %v1299
      %1317 = vmatprep.subr.bf16.mxu0 0
      %1318 = vmatpush1.bf16.msra.mxu0 %v1308
      %1319 = vmatprep.subr.bf16.mxu0 0
      %1320 = vmatpush1.bf16.msra.mxu0 %v1307
      %1321 = vmatprep.subr.bf16.mxu0 0
      %1322 = vmatpush1.bf16.msra.mxu0 %v1306
      %1323 = vmatprep.subr.bf16.mxu0 0
      %1324 = vmatpush1.bf16.msra.mxu0 %v1305
      %1325 = vmatprep.subr.bf16.mxu0 0
      %1326 = vmatpush1.bf16.msra.mxu0 %v1304
      %1327 = vmatprep.subr.bf16.mxu0 0
      %1328 = vmatpush1.bf16.msra.mxu0 %v1303
      %1329 = vmatprep.subr.bf16.mxu0 0
      %1330 = vmatpush1.bf16.msra.mxu0 %v1302
      %1331 = vmatprep.subr.bf16.mxu0 0
      %1332 = vmatpush1.bf16.msra.mxu0 %v1301
      %1333 = vmatprep.subr.bf16.mxu0 0
      %1334 = vmatpush2.bf16.msra.mxu0 0
      %1335 = vmatprep.subr.bf16.mxu0 0
      %1336 = vmatpush2.bf16.msra.mxu0 0
      %1337 = vmatprep.subr.bf16.mxu0 0
      %1338 = vmatpush2.bf16.msra.mxu0 0
      %1339 = vmatprep.subr.bf16.mxu0 0
      %1340 = vmatpush2.bf16.msra.mxu0 0
      %1341 = vmatprep.subr.bf16.mxu0 0
      %1342 = vmatpush2.bf16.msra.mxu0 0
      %1343 = vmatprep.subr.bf16.mxu0 0
      %1344 = vmatpush2.bf16.msra.mxu0 0
      %1345 = vmatprep.subr.bf16.mxu0 0
      %1346 = vmatpush2.bf16.msra.mxu0 0
      %1347 = vmatprep.subr.bf16.mxu0 0
      %1348 = vmatpush2.bf16.msra.mxu0 0
      %1349 = vmatprep.mubr.bf16.mxu0 0
      %1350 = vmatmul.mubr.bf16.gmra.mxu0 %v1234
      %v1351 = vpop.f32.mrf.mxu0
      %v1352 = vadd.f32 0.0, %v1351
      %v1353 = vpop.f32.mrf.mxu0
      %v1354 = vpop.f32.mrf.mxu0
      %v1355 = vadd.f32 0.0, %v1354
      %v1356 = vpop.f32.mrf.mxu0
      %1357 = vmatprep.mubr.bf16.mxu0 0
      %1358 = vmatmul.mubr.bf16.gmra.mxu0 %v1235
      %v1359 = vpop.f32.mrf.mxu0
      %v1360 = vadd.f32 0.0, %v1359
      %v1361 = vpop.f32.mrf.mxu0
      %v1362 = vpop.f32.mrf.mxu0
      %v1363 = vadd.f32 0.0, %v1362
      %v1364 = vpop.f32.mrf.mxu0
      %1365 = vmatprep.mubr.bf16.mxu0 0
      %1366 = vmatmul.mubr.bf16.gmra.mxu0 %v1236
      %v1367 = vpop.f32.mrf.mxu0
      %v1368 = vadd.f32 0.0, %v1367
      %v1369 = vpop.f32.mrf.mxu0
      %v1370 = vpop.f32.mrf.mxu0
      %v1371 = vadd.f32 0.0, %v1370
      %v1372 = vpop.f32.mrf.mxu0
      %1373 = vmatprep.mubr.bf16.mxu0 0
      %1374 = vmatmul.mubr.bf16.gmra.mxu0 %v1237
      %v1375 = vpop.f32.mrf.mxu0
      %v1376 = vadd.f32 0.0, %v1375
      %v1377 = vpop.f32.mrf.mxu0
      %v1378 = vpop.f32.mrf.mxu0
      %v1379 = vadd.f32 0.0, %v1378
      %v1380 = vpop.f32.mrf.mxu0
      %1381 = vmatprep.mubr.bf16.mxu0 0
      %1382 = vmatmul.mubr.bf16.gmra.mxu0 %v1238
      %v1383 = vpop.f32.mrf.mxu0
      %v1384 = vadd.f32 0.0, %v1383
      %v1385 = vpop.f32.mrf.mxu0
      %v1386 = vpop.f32.mrf.mxu0
      %v1387 = vadd.f32 0.0, %v1386
      %v1388 = vpop.f32.mrf.mxu0
      %1389 = vmatprep.mubr.bf16.mxu0 0
      %1390 = vmatmul.mubr.bf16.gmra.mxu0 %v1239
      %v1391 = vpop.f32.mrf.mxu0
      %v1392 = vadd.f32 0.0, %v1391
      %v1393 = vpop.f32.mrf.mxu0
      %v1394 = vpop.f32.mrf.mxu0
      %v1395 = vadd.f32 0.0, %v1394
      %v1396 = vpop.f32.mrf.mxu0
      %1397 = vmatprep.mubr.bf16.mxu0 0
      %1398 = vmatmul.mubr.bf16.gmra.mxu0 %v1240
      %v1399 = vpop.f32.mrf.mxu0
      %v1400 = vadd.f32 0.0, %v1399
      %v1401 = vpop.f32.mrf.mxu0
      %v1402 = vpop.f32.mrf.mxu0
      %v1403 = vadd.f32 0.0, %v1402
      %v1404 = vpop.f32.mrf.mxu0
      %1405 = vmatprep.mubr.bf16.mxu0 0
      %1406 = vmatmul.mubr.bf16.gmra.mxu0 %v1241
      %v1407 = vpop.f32.mrf.mxu0
      %v1408 = vadd.f32 0.0, %v1407
      %v1409 = vpop.f32.mrf.mxu0
      %v1410 = vpop.f32.mrf.mxu0
      %v1411 = vadd.f32 0.0, %v1410
      %v1412 = vpop.f32.mrf.mxu0
      %1413 = vmatprep.mubr.bf16.mxu0 0
      %1414 = vmatmul.mubr.bf16.gmra.mxu0 %v1242
      %v1415 = vpop.f32.mrf.mxu0
      %v1416 = vadd.f32 0.0, %v1415
      %v1417 = vpop.f32.mrf.mxu0
      %v1418 = vpop.f32.mrf.mxu0
      %v1419 = vadd.f32 0.0, %v1418
      %v1420 = vpop.f32.mrf.mxu0
      %1421 = vmatprep.mubr.bf16.mxu0 0
      %1422 = vmatmul.mubr.bf16.gmra.mxu0 %v1243
      %v1423 = vpop.f32.mrf.mxu0
      %v1424 = vadd.f32 0.0, %v1423
      %v1425 = vpop.f32.mrf.mxu0
      %v1426 = vpop.f32.mrf.mxu0
      %v1427 = vadd.f32 0.0, %v1426
      %v1428 = vpop.f32.mrf.mxu0
      %1429 = vmatprep.mubr.bf16.mxu0 0
      %1430 = vmatmul.mubr.bf16.gmra.mxu0 %v1244
      %v1431 = vpop.f32.mrf.mxu0
      %v1432 = vadd.f32 0.0, %v1431
      %v1433 = vpop.f32.mrf.mxu0
      %v1434 = vpop.f32.mrf.mxu0
      %v1435 = vadd.f32 0.0, %v1434
      %v1436 = vpop.f32.mrf.mxu0
      %1437 = vmatprep.mubr.bf16.mxu0 0
      %1438 = vmatmul.mubr.bf16.gmra.mxu0 %v1245
      %v1439 = vpop.f32.mrf.mxu0
      %v1440 = vadd.f32 0.0, %v1439
      %v1441 = vpop.f32.mrf.mxu0
      %v1442 = vpop.f32.mrf.mxu0
      %v1443 = vadd.f32 0.0, %v1442
      %v1444 = vpop.f32.mrf.mxu0
      %1445 = vmatprep.mubr.bf16.mxu0 0
      %1446 = vmatmul.mubr.bf16.gmra.mxu0 %v1246
      %v1447 = vpop.f32.mrf.mxu0
      %v1448 = vadd.f32 0.0, %v1447
      %v1449 = vpop.f32.mrf.mxu0
      %v1450 = vpop.f32.mrf.mxu0
      %v1451 = vadd.f32 0.0, %v1450
      %v1452 = vpop.f32.mrf.mxu0
      %1453 = vmatprep.mubr.bf16.mxu0 0
      %1454 = vmatmul.mubr.bf16.gmra.mxu0 %v1247
      %v1455 = vpop.f32.mrf.mxu0
      %v1456 = vadd.f32 0.0, %v1455
      %v1457 = vpop.f32.mrf.mxu0
      %v1458 = vpop.f32.mrf.mxu0
      %v1459 = vadd.f32 0.0, %v1458
      %v1460 = vpop.f32.mrf.mxu0
      %1461 = vmatprep.mubr.bf16.mxu0 0
      %1462 = vmatmul.mubr.bf16.gmra.mxu0 %v1248
      %v1463 = vpop.f32.mrf.mxu0
      %v1464 = vadd.f32 0.0, %v1463
      %v1465 = vpop.f32.mrf.mxu0
      %v1466 = vpop.f32.mrf.mxu0
      %v1467 = vadd.f32 0.0, %v1466
      %v1468 = vpop.f32.mrf.mxu0
      %1469 = vmatprep.mubr.bf16.mxu0 0
      %1470 = vmatmul.mubr.bf16.gmra.mxu0 %v1249
      %v1471 = vpop.f32.mrf.mxu0
      %v1472 = vadd.f32 0.0, %v1471
      %v1473 = vpop.f32.mrf.mxu0
      %v1474 = vpop.f32.mrf.mxu0
      %v1475 = vadd.f32 0.0, %v1474
      %v1476 = vpop.f32.mrf.mxu0
      %1477 = vmatprep.mubr.bf16.mxu0 0
      %1478 = vmatmul.mubr.bf16.gmra.mxu0 %v1250
      %v1479 = vpop.f32.mrf.mxu0
      %v1480 = vadd.f32 0.0, %v1479
      %v1481 = vpop.f32.mrf.mxu0
      %v1482 = vpop.f32.mrf.mxu0
      %v1483 = vadd.f32 0.0, %v1482
      %v1484 = vpop.f32.mrf.mxu0
      %1485 = vmatprep.mubr.bf16.mxu0 0
      %1486 = vmatmul.mubr.bf16.gmra.mxu0 %v1251
      %v1487 = vpop.f32.mrf.mxu0
      %v1488 = vadd.f32 0.0, %v1487
      %v1489 = vpop.f32.mrf.mxu0
      %v1490 = vpop.f32.mrf.mxu0
      %v1491 = vadd.f32 0.0, %v1490
      %v1492 = vpop.f32.mrf.mxu0
      %1493 = vdwg.mxu0
      %v1494 = vld [vmem:[#allocation4] sm:$0xff]
      %v1495 = vld [vmem:[#allocation4 + $0x8] sm:$0xff]
      %v1496 = vld [vmem:[#allocation4 + $0x10] sm:$0xff]
      %v1497 = vld [vmem:[#allocation4 + $0x18] sm:$0xff]
      %v1498 = vld [vmem:[#allocation4 + $0x20] sm:$0xff]
      %v1499 = vld [vmem:[#allocation4 + $0x28] sm:$0xff]
      %v1500 = vld [vmem:[#allocation4 + $0x30] sm:$0xff]
      %v1501 = vld [vmem:[#allocation4 + $0x38] sm:$0xff]
      %v1502 = vld [vmem:[#allocation4 + $0x40] sm:$0xff]
      %v1503 = vld [vmem:[#allocation4 + $0x48] sm:$0xff]
      %v1504 = vld [vmem:[#allocation4 + $0x50] sm:$0xff]
      %v1505 = vld [vmem:[#allocation4 + $0x58] sm:$0xff]
      %v1506 = vld [vmem:[#allocation4 + $0x60] sm:$0xff]
      %v1507 = vld [vmem:[#allocation4 + $0x68] sm:$0xff]
      %v1508 = vld [vmem:[#allocation4 + $0x70] sm:$0xff]
      %v1509 = vld [vmem:[#allocation4 + $0x78] sm:$0xff]
      %v1510 = vld [vmem:[#allocation4 + $0x80] sm:$0xff]
      %v1511 = vld [vmem:[#allocation4 + $0x88] sm:$0xff]
      %v1512 = vld [vmem:[#allocation4 + $0x90] sm:$0xff]
      %v1513 = vld [vmem:[#allocation4 + $0x98] sm:$0xff]
      %v1514 = vld [vmem:[#allocation4 + $0xa0] sm:$0xff]
      %v1515 = vld [vmem:[#allocation4 + $0xa8] sm:$0xff]
      %v1516 = vld [vmem:[#allocation4 + $0xb0] sm:$0xff]
      %v1517 = vld [vmem:[#allocation4 + $0xb8] sm:$0xff]
      %v1518 = vld [vmem:[#allocation4 + $0xc0] sm:$0xff]
      %v1519 = vld [vmem:[#allocation4 + $0xc8] sm:$0xff]
      %v1520 = vld [vmem:[#allocation4 + $0xd0] sm:$0xff]
      %v1521 = vld [vmem:[#allocation4 + $0xd8] sm:$0xff]
      %v1522 = vld [vmem:[#allocation4 + $0xe0] sm:$0xff]
      %v1523 = vld [vmem:[#allocation4 + $0xe8] sm:$0xff]
      %v1524 = vld [vmem:[#allocation4 + $0xf0] sm:$0xff]
      %v1525 = vld [vmem:[#allocation4 + $0xf8] sm:$0xff]
      %v1526 = vld [vmem:[#allocation4 + $0x100] sm:$0xff]
      %v1527 = vld [vmem:[#allocation4 + $0x108] sm:$0xff]
      %v1528 = vld [vmem:[#allocation4 + $0x110] sm:$0xff]
      %v1529 = vld [vmem:[#allocation4 + $0x118] sm:$0xff]
      %v1530 = vadd.f32 %v1494, %v1352
      %v1531 = vadd.f32 %v1495, %v1355
      %v1532 = vadd.f32 %v1496, %v1360
      %v1533 = vadd.f32 %v1497, %v1363
      %v1534 = vadd.f32 %v1498, %v1368
      %v1535 = vadd.f32 %v1499, %v1371
      %v1536 = vadd.f32 %v1500, %v1376
      %v1537 = vadd.f32 %v1501, %v1379
      %v1538 = vadd.f32 %v1502, %v1384
      %v1539 = vadd.f32 %v1503, %v1387
      %v1540 = vadd.f32 %v1504, %v1392
      %v1541 = vadd.f32 %v1505, %v1395
      %v1542 = vadd.f32 %v1506, %v1400
      %v1543 = vadd.f32 %v1507, %v1403
      %v1544 = vadd.f32 %v1508, %v1408
      %v1545 = vadd.f32 %v1509, %v1411
      %v1546 = vadd.f32 %v1510, %v1416
      %v1547 = vadd.f32 %v1511, %v1419
      %v1548 = vadd.f32 %v1512, %v1424
      %v1549 = vadd.f32 %v1513, %v1427
      %v1550 = vadd.f32 %v1514, %v1432
      %v1551 = vadd.f32 %v1515, %v1435
      %v1552 = vadd.f32 %v1516, %v1440
      %v1553 = vadd.f32 %v1517, %v1443
      %v1554 = vadd.f32 %v1518, %v1448
      %v1555 = vadd.f32 %v1519, %v1451
      %v1556 = vadd.f32 %v1520, %v1456
      %v1557 = vadd.f32 %v1521, %v1459
      %v1558 = vadd.f32 %v1522, %v1464
      %v1559 = vadd.f32 %v1523, %v1467
      %v1560 = vadd.f32 %v1524, %v1472
      %v1561 = vadd.f32 %v1525, %v1475
      %v1562 = vadd.f32 %v1526, %v1480
      %v1563 = vadd.f32 %v1527, %v1483
      %v1564 = vadd.f32 %v1528, %v1488
      %v1565 = vadd.f32 %v1529, %v1491
      %1566 = vst [vmem:[#allocation4] sm:$0xff] %v1530
      %1567 = vst [vmem:[#allocation4 + $0x8] sm:$0xff] %v1531
      %1568 = vst [vmem:[#allocation4 + $0x10] sm:$0xff] %v1532
      %1569 = vst [vmem:[#allocation4 + $0x18] sm:$0xff] %v1533
      %1570 = vst [vmem:[#allocation4 + $0x20] sm:$0xff] %v1534
      %1571 = vst [vmem:[#allocation4 + $0x28] sm:$0xff] %v1535
      %1572 = vst [vmem:[#allocation4 + $0x30] sm:$0xff] %v1536
      %1573 = vst [vmem:[#allocation4 + $0x38] sm:$0xff] %v1537
      %1574 = vst [vmem:[#allocation4 + $0x40] sm:$0xff] %v1538
      %1575 = vst [vmem:[#allocation4 + $0x48] sm:$0xff] %v1539
      %1576 = vst [vmem:[#allocation4 + $0x50] sm:$0xff] %v1540
      %1577 = vst [vmem:[#allocation4 + $0x58] sm:$0xff] %v1541
      %1578 = vst [vmem:[#allocation4 + $0x60] sm:$0xff] %v1542
      %1579 = vst [vmem:[#allocation4 + $0x68] sm:$0xff] %v1543
      %1580 = vst [vmem:[#allocation4 + $0x70] sm:$0xff] %v1544
      %1581 = vst [vmem:[#allocation4 + $0x78] sm:$0xff] %v1545
      %1582 = vst [vmem:[#allocation4 + $0x80] sm:$0xff] %v1546
      %1583 = vst [vmem:[#allocation4 + $0x88] sm:$0xff] %v1547
      %1584 = vst [vmem:[#allocation4 + $0x90] sm:$0xff] %v1548
      %1585 = vst [vmem:[#allocation4 + $0x98] sm:$0xff] %v1549
      %1586 = vst [vmem:[#allocation4 + $0xa0] sm:$0xff] %v1550
      %1587 = vst [vmem:[#allocation4 + $0xa8] sm:$0xff] %v1551
      %1588 = vst [vmem:[#allocation4 + $0xb0] sm:$0xff] %v1552
      %1589 = vst [vmem:[#allocation4 + $0xb8] sm:$0xff] %v1553
      %1590 = vst [vmem:[#allocation4 + $0xc0] sm:$0xff] %v1554
      %1591 = vst [vmem:[#allocation4 + $0xc8] sm:$0xff] %v1555
      %1592 = vst [vmem:[#allocation4 + $0xd0] sm:$0xff] %v1556
      %1593 = vst [vmem:[#allocation4 + $0xd8] sm:$0xff] %v1557
      %1594 = vst [vmem:[#allocation4 + $0xe0] sm:$0xff] %v1558
      %1595 = vst [vmem:[#allocation4 + $0xe8] sm:$0xff] %v1559
      %1596 = vst [vmem:[#allocation4 + $0xf0] sm:$0xff] %v1560
      %1597 = vst [vmem:[#allocation4 + $0xf8] sm:$0xff] %v1561
      %1598 = vst [vmem:[#allocation4 + $0x100] sm:$0xff] %v1562
      %1599 = vst [vmem:[#allocation4 + $0x108] sm:$0xff] %v1563
      %1600 = vst [vmem:[#allocation4 + $0x110] sm:$0xff] %v1564
      %1601 = vst [vmem:[#allocation4 + $0x118] sm:$0xff] %v1565
      %v1602 = vld [vmem:[#allocation2 + $0x2] sm:$0xff]
      %v1603 = vld [vmem:[#allocation2 + $0xa] sm:$0xff]
      %v1604 = vld [vmem:[#allocation2 + $0x12] sm:$0xff]
      %v1605 = vld [vmem:[#allocation2 + $0x1a] sm:$0xff]
      %v1606 = vld [vmem:[#allocation2 + $0x22] sm:$0xff]
      %v1607 = vld [vmem:[#allocation2 + $0x2a] sm:$0xff]
      %v1608 = vld [vmem:[#allocation2 + $0x32] sm:$0xff]
      %v1609 = vld [vmem:[#allocation2 + $0x3a] sm:$0xff]
      %v1610 = vld [vmem:[#allocation2 + $0x42] sm:$0xff]
      %v1611 = vld [vmem:[#allocation2 + $0x4a] sm:$0xff]
      %v1612 = vld [vmem:[#allocation2 + $0x52] sm:$0xff]
      %v1613 = vld [vmem:[#allocation2 + $0x5a] sm:$0xff]
      %v1614 = vld [vmem:[#allocation2 + $0x62] sm:$0xff]
      %v1615 = vld [vmem:[#allocation2 + $0x6a] sm:$0xff]
      %v1616 = vld [vmem:[#allocation2 + $0x72] sm:$0xff]
      %v1617 = vld [vmem:[#allocation2 + $0x7a] sm:$0xff]
      %v1618 = vld [vmem:[#allocation2 + $0x82] sm:$0xff]
      %v1619 = vld [vmem:[#allocation2 + $0x8a] sm:$0xff]
      %v1620 = vld [vmem:[#allocation2 + $0x92] sm:$0xff]
      %v1621 = vld [vmem:[#allocation2 + $0x9a] sm:$0xff]
      %v1622 = vld [vmem:[#allocation2 + $0xa2] sm:$0xff]
      %v1623 = vld [vmem:[#allocation2 + $0xaa] sm:$0xff]
      %v1624 = vld [vmem:[#allocation2 + $0xb2] sm:$0xff]
      %v1625 = vld [vmem:[#allocation2 + $0xba] sm:$0xff]
      %v1626 = vld [vmem:[#allocation2 + $0xc2] sm:$0xff]
      %v1627 = vld [vmem:[#allocation2 + $0xca] sm:$0xff]
      %v1628 = vld [vmem:[#allocation2 + $0xd2] sm:$0xff]
      %v1629 = vld [vmem:[#allocation2 + $0xda] sm:$0xff]
      %v1630 = vld [vmem:[#allocation2 + $0xe2] sm:$0xff]
      %v1631 = vld [vmem:[#allocation2 + $0xea] sm:$0xff]
      %v1632 = vld [vmem:[#allocation2 + $0xf2] sm:$0xff]
      %v1633 = vld [vmem:[#allocation2 + $0xfa] sm:$0xff]
      %v1634 = vld [vmem:[#allocation2 + $0x102] sm:$0xff]
      %v1635 = vld [vmem:[#allocation2 + $0x10a] sm:$0xff]
      %v1636 = vld [vmem:[#allocation2 + $0x112] sm:$0xff]
      %v1637 = vld [vmem:[#allocation2 + $0x11a] sm:$0xff]
      %v1638 = vpack.c.bf16 %v1603, %v1602
      %v1639 = vpack.c.bf16 %v1605, %v1604
      %v1640 = vpack.c.bf16 %v1607, %v1606
      %v1641 = vpack.c.bf16 %v1609, %v1608
      %v1642 = vpack.c.bf16 %v1611, %v1610
      %v1643 = vpack.c.bf16 %v1613, %v1612
      %v1644 = vpack.c.bf16 %v1615, %v1614
      %v1645 = vpack.c.bf16 %v1617, %v1616
      %v1646 = vpack.c.bf16 %v1619, %v1618
      %v1647 = vpack.c.bf16 %v1621, %v1620
      %v1648 = vpack.c.bf16 %v1623, %v1622
      %v1649 = vpack.c.bf16 %v1625, %v1624
      %v1650 = vpack.c.bf16 %v1627, %v1626
      %v1651 = vpack.c.bf16 %v1629, %v1628
      %v1652 = vpack.c.bf16 %v1631, %v1630
      %v1653 = vpack.c.bf16 %v1633, %v1632
      %v1654 = vpack.c.bf16 %v1635, %v1634
      %v1655 = vpack.c.bf16 %v1637, %v1636
      %s1656 = scalar_lea.vmem %s4, 128
      %v1657 = vld [vmem:[%s1656] sm:$0xf]
      %v1658 = vld [vmem:[%s1656 + $0x4] sm:$0xf]
      %v1659 = vld [vmem:[%s1656 + $0x8] sm:$0xf]
      %v1660 = vld [vmem:[%s1656 + $0xc] sm:$0xf]
      %v1661 = vld [vmem:[%s1656 + $0x10] sm:$0xf]
      %v1662 = vld [vmem:[%s1656 + $0x14] sm:$0xf]
      %v1663 = vld [vmem:[%s1656 + $0x18] sm:$0xf]
      %v1664 = vld [vmem:[%s1656 + $0x1c] sm:$0xf]
      %v1665 = vld [vmem:[%s1656 + $0x20] sm:$0xf]
      %v1666 = vld [vmem:[%s1656 + $0x24] sm:$0xf]
      %v1667 = vld [vmem:[%s1656 + $0x28] sm:$0xf]
      %v1668 = vld [vmem:[%s1656 + $0x2c] sm:$0xf]
      %v1669 = vld [vmem:[%s1656 + $0x30] sm:$0xf]
      %v1670 = vld [vmem:[%s1656 + $0x34] sm:$0xf]
      %v1671 = vld [vmem:[%s1656 + $0x38] sm:$0xf]
      %v1672 = vld [vmem:[%s1656 + $0x3c] sm:$0xf]
      %v1689 = vunpack.c.l.b16 %v1657
      %v1690 = vunpack.c.l.b16 %v1658
      %v1691 = vunpack.c.l.b16 %v1659
      %v1692 = vunpack.c.l.b16 %v1660
      %v1693 = vunpack.c.l.b16 %v1661
      %v1694 = vunpack.c.l.b16 %v1662
      %v1695 = vunpack.c.l.b16 %v1663
      %v1696 = vunpack.c.l.b16 %v1664
      %v1697 = vunpack.c.l.b16 %v1665
      %v1698 = vunpack.c.l.b16 %v1666
      %v1699 = vunpack.c.l.b16 %v1667
      %v1700 = vunpack.c.l.b16 %v1668
      %v1701 = vunpack.c.l.b16 %v1669
      %v1702 = vunpack.c.l.b16 %v1670
      %v1703 = vunpack.c.l.b16 %v1671
      %v1704 = vunpack.c.l.b16 %v1672
      %v1705 = vpack.c.b16 %v1690, %v1689
      %v1706 = vpack.c.b16 %v1692, %v1691
      %v1707 = vpack.c.b16 %v1694, %v1693
      %v1708 = vpack.c.b16 %v1696, %v1695
      %v1709 = vpack.c.b16 %v1698, %v1697
      %v1710 = vpack.c.b16 %v1700, %v1699
      %v1711 = vpack.c.b16 %v1702, %v1701
      %v1712 = vpack.c.b16 %v1704, %v1703
      %1721 = vmatprep.subr.bf16.mxu0 0
      %1722 = vmatpush1.bf16.msra.mxu0 %v1712
      %1723 = vmatprep.subr.bf16.mxu0 0
      %1724 = vmatpush1.bf16.msra.mxu0 %v1711
      %1725 = vmatprep.subr.bf16.mxu0 0
      %1726 = vmatpush1.bf16.msra.mxu0 %v1710
      %1727 = vmatprep.subr.bf16.mxu0 0
      %1728 = vmatpush1.bf16.msra.mxu0 %v1709
      %1729 = vmatprep.subr.bf16.mxu0 0
      %1730 = vmatpush1.bf16.msra.mxu0 %v1708
      %1731 = vmatprep.subr.bf16.mxu0 0
      %1732 = vmatpush1.bf16.msra.mxu0 %v1707
      %1733 = vmatprep.subr.bf16.mxu0 0
      %1734 = vmatpush1.bf16.msra.mxu0 %v1706
      %1735 = vmatprep.subr.bf16.mxu0 0
      %1736 = vmatpush1.bf16.msra.mxu0 %v1705
      %1737 = vmatprep.subr.bf16.mxu0 0
      %1738 = vmatpush2.bf16.msra.mxu0 0
      %1739 = vmatprep.subr.bf16.mxu0 0
      %1740 = vmatpush2.bf16.msra.mxu0 0
      %1741 = vmatprep.subr.bf16.mxu0 0
      %1742 = vmatpush2.bf16.msra.mxu0 0
      %1743 = vmatprep.subr.bf16.mxu0 0
      %1744 = vmatpush2.bf16.msra.mxu0 0
      %1745 = vmatprep.subr.bf16.mxu0 0
      %1746 = vmatpush2.bf16.msra.mxu0 0
      %1747 = vmatprep.subr.bf16.mxu0 0
      %1748 = vmatpush2.bf16.msra.mxu0 0
      %1749 = vmatprep.subr.bf16.mxu0 0
      %1750 = vmatpush2.bf16.msra.mxu0 0
      %1751 = vmatprep.subr.bf16.mxu0 0
      %1752 = vmatpush2.bf16.msra.mxu0 0
      %1753 = vmatprep.mubr.bf16.mxu0 0
      %1754 = vmatmul.mubr.bf16.gmra.mxu0 %v1638
      %v1755 = vpop.f32.mrf.mxu0
      %v1756 = vadd.f32 0.0, %v1755
      %v1757 = vpop.f32.mrf.mxu0
      %v1758 = vpop.f32.mrf.mxu0
      %v1759 = vadd.f32 0.0, %v1758
      %v1760 = vpop.f32.mrf.mxu0
      %1761 = vmatprep.mubr.bf16.mxu0 0
      %1762 = vmatmul.mubr.bf16.gmra.mxu0 %v1639
      %v1763 = vpop.f32.mrf.mxu0
      %v1764 = vadd.f32 0.0, %v1763
      %v1765 = vpop.f32.mrf.mxu0
      %v1766 = vpop.f32.mrf.mxu0
      %v1767 = vadd.f32 0.0, %v1766
      %v1768 = vpop.f32.mrf.mxu0
      %1769 = vmatprep.mubr.bf16.mxu0 0
      %1770 = vmatmul.mubr.bf16.gmra.mxu0 %v1640
      %v1771 = vpop.f32.mrf.mxu0
      %v1772 = vadd.f32 0.0, %v1771
      %v1773 = vpop.f32.mrf.mxu0
      %v1774 = vpop.f32.mrf.mxu0
      %v1775 = vadd.f32 0.0, %v1774
      %v1776 = vpop.f32.mrf.mxu0
      %1777 = vmatprep.mubr.bf16.mxu0 0
      %1778 = vmatmul.mubr.bf16.gmra.mxu0 %v1641
      %v1779 = vpop.f32.mrf.mxu0
      %v1780 = vadd.f32 0.0, %v1779
      %v1781 = vpop.f32.mrf.mxu0
      %v1782 = vpop.f32.mrf.mxu0
      %v1783 = vadd.f32 0.0, %v1782
      %v1784 = vpop.f32.mrf.mxu0
      %1785 = vmatprep.mubr.bf16.mxu0 0
      %1786 = vmatmul.mubr.bf16.gmra.mxu0 %v1642
      %v1787 = vpop.f32.mrf.mxu0
      %v1788 = vadd.f32 0.0, %v1787
      %v1789 = vpop.f32.mrf.mxu0
      %v1790 = vpop.f32.mrf.mxu0
      %v1791 = vadd.f32 0.0, %v1790
      %v1792 = vpop.f32.mrf.mxu0
      %1793 = vmatprep.mubr.bf16.mxu0 0
      %1794 = vmatmul.mubr.bf16.gmra.mxu0 %v1643
      %v1795 = vpop.f32.mrf.mxu0
      %v1796 = vadd.f32 0.0, %v1795
      %v1797 = vpop.f32.mrf.mxu0
      %v1798 = vpop.f32.mrf.mxu0
      %v1799 = vadd.f32 0.0, %v1798
      %v1800 = vpop.f32.mrf.mxu0
      %1801 = vmatprep.mubr.bf16.mxu0 0
      %1802 = vmatmul.mubr.bf16.gmra.mxu0 %v1644
      %v1803 = vpop.f32.mrf.mxu0
      %v1804 = vadd.f32 0.0, %v1803
      %v1805 = vpop.f32.mrf.mxu0
      %v1806 = vpop.f32.mrf.mxu0
      %v1807 = vadd.f32 0.0, %v1806
      %v1808 = vpop.f32.mrf.mxu0
      %1809 = vmatprep.mubr.bf16.mxu0 0
      %1810 = vmatmul.mubr.bf16.gmra.mxu0 %v1645
      %v1811 = vpop.f32.mrf.mxu0
      %v1812 = vadd.f32 0.0, %v1811
      %v1813 = vpop.f32.mrf.mxu0
      %v1814 = vpop.f32.mrf.mxu0
      %v1815 = vadd.f32 0.0, %v1814
      %v1816 = vpop.f32.mrf.mxu0
      %1817 = vmatprep.mubr.bf16.mxu0 0
      %1818 = vmatmul.mubr.bf16.gmra.mxu0 %v1646
      %v1819 = vpop.f32.mrf.mxu0
      %v1820 = vadd.f32 0.0, %v1819
      %v1821 = vpop.f32.mrf.mxu0
      %v1822 = vpop.f32.mrf.mxu0
      %v1823 = vadd.f32 0.0, %v1822
      %v1824 = vpop.f32.mrf.mxu0
      %1825 = vmatprep.mubr.bf16.mxu0 0
      %1826 = vmatmul.mubr.bf16.gmra.mxu0 %v1647
      %v1827 = vpop.f32.mrf.mxu0
      %v1828 = vadd.f32 0.0, %v1827
      %v1829 = vpop.f32.mrf.mxu0
      %v1830 = vpop.f32.mrf.mxu0
      %v1831 = vadd.f32 0.0, %v1830
      %v1832 = vpop.f32.mrf.mxu0
      %1833 = vmatprep.mubr.bf16.mxu0 0
      %1834 = vmatmul.mubr.bf16.gmra.mxu0 %v1648
      %v1835 = vpop.f32.mrf.mxu0
      %v1836 = vadd.f32 0.0, %v1835
      %v1837 = vpop.f32.mrf.mxu0
      %v1838 = vpop.f32.mrf.mxu0
      %v1839 = vadd.f32 0.0, %v1838
      %v1840 = vpop.f32.mrf.mxu0
      %1841 = vmatprep.mubr.bf16.mxu0 0
      %1842 = vmatmul.mubr.bf16.gmra.mxu0 %v1649
      %v1843 = vpop.f32.mrf.mxu0
      %v1844 = vadd.f32 0.0, %v1843
      %v1845 = vpop.f32.mrf.mxu0
      %v1846 = vpop.f32.mrf.mxu0
      %v1847 = vadd.f32 0.0, %v1846
      %v1848 = vpop.f32.mrf.mxu0
      %1849 = vmatprep.mubr.bf16.mxu0 0
      %1850 = vmatmul.mubr.bf16.gmra.mxu0 %v1650
      %v1851 = vpop.f32.mrf.mxu0
      %v1852 = vadd.f32 0.0, %v1851
      %v1853 = vpop.f32.mrf.mxu0
      %v1854 = vpop.f32.mrf.mxu0
      %v1855 = vadd.f32 0.0, %v1854
      %v1856 = vpop.f32.mrf.mxu0
      %1857 = vmatprep.mubr.bf16.mxu0 0
      %1858 = vmatmul.mubr.bf16.gmra.mxu0 %v1651
      %v1859 = vpop.f32.mrf.mxu0
      %v1860 = vadd.f32 0.0, %v1859
      %v1861 = vpop.f32.mrf.mxu0
      %v1862 = vpop.f32.mrf.mxu0
      %v1863 = vadd.f32 0.0, %v1862
      %v1864 = vpop.f32.mrf.mxu0
      %1865 = vmatprep.mubr.bf16.mxu0 0
      %1866 = vmatmul.mubr.bf16.gmra.mxu0 %v1652
      %v1867 = vpop.f32.mrf.mxu0
      %v1868 = vadd.f32 0.0, %v1867
      %v1869 = vpop.f32.mrf.mxu0
      %v1870 = vpop.f32.mrf.mxu0
      %v1871 = vadd.f32 0.0, %v1870
      %v1872 = vpop.f32.mrf.mxu0
      %1873 = vmatprep.mubr.bf16.mxu0 0
      %1874 = vmatmul.mubr.bf16.gmra.mxu0 %v1653
      %v1875 = vpop.f32.mrf.mxu0
      %v1876 = vadd.f32 0.0, %v1875
      %v1877 = vpop.f32.mrf.mxu0
      %v1878 = vpop.f32.mrf.mxu0
      %v1879 = vadd.f32 0.0, %v1878
      %v1880 = vpop.f32.mrf.mxu0
      %1881 = vmatprep.mubr.bf16.mxu0 0
      %1882 = vmatmul.mubr.bf16.gmra.mxu0 %v1654
      %v1883 = vpop.f32.mrf.mxu0
      %v1884 = vadd.f32 0.0, %v1883
      %v1885 = vpop.f32.mrf.mxu0
      %v1886 = vpop.f32.mrf.mxu0
      %v1887 = vadd.f32 0.0, %v1886
      %v1888 = vpop.f32.mrf.mxu0
      %1889 = vmatprep.mubr.bf16.mxu0 0
      %1890 = vmatmul.mubr.bf16.gmra.mxu0 %v1655
      %v1891 = vpop.f32.mrf.mxu0
      %v1892 = vadd.f32 0.0, %v1891
      %v1893 = vpop.f32.mrf.mxu0
      %v1894 = vpop.f32.mrf.mxu0
      %v1895 = vadd.f32 0.0, %v1894
      %v1896 = vpop.f32.mrf.mxu0
      %1897 = vdwg.mxu0
      %v1898 = vld [vmem:[#allocation4] sm:$0xff]
      %v1899 = vld [vmem:[#allocation4 + $0x8] sm:$0xff]
      %v1900 = vld [vmem:[#allocation4 + $0x10] sm:$0xff]
      %v1901 = vld [vmem:[#allocation4 + $0x18] sm:$0xff]
      %v1902 = vld [vmem:[#allocation4 + $0x20] sm:$0xff]
      %v1903 = vld [vmem:[#allocation4 + $0x28] sm:$0xff]
      %v1904 = vld [vmem:[#allocation4 + $0x30] sm:$0xff]
      %v1905 = vld [vmem:[#allocation4 + $0x38] sm:$0xff]
      %v1906 = vld [vmem:[#allocation4 + $0x40] sm:$0xff]
      %v1907 = vld [vmem:[#allocation4 + $0x48] sm:$0xff]
      %v1908 = vld [vmem:[#allocation4 + $0x50] sm:$0xff]
      %v1909 = vld [vmem:[#allocation4 + $0x58] sm:$0xff]
      %v1910 = vld [vmem:[#allocation4 + $0x60] sm:$0xff]
      %v1911 = vld [vmem:[#allocation4 + $0x68] sm:$0xff]
      %v1912 = vld [vmem:[#allocation4 + $0x70] sm:$0xff]
      %v1913 = vld [vmem:[#allocation4 + $0x78] sm:$0xff]
      %v1914 = vld [vmem:[#allocation4 + $0x80] sm:$0xff]
      %v1915 = vld [vmem:[#allocation4 + $0x88] sm:$0xff]
      %v1916 = vld [vmem:[#allocation4 + $0x90] sm:$0xff]
      %v1917 = vld [vmem:[#allocation4 + $0x98] sm:$0xff]
      %v1918 = vld [vmem:[#allocation4 + $0xa0] sm:$0xff]
      %v1919 = vld [vmem:[#allocation4 + $0xa8] sm:$0xff]
      %v1920 = vld [vmem:[#allocation4 + $0xb0] sm:$0xff]
      %v1921 = vld [vmem:[#allocation4 + $0xb8] sm:$0xff]
      %v1922 = vld [vmem:[#allocation4 + $0xc0] sm:$0xff]
      %v1923 = vld [vmem:[#allocation4 + $0xc8] sm:$0xff]
      %v1924 = vld [vmem:[#allocation4 + $0xd0] sm:$0xff]
      %v1925 = vld [vmem:[#allocation4 + $0xd8] sm:$0xff]
      %v1926 = vld [vmem:[#allocation4 + $0xe0] sm:$0xff]
      %v1927 = vld [vmem:[#allocation4 + $0xe8] sm:$0xff]
      %v1928 = vld [vmem:[#allocation4 + $0xf0] sm:$0xff]
      %v1929 = vld [vmem:[#allocation4 + $0xf8] sm:$0xff]
      %v1930 = vld [vmem:[#allocation4 + $0x100] sm:$0xff]
      %v1931 = vld [vmem:[#allocation4 + $0x108] sm:$0xff]
      %v1932 = vld [vmem:[#allocation4 + $0x110] sm:$0xff]
      %v1933 = vld [vmem:[#allocation4 + $0x118] sm:$0xff]
      %v1934 = vadd.f32 %v1898, %v1756
      %v1935 = vadd.f32 %v1899, %v1759
      %v1936 = vadd.f32 %v1900, %v1764
      %v1937 = vadd.f32 %v1901, %v1767
      %v1938 = vadd.f32 %v1902, %v1772
      %v1939 = vadd.f32 %v1903, %v1775
      %v1940 = vadd.f32 %v1904, %v1780
      %v1941 = vadd.f32 %v1905, %v1783
      %v1942 = vadd.f32 %v1906, %v1788
      %v1943 = vadd.f32 %v1907, %v1791
      %v1944 = vadd.f32 %v1908, %v1796
      %v1945 = vadd.f32 %v1909, %v1799
      %v1946 = vadd.f32 %v1910, %v1804
      %v1947 = vadd.f32 %v1911, %v1807
      %v1948 = vadd.f32 %v1912, %v1812
      %v1949 = vadd.f32 %v1913, %v1815
      %v1950 = vadd.f32 %v1914, %v1820
      %v1951 = vadd.f32 %v1915, %v1823
      %v1952 = vadd.f32 %v1916, %v1828
      %v1953 = vadd.f32 %v1917, %v1831
      %v1954 = vadd.f32 %v1918, %v1836
      %v1955 = vadd.f32 %v1919, %v1839
      %v1956 = vadd.f32 %v1920, %v1844
      %v1957 = vadd.f32 %v1921, %v1847
      %v1958 = vadd.f32 %v1922, %v1852
      %v1959 = vadd.f32 %v1923, %v1855
      %v1960 = vadd.f32 %v1924, %v1860
      %v1961 = vadd.f32 %v1925, %v1863
      %v1962 = vadd.f32 %v1926, %v1868
      %v1963 = vadd.f32 %v1927, %v1871
      %v1964 = vadd.f32 %v1928, %v1876
      %v1965 = vadd.f32 %v1929, %v1879
      %v1966 = vadd.f32 %v1930, %v1884
      %v1967 = vadd.f32 %v1931, %v1887
      %v1968 = vadd.f32 %v1932, %v1892
      %v1969 = vadd.f32 %v1933, %v1895
      %1970 = vst [vmem:[#allocation4] sm:$0xff] %v1934
      %1971 = vst [vmem:[#allocation4 + $0x8] sm:$0xff] %v1935
      %1972 = vst [vmem:[#allocation4 + $0x10] sm:$0xff] %v1936
      %1973 = vst [vmem:[#allocation4 + $0x18] sm:$0xff] %v1937
      %1974 = vst [vmem:[#allocation4 + $0x20] sm:$0xff] %v1938
      %1975 = vst [vmem:[#allocation4 + $0x28] sm:$0xff] %v1939
      %1976 = vst [vmem:[#allocation4 + $0x30] sm:$0xff] %v1940
      %1977 = vst [vmem:[#allocation4 + $0x38] sm:$0xff] %v1941
      %1978 = vst [vmem:[#allocation4 + $0x40] sm:$0xff] %v1942
      %1979 = vst [vmem:[#allocation4 + $0x48] sm:$0xff] %v1943
      %1980 = vst [vmem:[#allocation4 + $0x50] sm:$0xff] %v1944
      %1981 = vst [vmem:[#allocation4 + $0x58] sm:$0xff] %v1945
      %1982 = vst [vmem:[#allocation4 + $0x60] sm:$0xff] %v1946
      %1983 = vst [vmem:[#allocation4 + $0x68] sm:$0xff] %v1947
      %1984 = vst [vmem:[#allocation4 + $0x70] sm:$0xff] %v1948
      %1985 = vst [vmem:[#allocation4 + $0x78] sm:$0xff] %v1949
      %1986 = vst [vmem:[#allocation4 + $0x80] sm:$0xff] %v1950
      %1987 = vst [vmem:[#allocation4 + $0x88] sm:$0xff] %v1951
      %1988 = vst [vmem:[#allocation4 + $0x90] sm:$0xff] %v1952
      %1989 = vst [vmem:[#allocation4 + $0x98] sm:$0xff] %v1953
      %1990 = vst [vmem:[#allocation4 + $0xa0] sm:$0xff] %v1954
      %1991 = vst [vmem:[#allocation4 + $0xa8] sm:$0xff] %v1955
      %1992 = vst [vmem:[#allocation4 + $0xb0] sm:$0xff] %v1956
      %1993 = vst [vmem:[#allocation4 + $0xb8] sm:$0xff] %v1957
      %1994 = vst [vmem:[#allocation4 + $0xc0] sm:$0xff] %v1958
      %1995 = vst [vmem:[#allocation4 + $0xc8] sm:$0xff] %v1959
      %1996 = vst [vmem:[#allocation4 + $0xd0] sm:$0xff] %v1960
      %1997 = vst [vmem:[#allocation4 + $0xd8] sm:$0xff] %v1961
      %1998 = vst [vmem:[#allocation4 + $0xe0] sm:$0xff] %v1962
      %1999 = vst [vmem:[#allocation4 + $0xe8] sm:$0xff] %v1963
      %2000 = vst [vmem:[#allocation4 + $0xf0] sm:$0xff] %v1964
      %2001 = vst [vmem:[#allocation4 + $0xf8] sm:$0xff] %v1965
      %2002 = vst [vmem:[#allocation4 + $0x100] sm:$0xff] %v1966
      %2003 = vst [vmem:[#allocation4 + $0x108] sm:$0xff] %v1967
      %2004 = vst [vmem:[#allocation4 + $0x110] sm:$0xff] %v1968
      %2005 = vst [vmem:[#allocation4 + $0x118] sm:$0xff] %v1969
      %v2006 = vld [vmem:[#allocation2 + $0x12] sm:$0xff]
      %v2007 = vld [vmem:[#allocation2 + $0x1a] sm:$0xff]
      %v2008 = vld [vmem:[#allocation2 + $0x22] sm:$0xff]
      %v2009 = vld [vmem:[#allocation2 + $0x2a] sm:$0xff]
      %v2010 = vld [vmem:[#allocation2 + $0x32] sm:$0xff]
      %v2011 = vld [vmem:[#allocation2 + $0x3a] sm:$0xff]
      %v2012 = vld [vmem:[#allocation2 + $0x42] sm:$0xff]
      %v2013 = vld [vmem:[#allocation2 + $0x4a] sm:$0xff]
      %v2014 = vld [vmem:[#allocation2 + $0x52] sm:$0xff]
      %v2015 = vld [vmem:[#allocation2 + $0x5a] sm:$0xff]
      %v2016 = vld [vmem:[#allocation2 + $0x62] sm:$0xff]
      %v2017 = vld [vmem:[#allocation2 + $0x6a] sm:$0xff]
      %v2018 = vld [vmem:[#allocation2 + $0x72] sm:$0xff]
      %v2019 = vld [vmem:[#allocation2 + $0x7a] sm:$0xff]
      %v2020 = vld [vmem:[#allocation2 + $0x82] sm:$0xff]
      %v2021 = vld [vmem:[#allocation2 + $0x8a] sm:$0xff]
      %v2022 = vld [vmem:[#allocation2 + $0x92] sm:$0xff]
      %v2023 = vld [vmem:[#allocation2 + $0x9a] sm:$0xff]
      %v2024 = vld [vmem:[#allocation2 + $0xa2] sm:$0xff]
      %v2025 = vld [vmem:[#allocation2 + $0xaa] sm:$0xff]
      %v2026 = vld [vmem:[#allocation2 + $0xb2] sm:$0xff]
      %v2027 = vld [vmem:[#allocation2 + $0xba] sm:$0xff]
      %v2028 = vld [vmem:[#allocation2 + $0xc2] sm:$0xff]
      %v2029 = vld [vmem:[#allocation2 + $0xca] sm:$0xff]
      %v2030 = vld [vmem:[#allocation2 + $0xd2] sm:$0xff]
      %v2031 = vld [vmem:[#allocation2 + $0xda] sm:$0xff]
      %v2032 = vld [vmem:[#allocation2 + $0xe2] sm:$0xff]
      %v2033 = vld [vmem:[#allocation2 + $0xea] sm:$0xff]
      %v2034 = vld [vmem:[#allocation2 + $0xf2] sm:$0xff]
      %v2035 = vld [vmem:[#allocation2 + $0xfa] sm:$0xff]
      %v2036 = vld [vmem:[#allocation2 + $0x102] sm:$0xff]
      %v2037 = vld [vmem:[#allocation2 + $0x10a] sm:$0xff]
      %v2038 = vld [vmem:[#allocation2 + $0x112] sm:$0xff]
      %v2039 = vld [vmem:[#allocation2 + $0x11a] sm:$0xff]
      %v2040 = vld [vmem:[#allocation2 + $0x122] sm:$0xff]
      %v2041 = vld [vmem:[#allocation2 + $0x12a] sm:$0xff]
      %v2042 = vpack.c.bf16 %v2007, %v2006
      %v2043 = vpack.c.bf16 %v2009, %v2008
      %v2044 = vpack.c.bf16 %v2011, %v2010
      %v2045 = vpack.c.bf16 %v2013, %v2012
      %v2046 = vpack.c.bf16 %v2015, %v2014
      %v2047 = vpack.c.bf16 %v2017, %v2016
      %v2048 = vpack.c.bf16 %v2019, %v2018
      %v2049 = vpack.c.bf16 %v2021, %v2020
      %v2050 = vpack.c.bf16 %v2023, %v2022
      %v2051 = vpack.c.bf16 %v2025, %v2024
      %v2052 = vpack.c.bf16 %v2027, %v2026
      %v2053 = vpack.c.bf16 %v2029, %v2028
      %v2054 = vpack.c.bf16 %v2031, %v2030
      %v2055 = vpack.c.bf16 %v2033, %v2032
      %v2056 = vpack.c.bf16 %v2035, %v2034
      %v2057 = vpack.c.bf16 %v2037, %v2036
      %v2058 = vpack.c.bf16 %v2039, %v2038
      %v2059 = vpack.c.bf16 %v2041, %v2040
      %s2060 = scalar_lea.vmem %s4, 192
      %v2061 = vld [vmem:[%s2060] sm:$0xf]
      %v2062 = vld [vmem:[%s2060 + $0x4] sm:$0xf]
      %v2063 = vld [vmem:[%s2060 + $0x8] sm:$0xf]
      %v2064 = vld [vmem:[%s2060 + $0xc] sm:$0xf]
      %v2065 = vld [vmem:[%s2060 + $0x10] sm:$0xf]
      %v2066 = vld [vmem:[%s2060 + $0x14] sm:$0xf]
      %v2067 = vld [vmem:[%s2060 + $0x18] sm:$0xf]
      %v2068 = vld [vmem:[%s2060 + $0x1c] sm:$0xf]
      %v2069 = vld [vmem:[%s2060 + $0x20] sm:$0xf]
      %v2070 = vld [vmem:[%s2060 + $0x24] sm:$0xf]
      %v2071 = vld [vmem:[%s2060 + $0x28] sm:$0xf]
      %v2072 = vld [vmem:[%s2060 + $0x2c] sm:$0xf]
      %v2073 = vld [vmem:[%s2060 + $0x30] sm:$0xf]
      %v2074 = vld [vmem:[%s2060 + $0x34] sm:$0xf]
      %v2075 = vld [vmem:[%s2060 + $0x38] sm:$0xf]
      %v2076 = vld [vmem:[%s2060 + $0x3c] sm:$0xf]
      %v2093 = vunpack.c.l.b16 %v2061
      %v2094 = vunpack.c.l.b16 %v2062
      %v2095 = vunpack.c.l.b16 %v2063
      %v2096 = vunpack.c.l.b16 %v2064
      %v2097 = vunpack.c.l.b16 %v2065
      %v2098 = vunpack.c.l.b16 %v2066
      %v2099 = vunpack.c.l.b16 %v2067
      %v2100 = vunpack.c.l.b16 %v2068
      %v2101 = vunpack.c.l.b16 %v2069
      %v2102 = vunpack.c.l.b16 %v2070
      %v2103 = vunpack.c.l.b16 %v2071
      %v2104 = vunpack.c.l.b16 %v2072
      %v2105 = vunpack.c.l.b16 %v2073
      %v2106 = vunpack.c.l.b16 %v2074
      %v2107 = vunpack.c.l.b16 %v2075
      %v2108 = vunpack.c.l.b16 %v2076
      %v2109 = vpack.c.b16 %v2094, %v2093
      %v2110 = vpack.c.b16 %v2096, %v2095
      %v2111 = vpack.c.b16 %v2098, %v2097
      %v2112 = vpack.c.b16 %v2100, %v2099
      %v2113 = vpack.c.b16 %v2102, %v2101
      %v2114 = vpack.c.b16 %v2104, %v2103
      %v2115 = vpack.c.b16 %v2106, %v2105
      %v2116 = vpack.c.b16 %v2108, %v2107
      %2125 = vmatprep.subr.bf16.mxu0 0
      %2126 = vmatpush1.bf16.msra.mxu0 %v2116
      %2127 = vmatprep.subr.bf16.mxu0 0
      %2128 = vmatpush1.bf16.msra.mxu0 %v2115
      %2129 = vmatprep.subr.bf16.mxu0 0
      %2130 = vmatpush1.bf16.msra.mxu0 %v2114
      %2131 = vmatprep.subr.bf16.mxu0 0
      %2132 = vmatpush1.bf16.msra.mxu0 %v2113
      %2133 = vmatprep.subr.bf16.mxu0 0
      %2134 = vmatpush1.bf16.msra.mxu0 %v2112
      %2135 = vmatprep.subr.bf16.mxu0 0
      %2136 = vmatpush1.bf16.msra.mxu0 %v2111
      %2137 = vmatprep.subr.bf16.mxu0 0
      %2138 = vmatpush1.bf16.msra.mxu0 %v2110
      %2139 = vmatprep.subr.bf16.mxu0 0
      %2140 = vmatpush1.bf16.msra.mxu0 %v2109
      %2141 = vmatprep.subr.bf16.mxu0 0
      %2142 = vmatpush2.bf16.msra.mxu0 0
      %2143 = vmatprep.subr.bf16.mxu0 0
      %2144 = vmatpush2.bf16.msra.mxu0 0
      %2145 = vmatprep.subr.bf16.mxu0 0
      %2146 = vmatpush2.bf16.msra.mxu0 0
      %2147 = vmatprep.subr.bf16.mxu0 0
      %2148 = vmatpush2.bf16.msra.mxu0 0
      %2149 = vmatprep.subr.bf16.mxu0 0
      %2150 = vmatpush2.bf16.msra.mxu0 0
      %2151 = vmatprep.subr.bf16.mxu0 0
      %2152 = vmatpush2.bf16.msra.mxu0 0
      %2153 = vmatprep.subr.bf16.mxu0 0
      %2154 = vmatpush2.bf16.msra.mxu0 0
      %2155 = vmatprep.subr.bf16.mxu0 0
      %2156 = vmatpush2.bf16.msra.mxu0 0
      %2157 = vmatprep.mubr.bf16.mxu0 0
      %2158 = vmatmul.mubr.bf16.gmra.mxu0 %v2042
      %v2159 = vpop.f32.mrf.mxu0
      %v2160 = vadd.f32 0.0, %v2159
      %v2161 = vpop.f32.mrf.mxu0
      %v2162 = vpop.f32.mrf.mxu0
      %v2163 = vadd.f32 0.0, %v2162
      %v2164 = vpop.f32.mrf.mxu0
      %2165 = vmatprep.mubr.bf16.mxu0 0
      %2166 = vmatmul.mubr.bf16.gmra.mxu0 %v2043
      %v2167 = vpop.f32.mrf.mxu0
      %v2168 = vadd.f32 0.0, %v2167
      %v2169 = vpop.f32.mrf.mxu0
      %v2170 = vpop.f32.mrf.mxu0
      %v2171 = vadd.f32 0.0, %v2170
      %v2172 = vpop.f32.mrf.mxu0
      %2173 = vmatprep.mubr.bf16.mxu0 0
      %2174 = vmatmul.mubr.bf16.gmra.mxu0 %v2044
      %v2175 = vpop.f32.mrf.mxu0
      %v2176 = vadd.f32 0.0, %v2175
      %v2177 = vpop.f32.mrf.mxu0
      %v2178 = vpop.f32.mrf.mxu0
      %v2179 = vadd.f32 0.0, %v2178
      %v2180 = vpop.f32.mrf.mxu0
      %2181 = vmatprep.mubr.bf16.mxu0 0
      %2182 = vmatmul.mubr.bf16.gmra.mxu0 %v2045
      %v2183 = vpop.f32.mrf.mxu0
      %v2184 = vadd.f32 0.0, %v2183
      %v2185 = vpop.f32.mrf.mxu0
      %v2186 = vpop.f32.mrf.mxu0
      %v2187 = vadd.f32 0.0, %v2186
      %v2188 = vpop.f32.mrf.mxu0
      %2189 = vmatprep.mubr.bf16.mxu0 0
      %2190 = vmatmul.mubr.bf16.gmra.mxu0 %v2046
      %v2191 = vpop.f32.mrf.mxu0
      %v2192 = vadd.f32 0.0, %v2191
      %v2193 = vpop.f32.mrf.mxu0
      %v2194 = vpop.f32.mrf.mxu0
      %v2195 = vadd.f32 0.0, %v2194
      %v2196 = vpop.f32.mrf.mxu0
      %2197 = vmatprep.mubr.bf16.mxu0 0
      %2198 = vmatmul.mubr.bf16.gmra.mxu0 %v2047
      %v2199 = vpop.f32.mrf.mxu0
      %v2200 = vadd.f32 0.0, %v2199
      %v2201 = vpop.f32.mrf.mxu0
      %v2202 = vpop.f32.mrf.mxu0
      %v2203 = vadd.f32 0.0, %v2202
      %v2204 = vpop.f32.mrf.mxu0
      %2205 = vmatprep.mubr.bf16.mxu0 0
      %2206 = vmatmul.mubr.bf16.gmra.mxu0 %v2048
      %v2207 = vpop.f32.mrf.mxu0
      %v2208 = vadd.f32 0.0, %v2207
      %v2209 = vpop.f32.mrf.mxu0
      %v2210 = vpop.f32.mrf.mxu0
      %v2211 = vadd.f32 0.0, %v2210
      %v2212 = vpop.f32.mrf.mxu0
      %2213 = vmatprep.mubr.bf16.mxu0 0
      %2214 = vmatmul.mubr.bf16.gmra.mxu0 %v2049
      %v2215 = vpop.f32.mrf.mxu0
      %v2216 = vadd.f32 0.0, %v2215
      %v2217 = vpop.f32.mrf.mxu0
      %v2218 = vpop.f32.mrf.mxu0
      %v2219 = vadd.f32 0.0, %v2218
      %v2220 = vpop.f32.mrf.mxu0
      %2221 = vmatprep.mubr.bf16.mxu0 0
      %2222 = vmatmul.mubr.bf16.gmra.mxu0 %v2050
      %v2223 = vpop.f32.mrf.mxu0
      %v2224 = vadd.f32 0.0, %v2223
      %v2225 = vpop.f32.mrf.mxu0
      %v2226 = vpop.f32.mrf.mxu0
      %v2227 = vadd.f32 0.0, %v2226
      %v2228 = vpop.f32.mrf.mxu0
      %2229 = vmatprep.mubr.bf16.mxu0 0
      %2230 = vmatmul.mubr.bf16.gmra.mxu0 %v2051
      %v2231 = vpop.f32.mrf.mxu0
      %v2232 = vadd.f32 0.0, %v2231
      %v2233 = vpop.f32.mrf.mxu0
      %v2234 = vpop.f32.mrf.mxu0
      %v2235 = vadd.f32 0.0, %v2234
      %v2236 = vpop.f32.mrf.mxu0
      %2237 = vmatprep.mubr.bf16.mxu0 0
      %2238 = vmatmul.mubr.bf16.gmra.mxu0 %v2052
      %v2239 = vpop.f32.mrf.mxu0
      %v2240 = vadd.f32 0.0, %v2239
      %v2241 = vpop.f32.mrf.mxu0
      %v2242 = vpop.f32.mrf.mxu0
      %v2243 = vadd.f32 0.0, %v2242
      %v2244 = vpop.f32.mrf.mxu0
      %2245 = vmatprep.mubr.bf16.mxu0 0
      %2246 = vmatmul.mubr.bf16.gmra.mxu0 %v2053
      %v2247 = vpop.f32.mrf.mxu0
      %v2248 = vadd.f32 0.0, %v2247
      %v2249 = vpop.f32.mrf.mxu0
      %v2250 = vpop.f32.mrf.mxu0
      %v2251 = vadd.f32 0.0, %v2250
      %v2252 = vpop.f32.mrf.mxu0
      %2253 = vmatprep.mubr.bf16.mxu0 0
      %2254 = vmatmul.mubr.bf16.gmra.mxu0 %v2054
      %v2255 = vpop.f32.mrf.mxu0
      %v2256 = vadd.f32 0.0, %v2255
      %v2257 = vpop.f32.mrf.mxu0
      %v2258 = vpop.f32.mrf.mxu0
      %v2259 = vadd.f32 0.0, %v2258
      %v2260 = vpop.f32.mrf.mxu0
      %2261 = vmatprep.mubr.bf16.mxu0 0
      %2262 = vmatmul.mubr.bf16.gmra.mxu0 %v2055
      %v2263 = vpop.f32.mrf.mxu0
      %v2264 = vadd.f32 0.0, %v2263
      %v2265 = vpop.f32.mrf.mxu0
      %v2266 = vpop.f32.mrf.mxu0
      %v2267 = vadd.f32 0.0, %v2266
      %v2268 = vpop.f32.mrf.mxu0
      %2269 = vmatprep.mubr.bf16.mxu0 0
      %2270 = vmatmul.mubr.bf16.gmra.mxu0 %v2056
      %v2271 = vpop.f32.mrf.mxu0
      %v2272 = vadd.f32 0.0, %v2271
      %v2273 = vpop.f32.mrf.mxu0
      %v2274 = vpop.f32.mrf.mxu0
      %v2275 = vadd.f32 0.0, %v2274
      %v2276 = vpop.f32.mrf.mxu0
      %2277 = vmatprep.mubr.bf16.mxu0 0
      %2278 = vmatmul.mubr.bf16.gmra.mxu0 %v2057
      %v2279 = vpop.f32.mrf.mxu0
      %v2280 = vadd.f32 0.0, %v2279
      %v2281 = vpop.f32.mrf.mxu0
      %v2282 = vpop.f32.mrf.mxu0
      %v2283 = vadd.f32 0.0, %v2282
      %v2284 = vpop.f32.mrf.mxu0
      %2285 = vmatprep.mubr.bf16.mxu0 0
      %2286 = vmatmul.mubr.bf16.gmra.mxu0 %v2058
      %v2287 = vpop.f32.mrf.mxu0
      %v2288 = vadd.f32 0.0, %v2287
      %v2289 = vpop.f32.mrf.mxu0
      %v2290 = vpop.f32.mrf.mxu0
      %v2291 = vadd.f32 0.0, %v2290
      %v2292 = vpop.f32.mrf.mxu0
      %2293 = vmatprep.mubr.bf16.mxu0 0
      %2294 = vmatmul.mubr.bf16.gmra.mxu0 %v2059
      %v2295 = vpop.f32.mrf.mxu0
      %v2296 = vadd.f32 0.0, %v2295
      %v2297 = vpop.f32.mrf.mxu0
      %v2298 = vpop.f32.mrf.mxu0
      %v2299 = vadd.f32 0.0, %v2298
      %v2300 = vpop.f32.mrf.mxu0
      %2301 = vdwg.mxu0
      %v2302 = vld [vmem:[#allocation4] sm:$0xff]
      %v2303 = vld [vmem:[#allocation4 + $0x8] sm:$0xff]
      %v2304 = vld [vmem:[#allocation4 + $0x10] sm:$0xff]
      %v2305 = vld [vmem:[#allocation4 + $0x18] sm:$0xff]
      %v2306 = vld [vmem:[#allocation4 + $0x20] sm:$0xff]
      %v2307 = vld [vmem:[#allocation4 + $0x28] sm:$0xff]
      %v2308 = vld [vmem:[#allocation4 + $0x30] sm:$0xff]
      %v2309 = vld [vmem:[#allocation4 + $0x38] sm:$0xff]
      %v2310 = vld [vmem:[#allocation4 + $0x40] sm:$0xff]
      %v2311 = vld [vmem:[#allocation4 + $0x48] sm:$0xff]
      %v2312 = vld [vmem:[#allocation4 + $0x50] sm:$0xff]
      %v2313 = vld [vmem:[#allocation4 + $0x58] sm:$0xff]
      %v2314 = vld [vmem:[#allocation4 + $0x60] sm:$0xff]
      %v2315 = vld [vmem:[#allocation4 + $0x68] sm:$0xff]
      %v2316 = vld [vmem:[#allocation4 + $0x70] sm:$0xff]
      %v2317 = vld [vmem:[#allocation4 + $0x78] sm:$0xff]
      %v2318 = vld [vmem:[#allocation4 + $0x80] sm:$0xff]
      %v2319 = vld [vmem:[#allocation4 + $0x88] sm:$0xff]
      %v2320 = vld [vmem:[#allocation4 + $0x90] sm:$0xff]
      %v2321 = vld [vmem:[#allocation4 + $0x98] sm:$0xff]
      %v2322 = vld [vmem:[#allocation4 + $0xa0] sm:$0xff]
      %v2323 = vld [vmem:[#allocation4 + $0xa8] sm:$0xff]
      %v2324 = vld [vmem:[#allocation4 + $0xb0] sm:$0xff]
      %v2325 = vld [vmem:[#allocation4 + $0xb8] sm:$0xff]
      %v2326 = vld [vmem:[#allocation4 + $0xc0] sm:$0xff]
      %v2327 = vld [vmem:[#allocation4 + $0xc8] sm:$0xff]
      %v2328 = vld [vmem:[#allocation4 + $0xd0] sm:$0xff]
      %v2329 = vld [vmem:[#allocation4 + $0xd8] sm:$0xff]
      %v2330 = vld [vmem:[#allocation4 + $0xe0] sm:$0xff]
      %v2331 = vld [vmem:[#allocation4 + $0xe8] sm:$0xff]
      %v2332 = vld [vmem:[#allocation4 + $0xf0] sm:$0xff]
      %v2333 = vld [vmem:[#allocation4 + $0xf8] sm:$0xff]
      %v2334 = vld [vmem:[#allocation4 + $0x100] sm:$0xff]
      %v2335 = vld [vmem:[#allocation4 + $0x108] sm:$0xff]
      %v2336 = vld [vmem:[#allocation4 + $0x110] sm:$0xff]
      %v2337 = vld [vmem:[#allocation4 + $0x118] sm:$0xff]
      %v2338 = vadd.f32 %v2302, %v2160
      %v2339 = vadd.f32 %v2303, %v2163
      %v2340 = vadd.f32 %v2304, %v2168
      %v2341 = vadd.f32 %v2305, %v2171
      %v2342 = vadd.f32 %v2306, %v2176
      %v2343 = vadd.f32 %v2307, %v2179
      %v2344 = vadd.f32 %v2308, %v2184
      %v2345 = vadd.f32 %v2309, %v2187
      %v2346 = vadd.f32 %v2310, %v2192
      %v2347 = vadd.f32 %v2311, %v2195
      %v2348 = vadd.f32 %v2312, %v2200
      %v2349 = vadd.f32 %v2313, %v2203
      %v2350 = vadd.f32 %v2314, %v2208
      %v2351 = vadd.f32 %v2315, %v2211
      %v2352 = vadd.f32 %v2316, %v2216
      %v2353 = vadd.f32 %v2317, %v2219
      %v2354 = vadd.f32 %v2318, %v2224
      %v2355 = vadd.f32 %v2319, %v2227
      %v2356 = vadd.f32 %v2320, %v2232
      %v2357 = vadd.f32 %v2321, %v2235
      %v2358 = vadd.f32 %v2322, %v2240
      %v2359 = vadd.f32 %v2323, %v2243
      %v2360 = vadd.f32 %v2324, %v2248
      %v2361 = vadd.f32 %v2325, %v2251
      %v2362 = vadd.f32 %v2326, %v2256
      %v2363 = vadd.f32 %v2327, %v2259
      %v2364 = vadd.f32 %v2328, %v2264
      %v2365 = vadd.f32 %v2329, %v2267
      %v2366 = vadd.f32 %v2330, %v2272
      %v2367 = vadd.f32 %v2331, %v2275
      %v2368 = vadd.f32 %v2332, %v2280
      %v2369 = vadd.f32 %v2333, %v2283
      %v2370 = vadd.f32 %v2334, %v2288
      %v2371 = vadd.f32 %v2335, %v2291
      %v2372 = vadd.f32 %v2336, %v2296
      %v2373 = vadd.f32 %v2337, %v2299
      %2374 = vst [vmem:[#allocation4] sm:$0xff] %v2338
      %2375 = vst [vmem:[#allocation4 + $0x8] sm:$0xff] %v2339
      %2376 = vst [vmem:[#allocation4 + $0x10] sm:$0xff] %v2340
      %2377 = vst [vmem:[#allocation4 + $0x18] sm:$0xff] %v2341
      %2378 = vst [vmem:[#allocation4 + $0x20] sm:$0xff] %v2342
      %2379 = vst [vmem:[#allocation4 + $0x28] sm:$0xff] %v2343
      %2380 = vst [vmem:[#allocation4 + $0x30] sm:$0xff] %v2344
      %2381 = vst [vmem:[#allocation4 + $0x38] sm:$0xff] %v2345
      %2382 = vst [vmem:[#allocation4 + $0x40] sm:$0xff] %v2346
      %2383 = vst [vmem:[#allocation4 + $0x48] sm:$0xff] %v2347
      %2384 = vst [vmem:[#allocation4 + $0x50] sm:$0xff] %v2348
      %2385 = vst [vmem:[#allocation4 + $0x58] sm:$0xff] %v2349
      %2386 = vst [vmem:[#allocation4 + $0x60] sm:$0xff] %v2350
      %2387 = vst [vmem:[#allocation4 + $0x68] sm:$0xff] %v2351
      %2388 = vst [vmem:[#allocation4 + $0x70] sm:$0xff] %v2352
      %2389 = vst [vmem:[#allocation4 + $0x78] sm:$0xff] %v2353
      %2390 = vst [vmem:[#allocation4 + $0x80] sm:$0xff] %v2354
      %2391 = vst [vmem:[#allocation4 + $0x88] sm:$0xff] %v2355
      %2392 = vst [vmem:[#allocation4 + $0x90] sm:$0xff] %v2356
      %2393 = vst [vmem:[#allocation4 + $0x98] sm:$0xff] %v2357
      %2394 = vst [vmem:[#allocation4 + $0xa0] sm:$0xff] %v2358
      %2395 = vst [vmem:[#allocation4 + $0xa8] sm:$0xff] %v2359
      %2396 = vst [vmem:[#allocation4 + $0xb0] sm:$0xff] %v2360
      %2397 = vst [vmem:[#allocation4 + $0xb8] sm:$0xff] %v2361
      %2398 = vst [vmem:[#allocation4 + $0xc0] sm:$0xff] %v2362
      %2399 = vst [vmem:[#allocation4 + $0xc8] sm:$0xff] %v2363
      %2400 = vst [vmem:[#allocation4 + $0xd0] sm:$0xff] %v2364
      %2401 = vst [vmem:[#allocation4 + $0xd8] sm:$0xff] %v2365
      %2402 = vst [vmem:[#allocation4 + $0xe0] sm:$0xff] %v2366
      %2403 = vst [vmem:[#allocation4 + $0xe8] sm:$0xff] %v2367
      %2404 = vst [vmem:[#allocation4 + $0xf0] sm:$0xff] %v2368
      %2405 = vst [vmem:[#allocation4 + $0xf8] sm:$0xff] %v2369
      %2406 = vst [vmem:[#allocation4 + $0x100] sm:$0xff] %v2370
      %2407 = vst [vmem:[#allocation4 + $0x108] sm:$0xff] %v2371
      %2408 = vst [vmem:[#allocation4 + $0x110] sm:$0xff] %v2372
      %2409 = vst [vmem:[#allocation4 + $0x118] sm:$0xff] %v2373
      %v2410 = vld [vmem:[#allocation2 + $0x13] sm:$0xff]
      %v2411 = vld [vmem:[#allocation2 + $0x1b] sm:$0xff]
      %v2412 = vld [vmem:[#allocation2 + $0x23] sm:$0xff]
      %v2413 = vld [vmem:[#allocation2 + $0x2b] sm:$0xff]
      %v2414 = vld [vmem:[#allocation2 + $0x33] sm:$0xff]
      %v2415 = vld [vmem:[#allocation2 + $0x3b] sm:$0xff]
      %v2416 = vld [vmem:[#allocation2 + $0x43] sm:$0xff]
      %v2417 = vld [vmem:[#allocation2 + $0x4b] sm:$0xff]
      %v2418 = vld [vmem:[#allocation2 + $0x53] sm:$0xff]
      %v2419 = vld [vmem:[#allocation2 + $0x5b] sm:$0xff]
      %v2420 = vld [vmem:[#allocation2 + $0x63] sm:$0xff]
      %v2421 = vld [vmem:[#allocation2 + $0x6b] sm:$0xff]
      %v2422 = vld [vmem:[#allocation2 + $0x73] sm:$0xff]
      %v2423 = vld [vmem:[#allocation2 + $0x7b] sm:$0xff]
      %v2424 = vld [vmem:[#allocation2 + $0x83] sm:$0xff]
      %v2425 = vld [vmem:[#allocation2 + $0x8b] sm:$0xff]
      %v2426 = vld [vmem:[#allocation2 + $0x93] sm:$0xff]
      %v2427 = vld [vmem:[#allocation2 + $0x9b] sm:$0xff]
      %v2428 = vld [vmem:[#allocation2 + $0xa3] sm:$0xff]
      %v2429 = vld [vmem:[#allocation2 + $0xab] sm:$0xff]
      %v2430 = vld [vmem:[#allocation2 + $0xb3] sm:$0xff]
      %v2431 = vld [vmem:[#allocation2 + $0xbb] sm:$0xff]
      %v2432 = vld [vmem:[#allocation2 + $0xc3] sm:$0xff]
      %v2433 = vld [vmem:[#allocation2 + $0xcb] sm:$0xff]
      %v2434 = vld [vmem:[#allocation2 + $0xd3] sm:$0xff]
      %v2435 = vld [vmem:[#allocation2 + $0xdb] sm:$0xff]
      %v2436 = vld [vmem:[#allocation2 + $0xe3] sm:$0xff]
      %v2437 = vld [vmem:[#allocation2 + $0xeb] sm:$0xff]
      %v2438 = vld [vmem:[#allocation2 + $0xf3] sm:$0xff]
      %v2439 = vld [vmem:[#allocation2 + $0xfb] sm:$0xff]
      %v2440 = vld [vmem:[#allocation2 + $0x103] sm:$0xff]
      %v2441 = vld [vmem:[#allocation2 + $0x10b] sm:$0xff]
      %v2442 = vld [vmem:[#allocation2 + $0x113] sm:$0xff]
      %v2443 = vld [vmem:[#allocation2 + $0x11b] sm:$0xff]
      %v2444 = vld [vmem:[#allocation2 + $0x123] sm:$0xff]
      %v2445 = vld [vmem:[#allocation2 + $0x12b] sm:$0xff]
      %v2446 = vpack.c.bf16 %v2411, %v2410
      %v2447 = vpack.c.bf16 %v2413, %v2412
      %v2448 = vpack.c.bf16 %v2415, %v2414
      %v2449 = vpack.c.bf16 %v2417, %v2416
      %v2450 = vpack.c.bf16 %v2419, %v2418
      %v2451 = vpack.c.bf16 %v2421, %v2420
      %v2452 = vpack.c.bf16 %v2423, %v2422
      %v2453 = vpack.c.bf16 %v2425, %v2424
      %v2454 = vpack.c.bf16 %v2427, %v2426
      %v2455 = vpack.c.bf16 %v2429, %v2428
      %v2456 = vpack.c.bf16 %v2431, %v2430
      %v2457 = vpack.c.bf16 %v2433, %v2432
      %v2458 = vpack.c.bf16 %v2435, %v2434
      %v2459 = vpack.c.bf16 %v2437, %v2436
      %v2460 = vpack.c.bf16 %v2439, %v2438
      %v2461 = vpack.c.bf16 %v2441, %v2440
      %v2462 = vpack.c.bf16 %v2443, %v2442
      %v2463 = vpack.c.bf16 %v2445, %v2444
      %s2464 = scalar_lea.vmem %s4, 256
      %v2465 = vld [vmem:[%s2464] sm:$0xf]
      %v2466 = vld [vmem:[%s2464 + $0x4] sm:$0xf]
      %v2467 = vld [vmem:[%s2464 + $0x8] sm:$0xf]
      %v2468 = vld [vmem:[%s2464 + $0xc] sm:$0xf]
      %v2469 = vld [vmem:[%s2464 + $0x10] sm:$0xf]
      %v2470 = vld [vmem:[%s2464 + $0x14] sm:$0xf]
      %v2471 = vld [vmem:[%s2464 + $0x18] sm:$0xf]
      %v2472 = vld [vmem:[%s2464 + $0x1c] sm:$0xf]
      %v2473 = vld [vmem:[%s2464 + $0x20] sm:$0xf]
      %v2474 = vld [vmem:[%s2464 + $0x24] sm:$0xf]
      %v2475 = vld [vmem:[%s2464 + $0x28] sm:$0xf]
      %v2476 = vld [vmem:[%s2464 + $0x2c] sm:$0xf]
      %v2477 = vld [vmem:[%s2464 + $0x30] sm:$0xf]
      %v2478 = vld [vmem:[%s2464 + $0x34] sm:$0xf]
      %v2479 = vld [vmem:[%s2464 + $0x38] sm:$0xf]
      %v2480 = vld [vmem:[%s2464 + $0x3c] sm:$0xf]
      %v2497 = vunpack.c.l.b16 %v2465
      %v2498 = vunpack.c.l.b16 %v2466
      %v2499 = vunpack.c.l.b16 %v2467
      %v2500 = vunpack.c.l.b16 %v2468
      %v2501 = vunpack.c.l.b16 %v2469
      %v2502 = vunpack.c.l.b16 %v2470
      %v2503 = vunpack.c.l.b16 %v2471
      %v2504 = vunpack.c.l.b16 %v2472
      %v2505 = vunpack.c.l.b16 %v2473
      %v2506 = vunpack.c.l.b16 %v2474
      %v2507 = vunpack.c.l.b16 %v2475
      %v2508 = vunpack.c.l.b16 %v2476
      %v2509 = vunpack.c.l.b16 %v2477
      %v2510 = vunpack.c.l.b16 %v2478
      %v2511 = vunpack.c.l.b16 %v2479
      %v2512 = vunpack.c.l.b16 %v2480
      %v2513 = vpack.c.b16 %v2498, %v2497
      %v2514 = vpack.c.b16 %v2500, %v2499
      %v2515 = vpack.c.b16 %v2502, %v2501
      %v2516 = vpack.c.b16 %v2504, %v2503
      %v2517 = vpack.c.b16 %v2506, %v2505
      %v2518 = vpack.c.b16 %v2508, %v2507
      %v2519 = vpack.c.b16 %v2510, %v2509
      %v2520 = vpack.c.b16 %v2512, %v2511
      %2529 = vmatprep.subr.bf16.mxu0 0
      %2530 = vmatpush1.bf16.msra.mxu0 %v2520
      %2531 = vmatprep.subr.bf16.mxu0 0
      %2532 = vmatpush1.bf16.msra.mxu0 %v2519
      %2533 = vmatprep.subr.bf16.mxu0 0
      %2534 = vmatpush1.bf16.msra.mxu0 %v2518
      %2535 = vmatprep.subr.bf16.mxu0 0
      %2536 = vmatpush1.bf16.msra.mxu0 %v2517
      %2537 = vmatprep.subr.bf16.mxu0 0
      %2538 = vmatpush1.bf16.msra.mxu0 %v2516
      %2539 = vmatprep.subr.bf16.mxu0 0
      %2540 = vmatpush1.bf16.msra.mxu0 %v2515
      %2541 = vmatprep.subr.bf16.mxu0 0
      %2542 = vmatpush1.bf16.msra.mxu0 %v2514
      %2543 = vmatprep.subr.bf16.mxu0 0
      %2544 = vmatpush1.bf16.msra.mxu0 %v2513
      %2545 = vmatprep.subr.bf16.mxu0 0
      %2546 = vmatpush2.bf16.msra.mxu0 0
      %2547 = vmatprep.subr.bf16.mxu0 0
      %2548 = vmatpush2.bf16.msra.mxu0 0
      %2549 = vmatprep.subr.bf16.mxu0 0
      %2550 = vmatpush2.bf16.msra.mxu0 0
      %2551 = vmatprep.subr.bf16.mxu0 0
      %2552 = vmatpush2.bf16.msra.mxu0 0
      %2553 = vmatprep.subr.bf16.mxu0 0
      %2554 = vmatpush2.bf16.msra.mxu0 0
      %2555 = vmatprep.subr.bf16.mxu0 0
      %2556 = vmatpush2.bf16.msra.mxu0 0
      %2557 = vmatprep.subr.bf16.mxu0 0
      %2558 = vmatpush2.bf16.msra.mxu0 0
      %2559 = vmatprep.subr.bf16.mxu0 0
      %2560 = vmatpush2.bf16.msra.mxu0 0
      %2561 = vmatprep.mubr.bf16.mxu0 0
      %2562 = vmatmul.mubr.bf16.gmra.mxu0 %v2446
      %v2563 = vpop.f32.mrf.mxu0
      %v2564 = vadd.f32 0.0, %v2563
      %v2565 = vpop.f32.mrf.mxu0
      %v2566 = vpop.f32.mrf.mxu0
      %v2567 = vadd.f32 0.0, %v2566
      %v2568 = vpop.f32.mrf.mxu0
      %2569 = vmatprep.mubr.bf16.mxu0 0
      %2570 = vmatmul.mubr.bf16.gmra.mxu0 %v2447
      %v2571 = vpop.f32.mrf.mxu0
      %v2572 = vadd.f32 0.0, %v2571
      %v2573 = vpop.f32.mrf.mxu0
      %v2574 = vpop.f32.mrf.mxu0
      %v2575 = vadd.f32 0.0, %v2574
      %v2576 = vpop.f32.mrf.mxu0
      %2577 = vmatprep.mubr.bf16.mxu0 0
      %2578 = vmatmul.mubr.bf16.gmra.mxu0 %v2448
      %v2579 = vpop.f32.mrf.mxu0
      %v2580 = vadd.f32 0.0, %v2579
      %v2581 = vpop.f32.mrf.mxu0
      %v2582 = vpop.f32.mrf.mxu0
      %v2583 = vadd.f32 0.0, %v2582
      %v2584 = vpop.f32.mrf.mxu0
      %2585 = vmatprep.mubr.bf16.mxu0 0
      %2586 = vmatmul.mubr.bf16.gmra.mxu0 %v2449
      %v2587 = vpop.f32.mrf.mxu0
      %v2588 = vadd.f32 0.0, %v2587
      %v2589 = vpop.f32.mrf.mxu0
      %v2590 = vpop.f32.mrf.mxu0
      %v2591 = vadd.f32 0.0, %v2590
      %v2592 = vpop.f32.mrf.mxu0
      %2593 = vmatprep.mubr.bf16.mxu0 0
      %2594 = vmatmul.mubr.bf16.gmra.mxu0 %v2450
      %v2595 = vpop.f32.mrf.mxu0
      %v2596 = vadd.f32 0.0, %v2595
      %v2597 = vpop.f32.mrf.mxu0
      %v2598 = vpop.f32.mrf.mxu0
      %v2599 = vadd.f32 0.0, %v2598
      %v2600 = vpop.f32.mrf.mxu0
      %2601 = vmatprep.mubr.bf16.mxu0 0
      %2602 = vmatmul.mubr.bf16.gmra.mxu0 %v2451
      %v2603 = vpop.f32.mrf.mxu0
      %v2604 = vadd.f32 0.0, %v2603
      %v2605 = vpop.f32.mrf.mxu0
      %v2606 = vpop.f32.mrf.mxu0
      %v2607 = vadd.f32 0.0, %v2606
      %v2608 = vpop.f32.mrf.mxu0
      %2609 = vmatprep.mubr.bf16.mxu0 0
      %2610 = vmatmul.mubr.bf16.gmra.mxu0 %v2452
      %v2611 = vpop.f32.mrf.mxu0
      %v2612 = vadd.f32 0.0, %v2611
      %v2613 = vpop.f32.mrf.mxu0
      %v2614 = vpop.f32.mrf.mxu0
      %v2615 = vadd.f32 0.0, %v2614
      %v2616 = vpop.f32.mrf.mxu0
      %2617 = vmatprep.mubr.bf16.mxu0 0
      %2618 = vmatmul.mubr.bf16.gmra.mxu0 %v2453
      %v2619 = vpop.f32.mrf.mxu0
      %v2620 = vadd.f32 0.0, %v2619
      %v2621 = vpop.f32.mrf.mxu0
      %v2622 = vpop.f32.mrf.mxu0
      %v2623 = vadd.f32 0.0, %v2622
      %v2624 = vpop.f32.mrf.mxu0
      %2625 = vmatprep.mubr.bf16.mxu0 0
      %2626 = vmatmul.mubr.bf16.gmra.mxu0 %v2454
      %v2627 = vpop.f32.mrf.mxu0
      %v2628 = vadd.f32 0.0, %v2627
      %v2629 = vpop.f32.mrf.mxu0
      %v2630 = vpop.f32.mrf.mxu0
      %v2631 = vadd.f32 0.0, %v2630
      %v2632 = vpop.f32.mrf.mxu0
      %2633 = vmatprep.mubr.bf16.mxu0 0
      %2634 = vmatmul.mubr.bf16.gmra.mxu0 %v2455
      %v2635 = vpop.f32.mrf.mxu0
      %v2636 = vadd.f32 0.0, %v2635
      %v2637 = vpop.f32.mrf.mxu0
      %v2638 = vpop.f32.mrf.mxu0
      %v2639 = vadd.f32 0.0, %v2638
      %v2640 = vpop.f32.mrf.mxu0
      %2641 = vmatprep.mubr.bf16.mxu0 0
      %2642 = vmatmul.mubr.bf16.gmra.mxu0 %v2456
      %v2643 = vpop.f32.mrf.mxu0
      %v2644 = vadd.f32 0.0, %v2643
      %v2645 = vpop.f32.mrf.mxu0
      %v2646 = vpop.f32.mrf.mxu0
      %v2647 = vadd.f32 0.0, %v2646
      %v2648 = vpop.f32.mrf.mxu0
      %2649 = vmatprep.mubr.bf16.mxu0 0
      %2650 = vmatmul.mubr.bf16.gmra.mxu0 %v2457
      %v2651 = vpop.f32.mrf.mxu0
      %v2652 = vadd.f32 0.0, %v2651
      %v2653 = vpop.f32.mrf.mxu0
      %v2654 = vpop.f32.mrf.mxu0
      %v2655 = vadd.f32 0.0, %v2654
      %v2656 = vpop.f32.mrf.mxu0
      %2657 = vmatprep.mubr.bf16.mxu0 0
      %2658 = vmatmul.mubr.bf16.gmra.mxu0 %v2458
      %v2659 = vpop.f32.mrf.mxu0
      %v2660 = vadd.f32 0.0, %v2659
      %v2661 = vpop.f32.mrf.mxu0
      %v2662 = vpop.f32.mrf.mxu0
      %v2663 = vadd.f32 0.0, %v2662
      %v2664 = vpop.f32.mrf.mxu0
      %2665 = vmatprep.mubr.bf16.mxu0 0
      %2666 = vmatmul.mubr.bf16.gmra.mxu0 %v2459
      %v2667 = vpop.f32.mrf.mxu0
      %v2668 = vadd.f32 0.0, %v2667
      %v2669 = vpop.f32.mrf.mxu0
      %v2670 = vpop.f32.mrf.mxu0
      %v2671 = vadd.f32 0.0, %v2670
      %v2672 = vpop.f32.mrf.mxu0
      %2673 = vmatprep.mubr.bf16.mxu0 0
      %2674 = vmatmul.mubr.bf16.gmra.mxu0 %v2460
      %v2675 = vpop.f32.mrf.mxu0
      %v2676 = vadd.f32 0.0, %v2675
      %v2677 = vpop.f32.mrf.mxu0
      %v2678 = vpop.f32.mrf.mxu0
      %v2679 = vadd.f32 0.0, %v2678
      %v2680 = vpop.f32.mrf.mxu0
      %2681 = vmatprep.mubr.bf16.mxu0 0
      %2682 = vmatmul.mubr.bf16.gmra.mxu0 %v2461
      %v2683 = vpop.f32.mrf.mxu0
      %v2684 = vadd.f32 0.0, %v2683
      %v2685 = vpop.f32.mrf.mxu0
      %v2686 = vpop.f32.mrf.mxu0
      %v2687 = vadd.f32 0.0, %v2686
      %v2688 = vpop.f32.mrf.mxu0
      %2689 = vmatprep.mubr.bf16.mxu0 0
      %2690 = vmatmul.mubr.bf16.gmra.mxu0 %v2462
      %v2691 = vpop.f32.mrf.mxu0
      %v2692 = vadd.f32 0.0, %v2691
      %v2693 = vpop.f32.mrf.mxu0
      %v2694 = vpop.f32.mrf.mxu0
      %v2695 = vadd.f32 0.0, %v2694
      %v2696 = vpop.f32.mrf.mxu0
      %2697 = vmatprep.mubr.bf16.mxu0 0
      %2698 = vmatmul.mubr.bf16.gmra.mxu0 %v2463
      %v2699 = vpop.f32.mrf.mxu0
      %v2700 = vadd.f32 0.0, %v2699
      %v2701 = vpop.f32.mrf.mxu0
      %v2702 = vpop.f32.mrf.mxu0
      %v2703 = vadd.f32 0.0, %v2702
      %v2704 = vpop.f32.mrf.mxu0
      %2705 = vdwg.mxu0
      %v2706 = vld [vmem:[#allocation4] sm:$0xff]
      %v2707 = vld [vmem:[#allocation4 + $0x8] sm:$0xff]
      %v2708 = vld [vmem:[#allocation4 + $0x10] sm:$0xff]
      %v2709 = vld [vmem:[#allocation4 + $0x18] sm:$0xff]
      %v2710 = vld [vmem:[#allocation4 + $0x20] sm:$0xff]
      %v2711 = vld [vmem:[#allocation4 + $0x28] sm:$0xff]
      %v2712 = vld [vmem:[#allocation4 + $0x30] sm:$0xff]
      %v2713 = vld [vmem:[#allocation4 + $0x38] sm:$0xff]
      %v2714 = vld [vmem:[#allocation4 + $0x40] sm:$0xff]
      %v2715 = vld [vmem:[#allocation4 + $0x48] sm:$0xff]
      %v2716 = vld [vmem:[#allocation4 + $0x50] sm:$0xff]
      %v2717 = vld [vmem:[#allocation4 + $0x58] sm:$0xff]
      %v2718 = vld [vmem:[#allocation4 + $0x60] sm:$0xff]
      %v2719 = vld [vmem:[#allocation4 + $0x68] sm:$0xff]
      %v2720 = vld [vmem:[#allocation4 + $0x70] sm:$0xff]
      %v2721 = vld [vmem:[#allocation4 + $0x78] sm:$0xff]
      %v2722 = vld [vmem:[#allocation4 + $0x80] sm:$0xff]
      %v2723 = vld [vmem:[#allocation4 + $0x88] sm:$0xff]
      %v2724 = vld [vmem:[#allocation4 + $0x90] sm:$0xff]
      %v2725 = vld [vmem:[#allocation4 + $0x98] sm:$0xff]
      %v2726 = vld [vmem:[#allocation4 + $0xa0] sm:$0xff]
      %v2727 = vld [vmem:[#allocation4 + $0xa8] sm:$0xff]
      %v2728 = vld [vmem:[#allocation4 + $0xb0] sm:$0xff]
      %v2729 = vld [vmem:[#allocation4 + $0xb8] sm:$0xff]
      %v2730 = vld [vmem:[#allocation4 + $0xc0] sm:$0xff]
      %v2731 = vld [vmem:[#allocation4 + $0xc8] sm:$0xff]
      %v2732 = vld [vmem:[#allocation4 + $0xd0] sm:$0xff]
      %v2733 = vld [vmem:[#allocation4 + $0xd8] sm:$0xff]
      %v2734 = vld [vmem:[#allocation4 + $0xe0] sm:$0xff]
      %v2735 = vld [vmem:[#allocation4 + $0xe8] sm:$0xff]
      %v2736 = vld [vmem:[#allocation4 + $0xf0] sm:$0xff]
      %v2737 = vld [vmem:[#allocation4 + $0xf8] sm:$0xff]
      %v2738 = vld [vmem:[#allocation4 + $0x100] sm:$0xff]
      %v2739 = vld [vmem:[#allocation4 + $0x108] sm:$0xff]
      %v2740 = vld [vmem:[#allocation4 + $0x110] sm:$0xff]
      %v2741 = vld [vmem:[#allocation4 + $0x118] sm:$0xff]
      %v2742 = vadd.f32 %v2706, %v2564
      %v2743 = vadd.f32 %v2707, %v2567
      %v2744 = vadd.f32 %v2708, %v2572
      %v2745 = vadd.f32 %v2709, %v2575
      %v2746 = vadd.f32 %v2710, %v2580
      %v2747 = vadd.f32 %v2711, %v2583
      %v2748 = vadd.f32 %v2712, %v2588
      %v2749 = vadd.f32 %v2713, %v2591
      %v2750 = vadd.f32 %v2714, %v2596
      %v2751 = vadd.f32 %v2715, %v2599
      %v2752 = vadd.f32 %v2716, %v2604
      %v2753 = vadd.f32 %v2717, %v2607
      %v2754 = vadd.f32 %v2718, %v2612
      %v2755 = vadd.f32 %v2719, %v2615
      %v2756 = vadd.f32 %v2720, %v2620
      %v2757 = vadd.f32 %v2721, %v2623
      %v2758 = vadd.f32 %v2722, %v2628
      %v2759 = vadd.f32 %v2723, %v2631
      %v2760 = vadd.f32 %v2724, %v2636
      %v2761 = vadd.f32 %v2725, %v2639
      %v2762 = vadd.f32 %v2726, %v2644
      %v2763 = vadd.f32 %v2727, %v2647
      %v2764 = vadd.f32 %v2728, %v2652
      %v2765 = vadd.f32 %v2729, %v2655
      %v2766 = vadd.f32 %v2730, %v2660
      %v2767 = vadd.f32 %v2731, %v2663
      %v2768 = vadd.f32 %v2732, %v2668
      %v2769 = vadd.f32 %v2733, %v2671
      %v2770 = vadd.f32 %v2734, %v2676
      %v2771 = vadd.f32 %v2735, %v2679
      %v2772 = vadd.f32 %v2736, %v2684
      %v2773 = vadd.f32 %v2737, %v2687
      %v2774 = vadd.f32 %v2738, %v2692
      %v2775 = vadd.f32 %v2739, %v2695
      %v2776 = vadd.f32 %v2740, %v2700
      %v2777 = vadd.f32 %v2741, %v2703
      %2778 = vst [vmem:[#allocation4] sm:$0xff] %v2742
      %2779 = vst [vmem:[#allocation4 + $0x8] sm:$0xff] %v2743
      %2780 = vst [vmem:[#allocation4 + $0x10] sm:$0xff] %v2744
      %2781 = vst [vmem:[#allocation4 + $0x18] sm:$0xff] %v2745
      %2782 = vst [vmem:[#allocation4 + $0x20] sm:$0xff] %v2746
      %2783 = vst [vmem:[#allocation4 + $0x28] sm:$0xff] %v2747
      %2784 = vst [vmem:[#allocation4 + $0x30] sm:$0xff] %v2748
      %2785 = vst [vmem:[#allocation4 + $0x38] sm:$0xff] %v2749
      %2786 = vst [vmem:[#allocation4 + $0x40] sm:$0xff] %v2750
      %2787 = vst [vmem:[#allocation4 + $0x48] sm:$0xff] %v2751
      %2788 = vst [vmem:[#allocation4 + $0x50] sm:$0xff] %v2752
      %2789 = vst [vmem:[#allocation4 + $0x58] sm:$0xff] %v2753
      %2790 = vst [vmem:[#allocation4 + $0x60] sm:$0xff] %v2754
      %2791 = vst [vmem:[#allocation4 + $0x68] sm:$0xff] %v2755
      %2792 = vst [vmem:[#allocation4 + $0x70] sm:$0xff] %v2756
      %2793 = vst [vmem:[#allocation4 + $0x78] sm:$0xff] %v2757
      %2794 = vst [vmem:[#allocation4 + $0x80] sm:$0xff] %v2758
      %2795 = vst [vmem:[#allocation4 + $0x88] sm:$0xff] %v2759
      %2796 = vst [vmem:[#allocation4 + $0x90] sm:$0xff] %v2760
      %2797 = vst [vmem:[#allocation4 + $0x98] sm:$0xff] %v2761
      %2798 = vst [vmem:[#allocation4 + $0xa0] sm:$0xff] %v2762
      %2799 = vst [vmem:[#allocation4 + $0xa8] sm:$0xff] %v2763
      %2800 = vst [vmem:[#allocation4 + $0xb0] sm:$0xff] %v2764
      %2801 = vst [vmem:[#allocation4 + $0xb8] sm:$0xff] %v2765
      %2802 = vst [vmem:[#allocation4 + $0xc0] sm:$0xff] %v2766
      %2803 = vst [vmem:[#allocation4 + $0xc8] sm:$0xff] %v2767
      %2804 = vst [vmem:[#allocation4 + $0xd0] sm:$0xff] %v2768
      %2805 = vst [vmem:[#allocation4 + $0xd8] sm:$0xff] %v2769
      %2806 = vst [vmem:[#allocation4 + $0xe0] sm:$0xff] %v2770
      %2807 = vst [vmem:[#allocation4 + $0xe8] sm:$0xff] %v2771
      %2808 = vst [vmem:[#allocation4 + $0xf0] sm:$0xff] %v2772
      %2809 = vst [vmem:[#allocation4 + $0xf8] sm:$0xff] %v2773
      %2810 = vst [vmem:[#allocation4 + $0x100] sm:$0xff] %v2774
      %2811 = vst [vmem:[#allocation4 + $0x108] sm:$0xff] %v2775
      %2812 = vst [vmem:[#allocation4 + $0x110] sm:$0xff] %v2776
      %2813 = vst [vmem:[#allocation4 + $0x118] sm:$0xff] %v2777
      %v2814 = vld [vmem:[#allocation2 + $0x14] sm:$0xff]
      %v2815 = vld [vmem:[#allocation2 + $0x1c] sm:$0xff]
      %v2816 = vld [vmem:[#allocation2 + $0x24] sm:$0xff]
      %v2817 = vld [vmem:[#allocation2 + $0x2c] sm:$0xff]
      %v2818 = vld [vmem:[#allocation2 + $0x34] sm:$0xff]
      %v2819 = vld [vmem:[#allocation2 + $0x3c] sm:$0xff]
      %v2820 = vld [vmem:[#allocation2 + $0x44] sm:$0xff]
      %v2821 = vld [vmem:[#allocation2 + $0x4c] sm:$0xff]
      %v2822 = vld [vmem:[#allocation2 + $0x54] sm:$0xff]
      %v2823 = vld [vmem:[#allocation2 + $0x5c] sm:$0xff]
      %v2824 = vld [vmem:[#allocation2 + $0x64] sm:$0xff]
      %v2825 = vld [vmem:[#allocation2 + $0x6c] sm:$0xff]
      %v2826 = vld [vmem:[#allocation2 + $0x74] sm:$0xff]
      %v2827 = vld [vmem:[#allocation2 + $0x7c] sm:$0xff]
      %v2828 = vld [vmem:[#allocation2 + $0x84] sm:$0xff]
      %v2829 = vld [vmem:[#allocation2 + $0x8c] sm:$0xff]
      %v2830 = vld [vmem:[#allocation2 + $0x94] sm:$0xff]
      %v2831 = vld [vmem:[#allocation2 + $0x9c] sm:$0xff]
      %v2832 = vld [vmem:[#allocation2 + $0xa4] sm:$0xff]
      %v2833 = vld [vmem:[#allocation2 + $0xac] sm:$0xff]
      %v2834 = vld [vmem:[#allocation2 + $0xb4] sm:$0xff]
      %v2835 = vld [vmem:[#allocation2 + $0xbc] sm:$0xff]
      %v2836 = vld [vmem:[#allocation2 + $0xc4] sm:$0xff]
      %v2837 = vld [vmem:[#allocation2 + $0xcc] sm:$0xff]
      %v2838 = vld [vmem:[#allocation2 + $0xd4] sm:$0xff]
      %v2839 = vld [vmem:[#allocation2 + $0xdc] sm:$0xff]
      %v2840 = vld [vmem:[#allocation2 + $0xe4] sm:$0xff]
      %v2841 = vld [vmem:[#allocation2 + $0xec] sm:$0xff]
      %v2842 = vld [vmem:[#allocation2 + $0xf4] sm:$0xff]
      %v2843 = vld [vmem:[#allocation2 + $0xfc] sm:$0xff]
      %v2844 = vld [vmem:[#allocation2 + $0x104] sm:$0xff]
      %v2845 = vld [vmem:[#allocation2 + $0x10c] sm:$0xff]
      %v2846 = vld [vmem:[#allocation2 + $0x114] sm:$0xff]
      %v2847 = vld [vmem:[#allocation2 + $0x11c] sm:$0xff]
      %v2848 = vld [vmem:[#allocation2 + $0x124] sm:$0xff]
      %v2849 = vld [vmem:[#allocation2 + $0x12c] sm:$0xff]
      %v2850 = vpack.c.bf16 %v2815, %v2814
      %v2851 = vpack.c.bf16 %v2817, %v2816
      %v2852 = vpack.c.bf16 %v2819, %v2818
      %v2853 = vpack.c.bf16 %v2821, %v2820
      %v2854 = vpack.c.bf16 %v2823, %v2822
      %v2855 = vpack.c.bf16 %v2825, %v2824
      %v2856 = vpack.c.bf16 %v2827, %v2826
      %v2857 = vpack.c.bf16 %v2829, %v2828
      %v2858 = vpack.c.bf16 %v2831, %v2830
      %v2859 = vpack.c.bf16 %v2833, %v2832
      %v2860 = vpack.c.bf16 %v2835, %v2834
      %v2861 = vpack.c.bf16 %v2837, %v2836
      %v2862 = vpack.c.bf16 %v2839, %v2838
      %v2863 = vpack.c.bf16 %v2841, %v2840
      %v2864 = vpack.c.bf16 %v2843, %v2842
      %v2865 = vpack.c.bf16 %v2845, %v2844
      %v2866 = vpack.c.bf16 %v2847, %v2846
      %v2867 = vpack.c.bf16 %v2849, %v2848
      %s2868 = scalar_lea.vmem %s4, 320
      %v2869 = vld [vmem:[%s2868] sm:$0xf]
      %v2870 = vld [vmem:[%s2868 + $0x4] sm:$0xf]
      %v2871 = vld [vmem:[%s2868 + $0x8] sm:$0xf]
      %v2872 = vld [vmem:[%s2868 + $0xc] sm:$0xf]
      %v2873 = vld [vmem:[%s2868 + $0x10] sm:$0xf]
      %v2874 = vld [vmem:[%s2868 + $0x14] sm:$0xf]
      %v2875 = vld [vmem:[%s2868 + $0x18] sm:$0xf]
      %v2876 = vld [vmem:[%s2868 + $0x1c] sm:$0xf]
      %v2877 = vld [vmem:[%s2868 + $0x20] sm:$0xf]
      %v2878 = vld [vmem:[%s2868 + $0x24] sm:$0xf]
      %v2879 = vld [vmem:[%s2868 + $0x28] sm:$0xf]
      %v2880 = vld [vmem:[%s2868 + $0x2c] sm:$0xf]
      %v2881 = vld [vmem:[%s2868 + $0x30] sm:$0xf]
      %v2882 = vld [vmem:[%s2868 + $0x34] sm:$0xf]
      %v2883 = vld [vmem:[%s2868 + $0x38] sm:$0xf]
      %v2884 = vld [vmem:[%s2868 + $0x3c] sm:$0xf]
      %v2901 = vunpack.c.l.b16 %v2869
      %v2902 = vunpack.c.l.b16 %v2870
      %v2903 = vunpack.c.l.b16 %v2871
      %v2904 = vunpack.c.l.b16 %v2872
      %v2905 = vunpack.c.l.b16 %v2873
      %v2906 = vunpack.c.l.b16 %v2874
      %v2907 = vunpack.c.l.b16 %v2875
      %v2908 = vunpack.c.l.b16 %v2876
      %v2909 = vunpack.c.l.b16 %v2877
      %v2910 = vunpack.c.l.b16 %v2878
      %v2911 = vunpack.c.l.b16 %v2879
      %v2912 = vunpack.c.l.b16 %v2880
      %v2913 = vunpack.c.l.b16 %v2881
      %v2914 = vunpack.c.l.b16 %v2882
      %v2915 = vunpack.c.l.b16 %v2883
      %v2916 = vunpack.c.l.b16 %v2884
      %v2917 = vpack.c.b16 %v2902, %v2901
      %v2918 = vpack.c.b16 %v2904, %v2903
      %v2919 = vpack.c.b16 %v2906, %v2905
      %v2920 = vpack.c.b16 %v2908, %v2907
      %v2921 = vpack.c.b16 %v2910, %v2909
      %v2922 = vpack.c.b16 %v2912, %v2911
      %v2923 = vpack.c.b16 %v2914, %v2913
      %v2924 = vpack.c.b16 %v2916, %v2915
      %2933 = vmatprep.subr.bf16.mxu0 0
      %2934 = vmatpush1.bf16.msra.mxu0 %v2924
      %2935 = vmatprep.subr.bf16.mxu0 0
      %2936 = vmatpush1.bf16.msra.mxu0 %v2923
      %2937 = vmatprep.subr.bf16.mxu0 0
      %2938 = vmatpush1.bf16.msra.mxu0 %v2922
      %2939 = vmatprep.subr.bf16.mxu0 0
      %2940 = vmatpush1.bf16.msra.mxu0 %v2921
      %2941 = vmatprep.subr.bf16.mxu0 0
      %2942 = vmatpush1.bf16.msra.mxu0 %v2920
      %2943 = vmatprep.subr.bf16.mxu0 0
      %2944 = vmatpush1.bf16.msra.mxu0 %v2919
      %2945 = vmatprep.subr.bf16.mxu0 0
      %2946 = vmatpush1.bf16.msra.mxu0 %v2918
      %2947 = vmatprep.subr.bf16.mxu0 0
      %2948 = vmatpush1.bf16.msra.mxu0 %v2917
      %2949 = vmatprep.subr.bf16.mxu0 0
      %2950 = vmatpush2.bf16.msra.mxu0 0
      %2951 = vmatprep.subr.bf16.mxu0 0
      %2952 = vmatpush2.bf16.msra.mxu0 0
      %2953 = vmatprep.subr.bf16.mxu0 0
      %2954 = vmatpush2.bf16.msra.mxu0 0
      %2955 = vmatprep.subr.bf16.mxu0 0
      %2956 = vmatpush2.bf16.msra.mxu0 0
      %2957 = vmatprep.subr.bf16.mxu0 0
      %2958 = vmatpush2.bf16.msra.mxu0 0
      %2959 = vmatprep.subr.bf16.mxu0 0
      %2960 = vmatpush2.bf16.msra.mxu0 0
      %2961 = vmatprep.subr.bf16.mxu0 0
      %2962 = vmatpush2.bf16.msra.mxu0 0
      %2963 = vmatprep.subr.bf16.mxu0 0
      %2964 = vmatpush2.bf16.msra.mxu0 0
      %2965 = vmatprep.mubr.bf16.mxu0 0
      %2966 = vmatmul.mubr.bf16.gmra.mxu0 %v2850
      %v2967 = vpop.f32.mrf.mxu0
      %v2968 = vadd.f32 0.0, %v2967
      %v2969 = vpop.f32.mrf.mxu0
      %v2970 = vpop.f32.mrf.mxu0
      %v2971 = vadd.f32 0.0, %v2970
      %v2972 = vpop.f32.mrf.mxu0
      %2973 = vmatprep.mubr.bf16.mxu0 0
      %2974 = vmatmul.mubr.bf16.gmra.mxu0 %v2851
      %v2975 = vpop.f32.mrf.mxu0
      %v2976 = vadd.f32 0.0, %v2975
      %v2977 = vpop.f32.mrf.mxu0
      %v2978 = vpop.f32.mrf.mxu0
      %v2979 = vadd.f32 0.0, %v2978
      %v2980 = vpop.f32.mrf.mxu0
      %2981 = vmatprep.mubr.bf16.mxu0 0
      %2982 = vmatmul.mubr.bf16.gmra.mxu0 %v2852
      %v2983 = vpop.f32.mrf.mxu0
      %v2984 = vadd.f32 0.0, %v2983
      %v2985 = vpop.f32.mrf.mxu0
      %v2986 = vpop.f32.mrf.mxu0
      %v2987 = vadd.f32 0.0, %v2986
      %v2988 = vpop.f32.mrf.mxu0
      %2989 = vmatprep.mubr.bf16.mxu0 0
      %2990 = vmatmul.mubr.bf16.gmra.mxu0 %v2853
      %v2991 = vpop.f32.mrf.mxu0
      %v2992 = vadd.f32 0.0, %v2991
      %v2993 = vpop.f32.mrf.mxu0
      %v2994 = vpop.f32.mrf.mxu0
      %v2995 = vadd.f32 0.0, %v2994
      %v2996 = vpop.f32.mrf.mxu0
      %2997 = vmatprep.mubr.bf16.mxu0 0
      %2998 = vmatmul.mubr.bf16.gmra.mxu0 %v2854
      %v2999 = vpop.f32.mrf.mxu0
      %v3000 = vadd.f32 0.0, %v2999
      %v3001 = vpop.f32.mrf.mxu0
      %v3002 = vpop.f32.mrf.mxu0
      %v3003 = vadd.f32 0.0, %v3002
      %v3004 = vpop.f32.mrf.mxu0
      %3005 = vmatprep.mubr.bf16.mxu0 0
      %3006 = vmatmul.mubr.bf16.gmra.mxu0 %v2855
      %v3007 = vpop.f32.mrf.mxu0
      %v3008 = vadd.f32 0.0, %v3007
      %v3009 = vpop.f32.mrf.mxu0
      %v3010 = vpop.f32.mrf.mxu0
      %v3011 = vadd.f32 0.0, %v3010
      %v3012 = vpop.f32.mrf.mxu0
      %3013 = vmatprep.mubr.bf16.mxu0 0
      %3014 = vmatmul.mubr.bf16.gmra.mxu0 %v2856
      %v3015 = vpop.f32.mrf.mxu0
      %v3016 = vadd.f32 0.0, %v3015
      %v3017 = vpop.f32.mrf.mxu0
      %v3018 = vpop.f32.mrf.mxu0
      %v3019 = vadd.f32 0.0, %v3018
      %v3020 = vpop.f32.mrf.mxu0
      %3021 = vmatprep.mubr.bf16.mxu0 0
      %3022 = vmatmul.mubr.bf16.gmra.mxu0 %v2857
      %v3023 = vpop.f32.mrf.mxu0
      %v3024 = vadd.f32 0.0, %v3023
      %v3025 = vpop.f32.mrf.mxu0
      %v3026 = vpop.f32.mrf.mxu0
      %v3027 = vadd.f32 0.0, %v3026
      %v3028 = vpop.f32.mrf.mxu0
      %3029 = vmatprep.mubr.bf16.mxu0 0
      %3030 = vmatmul.mubr.bf16.gmra.mxu0 %v2858
      %v3031 = vpop.f32.mrf.mxu0
      %v3032 = vadd.f32 0.0, %v3031
      %v3033 = vpop.f32.mrf.mxu0
      %v3034 = vpop.f32.mrf.mxu0
      %v3035 = vadd.f32 0.0, %v3034
      %v3036 = vpop.f32.mrf.mxu0
      %3037 = vmatprep.mubr.bf16.mxu0 0
      %3038 = vmatmul.mubr.bf16.gmra.mxu0 %v2859
      %v3039 = vpop.f32.mrf.mxu0
      %v3040 = vadd.f32 0.0, %v3039
      %v3041 = vpop.f32.mrf.mxu0
      %v3042 = vpop.f32.mrf.mxu0
      %v3043 = vadd.f32 0.0, %v3042
      %v3044 = vpop.f32.mrf.mxu0
      %3045 = vmatprep.mubr.bf16.mxu0 0
      %3046 = vmatmul.mubr.bf16.gmra.mxu0 %v2860
      %v3047 = vpop.f32.mrf.mxu0
      %v3048 = vadd.f32 0.0, %v3047
      %v3049 = vpop.f32.mrf.mxu0
      %v3050 = vpop.f32.mrf.mxu0
      %v3051 = vadd.f32 0.0, %v3050
      %v3052 = vpop.f32.mrf.mxu0
      %3053 = vmatprep.mubr.bf16.mxu0 0
      %3054 = vmatmul.mubr.bf16.gmra.mxu0 %v2861
      %v3055 = vpop.f32.mrf.mxu0
      %v3056 = vadd.f32 0.0, %v3055
      %v3057 = vpop.f32.mrf.mxu0
      %v3058 = vpop.f32.mrf.mxu0
      %v3059 = vadd.f32 0.0, %v3058
      %v3060 = vpop.f32.mrf.mxu0
      %3061 = vmatprep.mubr.bf16.mxu0 0
      %3062 = vmatmul.mubr.bf16.gmra.mxu0 %v2862
      %v3063 = vpop.f32.mrf.mxu0
      %v3064 = vadd.f32 0.0, %v3063
      %v3065 = vpop.f32.mrf.mxu0
      %v3066 = vpop.f32.mrf.mxu0
      %v3067 = vadd.f32 0.0, %v3066
      %v3068 = vpop.f32.mrf.mxu0
      %3069 = vmatprep.mubr.bf16.mxu0 0
      %3070 = vmatmul.mubr.bf16.gmra.mxu0 %v2863
      %v3071 = vpop.f32.mrf.mxu0
      %v3072 = vadd.f32 0.0, %v3071
      %v3073 = vpop.f32.mrf.mxu0
      %v3074 = vpop.f32.mrf.mxu0
      %v3075 = vadd.f32 0.0, %v3074
      %v3076 = vpop.f32.mrf.mxu0
      %3077 = vmatprep.mubr.bf16.mxu0 0
      %3078 = vmatmul.mubr.bf16.gmra.mxu0 %v2864
      %v3079 = vpop.f32.mrf.mxu0
      %v3080 = vadd.f32 0.0, %v3079
      %v3081 = vpop.f32.mrf.mxu0
      %v3082 = vpop.f32.mrf.mxu0
      %v3083 = vadd.f32 0.0, %v3082
      %v3084 = vpop.f32.mrf.mxu0
      %3085 = vmatprep.mubr.bf16.mxu0 0
      %3086 = vmatmul.mubr.bf16.gmra.mxu0 %v2865
      %v3087 = vpop.f32.mrf.mxu0
      %v3088 = vadd.f32 0.0, %v3087
      %v3089 = vpop.f32.mrf.mxu0
      %v3090 = vpop.f32.mrf.mxu0
      %v3091 = vadd.f32 0.0, %v3090
      %v3092 = vpop.f32.mrf.mxu0
      %3093 = vmatprep.mubr.bf16.mxu0 0
      %3094 = vmatmul.mubr.bf16.gmra.mxu0 %v2866
      %v3095 = vpop.f32.mrf.mxu0
      %v3096 = vadd.f32 0.0, %v3095
      %v3097 = vpop.f32.mrf.mxu0
      %v3098 = vpop.f32.mrf.mxu0
      %v3099 = vadd.f32 0.0, %v3098
      %v3100 = vpop.f32.mrf.mxu0
      %3101 = vmatprep.mubr.bf16.mxu0 0
      %3102 = vmatmul.mubr.bf16.gmra.mxu0 %v2867
      %v3103 = vpop.f32.mrf.mxu0
      %v3104 = vadd.f32 0.0, %v3103
      %v3105 = vpop.f32.mrf.mxu0
      %v3106 = vpop.f32.mrf.mxu0
      %v3107 = vadd.f32 0.0, %v3106
      %v3108 = vpop.f32.mrf.mxu0
      %3109 = vdwg.mxu0
      %v3110 = vld [vmem:[#allocation4] sm:$0xff]
      %v3111 = vld [vmem:[#allocation4 + $0x8] sm:$0xff]
      %v3112 = vld [vmem:[#allocation4 + $0x10] sm:$0xff]
      %v3113 = vld [vmem:[#allocation4 + $0x18] sm:$0xff]
      %v3114 = vld [vmem:[#allocation4 + $0x20] sm:$0xff]
      %v3115 = vld [vmem:[#allocation4 + $0x28] sm:$0xff]
      %v3116 = vld [vmem:[#allocation4 + $0x30] sm:$0xff]
      %v3117 = vld [vmem:[#allocation4 + $0x38] sm:$0xff]
      %v3118 = vld [vmem:[#allocation4 + $0x40] sm:$0xff]
      %v3119 = vld [vmem:[#allocation4 + $0x48] sm:$0xff]
      %v3120 = vld [vmem:[#allocation4 + $0x50] sm:$0xff]
      %v3121 = vld [vmem:[#allocation4 + $0x58] sm:$0xff]
      %v3122 = vld [vmem:[#allocation4 + $0x60] sm:$0xff]
      %v3123 = vld [vmem:[#allocation4 + $0x68] sm:$0xff]
      %v3124 = vld [vmem:[#allocation4 + $0x70] sm:$0xff]
      %v3125 = vld [vmem:[#allocation4 + $0x78] sm:$0xff]
      %v3126 = vld [vmem:[#allocation4 + $0x80] sm:$0xff]
      %v3127 = vld [vmem:[#allocation4 + $0x88] sm:$0xff]
      %v3128 = vld [vmem:[#allocation4 + $0x90] sm:$0xff]
      %v3129 = vld [vmem:[#allocation4 + $0x98] sm:$0xff]
      %v3130 = vld [vmem:[#allocation4 + $0xa0] sm:$0xff]
      %v3131 = vld [vmem:[#allocation4 + $0xa8] sm:$0xff]
      %v3132 = vld [vmem:[#allocation4 + $0xb0] sm:$0xff]
      %v3133 = vld [vmem:[#allocation4 + $0xb8] sm:$0xff]
      %v3134 = vld [vmem:[#allocation4 + $0xc0] sm:$0xff]
      %v3135 = vld [vmem:[#allocation4 + $0xc8] sm:$0xff]
      %v3136 = vld [vmem:[#allocation4 + $0xd0] sm:$0xff]
      %v3137 = vld [vmem:[#allocation4 + $0xd8] sm:$0xff]
      %v3138 = vld [vmem:[#allocation4 + $0xe0] sm:$0xff]
      %v3139 = vld [vmem:[#allocation4 + $0xe8] sm:$0xff]
      %v3140 = vld [vmem:[#allocation4 + $0xf0] sm:$0xff]
      %v3141 = vld [vmem:[#allocation4 + $0xf8] sm:$0xff]
      %v3142 = vld [vmem:[#allocation4 + $0x100] sm:$0xff]
      %v3143 = vld [vmem:[#allocation4 + $0x108] sm:$0xff]
      %v3144 = vld [vmem:[#allocation4 + $0x110] sm:$0xff]
      %v3145 = vld [vmem:[#allocation4 + $0x118] sm:$0xff]
      %v3146 = vadd.f32 %v3110, %v2968
      %v3147 = vadd.f32 %v3111, %v2971
      %v3148 = vadd.f32 %v3112, %v2976
      %v3149 = vadd.f32 %v3113, %v2979
      %v3150 = vadd.f32 %v3114, %v2984
      %v3151 = vadd.f32 %v3115, %v2987
      %v3152 = vadd.f32 %v3116, %v2992
      %v3153 = vadd.f32 %v3117, %v2995
      %v3154 = vadd.f32 %v3118, %v3000
      %v3155 = vadd.f32 %v3119, %v3003
      %v3156 = vadd.f32 %v3120, %v3008
      %v3157 = vadd.f32 %v3121, %v3011
      %v3158 = vadd.f32 %v3122, %v3016
      %v3159 = vadd.f32 %v3123, %v3019
      %v3160 = vadd.f32 %v3124, %v3024
      %v3161 = vadd.f32 %v3125, %v3027
      %v3162 = vadd.f32 %v3126, %v3032
      %v3163 = vadd.f32 %v3127, %v3035
      %v3164 = vadd.f32 %v3128, %v3040
      %v3165 = vadd.f32 %v3129, %v3043
      %v3166 = vadd.f32 %v3130, %v3048
      %v3167 = vadd.f32 %v3131, %v3051
      %v3168 = vadd.f32 %v3132, %v3056
      %v3169 = vadd.f32 %v3133, %v3059
      %v3170 = vadd.f32 %v3134, %v3064
      %v3171 = vadd.f32 %v3135, %v3067
      %v3172 = vadd.f32 %v3136, %v3072
      %v3173 = vadd.f32 %v3137, %v3075
      %v3174 = vadd.f32 %v3138, %v3080
      %v3175 = vadd.f32 %v3139, %v3083
      %v3176 = vadd.f32 %v3140, %v3088
      %v3177 = vadd.f32 %v3141, %v3091
      %v3178 = vadd.f32 %v3142, %v3096
      %v3179 = vadd.f32 %v3143, %v3099
      %v3180 = vadd.f32 %v3144, %v3104
      %v3181 = vadd.f32 %v3145, %v3107
      %3182 = vst [vmem:[#allocation4] sm:$0xff] %v3146
      %3183 = vst [vmem:[#allocation4 + $0x8] sm:$0xff] %v3147
      %3184 = vst [vmem:[#allocation4 + $0x10] sm:$0xff] %v3148
      %3185 = vst [vmem:[#allocation4 + $0x18] sm:$0xff] %v3149
      %3186 = vst [vmem:[#allocation4 + $0x20] sm:$0xff] %v3150
      %3187 = vst [vmem:[#allocation4 + $0x28] sm:$0xff] %v3151
      %3188 = vst [vmem:[#allocation4 + $0x30] sm:$0xff] %v3152
      %3189 = vst [vmem:[#allocation4 + $0x38] sm:$0xff] %v3153
      %3190 = vst [vmem:[#allocation4 + $0x40] sm:$0xff] %v3154
      %3191 = vst [vmem:[#allocation4 + $0x48] sm:$0xff] %v3155
      %3192 = vst [vmem:[#allocation4 + $0x50] sm:$0xff] %v3156
      %3193 = vst [vmem:[#allocation4 + $0x58] sm:$0xff] %v3157
      %3194 = vst [vmem:[#allocation4 + $0x60] sm:$0xff] %v3158
      %3195 = vst [vmem:[#allocation4 + $0x68] sm:$0xff] %v3159
      %3196 = vst [vmem:[#allocation4 + $0x70] sm:$0xff] %v3160
      %3197 = vst [vmem:[#allocation4 + $0x78] sm:$0xff] %v3161
      %3198 = vst [vmem:[#allocation4 + $0x80] sm:$0xff] %v3162
      %3199 = vst [vmem:[#allocation4 + $0x88] sm:$0xff] %v3163
      %3200 = vst [vmem:[#allocation4 + $0x90] sm:$0xff] %v3164
      %3201 = vst [vmem:[#allocation4 + $0x98] sm:$0xff] %v3165
      %3202 = vst [vmem:[#allocation4 + $0xa0] sm:$0xff] %v3166
      %3203 = vst [vmem:[#allocation4 + $0xa8] sm:$0xff] %v3167
      %3204 = vst [vmem:[#allocation4 + $0xb0] sm:$0xff] %v3168
      %3205 = vst [vmem:[#allocation4 + $0xb8] sm:$0xff] %v3169
      %3206 = vst [vmem:[#allocation4 + $0xc0] sm:$0xff] %v3170
      %3207 = vst [vmem:[#allocation4 + $0xc8] sm:$0xff] %v3171
      %3208 = vst [vmem:[#allocation4 + $0xd0] sm:$0xff] %v3172
      %3209 = vst [vmem:[#allocation4 + $0xd8] sm:$0xff] %v3173
      %3210 = vst [vmem:[#allocation4 + $0xe0] sm:$0xff] %v3174
      %3211 = vst [vmem:[#allocation4 + $0xe8] sm:$0xff] %v3175
      %3212 = vst [vmem:[#allocation4 + $0xf0] sm:$0xff] %v3176
      %3213 = vst [vmem:[#allocation4 + $0xf8] sm:$0xff] %v3177
      %3214 = vst [vmem:[#allocation4 + $0x100] sm:$0xff] %v3178
      %3215 = vst [vmem:[#allocation4 + $0x108] sm:$0xff] %v3179
      %3216 = vst [vmem:[#allocation4 + $0x110] sm:$0xff] %v3180
      %3217 = vst [vmem:[#allocation4 + $0x118] sm:$0xff] %v3181
      %v3218 = vld [vmem:[#allocation2 + $0x24] sm:$0xff]
      %v3219 = vld [vmem:[#allocation2 + $0x2c] sm:$0xff]
      %v3220 = vld [vmem:[#allocation2 + $0x34] sm:$0xff]
      %v3221 = vld [vmem:[#allocation2 + $0x3c] sm:$0xff]
      %v3222 = vld [vmem:[#allocation2 + $0x44] sm:$0xff]
      %v3223 = vld [vmem:[#allocation2 + $0x4c] sm:$0xff]
      %v3224 = vld [vmem:[#allocation2 + $0x54] sm:$0xff]
      %v3225 = vld [vmem:[#allocation2 + $0x5c] sm:$0xff]
      %v3226 = vld [vmem:[#allocation2 + $0x64] sm:$0xff]
      %v3227 = vld [vmem:[#allocation2 + $0x6c] sm:$0xff]
      %v3228 = vld [vmem:[#allocation2 + $0x74] sm:$0xff]
      %v3229 = vld [vmem:[#allocation2 + $0x7c] sm:$0xff]
      %v3230 = vld [vmem:[#allocation2 + $0x84] sm:$0xff]
      %v3231 = vld [vmem:[#allocation2 + $0x8c] sm:$0xff]
      %v3232 = vld [vmem:[#allocation2 + $0x94] sm:$0xff]
      %v3233 = vld [vmem:[#allocation2 + $0x9c] sm:$0xff]
      %v3234 = vld [vmem:[#allocation2 + $0xa4] sm:$0xff]
      %v3235 = vld [vmem:[#allocation2 + $0xac] sm:$0xff]
      %v3236 = vld [vmem:[#allocation2 + $0xb4] sm:$0xff]
      %v3237 = vld [vmem:[#allocation2 + $0xbc] sm:$0xff]
      %v3238 = vld [vmem:[#allocation2 + $0xc4] sm:$0xff]
      %v3239 = vld [vmem:[#allocation2 + $0xcc] sm:$0xff]
      %v3240 = vld [vmem:[#allocation2 + $0xd4] sm:$0xff]
      %v3241 = vld [vmem:[#allocation2 + $0xdc] sm:$0xff]
      %v3242 = vld [vmem:[#allocation2 + $0xe4] sm:$0xff]
      %v3243 = vld [vmem:[#allocation2 + $0xec] sm:$0xff]
      %v3244 = vld [vmem:[#allocation2 + $0xf4] sm:$0xff]
      %v3245 = vld [vmem:[#allocation2 + $0xfc] sm:$0xff]
      %v3246 = vld [vmem:[#allocation2 + $0x104] sm:$0xff]
      %v3247 = vld [vmem:[#allocation2 + $0x10c] sm:$0xff]
      %v3248 = vld [vmem:[#allocation2 + $0x114] sm:$0xff]
      %v3249 = vld [vmem:[#allocation2 + $0x11c] sm:$0xff]
      %v3250 = vld [vmem:[#allocation2 + $0x124] sm:$0xff]
      %v3251 = vld [vmem:[#allocation2 + $0x12c] sm:$0xff]
      %v3252 = vld [vmem:[#allocation2 + $0x134] sm:$0xff]
      %v3253 = vld [vmem:[#allocation2 + $0x13c] sm:$0xff]
      %v3254 = vpack.c.bf16 %v3219, %v3218
      %v3255 = vpack.c.bf16 %v3221, %v3220
      %v3256 = vpack.c.bf16 %v3223, %v3222
      %v3257 = vpack.c.bf16 %v3225, %v3224
      %v3258 = vpack.c.bf16 %v3227, %v3226
      %v3259 = vpack.c.bf16 %v3229, %v3228
      %v3260 = vpack.c.bf16 %v3231, %v3230
      %v3261 = vpack.c.bf16 %v3233, %v3232
      %v3262 = vpack.c.bf16 %v3235, %v3234
      %v3263 = vpack.c.bf16 %v3237, %v3236
      %v3264 = vpack.c.bf16 %v3239, %v3238
      %v3265 = vpack.c.bf16 %v3241, %v3240
      %v3266 = vpack.c.bf16 %v3243, %v3242
      %v3267 = vpack.c.bf16 %v3245, %v3244
      %v3268 = vpack.c.bf16 %v3247, %v3246
      %v3269 = vpack.c.bf16 %v3249, %v3248
      %v3270 = vpack.c.bf16 %v3251, %v3250
      %v3271 = vpack.c.bf16 %v3253, %v3252
      %s3272 = scalar_lea.vmem %s4, 384
      %v3273 = vld [vmem:[%s3272] sm:$0xf]
      %v3274 = vld [vmem:[%s3272 + $0x4] sm:$0xf]
      %v3275 = vld [vmem:[%s3272 + $0x8] sm:$0xf]
      %v3276 = vld [vmem:[%s3272 + $0xc] sm:$0xf]
      %v3277 = vld [vmem:[%s3272 + $0x10] sm:$0xf]
      %v3278 = vld [vmem:[%s3272 + $0x14] sm:$0xf]
      %v3279 = vld [vmem:[%s3272 + $0x18] sm:$0xf]
      %v3280 = vld [vmem:[%s3272 + $0x1c] sm:$0xf]
      %v3281 = vld [vmem:[%s3272 + $0x20] sm:$0xf]
      %v3282 = vld [vmem:[%s3272 + $0x24] sm:$0xf]
      %v3283 = vld [vmem:[%s3272 + $0x28] sm:$0xf]
      %v3284 = vld [vmem:[%s3272 + $0x2c] sm:$0xf]
      %v3285 = vld [vmem:[%s3272 + $0x30] sm:$0xf]
      %v3286 = vld [vmem:[%s3272 + $0x34] sm:$0xf]
      %v3287 = vld [vmem:[%s3272 + $0x38] sm:$0xf]
      %v3288 = vld [vmem:[%s3272 + $0x3c] sm:$0xf]
      %v3305 = vunpack.c.l.b16 %v3273
      %v3306 = vunpack.c.l.b16 %v3274
      %v3307 = vunpack.c.l.b16 %v3275
      %v3308 = vunpack.c.l.b16 %v3276
      %v3309 = vunpack.c.l.b16 %v3277
      %v3310 = vunpack.c.l.b16 %v3278
      %v3311 = vunpack.c.l.b16 %v3279
      %v3312 = vunpack.c.l.b16 %v3280
      %v3313 = vunpack.c.l.b16 %v3281
      %v3314 = vunpack.c.l.b16 %v3282
      %v3315 = vunpack.c.l.b16 %v3283
      %v3316 = vunpack.c.l.b16 %v3284
      %v3317 = vunpack.c.l.b16 %v3285
      %v3318 = vunpack.c.l.b16 %v3286
      %v3319 = vunpack.c.l.b16 %v3287
      %v3320 = vunpack.c.l.b16 %v3288
      %v3321 = vpack.c.b16 %v3306, %v3305
      %v3322 = vpack.c.b16 %v3308, %v3307
      %v3323 = vpack.c.b16 %v3310, %v3309
      %v3324 = vpack.c.b16 %v3312, %v3311
      %v3325 = vpack.c.b16 %v3314, %v3313
      %v3326 = vpack.c.b16 %v3316, %v3315
      %v3327 = vpack.c.b16 %v3318, %v3317
      %v3328 = vpack.c.b16 %v3320, %v3319
      %3337 = vmatprep.subr.bf16.mxu0 0
      %3338 = vmatpush1.bf16.msra.mxu0 %v3328
      %3339 = vmatprep.subr.bf16.mxu0 0
      %3340 = vmatpush1.bf16.msra.mxu0 %v3327
      %3341 = vmatprep.subr.bf16.mxu0 0
      %3342 = vmatpush1.bf16.msra.mxu0 %v3326
      %3343 = vmatprep.subr.bf16.mxu0 0
      %3344 = vmatpush1.bf16.msra.mxu0 %v3325
      %3345 = vmatprep.subr.bf16.mxu0 0
      %3346 = vmatpush1.bf16.msra.mxu0 %v3324
      %3347 = vmatprep.subr.bf16.mxu0 0
      %3348 = vmatpush1.bf16.msra.mxu0 %v3323
      %3349 = vmatprep.subr.bf16.mxu0 0
      %3350 = vmatpush1.bf16.msra.mxu0 %v3322
      %3351 = vmatprep.subr.bf16.mxu0 0
      %3352 = vmatpush1.bf16.msra.mxu0 %v3321
      %3353 = vmatprep.subr.bf16.mxu0 0
      %3354 = vmatpush2.bf16.msra.mxu0 0
      %3355 = vmatprep.subr.bf16.mxu0 0
      %3356 = vmatpush2.bf16.msra.mxu0 0
      %3357 = vmatprep.subr.bf16.mxu0 0
      %3358 = vmatpush2.bf16.msra.mxu0 0
      %3359 = vmatprep.subr.bf16.mxu0 0
      %3360 = vmatpush2.bf16.msra.mxu0 0
      %3361 = vmatprep.subr.bf16.mxu0 0
      %3362 = vmatpush2.bf16.msra.mxu0 0
      %3363 = vmatprep.subr.bf16.mxu0 0
      %3364 = vmatpush2.bf16.msra.mxu0 0
      %3365 = vmatprep.subr.bf16.mxu0 0
      %3366 = vmatpush2.bf16.msra.mxu0 0
      %3367 = vmatprep.subr.bf16.mxu0 0
      %3368 = vmatpush2.bf16.msra.mxu0 0
      %3369 = vmatprep.mubr.bf16.mxu0 0
      %3370 = vmatmul.mubr.bf16.gmra.mxu0 %v3254
      %v3371 = vpop.f32.mrf.mxu0
      %v3372 = vadd.f32 0.0, %v3371
      %v3373 = vpop.f32.mrf.mxu0
      %v3374 = vpop.f32.mrf.mxu0
      %v3375 = vadd.f32 0.0, %v3374
      %v3376 = vpop.f32.mrf.mxu0
      %3377 = vmatprep.mubr.bf16.mxu0 0
      %3378 = vmatmul.mubr.bf16.gmra.mxu0 %v3255
      %v3379 = vpop.f32.mrf.mxu0
      %v3380 = vadd.f32 0.0, %v3379
      %v3381 = vpop.f32.mrf.mxu0
      %v3382 = vpop.f32.mrf.mxu0
      %v3383 = vadd.f32 0.0, %v3382
      %v3384 = vpop.f32.mrf.mxu0
      %3385 = vmatprep.mubr.bf16.mxu0 0
      %3386 = vmatmul.mubr.bf16.gmra.mxu0 %v3256
      %v3387 = vpop.f32.mrf.mxu0
      %v3388 = vadd.f32 0.0, %v3387
      %v3389 = vpop.f32.mrf.mxu0
      %v3390 = vpop.f32.mrf.mxu0
      %v3391 = vadd.f32 0.0, %v3390
      %v3392 = vpop.f32.mrf.mxu0
      %3393 = vmatprep.mubr.bf16.mxu0 0
      %3394 = vmatmul.mubr.bf16.gmra.mxu0 %v3257
      %v3395 = vpop.f32.mrf.mxu0
      %v3396 = vadd.f32 0.0, %v3395
      %v3397 = vpop.f32.mrf.mxu0
      %v3398 = vpop.f32.mrf.mxu0
      %v3399 = vadd.f32 0.0, %v3398
      %v3400 = vpop.f32.mrf.mxu0
      %3401 = vmatprep.mubr.bf16.mxu0 0
      %3402 = vmatmul.mubr.bf16.gmra.mxu0 %v3258
      %v3403 = vpop.f32.mrf.mxu0
      %v3404 = vadd.f32 0.0, %v3403
      %v3405 = vpop.f32.mrf.mxu0
      %v3406 = vpop.f32.mrf.mxu0
      %v3407 = vadd.f32 0.0, %v3406
      %v3408 = vpop.f32.mrf.mxu0
      %3409 = vmatprep.mubr.bf16.mxu0 0
      %3410 = vmatmul.mubr.bf16.gmra.mxu0 %v3259
      %v3411 = vpop.f32.mrf.mxu0
      %v3412 = vadd.f32 0.0, %v3411
      %v3413 = vpop.f32.mrf.mxu0
      %v3414 = vpop.f32.mrf.mxu0
      %v3415 = vadd.f32 0.0, %v3414
      %v3416 = vpop.f32.mrf.mxu0
      %3417 = vmatprep.mubr.bf16.mxu0 0
      %3418 = vmatmul.mubr.bf16.gmra.mxu0 %v3260
      %v3419 = vpop.f32.mrf.mxu0
      %v3420 = vadd.f32 0.0, %v3419
      %v3421 = vpop.f32.mrf.mxu0
      %v3422 = vpop.f32.mrf.mxu0
      %v3423 = vadd.f32 0.0, %v3422
      %v3424 = vpop.f32.mrf.mxu0
      %3425 = vmatprep.mubr.bf16.mxu0 0
      %3426 = vmatmul.mubr.bf16.gmra.mxu0 %v3261
      %v3427 = vpop.f32.mrf.mxu0
      %v3428 = vadd.f32 0.0, %v3427
      %v3429 = vpop.f32.mrf.mxu0
      %v3430 = vpop.f32.mrf.mxu0
      %v3431 = vadd.f32 0.0, %v3430
      %v3432 = vpop.f32.mrf.mxu0
      %3433 = vmatprep.mubr.bf16.mxu0 0
      %3434 = vmatmul.mubr.bf16.gmra.mxu0 %v3262
      %v3435 = vpop.f32.mrf.mxu0
      %v3436 = vadd.f32 0.0, %v3435
      %v3437 = vpop.f32.mrf.mxu0
      %v3438 = vpop.f32.mrf.mxu0
      %v3439 = vadd.f32 0.0, %v3438
      %v3440 = vpop.f32.mrf.mxu0
      %3441 = vmatprep.mubr.bf16.mxu0 0
      %3442 = vmatmul.mubr.bf16.gmra.mxu0 %v3263
      %v3443 = vpop.f32.mrf.mxu0
      %v3444 = vadd.f32 0.0, %v3443
      %v3445 = vpop.f32.mrf.mxu0
      %v3446 = vpop.f32.mrf.mxu0
      %v3447 = vadd.f32 0.0, %v3446
      %v3448 = vpop.f32.mrf.mxu0
      %3449 = vmatprep.mubr.bf16.mxu0 0
      %3450 = vmatmul.mubr.bf16.gmra.mxu0 %v3264
      %v3451 = vpop.f32.mrf.mxu0
      %v3452 = vadd.f32 0.0, %v3451
      %v3453 = vpop.f32.mrf.mxu0
      %v3454 = vpop.f32.mrf.mxu0
      %v3455 = vadd.f32 0.0, %v3454
      %v3456 = vpop.f32.mrf.mxu0
      %3457 = vmatprep.mubr.bf16.mxu0 0
      %3458 = vmatmul.mubr.bf16.gmra.mxu0 %v3265
      %v3459 = vpop.f32.mrf.mxu0
      %v3460 = vadd.f32 0.0, %v3459
      %v3461 = vpop.f32.mrf.mxu0
      %v3462 = vpop.f32.mrf.mxu0
      %v3463 = vadd.f32 0.0, %v3462
      %v3464 = vpop.f32.mrf.mxu0
      %3465 = vmatprep.mubr.bf16.mxu0 0
      %3466 = vmatmul.mubr.bf16.gmra.mxu0 %v3266
      %v3467 = vpop.f32.mrf.mxu0
      %v3468 = vadd.f32 0.0, %v3467
      %v3469 = vpop.f32.mrf.mxu0
      %v3470 = vpop.f32.mrf.mxu0
      %v3471 = vadd.f32 0.0, %v3470
      %v3472 = vpop.f32.mrf.mxu0
      %3473 = vmatprep.mubr.bf16.mxu0 0
      %3474 = vmatmul.mubr.bf16.gmra.mxu0 %v3267
      %v3475 = vpop.f32.mrf.mxu0
      %v3476 = vadd.f32 0.0, %v3475
      %v3477 = vpop.f32.mrf.mxu0
      %v3478 = vpop.f32.mrf.mxu0
      %v3479 = vadd.f32 0.0, %v3478
      %v3480 = vpop.f32.mrf.mxu0
      %3481 = vmatprep.mubr.bf16.mxu0 0
      %3482 = vmatmul.mubr.bf16.gmra.mxu0 %v3268
      %v3483 = vpop.f32.mrf.mxu0
      %v3484 = vadd.f32 0.0, %v3483
      %v3485 = vpop.f32.mrf.mxu0
      %v3486 = vpop.f32.mrf.mxu0
      %v3487 = vadd.f32 0.0, %v3486
      %v3488 = vpop.f32.mrf.mxu0
      %3489 = vmatprep.mubr.bf16.mxu0 0
      %3490 = vmatmul.mubr.bf16.gmra.mxu0 %v3269
      %v3491 = vpop.f32.mrf.mxu0
      %v3492 = vadd.f32 0.0, %v3491
      %v3493 = vpop.f32.mrf.mxu0
      %v3494 = vpop.f32.mrf.mxu0
      %v3495 = vadd.f32 0.0, %v3494
      %v3496 = vpop.f32.mrf.mxu0
      %3497 = vmatprep.mubr.bf16.mxu0 0
      %3498 = vmatmul.mubr.bf16.gmra.mxu0 %v3270
      %v3499 = vpop.f32.mrf.mxu0
      %v3500 = vadd.f32 0.0, %v3499
      %v3501 = vpop.f32.mrf.mxu0
      %v3502 = vpop.f32.mrf.mxu0
      %v3503 = vadd.f32 0.0, %v3502
      %v3504 = vpop.f32.mrf.mxu0
      %3505 = vmatprep.mubr.bf16.mxu0 0
      %3506 = vmatmul.mubr.bf16.gmra.mxu0 %v3271
      %v3507 = vpop.f32.mrf.mxu0
      %v3508 = vadd.f32 0.0, %v3507
      %v3509 = vpop.f32.mrf.mxu0
      %v3510 = vpop.f32.mrf.mxu0
      %v3511 = vadd.f32 0.0, %v3510
      %v3512 = vpop.f32.mrf.mxu0
      %3513 = vdwg.mxu0
      %v3514 = vld [vmem:[#allocation4] sm:$0xff]
      %v3515 = vld [vmem:[#allocation4 + $0x8] sm:$0xff]
      %v3516 = vld [vmem:[#allocation4 + $0x10] sm:$0xff]
      %v3517 = vld [vmem:[#allocation4 + $0x18] sm:$0xff]
      %v3518 = vld [vmem:[#allocation4 + $0x20] sm:$0xff]
      %v3519 = vld [vmem:[#allocation4 + $0x28] sm:$0xff]
      %v3520 = vld [vmem:[#allocation4 + $0x30] sm:$0xff]
      %v3521 = vld [vmem:[#allocation4 + $0x38] sm:$0xff]
      %v3522 = vld [vmem:[#allocation4 + $0x40] sm:$0xff]
      %v3523 = vld [vmem:[#allocation4 + $0x48] sm:$0xff]
      %v3524 = vld [vmem:[#allocation4 + $0x50] sm:$0xff]
      %v3525 = vld [vmem:[#allocation4 + $0x58] sm:$0xff]
      %v3526 = vld [vmem:[#allocation4 + $0x60] sm:$0xff]
      %v3527 = vld [vmem:[#allocation4 + $0x68] sm:$0xff]
      %v3528 = vld [vmem:[#allocation4 + $0x70] sm:$0xff]
      %v3529 = vld [vmem:[#allocation4 + $0x78] sm:$0xff]
      %v3530 = vld [vmem:[#allocation4 + $0x80] sm:$0xff]
      %v3531 = vld [vmem:[#allocation4 + $0x88] sm:$0xff]
      %v3532 = vld [vmem:[#allocation4 + $0x90] sm:$0xff]
      %v3533 = vld [vmem:[#allocation4 + $0x98] sm:$0xff]
      %v3534 = vld [vmem:[#allocation4 + $0xa0] sm:$0xff]
      %v3535 = vld [vmem:[#allocation4 + $0xa8] sm:$0xff]
      %v3536 = vld [vmem:[#allocation4 + $0xb0] sm:$0xff]
      %v3537 = vld [vmem:[#allocation4 + $0xb8] sm:$0xff]
      %v3538 = vld [vmem:[#allocation4 + $0xc0] sm:$0xff]
      %v3539 = vld [vmem:[#allocation4 + $0xc8] sm:$0xff]
      %v3540 = vld [vmem:[#allocation4 + $0xd0] sm:$0xff]
      %v3541 = vld [vmem:[#allocation4 + $0xd8] sm:$0xff]
      %v3542 = vld [vmem:[#allocation4 + $0xe0] sm:$0xff]
      %v3543 = vld [vmem:[#allocation4 + $0xe8] sm:$0xff]
      %v3544 = vld [vmem:[#allocation4 + $0xf0] sm:$0xff]
      %v3545 = vld [vmem:[#allocation4 + $0xf8] sm:$0xff]
      %v3546 = vld [vmem:[#allocation4 + $0x100] sm:$0xff]
      %v3547 = vld [vmem:[#allocation4 + $0x108] sm:$0xff]
      %v3548 = vld [vmem:[#allocation4 + $0x110] sm:$0xff]
      %v3549 = vld [vmem:[#allocation4 + $0x118] sm:$0xff]
      %v3550 = vadd.f32 %v3514, %v3372
      %v3551 = vadd.f32 %v3515, %v3375
      %v3552 = vadd.f32 %v3516, %v3380
      %v3553 = vadd.f32 %v3517, %v3383
      %v3554 = vadd.f32 %v3518, %v3388
      %v3555 = vadd.f32 %v3519, %v3391
      %v3556 = vadd.f32 %v3520, %v3396
      %v3557 = vadd.f32 %v3521, %v3399
      %v3558 = vadd.f32 %v3522, %v3404
      %v3559 = vadd.f32 %v3523, %v3407
      %v3560 = vadd.f32 %v3524, %v3412
      %v3561 = vadd.f32 %v3525, %v3415
      %v3562 = vadd.f32 %v3526, %v3420
      %v3563 = vadd.f32 %v3527, %v3423
      %v3564 = vadd.f32 %v3528, %v3428
      %v3565 = vadd.f32 %v3529, %v3431
      %v3566 = vadd.f32 %v3530, %v3436
      %v3567 = vadd.f32 %v3531, %v3439
      %v3568 = vadd.f32 %v3532, %v3444
      %v3569 = vadd.f32 %v3533, %v3447
      %v3570 = vadd.f32 %v3534, %v3452
      %v3571 = vadd.f32 %v3535, %v3455
      %v3572 = vadd.f32 %v3536, %v3460
      %v3573 = vadd.f32 %v3537, %v3463
      %v3574 = vadd.f32 %v3538, %v3468
      %v3575 = vadd.f32 %v3539, %v3471
      %v3576 = vadd.f32 %v3540, %v3476
      %v3577 = vadd.f32 %v3541, %v3479
      %v3578 = vadd.f32 %v3542, %v3484
      %v3579 = vadd.f32 %v3543, %v3487
      %v3580 = vadd.f32 %v3544, %v3492
      %v3581 = vadd.f32 %v3545, %v3495
      %v3582 = vadd.f32 %v3546, %v3500
      %v3583 = vadd.f32 %v3547, %v3503
      %v3584 = vadd.f32 %v3548, %v3508
      %v3585 = vadd.f32 %v3549, %v3511
      %3586 = vst [vmem:[#allocation4] sm:$0xff] %v3550
      %3587 = vst [vmem:[#allocation4 + $0x8] sm:$0xff] %v3551
      %3588 = vst [vmem:[#allocation4 + $0x10] sm:$0xff] %v3552
      %3589 = vst [vmem:[#allocation4 + $0x18] sm:$0xff] %v3553
      %3590 = vst [vmem:[#allocation4 + $0x20] sm:$0xff] %v3554
      %3591 = vst [vmem:[#allocation4 + $0x28] sm:$0xff] %v3555
      %3592 = vst [vmem:[#allocation4 + $0x30] sm:$0xff] %v3556
      %3593 = vst [vmem:[#allocation4 + $0x38] sm:$0xff] %v3557
      %3594 = vst [vmem:[#allocation4 + $0x40] sm:$0xff] %v3558
      %3595 = vst [vmem:[#allocation4 + $0x48] sm:$0xff] %v3559
      %3596 = vst [vmem:[#allocation4 + $0x50] sm:$0xff] %v3560
      %3597 = vst [vmem:[#allocation4 + $0x58] sm:$0xff] %v3561
      %3598 = vst [vmem:[#allocation4 + $0x60] sm:$0xff] %v3562
      %3599 = vst [vmem:[#allocation4 + $0x68] sm:$0xff] %v3563
      %3600 = vst [vmem:[#allocation4 + $0x70] sm:$0xff] %v3564
      %3601 = vst [vmem:[#allocation4 + $0x78] sm:$0xff] %v3565
      %3602 = vst [vmem:[#allocation4 + $0x80] sm:$0xff] %v3566
      %3603 = vst [vmem:[#allocation4 + $0x88] sm:$0xff] %v3567
      %3604 = vst [vmem:[#allocation4 + $0x90] sm:$0xff] %v3568
      %3605 = vst [vmem:[#allocation4 + $0x98] sm:$0xff] %v3569
      %3606 = vst [vmem:[#allocation4 + $0xa0] sm:$0xff] %v3570
      %3607 = vst [vmem:[#allocation4 + $0xa8] sm:$0xff] %v3571
      %3608 = vst [vmem:[#allocation4 + $0xb0] sm:$0xff] %v3572
      %3609 = vst [vmem:[#allocation4 + $0xb8] sm:$0xff] %v3573
      %3610 = vst [vmem:[#allocation4 + $0xc0] sm:$0xff] %v3574
      %3611 = vst [vmem:[#allocation4 + $0xc8] sm:$0xff] %v3575
      %3612 = vst [vmem:[#allocation4 + $0xd0] sm:$0xff] %v3576
      %3613 = vst [vmem:[#allocation4 + $0xd8] sm:$0xff] %v3577
      %3614 = vst [vmem:[#allocation4 + $0xe0] sm:$0xff] %v3578
      %3615 = vst [vmem:[#allocation4 + $0xe8] sm:$0xff] %v3579
      %3616 = vst [vmem:[#allocation4 + $0xf0] sm:$0xff] %v3580
      %3617 = vst [vmem:[#allocation4 + $0xf8] sm:$0xff] %v3581
      %3618 = vst [vmem:[#allocation4 + $0x100] sm:$0xff] %v3582
      %3619 = vst [vmem:[#allocation4 + $0x108] sm:$0xff] %v3583
      %3620 = vst [vmem:[#allocation4 + $0x110] sm:$0xff] %v3584
      %3621 = vst [vmem:[#allocation4 + $0x118] sm:$0xff] %v3585
      %v3622 = vld [vmem:[#allocation2 + $0x25] sm:$0xff]
      %v3623 = vld [vmem:[#allocation2 + $0x2d] sm:$0xff]
      %v3624 = vld [vmem:[#allocation2 + $0x35] sm:$0xff]
      %v3625 = vld [vmem:[#allocation2 + $0x3d] sm:$0xff]
      %v3626 = vld [vmem:[#allocation2 + $0x45] sm:$0xff]
      %v3627 = vld [vmem:[#allocation2 + $0x4d] sm:$0xff]
      %v3628 = vld [vmem:[#allocation2 + $0x55] sm:$0xff]
      %v3629 = vld [vmem:[#allocation2 + $0x5d] sm:$0xff]
      %v3630 = vld [vmem:[#allocation2 + $0x65] sm:$0xff]
      %v3631 = vld [vmem:[#allocation2 + $0x6d] sm:$0xff]
      %v3632 = vld [vmem:[#allocation2 + $0x75] sm:$0xff]
      %v3633 = vld [vmem:[#allocation2 + $0x7d] sm:$0xff]
      %v3634 = vld [vmem:[#allocation2 + $0x85] sm:$0xff]
      %v3635 = vld [vmem:[#allocation2 + $0x8d] sm:$0xff]
      %v3636 = vld [vmem:[#allocation2 + $0x95] sm:$0xff]
      %v3637 = vld [vmem:[#allocation2 + $0x9d] sm:$0xff]
      %v3638 = vld [vmem:[#allocation2 + $0xa5] sm:$0xff]
      %v3639 = vld [vmem:[#allocation2 + $0xad] sm:$0xff]
      %v3640 = vld [vmem:[#allocation2 + $0xb5] sm:$0xff]
      %v3641 = vld [vmem:[#allocation2 + $0xbd] sm:$0xff]
      %v3642 = vld [vmem:[#allocation2 + $0xc5] sm:$0xff]
      %v3643 = vld [vmem:[#allocation2 + $0xcd] sm:$0xff]
      %v3644 = vld [vmem:[#allocation2 + $0xd5] sm:$0xff]
      %v3645 = vld [vmem:[#allocation2 + $0xdd] sm:$0xff]
      %v3646 = vld [vmem:[#allocation2 + $0xe5] sm:$0xff]
      %v3647 = vld [vmem:[#allocation2 + $0xed] sm:$0xff]
      %v3648 = vld [vmem:[#allocation2 + $0xf5] sm:$0xff]
      %v3649 = vld [vmem:[#allocation2 + $0xfd] sm:$0xff]
      %v3650 = vld [vmem:[#allocation2 + $0x105] sm:$0xff]
      %v3651 = vld [vmem:[#allocation2 + $0x10d] sm:$0xff]
      %v3652 = vld [vmem:[#allocation2 + $0x115] sm:$0xff]
      %v3653 = vld [vmem:[#allocation2 + $0x11d] sm:$0xff]
      %v3654 = vld [vmem:[#allocation2 + $0x125] sm:$0xff]
      %v3655 = vld [vmem:[#allocation2 + $0x12d] sm:$0xff]
      %v3656 = vld [vmem:[#allocation2 + $0x135] sm:$0xff]
      %v3657 = vld [vmem:[#allocation2 + $0x13d] sm:$0xff]
      %v3658 = vpack.c.bf16 %v3623, %v3622
      %v3659 = vpack.c.bf16 %v3625, %v3624
      %v3660 = vpack.c.bf16 %v3627, %v3626
      %v3661 = vpack.c.bf16 %v3629, %v3628
      %v3662 = vpack.c.bf16 %v3631, %v3630
      %v3663 = vpack.c.bf16 %v3633, %v3632
      %v3664 = vpack.c.bf16 %v3635, %v3634
      %v3665 = vpack.c.bf16 %v3637, %v3636
      %v3666 = vpack.c.bf16 %v3639, %v3638
      %v3667 = vpack.c.bf16 %v3641, %v3640
      %v3668 = vpack.c.bf16 %v3643, %v3642
      %v3669 = vpack.c.bf16 %v3645, %v3644
      %v3670 = vpack.c.bf16 %v3647, %v3646
      %v3671 = vpack.c.bf16 %v3649, %v3648
      %v3672 = vpack.c.bf16 %v3651, %v3650
      %v3673 = vpack.c.bf16 %v3653, %v3652
      %v3674 = vpack.c.bf16 %v3655, %v3654
      %v3675 = vpack.c.bf16 %v3657, %v3656
      %s3676 = scalar_lea.vmem %s4, 448
      %v3677 = vld [vmem:[%s3676] sm:$0xf]
      %v3678 = vld [vmem:[%s3676 + $0x4] sm:$0xf]
      %v3679 = vld [vmem:[%s3676 + $0x8] sm:$0xf]
      %v3680 = vld [vmem:[%s3676 + $0xc] sm:$0xf]
      %v3681 = vld [vmem:[%s3676 + $0x10] sm:$0xf]
      %v3682 = vld [vmem:[%s3676 + $0x14] sm:$0xf]
      %v3683 = vld [vmem:[%s3676 + $0x18] sm:$0xf]
      %v3684 = vld [vmem:[%s3676 + $0x1c] sm:$0xf]
      %v3685 = vld [vmem:[%s3676 + $0x20] sm:$0xf]
      %v3686 = vld [vmem:[%s3676 + $0x24] sm:$0xf]
      %v3687 = vld [vmem:[%s3676 + $0x28] sm:$0xf]
      %v3688 = vld [vmem:[%s3676 + $0x2c] sm:$0xf]
      %v3689 = vld [vmem:[%s3676 + $0x30] sm:$0xf]
      %v3690 = vld [vmem:[%s3676 + $0x34] sm:$0xf]
      %v3691 = vld [vmem:[%s3676 + $0x38] sm:$0xf]
      %v3692 = vld [vmem:[%s3676 + $0x3c] sm:$0xf]
      %v3709 = vunpack.c.l.b16 %v3677
      %v3710 = vunpack.c.l.b16 %v3678
      %v3711 = vunpack.c.l.b16 %v3679
      %v3712 = vunpack.c.l.b16 %v3680
      %v3713 = vunpack.c.l.b16 %v3681
      %v3714 = vunpack.c.l.b16 %v3682
      %v3715 = vunpack.c.l.b16 %v3683
      %v3716 = vunpack.c.l.b16 %v3684
      %v3717 = vunpack.c.l.b16 %v3685
      %v3718 = vunpack.c.l.b16 %v3686
      %v3719 = vunpack.c.l.b16 %v3687
      %v3720 = vunpack.c.l.b16 %v3688
      %v3721 = vunpack.c.l.b16 %v3689
      %v3722 = vunpack.c.l.b16 %v3690
      %v3723 = vunpack.c.l.b16 %v3691
      %v3724 = vunpack.c.l.b16 %v3692
      %v3725 = vpack.c.b16 %v3710, %v3709
      %v3726 = vpack.c.b16 %v3712, %v3711
      %v3727 = vpack.c.b16 %v3714, %v3713
      %v3728 = vpack.c.b16 %v3716, %v3715
      %v3729 = vpack.c.b16 %v3718, %v3717
      %v3730 = vpack.c.b16 %v3720, %v3719
      %v3731 = vpack.c.b16 %v3722, %v3721
      %v3732 = vpack.c.b16 %v3724, %v3723
      %3741 = vmatprep.subr.bf16.mxu0 0
      %3742 = vmatpush1.bf16.msra.mxu0 %v3732
      %3743 = vmatprep.subr.bf16.mxu0 0
      %3744 = vmatpush1.bf16.msra.mxu0 %v3731
      %3745 = vmatprep.subr.bf16.mxu0 0
      %3746 = vmatpush1.bf16.msra.mxu0 %v3730
      %3747 = vmatprep.subr.bf16.mxu0 0
      %3748 = vmatpush1.bf16.msra.mxu0 %v3729
      %3749 = vmatprep.subr.bf16.mxu0 0
      %3750 = vmatpush1.bf16.msra.mxu0 %v3728
      %3751 = vmatprep.subr.bf16.mxu0 0
      %3752 = vmatpush1.bf16.msra.mxu0 %v3727
      %3753 = vmatprep.subr.bf16.mxu0 0
      %3754 = vmatpush1.bf16.msra.mxu0 %v3726
      %3755 = vmatprep.subr.bf16.mxu0 0
      %3756 = vmatpush1.bf16.msra.mxu0 %v3725
      %3757 = vmatprep.subr.bf16.mxu0 0
      %3758 = vmatpush2.bf16.msra.mxu0 0
      %3759 = vmatprep.subr.bf16.mxu0 0
      %3760 = vmatpush2.bf16.msra.mxu0 0
      %3761 = vmatprep.subr.bf16.mxu0 0
      %3762 = vmatpush2.bf16.msra.mxu0 0
      %3763 = vmatprep.subr.bf16.mxu0 0
      %3764 = vmatpush2.bf16.msra.mxu0 0
      %3765 = vmatprep.subr.bf16.mxu0 0
      %3766 = vmatpush2.bf16.msra.mxu0 0
      %3767 = vmatprep.subr.bf16.mxu0 0
      %3768 = vmatpush2.bf16.msra.mxu0 0
      %3769 = vmatprep.subr.bf16.mxu0 0
      %3770 = vmatpush2.bf16.msra.mxu0 0
      %3771 = vmatprep.subr.bf16.mxu0 0
      %3772 = vmatpush2.bf16.msra.mxu0 0
      %3773 = vmatprep.mubr.bf16.mxu0 0
      %3774 = vmatmul.mubr.bf16.gmra.mxu0 %v3658
      %v3775 = vpop.f32.mrf.mxu0
      %v3776 = vadd.f32 0.0, %v3775
      %v3777 = vpop.f32.mrf.mxu0
      %v3778 = vpop.f32.mrf.mxu0
      %v3779 = vadd.f32 0.0, %v3778
      %v3780 = vpop.f32.mrf.mxu0
      %3781 = vmatprep.mubr.bf16.mxu0 0
      %3782 = vmatmul.mubr.bf16.gmra.mxu0 %v3659
      %v3783 = vpop.f32.mrf.mxu0
      %v3784 = vadd.f32 0.0, %v3783
      %v3785 = vpop.f32.mrf.mxu0
      %v3786 = vpop.f32.mrf.mxu0
      %v3787 = vadd.f32 0.0, %v3786
      %v3788 = vpop.f32.mrf.mxu0
      %3789 = vmatprep.mubr.bf16.mxu0 0
      %3790 = vmatmul.mubr.bf16.gmra.mxu0 %v3660
      %v3791 = vpop.f32.mrf.mxu0
      %v3792 = vadd.f32 0.0, %v3791
      %v3793 = vpop.f32.mrf.mxu0
      %v3794 = vpop.f32.mrf.mxu0
      %v3795 = vadd.f32 0.0, %v3794
      %v3796 = vpop.f32.mrf.mxu0
      %3797 = vmatprep.mubr.bf16.mxu0 0
      %3798 = vmatmul.mubr.bf16.gmra.mxu0 %v3661
      %v3799 = vpop.f32.mrf.mxu0
      %v3800 = vadd.f32 0.0, %v3799
      %v3801 = vpop.f32.mrf.mxu0
      %v3802 = vpop.f32.mrf.mxu0
      %v3803 = vadd.f32 0.0, %v3802
      %v3804 = vpop.f32.mrf.mxu0
      %3805 = vmatprep.mubr.bf16.mxu0 0
      %3806 = vmatmul.mubr.bf16.gmra.mxu0 %v3662
      %v3807 = vpop.f32.mrf.mxu0
      %v3808 = vadd.f32 0.0, %v3807
      %v3809 = vpop.f32.mrf.mxu0
      %v3810 = vpop.f32.mrf.mxu0
      %v3811 = vadd.f32 0.0, %v3810
      %v3812 = vpop.f32.mrf.mxu0
      %3813 = vmatprep.mubr.bf16.mxu0 0
      %3814 = vmatmul.mubr.bf16.gmra.mxu0 %v3663
      %v3815 = vpop.f32.mrf.mxu0
      %v3816 = vadd.f32 0.0, %v3815
      %v3817 = vpop.f32.mrf.mxu0
      %v3818 = vpop.f32.mrf.mxu0
      %v3819 = vadd.f32 0.0, %v3818
      %v3820 = vpop.f32.mrf.mxu0
      %3821 = vmatprep.mubr.bf16.mxu0 0
      %3822 = vmatmul.mubr.bf16.gmra.mxu0 %v3664
      %v3823 = vpop.f32.mrf.mxu0
      %v3824 = vadd.f32 0.0, %v3823
      %v3825 = vpop.f32.mrf.mxu0
      %v3826 = vpop.f32.mrf.mxu0
      %v3827 = vadd.f32 0.0, %v3826
      %v3828 = vpop.f32.mrf.mxu0
      %3829 = vmatprep.mubr.bf16.mxu0 0
      %3830 = vmatmul.mubr.bf16.gmra.mxu0 %v3665
      %v3831 = vpop.f32.mrf.mxu0
      %v3832 = vadd.f32 0.0, %v3831
      %v3833 = vpop.f32.mrf.mxu0
      %v3834 = vpop.f32.mrf.mxu0
      %v3835 = vadd.f32 0.0, %v3834
      %v3836 = vpop.f32.mrf.mxu0
      %3837 = vmatprep.mubr.bf16.mxu0 0
      %3838 = vmatmul.mubr.bf16.gmra.mxu0 %v3666
      %v3839 = vpop.f32.mrf.mxu0
      %v3840 = vadd.f32 0.0, %v3839
      %v3841 = vpop.f32.mrf.mxu0
      %v3842 = vpop.f32.mrf.mxu0
      %v3843 = vadd.f32 0.0, %v3842
      %v3844 = vpop.f32.mrf.mxu0
      %3845 = vmatprep.mubr.bf16.mxu0 0
      %3846 = vmatmul.mubr.bf16.gmra.mxu0 %v3667
      %v3847 = vpop.f32.mrf.mxu0
      %v3848 = vadd.f32 0.0, %v3847
      %v3849 = vpop.f32.mrf.mxu0
      %v3850 = vpop.f32.mrf.mxu0
      %v3851 = vadd.f32 0.0, %v3850
      %v3852 = vpop.f32.mrf.mxu0
      %3853 = vmatprep.mubr.bf16.mxu0 0
      %3854 = vmatmul.mubr.bf16.gmra.mxu0 %v3668
      %v3855 = vpop.f32.mrf.mxu0
      %v3856 = vadd.f32 0.0, %v3855
      %v3857 = vpop.f32.mrf.mxu0
      %v3858 = vpop.f32.mrf.mxu0
      %v3859 = vadd.f32 0.0, %v3858
      %v3860 = vpop.f32.mrf.mxu0
      %3861 = vmatprep.mubr.bf16.mxu0 0
      %3862 = vmatmul.mubr.bf16.gmra.mxu0 %v3669
      %v3863 = vpop.f32.mrf.mxu0
      %v3864 = vadd.f32 0.0, %v3863
      %v3865 = vpop.f32.mrf.mxu0
      %v3866 = vpop.f32.mrf.mxu0
      %v3867 = vadd.f32 0.0, %v3866
      %v3868 = vpop.f32.mrf.mxu0
      %3869 = vmatprep.mubr.bf16.mxu0 0
      %3870 = vmatmul.mubr.bf16.gmra.mxu0 %v3670
      %v3871 = vpop.f32.mrf.mxu0
      %v3872 = vadd.f32 0.0, %v3871
      %v3873 = vpop.f32.mrf.mxu0
      %v3874 = vpop.f32.mrf.mxu0
      %v3875 = vadd.f32 0.0, %v3874
      %v3876 = vpop.f32.mrf.mxu0
      %3877 = vmatprep.mubr.bf16.mxu0 0
      %3878 = vmatmul.mubr.bf16.gmra.mxu0 %v3671
      %v3879 = vpop.f32.mrf.mxu0
      %v3880 = vadd.f32 0.0, %v3879
      %v3881 = vpop.f32.mrf.mxu0
      %v3882 = vpop.f32.mrf.mxu0
      %v3883 = vadd.f32 0.0, %v3882
      %v3884 = vpop.f32.mrf.mxu0
      %3885 = vmatprep.mubr.bf16.mxu0 0
      %3886 = vmatmul.mubr.bf16.gmra.mxu0 %v3672
      %v3887 = vpop.f32.mrf.mxu0
      %v3888 = vadd.f32 0.0, %v3887
      %v3889 = vpop.f32.mrf.mxu0
      %v3890 = vpop.f32.mrf.mxu0
      %v3891 = vadd.f32 0.0, %v3890
      %v3892 = vpop.f32.mrf.mxu0
      %3893 = vmatprep.mubr.bf16.mxu0 0
      %3894 = vmatmul.mubr.bf16.gmra.mxu0 %v3673
      %v3895 = vpop.f32.mrf.mxu0
      %v3896 = vadd.f32 0.0, %v3895
      %v3897 = vpop.f32.mrf.mxu0
      %v3898 = vpop.f32.mrf.mxu0
      %v3899 = vadd.f32 0.0, %v3898
      %v3900 = vpop.f32.mrf.mxu0
      %3901 = vmatprep.mubr.bf16.mxu0 0
      %3902 = vmatmul.mubr.bf16.gmra.mxu0 %v3674
      %v3903 = vpop.f32.mrf.mxu0
      %v3904 = vadd.f32 0.0, %v3903
      %v3905 = vpop.f32.mrf.mxu0
      %v3906 = vpop.f32.mrf.mxu0
      %v3907 = vadd.f32 0.0, %v3906
      %v3908 = vpop.f32.mrf.mxu0
      %3909 = vmatprep.mubr.bf16.mxu0 0
      %3910 = vmatmul.mubr.bf16.gmra.mxu0 %v3675
      %v3911 = vpop.f32.mrf.mxu0
      %v3912 = vadd.f32 0.0, %v3911
      %v3913 = vpop.f32.mrf.mxu0
      %v3914 = vpop.f32.mrf.mxu0
      %v3915 = vadd.f32 0.0, %v3914
      %v3916 = vpop.f32.mrf.mxu0
      %3917 = vdwg.mxu0
      %v3918 = vld [vmem:[#allocation4] sm:$0xff]
      %v3919 = vld [vmem:[#allocation4 + $0x8] sm:$0xff]
      %v3920 = vld [vmem:[#allocation4 + $0x10] sm:$0xff]
      %v3921 = vld [vmem:[#allocation4 + $0x18] sm:$0xff]
      %v3922 = vld [vmem:[#allocation4 + $0x20] sm:$0xff]
      %v3923 = vld [vmem:[#allocation4 + $0x28] sm:$0xff]
      %v3924 = vld [vmem:[#allocation4 + $0x30] sm:$0xff]
      %v3925 = vld [vmem:[#allocation4 + $0x38] sm:$0xff]
      %v3926 = vld [vmem:[#allocation4 + $0x40] sm:$0xff]
      %v3927 = vld [vmem:[#allocation4 + $0x48] sm:$0xff]
      %v3928 = vld [vmem:[#allocation4 + $0x50] sm:$0xff]
      %v3929 = vld [vmem:[#allocation4 + $0x58] sm:$0xff]
      %v3930 = vld [vmem:[#allocation4 + $0x60] sm:$0xff]
      %v3931 = vld [vmem:[#allocation4 + $0x68] sm:$0xff]
      %v3932 = vld [vmem:[#allocation4 + $0x70] sm:$0xff]
      %v3933 = vld [vmem:[#allocation4 + $0x78] sm:$0xff]
      %v3934 = vld [vmem:[#allocation4 + $0x80] sm:$0xff]
      %v3935 = vld [vmem:[#allocation4 + $0x88] sm:$0xff]
      %v3936 = vld [vmem:[#allocation4 + $0x90] sm:$0xff]
      %v3937 = vld [vmem:[#allocation4 + $0x98] sm:$0xff]
      %v3938 = vld [vmem:[#allocation4 + $0xa0] sm:$0xff]
      %v3939 = vld [vmem:[#allocation4 + $0xa8] sm:$0xff]
      %v3940 = vld [vmem:[#allocation4 + $0xb0] sm:$0xff]
      %v3941 = vld [vmem:[#allocation4 + $0xb8] sm:$0xff]
      %v3942 = vld [vmem:[#allocation4 + $0xc0] sm:$0xff]
      %v3943 = vld [vmem:[#allocation4 + $0xc8] sm:$0xff]
      %v3944 = vld [vmem:[#allocation4 + $0xd0] sm:$0xff]
      %v3945 = vld [vmem:[#allocation4 + $0xd8] sm:$0xff]
      %v3946 = vld [vmem:[#allocation4 + $0xe0] sm:$0xff]
      %v3947 = vld [vmem:[#allocation4 + $0xe8] sm:$0xff]
      %v3948 = vld [vmem:[#allocation4 + $0xf0] sm:$0xff]
      %v3949 = vld [vmem:[#allocation4 + $0xf8] sm:$0xff]
      %v3950 = vld [vmem:[#allocation4 + $0x100] sm:$0xff]
      %v3951 = vld [vmem:[#allocation4 + $0x108] sm:$0xff]
      %v3952 = vld [vmem:[#allocation4 + $0x110] sm:$0xff]
      %v3953 = vld [vmem:[#allocation4 + $0x118] sm:$0xff]
      %v3954 = vadd.f32 %v3918, %v3776
      %v3955 = vadd.f32 %v3919, %v3779
      %v3956 = vadd.f32 %v3920, %v3784
      %v3957 = vadd.f32 %v3921, %v3787
      %v3958 = vadd.f32 %v3922, %v3792
      %v3959 = vadd.f32 %v3923, %v3795
      %v3960 = vadd.f32 %v3924, %v3800
      %v3961 = vadd.f32 %v3925, %v3803
      %v3962 = vadd.f32 %v3926, %v3808
      %v3963 = vadd.f32 %v3927, %v3811
      %v3964 = vadd.f32 %v3928, %v3816
      %v3965 = vadd.f32 %v3929, %v3819
      %v3966 = vadd.f32 %v3930, %v3824
      %v3967 = vadd.f32 %v3931, %v3827
      %v3968 = vadd.f32 %v3932, %v3832
      %v3969 = vadd.f32 %v3933, %v3835
      %v3970 = vadd.f32 %v3934, %v3840
      %v3971 = vadd.f32 %v3935, %v3843
      %v3972 = vadd.f32 %v3936, %v3848
      %v3973 = vadd.f32 %v3937, %v3851
      %v3974 = vadd.f32 %v3938, %v3856
      %v3975 = vadd.f32 %v3939, %v3859
      %v3976 = vadd.f32 %v3940, %v3864
      %v3977 = vadd.f32 %v3941, %v3867
      %v3978 = vadd.f32 %v3942, %v3872
      %v3979 = vadd.f32 %v3943, %v3875
      %v3980 = vadd.f32 %v3944, %v3880
      %v3981 = vadd.f32 %v3945, %v3883
      %v3982 = vadd.f32 %v3946, %v3888
      %v3983 = vadd.f32 %v3947, %v3891
      %v3984 = vadd.f32 %v3948, %v3896
      %v3985 = vadd.f32 %v3949, %v3899
      %v3986 = vadd.f32 %v3950, %v3904
      %v3987 = vadd.f32 %v3951, %v3907
      %v3988 = vadd.f32 %v3952, %v3912
      %v3989 = vadd.f32 %v3953, %v3915
      %3990 = vst [vmem:[#allocation4] sm:$0xff] %v3954
      %3991 = vst [vmem:[#allocation4 + $0x8] sm:$0xff] %v3955
      %3992 = vst [vmem:[#allocation4 + $0x10] sm:$0xff] %v3956
      %3993 = vst [vmem:[#allocation4 + $0x18] sm:$0xff] %v3957
      %3994 = vst [vmem:[#allocation4 + $0x20] sm:$0xff] %v3958
      %3995 = vst [vmem:[#allocation4 + $0x28] sm:$0xff] %v3959
      %3996 = vst [vmem:[#allocation4 + $0x30] sm:$0xff] %v3960
      %3997 = vst [vmem:[#allocation4 + $0x38] sm:$0xff] %v3961
      %3998 = vst [vmem:[#allocation4 + $0x40] sm:$0xff] %v3962
      %3999 = vst [vmem:[#allocation4 + $0x48] sm:$0xff] %v3963
      %4000 = vst [vmem:[#allocation4 + $0x50] sm:$0xff] %v3964
      %4001 = vst [vmem:[#allocation4 + $0x58] sm:$0xff] %v3965
      %4002 = vst [vmem:[#allocation4 + $0x60] sm:$0xff] %v3966
      %4003 = vst [vmem:[#allocation4 + $0x68] sm:$0xff] %v3967
      %4004 = vst [vmem:[#allocation4 + $0x70] sm:$0xff] %v3968
      %4005 = vst [vmem:[#allocation4 + $0x78] sm:$0xff] %v3969
      %4006 = vst [vmem:[#allocation4 + $0x80] sm:$0xff] %v3970
      %4007 = vst [vmem:[#allocation4 + $0x88] sm:$0xff] %v3971
      %4008 = vst [vmem:[#allocation4 + $0x90] sm:$0xff] %v3972
      %4009 = vst [vmem:[#allocation4 + $0x98] sm:$0xff] %v3973
      %4010 = vst [vmem:[#allocation4 + $0xa0] sm:$0xff] %v3974
      %4011 = vst [vmem:[#allocation4 + $0xa8] sm:$0xff] %v3975
      %4012 = vst [vmem:[#allocation4 + $0xb0] sm:$0xff] %v3976
      %4013 = vst [vmem:[#allocation4 + $0xb8] sm:$0xff] %v3977
      %4014 = vst [vmem:[#allocation4 + $0xc0] sm:$0xff] %v3978
      %4015 = vst [vmem:[#allocation4 + $0xc8] sm:$0xff] %v3979
      %4016 = vst [vmem:[#allocation4 + $0xd0] sm:$0xff] %v3980
      %4017 = vst [vmem:[#allocation4 + $0xd8] sm:$0xff] %v3981
      %4018 = vst [vmem:[#allocation4 + $0xe0] sm:$0xff] %v3982
      %4019 = vst [vmem:[#allocation4 + $0xe8] sm:$0xff] %v3983
      %4020 = vst [vmem:[#allocation4 + $0xf0] sm:$0xff] %v3984
      %4021 = vst [vmem:[#allocation4 + $0xf8] sm:$0xff] %v3985
      %4022 = vst [vmem:[#allocation4 + $0x100] sm:$0xff] %v3986
      %4023 = vst [vmem:[#allocation4 + $0x108] sm:$0xff] %v3987
      %4024 = vst [vmem:[#allocation4 + $0x110] sm:$0xff] %v3988
      %4025 = vst [vmem:[#allocation4 + $0x118] sm:$0xff] %v3989
      %v4026 = vld [vmem:[#allocation2 + $0x26] sm:$0xff]
      %v4027 = vld [vmem:[#allocation2 + $0x2e] sm:$0xff]
      %v4028 = vld [vmem:[#allocation2 + $0x36] sm:$0xff]
      %v4029 = vld [vmem:[#allocation2 + $0x3e] sm:$0xff]
      %v4030 = vld [vmem:[#allocation2 + $0x46] sm:$0xff]
      %v4031 = vld [vmem:[#allocation2 + $0x4e] sm:$0xff]
      %v4032 = vld [vmem:[#allocation2 + $0x56] sm:$0xff]
      %v4033 = vld [vmem:[#allocation2 + $0x5e] sm:$0xff]
      %v4034 = vld [vmem:[#allocation2 + $0x66] sm:$0xff]
      %v4035 = vld [vmem:[#allocation2 + $0x6e] sm:$0xff]
      %v4036 = vld [vmem:[#allocation2 + $0x76] sm:$0xff]
      %v4037 = vld [vmem:[#allocation2 + $0x7e] sm:$0xff]
      %v4038 = vld [vmem:[#allocation2 + $0x86] sm:$0xff]
      %v4039 = vld [vmem:[#allocation2 + $0x8e] sm:$0xff]
      %v4040 = vld [vmem:[#allocation2 + $0x96] sm:$0xff]
      %v4041 = vld [vmem:[#allocation2 + $0x9e] sm:$0xff]
      %v4042 = vld [vmem:[#allocation2 + $0xa6] sm:$0xff]
      %v4043 = vld [vmem:[#allocation2 + $0xae] sm:$0xff]
      %v4044 = vld [vmem:[#allocation2 + $0xb6] sm:$0xff]
      %v4045 = vld [vmem:[#allocation2 + $0xbe] sm:$0xff]
      %v4046 = vld [vmem:[#allocation2 + $0xc6] sm:$0xff]
      %v4047 = vld [vmem:[#allocation2 + $0xce] sm:$0xff]
      %v4048 = vld [vmem:[#allocation2 + $0xd6] sm:$0xff]
      %v4049 = vld [vmem:[#allocation2 + $0xde] sm:$0xff]
      %v4050 = vld [vmem:[#allocation2 + $0xe6] sm:$0xff]
      %v4051 = vld [vmem:[#allocation2 + $0xee] sm:$0xff]
      %v4052 = vld [vmem:[#allocation2 + $0xf6] sm:$0xff]
      %v4053 = vld [vmem:[#allocation2 + $0xfe] sm:$0xff]
      %v4054 = vld [vmem:[#allocation2 + $0x106] sm:$0xff]
      %v4055 = vld [vmem:[#allocation2 + $0x10e] sm:$0xff]
      %v4056 = vld [vmem:[#allocation2 + $0x116] sm:$0xff]
      %v4057 = vld [vmem:[#allocation2 + $0x11e] sm:$0xff]
      %v4058 = vld [vmem:[#allocation2 + $0x126] sm:$0xff]
      %v4059 = vld [vmem:[#allocation2 + $0x12e] sm:$0xff]
      %v4060 = vld [vmem:[#allocation2 + $0x136] sm:$0xff]
      %v4061 = vld [vmem:[#allocation2 + $0x13e] sm:$0xff]
      %v4062 = vpack.c.bf16 %v4027, %v4026
      %v4063 = vpack.c.bf16 %v4029, %v4028
      %v4064 = vpack.c.bf16 %v4031, %v4030
      %v4065 = vpack.c.bf16 %v4033, %v4032
      %v4066 = vpack.c.bf16 %v4035, %v4034
      %v4067 = vpack.c.bf16 %v4037, %v4036
      %v4068 = vpack.c.bf16 %v4039, %v4038
      %v4069 = vpack.c.bf16 %v4041, %v4040
      %v4070 = vpack.c.bf16 %v4043, %v4042
      %v4071 = vpack.c.bf16 %v4045, %v4044
      %v4072 = vpack.c.bf16 %v4047, %v4046
      %v4073 = vpack.c.bf16 %v4049, %v4048
      %v4074 = vpack.c.bf16 %v4051, %v4050
      %v4075 = vpack.c.bf16 %v4053, %v4052
      %v4076 = vpack.c.bf16 %v4055, %v4054
      %v4077 = vpack.c.bf16 %v4057, %v4056
      %v4078 = vpack.c.bf16 %v4059, %v4058
      %v4079 = vpack.c.bf16 %v4061, %v4060
      %s4080 = scalar_lea.vmem %s4, 512
      %v4081 = vld [vmem:[%s4080] sm:$0xf]
      %v4082 = vld [vmem:[%s4080 + $0x4] sm:$0xf]
      %v4083 = vld [vmem:[%s4080 + $0x8] sm:$0xf]
      %v4084 = vld [vmem:[%s4080 + $0xc] sm:$0xf]
      %v4085 = vld [vmem:[%s4080 + $0x10] sm:$0xf]
      %v4086 = vld [vmem:[%s4080 + $0x14] sm:$0xf]
      %v4087 = vld [vmem:[%s4080 + $0x18] sm:$0xf]
      %v4088 = vld [vmem:[%s4080 + $0x1c] sm:$0xf]
      %v4089 = vld [vmem:[%s4080 + $0x20] sm:$0xf]
      %v4090 = vld [vmem:[%s4080 + $0x24] sm:$0xf]
      %v4091 = vld [vmem:[%s4080 + $0x28] sm:$0xf]
      %v4092 = vld [vmem:[%s4080 + $0x2c] sm:$0xf]
      %v4093 = vld [vmem:[%s4080 + $0x30] sm:$0xf]
      %v4094 = vld [vmem:[%s4080 + $0x34] sm:$0xf]
      %v4095 = vld [vmem:[%s4080 + $0x38] sm:$0xf]
      %v4096 = vld [vmem:[%s4080 + $0x3c] sm:$0xf]
      %v4113 = vunpack.c.l.b16 %v4081
      %v4114 = vunpack.c.l.b16 %v4082
      %v4115 = vunpack.c.l.b16 %v4083
      %v4116 = vunpack.c.l.b16 %v4084
      %v4117 = vunpack.c.l.b16 %v4085
      %v4118 = vunpack.c.l.b16 %v4086
      %v4119 = vunpack.c.l.b16 %v4087
      %v4120 = vunpack.c.l.b16 %v4088
      %v4121 = vunpack.c.l.b16 %v4089
      %v4122 = vunpack.c.l.b16 %v4090
      %v4123 = vunpack.c.l.b16 %v4091
      %v4124 = vunpack.c.l.b16 %v4092
      %v4125 = vunpack.c.l.b16 %v4093
      %v4126 = vunpack.c.l.b16 %v4094
      %v4127 = vunpack.c.l.b16 %v4095
      %v4128 = vunpack.c.l.b16 %v4096
      %v4129 = vpack.c.b16 %v4114, %v4113
      %v4130 = vpack.c.b16 %v4116, %v4115
      %v4131 = vpack.c.b16 %v4118, %v4117
      %v4132 = vpack.c.b16 %v4120, %v4119
      %v4133 = vpack.c.b16 %v4122, %v4121
      %v4134 = vpack.c.b16 %v4124, %v4123
      %v4135 = vpack.c.b16 %v4126, %v4125
      %v4136 = vpack.c.b16 %v4128, %v4127
      %4145 = vmatprep.subr.bf16.mxu0 0
      %4146 = vmatpush1.bf16.msra.mxu0 %v4136
      %4147 = vmatprep.subr.bf16.mxu0 0
      %4148 = vmatpush1.bf16.msra.mxu0 %v4135
      %4149 = vmatprep.subr.bf16.mxu0 0
      %4150 = vmatpush1.bf16.msra.mxu0 %v4134
      %4151 = vmatprep.subr.bf16.mxu0 0
      %4152 = vmatpush1.bf16.msra.mxu0 %v4133
      %4153 = vmatprep.subr.bf16.mxu0 0
      %4154 = vmatpush1.bf16.msra.mxu0 %v4132
      %4155 = vmatprep.subr.bf16.mxu0 0
      %4156 = vmatpush1.bf16.msra.mxu0 %v4131
      %4157 = vmatprep.subr.bf16.mxu0 0
      %4158 = vmatpush1.bf16.msra.mxu0 %v4130
      %4159 = vmatprep.subr.bf16.mxu0 0
      %4160 = vmatpush1.bf16.msra.mxu0 %v4129
      %4161 = vmatprep.subr.bf16.mxu0 0
      %4162 = vmatpush2.bf16.msra.mxu0 0
      %4163 = vmatprep.subr.bf16.mxu0 0
      %4164 = vmatpush2.bf16.msra.mxu0 0
      %4165 = vmatprep.subr.bf16.mxu0 0
      %4166 = vmatpush2.bf16.msra.mxu0 0
      %4167 = vmatprep.subr.bf16.mxu0 0
      %4168 = vmatpush2.bf16.msra.mxu0 0
      %4169 = vmatprep.subr.bf16.mxu0 0
      %4170 = vmatpush2.bf16.msra.mxu0 0
      %4171 = vmatprep.subr.bf16.mxu0 0
      %4172 = vmatpush2.bf16.msra.mxu0 0
      %4173 = vmatprep.subr.bf16.mxu0 0
      %4174 = vmatpush2.bf16.msra.mxu0 0
      %4175 = vmatprep.subr.bf16.mxu0 0
      %4176 = vmatpush2.bf16.msra.mxu0 0
      %4177 = vmatprep.mubr.bf16.mxu0 0
      %4178 = vmatmul.mubr.bf16.gmra.mxu0 %v4062
      %v4179 = vpop.f32.mrf.mxu0
      %v4180 = vadd.f32 0.0, %v4179
      %v4181 = vpop.f32.mrf.mxu0
      %v4182 = vpop.f32.mrf.mxu0
      %v4183 = vadd.f32 0.0, %v4182
      %v4184 = vpop.f32.mrf.mxu0
      %4185 = vmatprep.mubr.bf16.mxu0 0
      %4186 = vmatmul.mubr.bf16.gmra.mxu0 %v4063
      %v4187 = vpop.f32.mrf.mxu0
      %v4188 = vadd.f32 0.0, %v4187
      %v4189 = vpop.f32.mrf.mxu0
      %v4190 = vpop.f32.mrf.mxu0
      %v4191 = vadd.f32 0.0, %v4190
      %v4192 = vpop.f32.mrf.mxu0
      %4193 = vmatprep.mubr.bf16.mxu0 0
      %4194 = vmatmul.mubr.bf16.gmra.mxu0 %v4064
      %v4195 = vpop.f32.mrf.mxu0
      %v4196 = vadd.f32 0.0, %v4195
      %v4197 = vpop.f32.mrf.mxu0
      %v4198 = vpop.f32.mrf.mxu0
      %v4199 = vadd.f32 0.0, %v4198
      %v4200 = vpop.f32.mrf.mxu0
      %4201 = vmatprep.mubr.bf16.mxu0 0
      %4202 = vmatmul.mubr.bf16.gmra.mxu0 %v4065
      %v4203 = vpop.f32.mrf.mxu0
      %v4204 = vadd.f32 0.0, %v4203
      %v4205 = vpop.f32.mrf.mxu0
      %v4206 = vpop.f32.mrf.mxu0
      %v4207 = vadd.f32 0.0, %v4206
      %v4208 = vpop.f32.mrf.mxu0
      %4209 = vmatprep.mubr.bf16.mxu0 0
      %4210 = vmatmul.mubr.bf16.gmra.mxu0 %v4066
      %v4211 = vpop.f32.mrf.mxu0
      %v4212 = vadd.f32 0.0, %v4211
      %v4213 = vpop.f32.mrf.mxu0
      %v4214 = vpop.f32.mrf.mxu0
      %v4215 = vadd.f32 0.0, %v4214
      %v4216 = vpop.f32.mrf.mxu0
      %4217 = vmatprep.mubr.bf16.mxu0 0
      %4218 = vmatmul.mubr.bf16.gmra.mxu0 %v4067
      %v4219 = vpop.f32.mrf.mxu0
      %v4220 = vadd.f32 0.0, %v4219
      %v4221 = vpop.f32.mrf.mxu0
      %v4222 = vpop.f32.mrf.mxu0
      %v4223 = vadd.f32 0.0, %v4222
      %v4224 = vpop.f32.mrf.mxu0
      %4225 = vmatprep.mubr.bf16.mxu0 0
      %4226 = vmatmul.mubr.bf16.gmra.mxu0 %v4068
      %v4227 = vpop.f32.mrf.mxu0
      %v4228 = vadd.f32 0.0, %v4227
      %v4229 = vpop.f32.mrf.mxu0
      %v4230 = vpop.f32.mrf.mxu0
      %v4231 = vadd.f32 0.0, %v4230
      %v4232 = vpop.f32.mrf.mxu0
      %4233 = vmatprep.mubr.bf16.mxu0 0
      %4234 = vmatmul.mubr.bf16.gmra.mxu0 %v4069
      %v4235 = vpop.f32.mrf.mxu0
      %v4236 = vadd.f32 0.0, %v4235
      %v4237 = vpop.f32.mrf.mxu0
      %v4238 = vpop.f32.mrf.mxu0
      %v4239 = vadd.f32 0.0, %v4238
      %v4240 = vpop.f32.mrf.mxu0
      %4241 = vmatprep.mubr.bf16.mxu0 0
      %4242 = vmatmul.mubr.bf16.gmra.mxu0 %v4070
      %v4243 = vpop.f32.mrf.mxu0
      %v4244 = vadd.f32 0.0, %v4243
      %v4245 = vpop.f32.mrf.mxu0
      %v4246 = vpop.f32.mrf.mxu0
      %v4247 = vadd.f32 0.0, %v4246
      %v4248 = vpop.f32.mrf.mxu0
      %4249 = vmatprep.mubr.bf16.mxu0 0
      %4250 = vmatmul.mubr.bf16.gmra.mxu0 %v4071
      %v4251 = vpop.f32.mrf.mxu0
      %v4252 = vadd.f32 0.0, %v4251
      %v4253 = vpop.f32.mrf.mxu0
      %v4254 = vpop.f32.mrf.mxu0
      %v4255 = vadd.f32 0.0, %v4254
      %v4256 = vpop.f32.mrf.mxu0
      %4257 = vmatprep.mubr.bf16.mxu0 0
      %4258 = vmatmul.mubr.bf16.gmra.mxu0 %v4072
      %v4259 = vpop.f32.mrf.mxu0
      %v4260 = vadd.f32 0.0, %v4259
      %v4261 = vpop.f32.mrf.mxu0
      %v4262 = vpop.f32.mrf.mxu0
      %v4263 = vadd.f32 0.0, %v4262
      %v4264 = vpop.f32.mrf.mxu0
      %4265 = vmatprep.mubr.bf16.mxu0 0
      %4266 = vmatmul.mubr.bf16.gmra.mxu0 %v4073
      %v4267 = vpop.f32.mrf.mxu0
      %v4268 = vadd.f32 0.0, %v4267
      %v4269 = vpop.f32.mrf.mxu0
      %v4270 = vpop.f32.mrf.mxu0
      %v4271 = vadd.f32 0.0, %v4270
      %v4272 = vpop.f32.mrf.mxu0
      %4273 = vmatprep.mubr.bf16.mxu0 0
      %4274 = vmatmul.mubr.bf16.gmra.mxu0 %v4074
      %v4275 = vpop.f32.mrf.mxu0
      %v4276 = vadd.f32 0.0, %v4275
      %v4277 = vpop.f32.mrf.mxu0
      %v4278 = vpop.f32.mrf.mxu0
      %v4279 = vadd.f32 0.0, %v4278
      %v4280 = vpop.f32.mrf.mxu0
      %4281 = vmatprep.mubr.bf16.mxu0 0
      %4282 = vmatmul.mubr.bf16.gmra.mxu0 %v4075
      %v4283 = vpop.f32.mrf.mxu0
      %v4284 = vadd.f32 0.0, %v4283
      %v4285 = vpop.f32.mrf.mxu0
      %v4286 = vpop.f32.mrf.mxu0
      %v4287 = vadd.f32 0.0, %v4286
      %v4288 = vpop.f32.mrf.mxu0
      %4289 = vmatprep.mubr.bf16.mxu0 0
      %4290 = vmatmul.mubr.bf16.gmra.mxu0 %v4076
      %v4291 = vpop.f32.mrf.mxu0
      %v4292 = vadd.f32 0.0, %v4291
      %v4293 = vpop.f32.mrf.mxu0
      %v4294 = vpop.f32.mrf.mxu0
      %v4295 = vadd.f32 0.0, %v4294
      %v4296 = vpop.f32.mrf.mxu0
      %4297 = vmatprep.mubr.bf16.mxu0 0
      %4298 = vmatmul.mubr.bf16.gmra.mxu0 %v4077
      %v4299 = vpop.f32.mrf.mxu0
      %v4300 = vadd.f32 0.0, %v4299
      %v4301 = vpop.f32.mrf.mxu0
      %v4302 = vpop.f32.mrf.mxu0
      %v4303 = vadd.f32 0.0, %v4302
      %v4304 = vpop.f32.mrf.mxu0
      %4305 = vmatprep.mubr.bf16.mxu0 0
      %4306 = vmatmul.mubr.bf16.gmra.mxu0 %v4078
      %v4307 = vpop.f32.mrf.mxu0
      %v4308 = vadd.f32 0.0, %v4307
      %v4309 = vpop.f32.mrf.mxu0
      %v4310 = vpop.f32.mrf.mxu0
      %v4311 = vadd.f32 0.0, %v4310
      %v4312 = vpop.f32.mrf.mxu0
      %4313 = vmatprep.mubr.bf16.mxu0 0
      %4314 = vmatmul.mubr.bf16.gmra.mxu0 %v4079
      %v4315 = vpop.f32.mrf.mxu0
      %v4316 = vadd.f32 0.0, %v4315
      %v4317 = vpop.f32.mrf.mxu0
      %v4318 = vpop.f32.mrf.mxu0
      %v4319 = vadd.f32 0.0, %v4318
      %v4320 = vpop.f32.mrf.mxu0
      %4321 = vdwg.mxu0
      %v4322 = vld [vmem:[#allocation4] sm:$0xff]
      %v4323 = vld [vmem:[#allocation4 + $0x8] sm:$0xff]
      %v4324 = vld [vmem:[#allocation4 + $0x10] sm:$0xff]
      %v4325 = vld [vmem:[#allocation4 + $0x18] sm:$0xff]
      %v4326 = vld [vmem:[#allocation4 + $0x20] sm:$0xff]
      %v4327 = vld [vmem:[#allocation4 + $0x28] sm:$0xff]
      %v4328 = vld [vmem:[#allocation4 + $0x30] sm:$0xff]
      %v4329 = vld [vmem:[#allocation4 + $0x38] sm:$0xff]
      %v4330 = vld [vmem:[#allocation4 + $0x40] sm:$0xff]
      %v4331 = vld [vmem:[#allocation4 + $0x48] sm:$0xff]
      %v4332 = vld [vmem:[#allocation4 + $0x50] sm:$0xff]
      %v4333 = vld [vmem:[#allocation4 + $0x58] sm:$0xff]
      %v4334 = vld [vmem:[#allocation4 + $0x60] sm:$0xff]
      %v4335 = vld [vmem:[#allocation4 + $0x68] sm:$0xff]
      %v4336 = vld [vmem:[#allocation4 + $0x70] sm:$0xff]
      %v4337 = vld [vmem:[#allocation4 + $0x78] sm:$0xff]
      %v4338 = vld [vmem:[#allocation4 + $0x80] sm:$0xff]
      %v4339 = vld [vmem:[#allocation4 + $0x88] sm:$0xff]
      %v4340 = vld [vmem:[#allocation4 + $0x90] sm:$0xff]
      %v4341 = vld [vmem:[#allocation4 + $0x98] sm:$0xff]
      %v4342 = vld [vmem:[#allocation4 + $0xa0] sm:$0xff]
      %v4343 = vld [vmem:[#allocation4 + $0xa8] sm:$0xff]
      %v4344 = vld [vmem:[#allocation4 + $0xb0] sm:$0xff]
      %v4345 = vld [vmem:[#allocation4 + $0xb8] sm:$0xff]
      %v4346 = vld [vmem:[#allocation4 + $0xc0] sm:$0xff]
      %v4347 = vld [vmem:[#allocation4 + $0xc8] sm:$0xff]
      %v4348 = vld [vmem:[#allocation4 + $0xd0] sm:$0xff]
      %v4349 = vld [vmem:[#allocation4 + $0xd8] sm:$0xff]
      %v4350 = vld [vmem:[#allocation4 + $0xe0] sm:$0xff]
      %v4351 = vld [vmem:[#allocation4 + $0xe8] sm:$0xff]
      %v4352 = vld [vmem:[#allocation4 + $0xf0] sm:$0xff]
      %v4353 = vld [vmem:[#allocation4 + $0xf8] sm:$0xff]
      %v4354 = vld [vmem:[#allocation4 + $0x100] sm:$0xff]
      %v4355 = vld [vmem:[#allocation4 + $0x108] sm:$0xff]
      %v4356 = vld [vmem:[#allocation4 + $0x110] sm:$0xff]
      %v4357 = vld [vmem:[#allocation4 + $0x118] sm:$0xff]
      %v4358 = vadd.f32 %v4322, %v4180
      %v4359 = vadd.f32 %v4323, %v4183
      %v4360 = vadd.f32 %v4324, %v4188
      %v4361 = vadd.f32 %v4325, %v4191
      %v4362 = vadd.f32 %v4326, %v4196
      %v4363 = vadd.f32 %v4327, %v4199
      %v4364 = vadd.f32 %v4328, %v4204
      %v4365 = vadd.f32 %v4329, %v4207
      %v4366 = vadd.f32 %v4330, %v4212
      %v4367 = vadd.f32 %v4331, %v4215
      %v4368 = vadd.f32 %v4332, %v4220
      %v4369 = vadd.f32 %v4333, %v4223
      %v4370 = vadd.f32 %v4334, %v4228
      %v4371 = vadd.f32 %v4335, %v4231
      %v4372 = vadd.f32 %v4336, %v4236
      %v4373 = vadd.f32 %v4337, %v4239
      %v4374 = vadd.f32 %v4338, %v4244
      %v4375 = vadd.f32 %v4339, %v4247
      %v4376 = vadd.f32 %v4340, %v4252
      %v4377 = vadd.f32 %v4341, %v4255
      %v4378 = vadd.f32 %v4342, %v4260
      %v4379 = vadd.f32 %v4343, %v4263
      %v4380 = vadd.f32 %v4344, %v4268
      %v4381 = vadd.f32 %v4345, %v4271
      %v4382 = vadd.f32 %v4346, %v4276
      %v4383 = vadd.f32 %v4347, %v4279
      %v4384 = vadd.f32 %v4348, %v4284
      %v4385 = vadd.f32 %v4349, %v4287
      %v4386 = vadd.f32 %v4350, %v4292
      %v4387 = vadd.f32 %v4351, %v4295
      %v4388 = vadd.f32 %v4352, %v4300
      %v4389 = vadd.f32 %v4353, %v4303
      %v4390 = vadd.f32 %v4354, %v4308
      %v4391 = vadd.f32 %v4355, %v4311
      %v4392 = vadd.f32 %v4356, %v4316
      %v4393 = vadd.f32 %v4357, %v4319
      %4394 = vst [vmem:[#allocation4] sm:$0xff] %v4358
      %4395 = vst [vmem:[#allocation4 + $0x8] sm:$0xff] %v4359
      %4396 = vst [vmem:[#allocation4 + $0x10] sm:$0xff] %v4360
      %4397 = vst [vmem:[#allocation4 + $0x18] sm:$0xff] %v4361
      %4398 = vst [vmem:[#allocation4 + $0x20] sm:$0xff] %v4362
      %4399 = vst [vmem:[#allocation4 + $0x28] sm:$0xff] %v4363
      %4400 = vst [vmem:[#allocation4 + $0x30] sm:$0xff] %v4364
      %4401 = vst [vmem:[#allocation4 + $0x38] sm:$0xff] %v4365
      %4402 = vst [vmem:[#allocation4 + $0x40] sm:$0xff] %v4366
      %4403 = vst [vmem:[#allocation4 + $0x48] sm:$0xff] %v4367
      %4404 = vst [vmem:[#allocation4 + $0x50] sm:$0xff] %v4368
      %4405 = vst [vmem:[#allocation4 + $0x58] sm:$0xff] %v4369
      %4406 = vst [vmem:[#allocation4 + $0x60] sm:$0xff] %v4370
      %4407 = vst [vmem:[#allocation4 + $0x68] sm:$0xff] %v4371
      %4408 = vst [vmem:[#allocation4 + $0x70] sm:$0xff] %v4372
      %4409 = vst [vmem:[#allocation4 + $0x78] sm:$0xff] %v4373
      %4410 = vst [vmem:[#allocation4 + $0x80] sm:$0xff] %v4374
      %4411 = vst [vmem:[#allocation4 + $0x88] sm:$0xff] %v4375
      %4412 = vst [vmem:[#allocation4 + $0x90] sm:$0xff] %v4376
      %4413 = vst [vmem:[#allocation4 + $0x98] sm:$0xff] %v4377
      %4414 = vst [vmem:[#allocation4 + $0xa0] sm:$0xff] %v4378
      %4415 = vst [vmem:[#allocation4 + $0xa8] sm:$0xff] %v4379
      %4416 = vst [vmem:[#allocation4 + $0xb0] sm:$0xff] %v4380
      %4417 = vst [vmem:[#allocation4 + $0xb8] sm:$0xff] %v4381
      %4418 = vst [vmem:[#allocation4 + $0xc0] sm:$0xff] %v4382
      %4419 = vst [vmem:[#allocation4 + $0xc8] sm:$0xff] %v4383
      %4420 = vst [vmem:[#allocation4 + $0xd0] sm:$0xff] %v4384
      %4421 = vst [vmem:[#allocation4 + $0xd8] sm:$0xff] %v4385
      %4422 = vst [vmem:[#allocation4 + $0xe0] sm:$0xff] %v4386
      %4423 = vst [vmem:[#allocation4 + $0xe8] sm:$0xff] %v4387
      %4424 = vst [vmem:[#allocation4 + $0xf0] sm:$0xff] %v4388
      %4425 = vst [vmem:[#allocation4 + $0xf8] sm:$0xff] %v4389
      %4426 = vst [vmem:[#allocation4 + $0x100] sm:$0xff] %v4390
      %4427 = vst [vmem:[#allocation4 + $0x108] sm:$0xff] %v4391
      %4428 = vst [vmem:[#allocation4 + $0x110] sm:$0xff] %v4392
      %4429 = vst [vmem:[#allocation4 + $0x118] sm:$0xff] %v4393
      %v4430 = vld [vmem:[#allocation4] sm:$0xff]
      %v4431 = vld [vmem:[#allocation4 + $0x8] sm:$0xff]
      %v4432 = vld [vmem:[#allocation4 + $0x10] sm:$0xff]
      %v4433 = vld [vmem:[#allocation4 + $0x18] sm:$0xff]
      %v4434 = vld [vmem:[#allocation4 + $0x20] sm:$0xff]
      %v4435 = vld [vmem:[#allocation4 + $0x28] sm:$0xff]
      %v4436 = vld [vmem:[#allocation4 + $0x30] sm:$0xff]
      %v4437 = vld [vmem:[#allocation4 + $0x38] sm:$0xff]
      %v4438 = vld [vmem:[#allocation4 + $0x40] sm:$0xff]
      %v4439 = vld [vmem:[#allocation4 + $0x48] sm:$0xff]
      %v4440 = vld [vmem:[#allocation4 + $0x50] sm:$0xff]
      %v4441 = vld [vmem:[#allocation4 + $0x58] sm:$0xff]
      %v4442 = vld [vmem:[#allocation4 + $0x60] sm:$0xff]
      %v4443 = vld [vmem:[#allocation4 + $0x68] sm:$0xff]
      %v4444 = vld [vmem:[#allocation4 + $0x70] sm:$0xff]
      %v4445 = vld [vmem:[#allocation4 + $0x78] sm:$0xff]
      %v4446 = vld [vmem:[#allocation4 + $0x80] sm:$0xff]
      %v4447 = vld [vmem:[#allocation4 + $0x88] sm:$0xff]
      %v4448 = vld [vmem:[#allocation4 + $0x90] sm:$0xff]
      %v4449 = vld [vmem:[#allocation4 + $0x98] sm:$0xff]
      %v4450 = vld [vmem:[#allocation4 + $0xa0] sm:$0xff]
      %v4451 = vld [vmem:[#allocation4 + $0xa8] sm:$0xff]
      %v4452 = vld [vmem:[#allocation4 + $0xb0] sm:$0xff]
      %v4453 = vld [vmem:[#allocation4 + $0xb8] sm:$0xff]
      %v4454 = vld [vmem:[#allocation4 + $0xc0] sm:$0xff]
      %v4455 = vld [vmem:[#allocation4 + $0xc8] sm:$0xff]
      %v4456 = vld [vmem:[#allocation4 + $0xd0] sm:$0xff]
      %v4457 = vld [vmem:[#allocation4 + $0xd8] sm:$0xff]
      %v4458 = vld [vmem:[#allocation4 + $0xe0] sm:$0xff]
      %v4459 = vld [vmem:[#allocation4 + $0xe8] sm:$0xff]
      %v4460 = vld [vmem:[#allocation4 + $0xf0] sm:$0xff]
      %v4461 = vld [vmem:[#allocation4 + $0xf8] sm:$0xff]
      %v4462 = vld [vmem:[#allocation4 + $0x100] sm:$0xff]
      %v4463 = vld [vmem:[#allocation4 + $0x108] sm:$0xff]
      %v4464 = vld [vmem:[#allocation4 + $0x110] sm:$0xff]
      %v4465 = vld [vmem:[#allocation4 + $0x118] sm:$0xff]
      %v4466 = vld [vmem:[%s5] sm:$0x1]
      %v4468 = vlaneseq
      %v4469 = vshrl.u32 %v4468, 7
      %v4470 = vsub.s32 0, %v4469
      %v4471 = vrot.slane %v4466, %v4470
      %v4473 = vmul.f32 %v4430, %v4471
      %v4474 = vmul.f32 %v4431, %v4471
      %v4475 = vmul.f32 %v4432, %v4471
      %v4476 = vmul.f32 %v4433, %v4471
      %v4477 = vmul.f32 %v4434, %v4471
      %v4478 = vmul.f32 %v4435, %v4471
      %v4479 = vmul.f32 %v4436, %v4471
      %v4480 = vmul.f32 %v4437, %v4471
      %v4481 = vmul.f32 %v4438, %v4471
      %v4482 = vmul.f32 %v4439, %v4471
      %v4483 = vmul.f32 %v4440, %v4471
      %v4484 = vmul.f32 %v4441, %v4471
      %v4485 = vmul.f32 %v4442, %v4471
      %v4486 = vmul.f32 %v4443, %v4471
      %v4487 = vmul.f32 %v4444, %v4471
      %v4488 = vmul.f32 %v4445, %v4471
      %v4489 = vmul.f32 %v4446, %v4471
      %v4490 = vmul.f32 %v4447, %v4471
      %v4491 = vmul.f32 %v4448, %v4471
      %v4492 = vmul.f32 %v4449, %v4471
      %v4493 = vmul.f32 %v4450, %v4471
      %v4494 = vmul.f32 %v4451, %v4471
      %v4495 = vmul.f32 %v4452, %v4471
      %v4496 = vmul.f32 %v4453, %v4471
      %v4497 = vmul.f32 %v4454, %v4471
      %v4498 = vmul.f32 %v4455, %v4471
      %v4499 = vmul.f32 %v4456, %v4471
      %v4500 = vmul.f32 %v4457, %v4471
      %v4501 = vmul.f32 %v4458, %v4471
      %v4502 = vmul.f32 %v4459, %v4471
      %v4503 = vmul.f32 %v4460, %v4471
      %v4504 = vmul.f32 %v4461, %v4471
      %v4505 = vmul.f32 %v4462, %v4471
      %v4506 = vmul.f32 %v4463, %v4471
      %v4507 = vmul.f32 %v4464, %v4471
      %v4508 = vmul.f32 %v4465, %v4471
      %v4509 = vld [vmem:[%s6] sm:$0x1]
      %v4511 = vlaneseq
      %v4512 = vshrl.u32 %v4511, 7
      %v4513 = vsub.s32 0, %v4512
      %v4514 = vrot.slane %v4509, %v4513
      %v4516 = vadd.f32 %v4473, %v4514
      %v4517 = vadd.f32 %v4474, %v4514
      %v4518 = vadd.f32 %v4475, %v4514
      %v4519 = vadd.f32 %v4476, %v4514
      %v4520 = vadd.f32 %v4477, %v4514
      %v4521 = vadd.f32 %v4478, %v4514
      %v4522 = vadd.f32 %v4479, %v4514
      %v4523 = vadd.f32 %v4480, %v4514
      %v4524 = vadd.f32 %v4481, %v4514
      %v4525 = vadd.f32 %v4482, %v4514
      %v4526 = vadd.f32 %v4483, %v4514
      %v4527 = vadd.f32 %v4484, %v4514
      %v4528 = vadd.f32 %v4485, %v4514
      %v4529 = vadd.f32 %v4486, %v4514
      %v4530 = vadd.f32 %v4487, %v4514
      %v4531 = vadd.f32 %v4488, %v4514
      %v4532 = vadd.f32 %v4489, %v4514
      %v4533 = vadd.f32 %v4490, %v4514
      %v4534 = vadd.f32 %v4491, %v4514
      %v4535 = vadd.f32 %v4492, %v4514
      %v4536 = vadd.f32 %v4493, %v4514
      %v4537 = vadd.f32 %v4494, %v4514
      %v4538 = vadd.f32 %v4495, %v4514
      %v4539 = vadd.f32 %v4496, %v4514
      %v4540 = vadd.f32 %v4497, %v4514
      %v4541 = vadd.f32 %v4498, %v4514
      %v4542 = vadd.f32 %v4499, %v4514
      %v4543 = vadd.f32 %v4500, %v4514
      %v4544 = vadd.f32 %v4501, %v4514
      %v4545 = vadd.f32 %v4502, %v4514
      %v4546 = vadd.f32 %v4503, %v4514
      %v4547 = vadd.f32 %v4504, %v4514
      %v4548 = vadd.f32 %v4505, %v4514
      %v4549 = vadd.f32 %v4506, %v4514
      %v4550 = vadd.f32 %v4507, %v4514
      %v4551 = vadd.f32 %v4508, %v4514
      %v4552 = vmax.f32 %v4516, 0.0
      %v4553 = vmax.f32 %v4517, 0.0
      %v4554 = vmax.f32 %v4518, 0.0
      %v4555 = vmax.f32 %v4519, 0.0
      %v4556 = vmax.f32 %v4520, 0.0
      %v4557 = vmax.f32 %v4521, 0.0
      %v4558 = vmax.f32 %v4522, 0.0
      %v4559 = vmax.f32 %v4523, 0.0
      %v4560 = vmax.f32 %v4524, 0.0
      %v4561 = vmax.f32 %v4525, 0.0
      %v4562 = vmax.f32 %v4526, 0.0
      %v4563 = vmax.f32 %v4527, 0.0
      %v4564 = vmax.f32 %v4528, 0.0
      %v4565 = vmax.f32 %v4529, 0.0
      %v4566 = vmax.f32 %v4530, 0.0
      %v4567 = vmax.f32 %v4531, 0.0
      %v4568 = vmax.f32 %v4532, 0.0
      %v4569 = vmax.f32 %v4533, 0.0
      %v4570 = vmax.f32 %v4534, 0.0
      %v4571 = vmax.f32 %v4535, 0.0
      %v4572 = vmax.f32 %v4536, 0.0
      %v4573 = vmax.f32 %v4537, 0.0
      %v4574 = vmax.f32 %v4538, 0.0
      %v4575 = vmax.f32 %v4539, 0.0
      %v4576 = vmax.f32 %v4540, 0.0
      %v4577 = vmax.f32 %v4541, 0.0
      %v4578 = vmax.f32 %v4542, 0.0
      %v4579 = vmax.f32 %v4543, 0.0
      %v4580 = vmax.f32 %v4544, 0.0
      %v4581 = vmax.f32 %v4545, 0.0
      %v4582 = vmax.f32 %v4546, 0.0
      %v4583 = vmax.f32 %v4547, 0.0
      %v4584 = vmax.f32 %v4548, 0.0
      %v4585 = vmax.f32 %v4549, 0.0
      %v4586 = vmax.f32 %v4550, 0.0
      %v4587 = vmax.f32 %v4551, 0.0
      %v4588 = vld [vmem:[%s1 + $0x13] sm:$0xff]
      %v4589 = vld [vmem:[%s1 + $0x1b] sm:$0xff]
      %v4590 = vld [vmem:[%s1 + $0x23] sm:$0xff]
      %v4591 = vld [vmem:[%s1 + $0x2b] sm:$0xff]
      %v4592 = vld [vmem:[%s1 + $0x33] sm:$0xff]
      %v4593 = vld [vmem:[%s1 + $0x3b] sm:$0xff]
      %v4594 = vld [vmem:[%s1 + $0x43] sm:$0xff]
      %v4595 = vld [vmem:[%s1 + $0x4b] sm:$0xff]
      %v4596 = vld [vmem:[%s1 + $0x53] sm:$0xff]
      %v4597 = vld [vmem:[%s1 + $0x5b] sm:$0xff]
      %v4598 = vld [vmem:[%s1 + $0x63] sm:$0xff]
      %v4599 = vld [vmem:[%s1 + $0x6b] sm:$0xff]
      %v4600 = vld [vmem:[%s1 + $0x73] sm:$0xff]
      %v4601 = vld [vmem:[%s1 + $0x7b] sm:$0xff]
      %v4602 = vld [vmem:[%s1 + $0x83] sm:$0xff]
      %v4603 = vld [vmem:[%s1 + $0x8b] sm:$0xff]
      %v4604 = vld [vmem:[%s1 + $0x93] sm:$0xff]
      %v4605 = vld [vmem:[%s1 + $0x9b] sm:$0xff]
      %v4606 = vld [vmem:[%s1 + $0xa3] sm:$0xff]
      %v4607 = vld [vmem:[%s1 + $0xab] sm:$0xff]
      %v4608 = vld [vmem:[%s1 + $0xb3] sm:$0xff]
      %v4609 = vld [vmem:[%s1 + $0xbb] sm:$0xff]
      %v4610 = vld [vmem:[%s1 + $0xc3] sm:$0xff]
      %v4611 = vld [vmem:[%s1 + $0xcb] sm:$0xff]
      %v4612 = vld [vmem:[%s1 + $0xd3] sm:$0xff]
      %v4613 = vld [vmem:[%s1 + $0xdb] sm:$0xff]
      %v4614 = vld [vmem:[%s1 + $0xe3] sm:$0xff]
      %v4615 = vld [vmem:[%s1 + $0xeb] sm:$0xff]
      %v4616 = vld [vmem:[%s1 + $0xf3] sm:$0xff]
      %v4617 = vld [vmem:[%s1 + $0xfb] sm:$0xff]
      %v4618 = vld [vmem:[%s1 + $0x103] sm:$0xff]
      %v4619 = vld [vmem:[%s1 + $0x10b] sm:$0xff]
      %v4620 = vld [vmem:[%s1 + $0x113] sm:$0xff]
      %v4621 = vld [vmem:[%s1 + $0x11b] sm:$0xff]
      %v4622 = vld [vmem:[%s1 + $0x123] sm:$0xff]
      %v4623 = vld [vmem:[%s1 + $0x12b] sm:$0xff]
      %4625 = vset.pattern.permute.xlu0 0
      %4626 = vperm.xlu0 %4625, %v4588
      %v4627 = vpop.permute.xlu0 %4626
      %4630 = vset.pattern.permute.xlu0 0
      %4631 = vperm.xlu0 %4630, %v4589
      %v4632 = vpop.permute.xlu0 %4631
      %4635 = vset.pattern.permute.xlu0 0
      %4636 = vperm.xlu0 %4635, %v4590
      %v4637 = vpop.permute.xlu0 %4636
      %4640 = vset.pattern.permute.xlu0 0
      %4641 = vperm.xlu0 %4640, %v4591
      %v4642 = vpop.permute.xlu0 %4641
      %4645 = vset.pattern.permute.xlu0 0
      %4646 = vperm.xlu0 %4645, %v4592
      %v4647 = vpop.permute.xlu0 %4646
      %4650 = vset.pattern.permute.xlu0 0
      %4651 = vperm.xlu0 %4650, %v4593
      %v4652 = vpop.permute.xlu0 %4651
      %4655 = vset.pattern.permute.xlu0 0
      %4656 = vperm.xlu0 %4655, %v4594
      %v4657 = vpop.permute.xlu0 %4656
      %4660 = vset.pattern.permute.xlu0 0
      %4661 = vperm.xlu0 %4660, %v4595
      %v4662 = vpop.permute.xlu0 %4661
      %4665 = vset.pattern.permute.xlu0 0
      %4666 = vperm.xlu0 %4665, %v4596
      %v4667 = vpop.permute.xlu0 %4666
      %4670 = vset.pattern.permute.xlu0 0
      %4671 = vperm.xlu0 %4670, %v4597
      %v4672 = vpop.permute.xlu0 %4671
      %4675 = vset.pattern.permute.xlu0 0
      %4676 = vperm.xlu0 %4675, %v4598
      %v4677 = vpop.permute.xlu0 %4676
      %4680 = vset.pattern.permute.xlu0 0
      %4681 = vperm.xlu0 %4680, %v4599
      %v4682 = vpop.permute.xlu0 %4681
      %4685 = vset.pattern.permute.xlu0 0
      %4686 = vperm.xlu0 %4685, %v4600
      %v4687 = vpop.permute.xlu0 %4686
      %4690 = vset.pattern.permute.xlu0 0
      %4691 = vperm.xlu0 %4690, %v4601
      %v4692 = vpop.permute.xlu0 %4691
      %4695 = vset.pattern.permute.xlu0 0
      %4696 = vperm.xlu0 %4695, %v4602
      %v4697 = vpop.permute.xlu0 %4696
      %4700 = vset.pattern.permute.xlu0 0
      %4701 = vperm.xlu0 %4700, %v4603
      %v4702 = vpop.permute.xlu0 %4701
      %4705 = vset.pattern.permute.xlu0 0
      %4706 = vperm.xlu0 %4705, %v4604
      %v4707 = vpop.permute.xlu0 %4706
      %4710 = vset.pattern.permute.xlu0 0
      %4711 = vperm.xlu0 %4710, %v4605
      %v4712 = vpop.permute.xlu0 %4711
      %4715 = vset.pattern.permute.xlu0 0
      %4716 = vperm.xlu0 %4715, %v4606
      %v4717 = vpop.permute.xlu0 %4716
      %4720 = vset.pattern.permute.xlu0 0
      %4721 = vperm.xlu0 %4720, %v4607
      %v4722 = vpop.permute.xlu0 %4721
      %4725 = vset.pattern.permute.xlu0 0
      %4726 = vperm.xlu0 %4725, %v4608
      %v4727 = vpop.permute.xlu0 %4726
      %4730 = vset.pattern.permute.xlu0 0
      %4731 = vperm.xlu0 %4730, %v4609
      %v4732 = vpop.permute.xlu0 %4731
      %4735 = vset.pattern.permute.xlu0 0
      %4736 = vperm.xlu0 %4735, %v4610
      %v4737 = vpop.permute.xlu0 %4736
      %4740 = vset.pattern.permute.xlu0 0
      %4741 = vperm.xlu0 %4740, %v4611
      %v4742 = vpop.permute.xlu0 %4741
      %4745 = vset.pattern.permute.xlu0 0
      %4746 = vperm.xlu0 %4745, %v4612
      %v4747 = vpop.permute.xlu0 %4746
      %4750 = vset.pattern.permute.xlu0 0
      %4751 = vperm.xlu0 %4750, %v4613
      %v4752 = vpop.permute.xlu0 %4751
      %4755 = vset.pattern.permute.xlu0 0
      %4756 = vperm.xlu0 %4755, %v4614
      %v4757 = vpop.permute.xlu0 %4756
      %4760 = vset.pattern.permute.xlu0 0
      %4761 = vperm.xlu0 %4760, %v4615
      %v4762 = vpop.permute.xlu0 %4761
      %4765 = vset.pattern.permute.xlu0 0
      %4766 = vperm.xlu0 %4765, %v4616
      %v4767 = vpop.permute.xlu0 %4766
      %4770 = vset.pattern.permute.xlu0 0
      %4771 = vperm.xlu0 %4770, %v4617
      %v4772 = vpop.permute.xlu0 %4771
      %4775 = vset.pattern.permute.xlu0 0
      %4776 = vperm.xlu0 %4775, %v4618
      %v4777 = vpop.permute.xlu0 %4776
      %4780 = vset.pattern.permute.xlu0 0
      %4781 = vperm.xlu0 %4780, %v4619
      %v4782 = vpop.permute.xlu0 %4781
      %4785 = vset.pattern.permute.xlu0 0
      %4786 = vperm.xlu0 %4785, %v4620
      %v4787 = vpop.permute.xlu0 %4786
      %4790 = vset.pattern.permute.xlu0 0
      %4791 = vperm.xlu0 %4790, %v4621
      %v4792 = vpop.permute.xlu0 %4791
      %4795 = vset.pattern.permute.xlu0 0
      %4796 = vperm.xlu0 %4795, %v4622
      %v4797 = vpop.permute.xlu0 %4796
      %4800 = vset.pattern.permute.xlu0 0
      %4801 = vperm.xlu0 %4800, %v4623
      %v4802 = vpop.permute.xlu0 %4801
      %v4804 = vmul.f32 %v4552, %v4627
      %v4805 = vmul.f32 %v4553, %v4632
      %v4806 = vmul.f32 %v4554, %v4637
      %v4807 = vmul.f32 %v4555, %v4642
      %v4808 = vmul.f32 %v4556, %v4647
      %v4809 = vmul.f32 %v4557, %v4652
      %v4810 = vmul.f32 %v4558, %v4657
      %v4811 = vmul.f32 %v4559, %v4662
      %v4812 = vmul.f32 %v4560, %v4667
      %v4813 = vmul.f32 %v4561, %v4672
      %v4814 = vmul.f32 %v4562, %v4677
      %v4815 = vmul.f32 %v4563, %v4682
      %v4816 = vmul.f32 %v4564, %v4687
      %v4817 = vmul.f32 %v4565, %v4692
      %v4818 = vmul.f32 %v4566, %v4697
      %v4819 = vmul.f32 %v4567, %v4702
      %v4820 = vmul.f32 %v4568, %v4707
      %v4821 = vmul.f32 %v4569, %v4712
      %v4822 = vmul.f32 %v4570, %v4717
      %v4823 = vmul.f32 %v4571, %v4722
      %v4824 = vmul.f32 %v4572, %v4727
      %v4825 = vmul.f32 %v4573, %v4732
      %v4826 = vmul.f32 %v4574, %v4737
      %v4827 = vmul.f32 %v4575, %v4742
      %v4828 = vmul.f32 %v4576, %v4747
      %v4829 = vmul.f32 %v4577, %v4752
      %v4830 = vmul.f32 %v4578, %v4757
      %v4831 = vmul.f32 %v4579, %v4762
      %v4832 = vmul.f32 %v4580, %v4767
      %v4833 = vmul.f32 %v4581, %v4772
      %v4834 = vmul.f32 %v4582, %v4777
      %v4835 = vmul.f32 %v4583, %v4782
      %v4836 = vmul.f32 %v4584, %v4787
      %v4837 = vmul.f32 %v4585, %v4792
      %v4838 = vmul.f32 %v4586, %v4797
      %v4839 = vmul.f32 %v4587, %v4802
      %4840 = vst [vmem:[#allocation3] sm:$0xff] 0.0
      %4841 = vst [vmem:[#allocation3 + $0x8] sm:$0xff] 0.0
      %4842 = vst [vmem:[#allocation3 + $0x10] sm:$0xff] 0.0
      %4843 = vst [vmem:[#allocation3 + $0x18] sm:$0xff] 0.0
      %4844 = vst [vmem:[#allocation3 + $0x20] sm:$0xff] 0.0
      %4845 = vst [vmem:[#allocation3 + $0x28] sm:$0xff] 0.0
      %4846 = vst [vmem:[#allocation3 + $0x30] sm:$0xff] 0.0
      %4847 = vst [vmem:[#allocation3 + $0x38] sm:$0xff] 0.0
      %4848 = vst [vmem:[#allocation3 + $0x40] sm:$0xff] 0.0
      %4849 = vst [vmem:[#allocation3 + $0x48] sm:$0xff] 0.0
      %4850 = vst [vmem:[#allocation3 + $0x50] sm:$0xff] 0.0
      %4851 = vst [vmem:[#allocation3 + $0x58] sm:$0xff] 0.0
      %4852 = vst [vmem:[#allocation3 + $0x60] sm:$0xff] 0.0
      %4853 = vst [vmem:[#allocation3 + $0x68] sm:$0xff] 0.0
      %4854 = vst [vmem:[#allocation3 + $0x70] sm:$0xff] 0.0
      %4855 = vst [vmem:[#allocation3 + $0x78] sm:$0xff] 0.0
      %4856 = vst [vmem:[#allocation3 + $0x80] sm:$0xff] 0.0
      %4857 = vst [vmem:[#allocation3 + $0x88] sm:$0xff] 0.0
      %4858 = vst [vmem:[#allocation3 + $0x90] sm:$0xff] 0.0
      %4859 = vst [vmem:[#allocation3 + $0x98] sm:$0xff] 0.0
      %4860 = vst [vmem:[#allocation3 + $0xa0] sm:$0xff] 0.0
      %4861 = vst [vmem:[#allocation3 + $0xa8] sm:$0xff] 0.0
      %4862 = vst [vmem:[#allocation3 + $0xb0] sm:$0xff] 0.0
      %4863 = vst [vmem:[#allocation3 + $0xb8] sm:$0xff] 0.0
      %4864 = vst [vmem:[#allocation3 + $0xc0] sm:$0xff] 0.0
      %4865 = vst [vmem:[#allocation3 + $0xc8] sm:$0xff] 0.0
      %4866 = vst [vmem:[#allocation3 + $0xd0] sm:$0xff] 0.0
      %4867 = vst [vmem:[#allocation3 + $0xd8] sm:$0xff] 0.0
      %4868 = vst [vmem:[#allocation3 + $0xe0] sm:$0xff] 0.0
      %4869 = vst [vmem:[#allocation3 + $0xe8] sm:$0xff] 0.0
      %4870 = vst [vmem:[#allocation3 + $0xf0] sm:$0xff] 0.0
      %4871 = vst [vmem:[#allocation3 + $0xf8] sm:$0xff] 0.0
      %4872 = vst [vmem:[#allocation3 + $0x100] sm:$0xff] 0.0
      %4873 = vst [vmem:[#allocation3 + $0x108] sm:$0xff] 0.0
      %4874 = vst [vmem:[#allocation3 + $0x110] sm:$0xff] 0.0
      %4875 = vst [vmem:[#allocation3 + $0x118] sm:$0xff] 0.0
      %4876 = vst [vmem:[#allocation3 + $0x120] sm:$0xff] 0.0
      %4877 = vst [vmem:[#allocation3 + $0x128] sm:$0xff] 0.0
      %4878 = vst [vmem:[#allocation3 + $0x130] sm:$0xff] 0.0
      %4879 = vst [vmem:[#allocation3 + $0x138] sm:$0xff] 0.0
      %4880 = vst [vmem:[#allocation3 + $0x140] sm:$0xff] 0.0
      %4881 = vst [vmem:[#allocation3 + $0x13] sm:$0xff] %v4804
      %4882 = vst [vmem:[#allocation3 + $0x1b] sm:$0xff] %v4805
      %4883 = vst [vmem:[#allocation3 + $0x23] sm:$0xff] %v4806
      %4884 = vst [vmem:[#allocation3 + $0x2b] sm:$0xff] %v4807
      %4885 = vst [vmem:[#allocation3 + $0x33] sm:$0xff] %v4808
      %4886 = vst [vmem:[#allocation3 + $0x3b] sm:$0xff] %v4809
      %4887 = vst [vmem:[#allocation3 + $0x43] sm:$0xff] %v4810
      %4888 = vst [vmem:[#allocation3 + $0x4b] sm:$0xff] %v4811
      %4889 = vst [vmem:[#allocation3 + $0x53] sm:$0xff] %v4812
      %4890 = vst [vmem:[#allocation3 + $0x5b] sm:$0xff] %v4813
      %4891 = vst [vmem:[#allocation3 + $0x63] sm:$0xff] %v4814
      %4892 = vst [vmem:[#allocation3 + $0x6b] sm:$0xff] %v4815
      %4893 = vst [vmem:[#allocation3 + $0x73] sm:$0xff] %v4816
      %4894 = vst [vmem:[#allocation3 + $0x7b] sm:$0xff] %v4817
      %4895 = vst [vmem:[#allocation3 + $0x83] sm:$0xff] %v4818
      %4896 = vst [vmem:[#allocation3 + $0x8b] sm:$0xff] %v4819
      %4897 = vst [vmem:[#allocation3 + $0x93] sm:$0xff] %v4820
      %4898 = vst [vmem:[#allocation3 + $0x9b] sm:$0xff] %v4821
      %4899 = vst [vmem:[#allocation3 + $0xa3] sm:$0xff] %v4822
      %4900 = vst [vmem:[#allocation3 + $0xab] sm:$0xff] %v4823
      %4901 = vst [vmem:[#allocation3 + $0xb3] sm:$0xff] %v4824
      %4902 = vst [vmem:[#allocation3 + $0xbb] sm:$0xff] %v4825
      %4903 = vst [vmem:[#allocation3 + $0xc3] sm:$0xff] %v4826
      %4904 = vst [vmem:[#allocation3 + $0xcb] sm:$0xff] %v4827
      %4905 = vst [vmem:[#allocation3 + $0xd3] sm:$0xff] %v4828
      %4906 = vst [vmem:[#allocation3 + $0xdb] sm:$0xff] %v4829
      %4907 = vst [vmem:[#allocation3 + $0xe3] sm:$0xff] %v4830
      %4908 = vst [vmem:[#allocation3 + $0xeb] sm:$0xff] %v4831
      %4909 = vst [vmem:[#allocation3 + $0xf3] sm:$0xff] %v4832
      %4910 = vst [vmem:[#allocation3 + $0xfb] sm:$0xff] %v4833
      %4911 = vst [vmem:[#allocation3 + $0x103] sm:$0xff] %v4834
      %4912 = vst [vmem:[#allocation3 + $0x10b] sm:$0xff] %v4835
      %4913 = vst [vmem:[#allocation3 + $0x113] sm:$0xff] %v4836
      %4914 = vst [vmem:[#allocation3 + $0x11b] sm:$0xff] %v4837
      %4915 = vst [vmem:[#allocation3 + $0x123] sm:$0xff] %v4838
      %4916 = vst [vmem:[#allocation3 + $0x12b] sm:$0xff] %v4839
      %v4917 = vld [vmem:[#allocation3] sm:$0xff]
      %v4918 = vld [vmem:[#allocation3 + $0x8] sm:$0xff]
      %v4919 = vld [vmem:[#allocation3 + $0x10] sm:$0xff]
      %v4920 = vld [vmem:[#allocation3 + $0x18] sm:$0xff]
      %v4921 = vld [vmem:[#allocation3 + $0x20] sm:$0xff]
      %v4922 = vld [vmem:[#allocation3 + $0x28] sm:$0xff]
      %v4923 = vld [vmem:[#allocation3 + $0x30] sm:$0xff]
      %v4924 = vld [vmem:[#allocation3 + $0x38] sm:$0xff]
      %v4925 = vld [vmem:[#allocation3 + $0x40] sm:$0xff]
      %v4926 = vld [vmem:[#allocation3 + $0x48] sm:$0xff]
      %v4927 = vld [vmem:[#allocation3 + $0x50] sm:$0xff]
      %v4928 = vld [vmem:[#allocation3 + $0x58] sm:$0xff]
      %v4929 = vld [vmem:[#allocation3 + $0x60] sm:$0xff]
      %v4930 = vld [vmem:[#allocation3 + $0x68] sm:$0xff]
      %v4931 = vld [vmem:[#allocation3 + $0x70] sm:$0xff]
      %v4932 = vld [vmem:[#allocation3 + $0x78] sm:$0xff]
      %v4933 = vld [vmem:[#allocation3 + $0x80] sm:$0xff]
      %v4934 = vld [vmem:[#allocation3 + $0x88] sm:$0xff]
      %v4935 = vld [vmem:[#allocation3 + $0x90] sm:$0xff]
      %v4936 = vld [vmem:[#allocation3 + $0x98] sm:$0xff]
      %v4937 = vld [vmem:[#allocation3 + $0xa0] sm:$0xff]
      %v4938 = vld [vmem:[#allocation3 + $0xa8] sm:$0xff]
      %v4939 = vld [vmem:[#allocation3 + $0xb0] sm:$0xff]
      %v4940 = vld [vmem:[#allocation3 + $0xb8] sm:$0xff]
      %v4941 = vld [vmem:[#allocation3 + $0xc0] sm:$0xff]
      %v4942 = vld [vmem:[#allocation3 + $0xc8] sm:$0xff]
      %v4943 = vld [vmem:[#allocation3 + $0xd0] sm:$0xff]
      %v4944 = vld [vmem:[#allocation3 + $0xd8] sm:$0xff]
      %v4945 = vld [vmem:[#allocation3 + $0xe0] sm:$0xff]
      %v4946 = vld [vmem:[#allocation3 + $0xe8] sm:$0xff]
      %v4947 = vld [vmem:[#allocation3 + $0xf0] sm:$0xff]
      %v4948 = vld [vmem:[#allocation3 + $0xf8] sm:$0xff]
      %v4949 = vld [vmem:[#allocation3 + $0x100] sm:$0xff]
      %v4950 = vld [vmem:[#allocation3 + $0x108] sm:$0xff]
      %v4951 = vld [vmem:[#allocation3 + $0x110] sm:$0xff]
      %v4952 = vld [vmem:[#allocation3 + $0x118] sm:$0xff]
      %v4953 = vpack.c.bf16 %v4918, %v4917
      %v4954 = vpack.c.bf16 %v4920, %v4919
      %v4955 = vpack.c.bf16 %v4922, %v4921
      %v4956 = vpack.c.bf16 %v4924, %v4923
      %v4957 = vpack.c.bf16 %v4926, %v4925
      %v4958 = vpack.c.bf16 %v4928, %v4927
      %v4959 = vpack.c.bf16 %v4930, %v4929
      %v4960 = vpack.c.bf16 %v4932, %v4931
      %v4961 = vpack.c.bf16 %v4934, %v4933
      %v4962 = vpack.c.bf16 %v4936, %v4935
      %v4963 = vpack.c.bf16 %v4938, %v4937
      %v4964 = vpack.c.bf16 %v4940, %v4939
      %v4965 = vpack.c.bf16 %v4942, %v4941
      %v4966 = vpack.c.bf16 %v4944, %v4943
      %v4967 = vpack.c.bf16 %v4946, %v4945
      %v4968 = vpack.c.bf16 %v4948, %v4947
      %v4969 = vpack.c.bf16 %v4950, %v4949
      %v4970 = vpack.c.bf16 %v4952, %v4951
      %v4971 = vld [vmem:[%s7] sm:$0xf]
      %v4972 = vld [vmem:[%s7 + $0x4] sm:$0xf]
      %v4973 = vld [vmem:[%s7 + $0x8] sm:$0xf]
      %v4974 = vld [vmem:[%s7 + $0xc] sm:$0xf]
      %v4975 = vld [vmem:[%s7 + $0x10] sm:$0xf]
      %v4976 = vld [vmem:[%s7 + $0x14] sm:$0xf]
      %v4977 = vld [vmem:[%s7 + $0x18] sm:$0xf]
      %v4978 = vld [vmem:[%s7 + $0x1c] sm:$0xf]
      %v4979 = vld [vmem:[%s7 + $0x20] sm:$0xf]
      %v4980 = vld [vmem:[%s7 + $0x24] sm:$0xf]
      %v4981 = vld [vmem:[%s7 + $0x28] sm:$0xf]
      %v4982 = vld [vmem:[%s7 + $0x2c] sm:$0xf]
      %v4983 = vld [vmem:[%s7 + $0x30] sm:$0xf]
      %v4984 = vld [vmem:[%s7 + $0x34] sm:$0xf]
      %v4985 = vld [vmem:[%s7 + $0x38] sm:$0xf]
      %v4986 = vld [vmem:[%s7 + $0x3c] sm:$0xf]
      %v5003 = vunpack.c.l.b16 %v4971
      %v5004 = vunpack.c.l.b16 %v4972
      %v5005 = vunpack.c.l.b16 %v4973
      %v5006 = vunpack.c.l.b16 %v4974
      %v5007 = vunpack.c.l.b16 %v4975
      %v5008 = vunpack.c.l.b16 %v4976
      %v5009 = vunpack.c.l.b16 %v4977
      %v5010 = vunpack.c.l.b16 %v4978
      %v5011 = vunpack.c.l.b16 %v4979
      %v5012 = vunpack.c.l.b16 %v4980
      %v5013 = vunpack.c.l.b16 %v4981
      %v5014 = vunpack.c.l.b16 %v4982
      %v5015 = vunpack.c.l.b16 %v4983
      %v5016 = vunpack.c.l.b16 %v4984
      %v5017 = vunpack.c.l.b16 %v4985
      %v5018 = vunpack.c.l.b16 %v4986
      %v5019 = vpack.c.b16 %v5004, %v5003
      %v5020 = vpack.c.b16 %v5006, %v5005
      %v5021 = vpack.c.b16 %v5008, %v5007
      %v5022 = vpack.c.b16 %v5010, %v5009
      %v5023 = vpack.c.b16 %v5012, %v5011
      %v5024 = vpack.c.b16 %v5014, %v5013
      %v5025 = vpack.c.b16 %v5016, %v5015
      %v5026 = vpack.c.b16 %v5018, %v5017
      %5035 = vmatprep.subr.bf16.mxu0 0
      %5036 = vmatpush1.bf16.msra.mxu0 %v5026
      %5037 = vmatprep.subr.bf16.mxu0 0
      %5038 = vmatpush1.bf16.msra.mxu0 %v5025
      %5039 = vmatprep.subr.bf16.mxu0 0
      %5040 = vmatpush1.bf16.msra.mxu0 %v5024
      %5041 = vmatprep.subr.bf16.mxu0 0
      %5042 = vmatpush1.bf16.msra.mxu0 %v5023
      %5043 = vmatprep.subr.bf16.mxu0 0
      %5044 = vmatpush1.bf16.msra.mxu0 %v5022
      %5045 = vmatprep.subr.bf16.mxu0 0
      %5046 = vmatpush1.bf16.msra.mxu0 %v5021
      %5047 = vmatprep.subr.bf16.mxu0 0
      %5048 = vmatpush1.bf16.msra.mxu0 %v5020
      %5049 = vmatprep.subr.bf16.mxu0 0
      %5050 = vmatpush1.bf16.msra.mxu0 %v5019
      %5051 = vmatprep.subr.bf16.mxu0 0
      %5052 = vmatpush2.bf16.msra.mxu0 0
      %5053 = vmatprep.subr.bf16.mxu0 0
      %5054 = vmatpush2.bf16.msra.mxu0 0
      %5055 = vmatprep.subr.bf16.mxu0 0
      %5056 = vmatpush2.bf16.msra.mxu0 0
      %5057 = vmatprep.subr.bf16.mxu0 0
      %5058 = vmatpush2.bf16.msra.mxu0 0
      %5059 = vmatprep.subr.bf16.mxu0 0
      %5060 = vmatpush2.bf16.msra.mxu0 0
      %5061 = vmatprep.subr.bf16.mxu0 0
      %5062 = vmatpush2.bf16.msra.mxu0 0
      %5063 = vmatprep.subr.bf16.mxu0 0
      %5064 = vmatpush2.bf16.msra.mxu0 0
      %5065 = vmatprep.subr.bf16.mxu0 0
      %5066 = vmatpush2.bf16.msra.mxu0 0
      %5067 = vmatprep.mubr.bf16.mxu0 0
      %5068 = vmatmul.mubr.bf16.gmra.mxu0 %v4953
      %v5069 = vpop.f32.mrf.mxu0
      %v5070 = vadd.f32 0.0, %v5069
      %v5071 = vpop.f32.mrf.mxu0
      %v5072 = vpop.f32.mrf.mxu0
      %v5073 = vadd.f32 0.0, %v5072
      %v5074 = vpop.f32.mrf.mxu0
      %5075 = vmatprep.mubr.bf16.mxu0 0
      %5076 = vmatmul.mubr.bf16.gmra.mxu0 %v4954
      %v5077 = vpop.f32.mrf.mxu0
      %v5078 = vadd.f32 0.0, %v5077
      %v5079 = vpop.f32.mrf.mxu0
      %v5080 = vpop.f32.mrf.mxu0
      %v5081 = vadd.f32 0.0, %v5080
      %v5082 = vpop.f32.mrf.mxu0
      %5083 = vmatprep.mubr.bf16.mxu0 0
      %5084 = vmatmul.mubr.bf16.gmra.mxu0 %v4955
      %v5085 = vpop.f32.mrf.mxu0
      %v5086 = vadd.f32 0.0, %v5085
      %v5087 = vpop.f32.mrf.mxu0
      %v5088 = vpop.f32.mrf.mxu0
      %v5089 = vadd.f32 0.0, %v5088
      %v5090 = vpop.f32.mrf.mxu0
      %5091 = vmatprep.mubr.bf16.mxu0 0
      %5092 = vmatmul.mubr.bf16.gmra.mxu0 %v4956
      %v5093 = vpop.f32.mrf.mxu0
      %v5094 = vadd.f32 0.0, %v5093
      %v5095 = vpop.f32.mrf.mxu0
      %v5096 = vpop.f32.mrf.mxu0
      %v5097 = vadd.f32 0.0, %v5096
      %v5098 = vpop.f32.mrf.mxu0
      %5099 = vmatprep.mubr.bf16.mxu0 0
      %5100 = vmatmul.mubr.bf16.gmra.mxu0 %v4957
      %v5101 = vpop.f32.mrf.mxu0
      %v5102 = vadd.f32 0.0, %v5101
      %v5103 = vpop.f32.mrf.mxu0
      %v5104 = vpop.f32.mrf.mxu0
      %v5105 = vadd.f32 0.0, %v5104
      %v5106 = vpop.f32.mrf.mxu0
      %5107 = vmatprep.mubr.bf16.mxu0 0
      %5108 = vmatmul.mubr.bf16.gmra.mxu0 %v4958
      %v5109 = vpop.f32.mrf.mxu0
      %v5110 = vadd.f32 0.0, %v5109
      %v5111 = vpop.f32.mrf.mxu0
      %v5112 = vpop.f32.mrf.mxu0
      %v5113 = vadd.f32 0.0, %v5112
      %v5114 = vpop.f32.mrf.mxu0
      %5115 = vmatprep.mubr.bf16.mxu0 0
      %5116 = vmatmul.mubr.bf16.gmra.mxu0 %v4959
      %v5117 = vpop.f32.mrf.mxu0
      %v5118 = vadd.f32 0.0, %v5117
      %v5119 = vpop.f32.mrf.mxu0
      %v5120 = vpop.f32.mrf.mxu0
      %v5121 = vadd.f32 0.0, %v5120
      %v5122 = vpop.f32.mrf.mxu0
      %5123 = vmatprep.mubr.bf16.mxu0 0
      %5124 = vmatmul.mubr.bf16.gmra.mxu0 %v4960
      %v5125 = vpop.f32.mrf.mxu0
      %v5126 = vadd.f32 0.0, %v5125
      %v5127 = vpop.f32.mrf.mxu0
      %v5128 = vpop.f32.mrf.mxu0
      %v5129 = vadd.f32 0.0, %v5128
      %v5130 = vpop.f32.mrf.mxu0
      %5131 = vmatprep.mubr.bf16.mxu0 0
      %5132 = vmatmul.mubr.bf16.gmra.mxu0 %v4961
      %v5133 = vpop.f32.mrf.mxu0
      %v5134 = vadd.f32 0.0, %v5133
      %v5135 = vpop.f32.mrf.mxu0
      %v5136 = vpop.f32.mrf.mxu0
      %v5137 = vadd.f32 0.0, %v5136
      %v5138 = vpop.f32.mrf.mxu0
      %5139 = vmatprep.mubr.bf16.mxu0 0
      %5140 = vmatmul.mubr.bf16.gmra.mxu0 %v4962
      %v5141 = vpop.f32.mrf.mxu0
      %v5142 = vadd.f32 0.0, %v5141
      %v5143 = vpop.f32.mrf.mxu0
      %v5144 = vpop.f32.mrf.mxu0
      %v5145 = vadd.f32 0.0, %v5144
      %v5146 = vpop.f32.mrf.mxu0
      %5147 = vmatprep.mubr.bf16.mxu0 0
      %5148 = vmatmul.mubr.bf16.gmra.mxu0 %v4963
      %v5149 = vpop.f32.mrf.mxu0
      %v5150 = vadd.f32 0.0, %v5149
      %v5151 = vpop.f32.mrf.mxu0
      %v5152 = vpop.f32.mrf.mxu0
      %v5153 = vadd.f32 0.0, %v5152
      %v5154 = vpop.f32.mrf.mxu0
      %5155 = vmatprep.mubr.bf16.mxu0 0
      %5156 = vmatmul.mubr.bf16.gmra.mxu0 %v4964
      %v5157 = vpop.f32.mrf.mxu0
      %v5158 = vadd.f32 0.0, %v5157
      %v5159 = vpop.f32.mrf.mxu0
      %v5160 = vpop.f32.mrf.mxu0
      %v5161 = vadd.f32 0.0, %v5160
      %v5162 = vpop.f32.mrf.mxu0
      %5163 = vmatprep.mubr.bf16.mxu0 0
      %5164 = vmatmul.mubr.bf16.gmra.mxu0 %v4965
      %v5165 = vpop.f32.mrf.mxu0
      %v5166 = vadd.f32 0.0, %v5165
      %v5167 = vpop.f32.mrf.mxu0
      %v5168 = vpop.f32.mrf.mxu0
      %v5169 = vadd.f32 0.0, %v5168
      %v5170 = vpop.f32.mrf.mxu0
      %5171 = vmatprep.mubr.bf16.mxu0 0
      %5172 = vmatmul.mubr.bf16.gmra.mxu0 %v4966
      %v5173 = vpop.f32.mrf.mxu0
      %v5174 = vadd.f32 0.0, %v5173
      %v5175 = vpop.f32.mrf.mxu0
      %v5176 = vpop.f32.mrf.mxu0
      %v5177 = vadd.f32 0.0, %v5176
      %v5178 = vpop.f32.mrf.mxu0
      %5179 = vmatprep.mubr.bf16.mxu0 0
      %5180 = vmatmul.mubr.bf16.gmra.mxu0 %v4967
      %v5181 = vpop.f32.mrf.mxu0
      %v5182 = vadd.f32 0.0, %v5181
      %v5183 = vpop.f32.mrf.mxu0
      %v5184 = vpop.f32.mrf.mxu0
      %v5185 = vadd.f32 0.0, %v5184
      %v5186 = vpop.f32.mrf.mxu0
      %5187 = vmatprep.mubr.bf16.mxu0 0
      %5188 = vmatmul.mubr.bf16.gmra.mxu0 %v4968
      %v5189 = vpop.f32.mrf.mxu0
      %v5190 = vadd.f32 0.0, %v5189
      %v5191 = vpop.f32.mrf.mxu0
      %v5192 = vpop.f32.mrf.mxu0
      %v5193 = vadd.f32 0.0, %v5192
      %v5194 = vpop.f32.mrf.mxu0
      %5195 = vmatprep.mubr.bf16.mxu0 0
      %5196 = vmatmul.mubr.bf16.gmra.mxu0 %v4969
      %v5197 = vpop.f32.mrf.mxu0
      %v5198 = vadd.f32 0.0, %v5197
      %v5199 = vpop.f32.mrf.mxu0
      %v5200 = vpop.f32.mrf.mxu0
      %v5201 = vadd.f32 0.0, %v5200
      %v5202 = vpop.f32.mrf.mxu0
      %5203 = vmatprep.mubr.bf16.mxu0 0
      %5204 = vmatmul.mubr.bf16.gmra.mxu0 %v4970
      %v5205 = vpop.f32.mrf.mxu0
      %v5206 = vadd.f32 0.0, %v5205
      %v5207 = vpop.f32.mrf.mxu0
      %v5208 = vpop.f32.mrf.mxu0
      %v5209 = vadd.f32 0.0, %v5208
      %v5210 = vpop.f32.mrf.mxu0
      %5211 = vdwg.mxu0
      %5212 = vst [vmem:[#allocation4] sm:$0xff] %v5070
      %5213 = vst [vmem:[#allocation4 + $0x8] sm:$0xff] %v5073
      %5214 = vst [vmem:[#allocation4 + $0x10] sm:$0xff] %v5078
      %5215 = vst [vmem:[#allocation4 + $0x18] sm:$0xff] %v5081
      %5216 = vst [vmem:[#allocation4 + $0x20] sm:$0xff] %v5086
      %5217 = vst [vmem:[#allocation4 + $0x28] sm:$0xff] %v5089
      %5218 = vst [vmem:[#allocation4 + $0x30] sm:$0xff] %v5094
      %5219 = vst [vmem:[#allocation4 + $0x38] sm:$0xff] %v5097
      %5220 = vst [vmem:[#allocation4 + $0x40] sm:$0xff] %v5102
      %5221 = vst [vmem:[#allocation4 + $0x48] sm:$0xff] %v5105
      %5222 = vst [vmem:[#allocation4 + $0x50] sm:$0xff] %v5110
      %5223 = vst [vmem:[#allocation4 + $0x58] sm:$0xff] %v5113
      %5224 = vst [vmem:[#allocation4 + $0x60] sm:$0xff] %v5118
      %5225 = vst [vmem:[#allocation4 + $0x68] sm:$0xff] %v5121
      %5226 = vst [vmem:[#allocation4 + $0x70] sm:$0xff] %v5126
      %5227 = vst [vmem:[#allocation4 + $0x78] sm:$0xff] %v5129
      %5228 = vst [vmem:[#allocation4 + $0x80] sm:$0xff] %v5134
      %5229 = vst [vmem:[#allocation4 + $0x88] sm:$0xff] %v5137
      %5230 = vst [vmem:[#allocation4 + $0x90] sm:$0xff] %v5142
      %5231 = vst [vmem:[#allocation4 + $0x98] sm:$0xff] %v5145
      %5232 = vst [vmem:[#allocation4 + $0xa0] sm:$0xff] %v5150
      %5233 = vst [vmem:[#allocation4 + $0xa8] sm:$0xff] %v5153
      %5234 = vst [vmem:[#allocation4 + $0xb0] sm:$0xff] %v5158
      %5235 = vst [vmem:[#allocation4 + $0xb8] sm:$0xff] %v5161
      %5236 = vst [vmem:[#allocation4 + $0xc0] sm:$0xff] %v5166
      %5237 = vst [vmem:[#allocation4 + $0xc8] sm:$0xff] %v5169
      %5238 = vst [vmem:[#allocation4 + $0xd0] sm:$0xff] %v5174
      %5239 = vst [vmem:[#allocation4 + $0xd8] sm:$0xff] %v5177
      %5240 = vst [vmem:[#allocation4 + $0xe0] sm:$0xff] %v5182
      %5241 = vst [vmem:[#allocation4 + $0xe8] sm:$0xff] %v5185
      %5242 = vst [vmem:[#allocation4 + $0xf0] sm:$0xff] %v5190
      %5243 = vst [vmem:[#allocation4 + $0xf8] sm:$0xff] %v5193
      %5244 = vst [vmem:[#allocation4 + $0x100] sm:$0xff] %v5198
      %5245 = vst [vmem:[#allocation4 + $0x108] sm:$0xff] %v5201
      %5246 = vst [vmem:[#allocation4 + $0x110] sm:$0xff] %v5206
      %5247 = vst [vmem:[#allocation4 + $0x118] sm:$0xff] %v5209
      %v5248 = vld [vmem:[#allocation3 + $0x1] sm:$0xff]
      %v5249 = vld [vmem:[#allocation3 + $0x9] sm:$0xff]
      %v5250 = vld [vmem:[#allocation3 + $0x11] sm:$0xff]
      %v5251 = vld [vmem:[#allocation3 + $0x19] sm:$0xff]
      %v5252 = vld [vmem:[#allocation3 + $0x21] sm:$0xff]
      %v5253 = vld [vmem:[#allocation3 + $0x29] sm:$0xff]
      %v5254 = vld [vmem:[#allocation3 + $0x31] sm:$0xff]
      %v5255 = vld [vmem:[#allocation3 + $0x39] sm:$0xff]
      %v5256 = vld [vmem:[#allocation3 + $0x41] sm:$0xff]
      %v5257 = vld [vmem:[#allocation3 + $0x49] sm:$0xff]
      %v5258 = vld [vmem:[#allocation3 + $0x51] sm:$0xff]
      %v5259 = vld [vmem:[#allocation3 + $0x59] sm:$0xff]
      %v5260 = vld [vmem:[#allocation3 + $0x61] sm:$0xff]
      %v5261 = vld [vmem:[#allocation3 + $0x69] sm:$0xff]
      %v5262 = vld [vmem:[#allocation3 + $0x71] sm:$0xff]
      %v5263 = vld [vmem:[#allocation3 + $0x79] sm:$0xff]
      %v5264 = vld [vmem:[#allocation3 + $0x81] sm:$0xff]
      %v5265 = vld [vmem:[#allocation3 + $0x89] sm:$0xff]
      %v5266 = vld [vmem:[#allocation3 + $0x91] sm:$0xff]
      %v5267 = vld [vmem:[#allocation3 + $0x99] sm:$0xff]
      %v5268 = vld [vmem:[#allocation3 + $0xa1] sm:$0xff]
      %v5269 = vld [vmem:[#allocation3 + $0xa9] sm:$0xff]
      %v5270 = vld [vmem:[#allocation3 + $0xb1] sm:$0xff]
      %v5271 = vld [vmem:[#allocation3 + $0xb9] sm:$0xff]
      %v5272 = vld [vmem:[#allocation3 + $0xc1] sm:$0xff]
      %v5273 = vld [vmem:[#allocation3 + $0xc9] sm:$0xff]
      %v5274 = vld [vmem:[#allocation3 + $0xd1] sm:$0xff]
      %v5275 = vld [vmem:[#allocation3 + $0xd9] sm:$0xff]
      %v5276 = vld [vmem:[#allocation3 + $0xe1] sm:$0xff]
      %v5277 = vld [vmem:[#allocation3 + $0xe9] sm:$0xff]
      %v5278 = vld [vmem:[#allocation3 + $0xf1] sm:$0xff]
      %v5279 = vld [vmem:[#allocation3 + $0xf9] sm:$0xff]
      %v5280 = vld [vmem:[#allocation3 + $0x101] sm:$0xff]
      %v5281 = vld [vmem:[#allocation3 + $0x109] sm:$0xff]
      %v5282 = vld [vmem:[#allocation3 + $0x111] sm:$0xff]
      %v5283 = vld [vmem:[#allocation3 + $0x119] sm:$0xff]
      %v5284 = vpack.c.bf16 %v5249, %v5248
      %v5285 = vpack.c.bf16 %v5251, %v5250
      %v5286 = vpack.c.bf16 %v5253, %v5252
      %v5287 = vpack.c.bf16 %v5255, %v5254
      %v5288 = vpack.c.bf16 %v5257, %v5256
      %v5289 = vpack.c.bf16 %v5259, %v5258
      %v5290 = vpack.c.bf16 %v5261, %v5260
      %v5291 = vpack.c.bf16 %v5263, %v5262
      %v5292 = vpack.c.bf16 %v5265, %v5264
      %v5293 = vpack.c.bf16 %v5267, %v5266
      %v5294 = vpack.c.bf16 %v5269, %v5268
      %v5295 = vpack.c.bf16 %v5271, %v5270
      %v5296 = vpack.c.bf16 %v5273, %v5272
      %v5297 = vpack.c.bf16 %v5275, %v5274
      %v5298 = vpack.c.bf16 %v5277, %v5276
      %v5299 = vpack.c.bf16 %v5279, %v5278
      %v5300 = vpack.c.bf16 %v5281, %v5280
      %v5301 = vpack.c.bf16 %v5283, %v5282
      %s5302 = scalar_lea.vmem %s7, 64
      %v5303 = vld [vmem:[%s5302] sm:$0xf]
      %v5304 = vld [vmem:[%s5302 + $0x4] sm:$0xf]
      %v5305 = vld [vmem:[%s5302 + $0x8] sm:$0xf]
      %v5306 = vld [vmem:[%s5302 + $0xc] sm:$0xf]
      %v5307 = vld [vmem:[%s5302 + $0x10] sm:$0xf]
      %v5308 = vld [vmem:[%s5302 + $0x14] sm:$0xf]
      %v5309 = vld [vmem:[%s5302 + $0x18] sm:$0xf]
      %v5310 = vld [vmem:[%s5302 + $0x1c] sm:$0xf]
      %v5311 = vld [vmem:[%s5302 + $0x20] sm:$0xf]
      %v5312 = vld [vmem:[%s5302 + $0x24] sm:$0xf]
      %v5313 = vld [vmem:[%s5302 + $0x28] sm:$0xf]
      %v5314 = vld [vmem:[%s5302 + $0x2c] sm:$0xf]
      %v5315 = vld [vmem:[%s5302 + $0x30] sm:$0xf]
      %v5316 = vld [vmem:[%s5302 + $0x34] sm:$0xf]
      %v5317 = vld [vmem:[%s5302 + $0x38] sm:$0xf]
      %v5318 = vld [vmem:[%s5302 + $0x3c] sm:$0xf]
      %v5335 = vunpack.c.l.b16 %v5303
      %v5336 = vunpack.c.l.b16 %v5304
      %v5337 = vunpack.c.l.b16 %v5305
      %v5338 = vunpack.c.l.b16 %v5306
      %v5339 = vunpack.c.l.b16 %v5307
      %v5340 = vunpack.c.l.b16 %v5308
      %v5341 = vunpack.c.l.b16 %v5309
      %v5342 = vunpack.c.l.b16 %v5310
      %v5343 = vunpack.c.l.b16 %v5311
      %v5344 = vunpack.c.l.b16 %v5312
      %v5345 = vunpack.c.l.b16 %v5313
      %v5346 = vunpack.c.l.b16 %v5314
      %v5347 = vunpack.c.l.b16 %v5315
      %v5348 = vunpack.c.l.b16 %v5316
      %v5349 = vunpack.c.l.b16 %v5317
      %v5350 = vunpack.c.l.b16 %v5318
      %v5351 = vpack.c.b16 %v5336, %v5335
      %v5352 = vpack.c.b16 %v5338, %v5337
      %v5353 = vpack.c.b16 %v5340, %v5339
      %v5354 = vpack.c.b16 %v5342, %v5341
      %v5355 = vpack.c.b16 %v5344, %v5343
      %v5356 = vpack.c.b16 %v5346, %v5345
      %v5357 = vpack.c.b16 %v5348, %v5347
      %v5358 = vpack.c.b16 %v5350, %v5349
      %5367 = vmatprep.subr.bf16.mxu0 0
      %5368 = vmatpush1.bf16.msra.mxu0 %v5358
      %5369 = vmatprep.subr.bf16.mxu0 0
      %5370 = vmatpush1.bf16.msra.mxu0 %v5357
      %5371 = vmatprep.subr.bf16.mxu0 0
      %5372 = vmatpush1.bf16.msra.mxu0 %v5356
      %5373 = vmatprep.subr.bf16.mxu0 0
      %5374 = vmatpush1.bf16.msra.mxu0 %v5355
      %5375 = vmatprep.subr.bf16.mxu0 0
      %5376 = vmatpush1.bf16.msra.mxu0 %v5354
      %5377 = vmatprep.subr.bf16.mxu0 0
      %5378 = vmatpush1.bf16.msra.mxu0 %v5353
      %5379 = vmatprep.subr.bf16.mxu0 0
      %5380 = vmatpush1.bf16.msra.mxu0 %v5352
      %5381 = vmatprep.subr.bf16.mxu0 0
      %5382 = vmatpush1.bf16.msra.mxu0 %v5351
      %5383 = vmatprep.subr.bf16.mxu0 0
      %5384 = vmatpush2.bf16.msra.mxu0 0
      %5385 = vmatprep.subr.bf16.mxu0 0
      %5386 = vmatpush2.bf16.msra.mxu0 0
      %5387 = vmatprep.subr.bf16.mxu0 0
      %5388 = vmatpush2.bf16.msra.mxu0 0
      %5389 = vmatprep.subr.bf16.mxu0 0
      %5390 = vmatpush2.bf16.msra.mxu0 0
      %5391 = vmatprep.subr.bf16.mxu0 0
      %5392 = vmatpush2.bf16.msra.mxu0 0
      %5393 = vmatprep.subr.bf16.mxu0 0
      %5394 = vmatpush2.bf16.msra.mxu0 0
      %5395 = vmatprep.subr.bf16.mxu0 0
      %5396 = vmatpush2.bf16.msra.mxu0 0
      %5397 = vmatprep.subr.bf16.mxu0 0
      %5398 = vmatpush2.bf16.msra.mxu0 0
      %5399 = vmatprep.mubr.bf16.mxu0 0
      %5400 = vmatmul.mubr.bf16.gmra.mxu0 %v5284
      %v5401 = vpop.f32.mrf.mxu0
      %v5402 = vadd.f32 0.0, %v5401
      %v5403 = vpop.f32.mrf.mxu0
      %v5404 = vpop.f32.mrf.mxu0
      %v5405 = vadd.f32 0.0, %v5404
      %v5406 = vpop.f32.mrf.mxu0
      %5407 = vmatprep.mubr.bf16.mxu0 0
      %5408 = vmatmul.mubr.bf16.gmra.mxu0 %v5285
      %v5409 = vpop.f32.mrf.mxu0
      %v5410 = vadd.f32 0.0, %v5409
      %v5411 = vpop.f32.mrf.mxu0
      %v5412 = vpop.f32.mrf.mxu0
      %v5413 = vadd.f32 0.0, %v5412
      %v5414 = vpop.f32.mrf.mxu0
      %5415 = vmatprep.mubr.bf16.mxu0 0
      %5416 = vmatmul.mubr.bf16.gmra.mxu0 %v5286
      %v5417 = vpop.f32.mrf.mxu0
      %v5418 = vadd.f32 0.0, %v5417
      %v5419 = vpop.f32.mrf.mxu0
      %v5420 = vpop.f32.mrf.mxu0
      %v5421 = vadd.f32 0.0, %v5420
      %v5422 = vpop.f32.mrf.mxu0
      %5423 = vmatprep.mubr.bf16.mxu0 0
      %5424 = vmatmul.mubr.bf16.gmra.mxu0 %v5287
      %v5425 = vpop.f32.mrf.mxu0
      %v5426 = vadd.f32 0.0, %v5425
      %v5427 = vpop.f32.mrf.mxu0
      %v5428 = vpop.f32.mrf.mxu0
      %v5429 = vadd.f32 0.0, %v5428
      %v5430 = vpop.f32.mrf.mxu0
      %5431 = vmatprep.mubr.bf16.mxu0 0
      %5432 = vmatmul.mubr.bf16.gmra.mxu0 %v5288
      %v5433 = vpop.f32.mrf.mxu0
      %v5434 = vadd.f32 0.0, %v5433
      %v5435 = vpop.f32.mrf.mxu0
      %v5436 = vpop.f32.mrf.mxu0
      %v5437 = vadd.f32 0.0, %v5436
      %v5438 = vpop.f32.mrf.mxu0
      %5439 = vmatprep.mubr.bf16.mxu0 0
      %5440 = vmatmul.mubr.bf16.gmra.mxu0 %v5289
      %v5441 = vpop.f32.mrf.mxu0
      %v5442 = vadd.f32 0.0, %v5441
      %v5443 = vpop.f32.mrf.mxu0
      %v5444 = vpop.f32.mrf.mxu0
      %v5445 = vadd.f32 0.0, %v5444
      %v5446 = vpop.f32.mrf.mxu0
      %5447 = vmatprep.mubr.bf16.mxu0 0
      %5448 = vmatmul.mubr.bf16.gmra.mxu0 %v5290
      %v5449 = vpop.f32.mrf.mxu0
      %v5450 = vadd.f32 0.0, %v5449
      %v5451 = vpop.f32.mrf.mxu0
      %v5452 = vpop.f32.mrf.mxu0
      %v5453 = vadd.f32 0.0, %v5452
      %v5454 = vpop.f32.mrf.mxu0
      %5455 = vmatprep.mubr.bf16.mxu0 0
      %5456 = vmatmul.mubr.bf16.gmra.mxu0 %v5291
      %v5457 = vpop.f32.mrf.mxu0
      %v5458 = vadd.f32 0.0, %v5457
      %v5459 = vpop.f32.mrf.mxu0
      %v5460 = vpop.f32.mrf.mxu0
      %v5461 = vadd.f32 0.0, %v5460
      %v5462 = vpop.f32.mrf.mxu0
      %5463 = vmatprep.mubr.bf16.mxu0 0
      %5464 = vmatmul.mubr.bf16.gmra.mxu0 %v5292
      %v5465 = vpop.f32.mrf.mxu0
      %v5466 = vadd.f32 0.0, %v5465
      %v5467 = vpop.f32.mrf.mxu0
      %v5468 = vpop.f32.mrf.mxu0
      %v5469 = vadd.f32 0.0, %v5468
      %v5470 = vpop.f32.mrf.mxu0
      %5471 = vmatprep.mubr.bf16.mxu0 0
      %5472 = vmatmul.mubr.bf16.gmra.mxu0 %v5293
      %v5473 = vpop.f32.mrf.mxu0
      %v5474 = vadd.f32 0.0, %v5473
      %v5475 = vpop.f32.mrf.mxu0
      %v5476 = vpop.f32.mrf.mxu0
      %v5477 = vadd.f32 0.0, %v5476
      %v5478 = vpop.f32.mrf.mxu0
      %5479 = vmatprep.mubr.bf16.mxu0 0
      %5480 = vmatmul.mubr.bf16.gmra.mxu0 %v5294
      %v5481 = vpop.f32.mrf.mxu0
      %v5482 = vadd.f32 0.0, %v5481
      %v5483 = vpop.f32.mrf.mxu0
      %v5484 = vpop.f32.mrf.mxu0
      %v5485 = vadd.f32 0.0, %v5484
      %v5486 = vpop.f32.mrf.mxu0
      %5487 = vmatprep.mubr.bf16.mxu0 0
      %5488 = vmatmul.mubr.bf16.gmra.mxu0 %v5295
      %v5489 = vpop.f32.mrf.mxu0
      %v5490 = vadd.f32 0.0, %v5489
      %v5491 = vpop.f32.mrf.mxu0
      %v5492 = vpop.f32.mrf.mxu0
      %v5493 = vadd.f32 0.0, %v5492
      %v5494 = vpop.f32.mrf.mxu0
      %5495 = vmatprep.mubr.bf16.mxu0 0
      %5496 = vmatmul.mubr.bf16.gmra.mxu0 %v5296
      %v5497 = vpop.f32.mrf.mxu0
      %v5498 = vadd.f32 0.0, %v5497
      %v5499 = vpop.f32.mrf.mxu0
      %v5500 = vpop.f32.mrf.mxu0
      %v5501 = vadd.f32 0.0, %v5500
      %v5502 = vpop.f32.mrf.mxu0
      %5503 = vmatprep.mubr.bf16.mxu0 0
      %5504 = vmatmul.mubr.bf16.gmra.mxu0 %v5297
      %v5505 = vpop.f32.mrf.mxu0
      %v5506 = vadd.f32 0.0, %v5505
      %v5507 = vpop.f32.mrf.mxu0
      %v5508 = vpop.f32.mrf.mxu0
      %v5509 = vadd.f32 0.0, %v5508
      %v5510 = vpop.f32.mrf.mxu0
      %5511 = vmatprep.mubr.bf16.mxu0 0
      %5512 = vmatmul.mubr.bf16.gmra.mxu0 %v5298
      %v5513 = vpop.f32.mrf.mxu0
      %v5514 = vadd.f32 0.0, %v5513
      %v5515 = vpop.f32.mrf.mxu0
      %v5516 = vpop.f32.mrf.mxu0
      %v5517 = vadd.f32 0.0, %v5516
      %v5518 = vpop.f32.mrf.mxu0
      %5519 = vmatprep.mubr.bf16.mxu0 0
      %5520 = vmatmul.mubr.bf16.gmra.mxu0 %v5299
      %v5521 = vpop.f32.mrf.mxu0
      %v5522 = vadd.f32 0.0, %v5521
      %v5523 = vpop.f32.mrf.mxu0
      %v5524 = vpop.f32.mrf.mxu0
      %v5525 = vadd.f32 0.0, %v5524
      %v5526 = vpop.f32.mrf.mxu0
      %5527 = vmatprep.mubr.bf16.mxu0 0
      %5528 = vmatmul.mubr.bf16.gmra.mxu0 %v5300
      %v5529 = vpop.f32.mrf.mxu0
      %v5530 = vadd.f32 0.0, %v5529
      %v5531 = vpop.f32.mrf.mxu0
      %v5532 = vpop.f32.mrf.mxu0
      %v5533 = vadd.f32 0.0, %v5532
      %v5534 = vpop.f32.mrf.mxu0
      %5535 = vmatprep.mubr.bf16.mxu0 0
      %5536 = vmatmul.mubr.bf16.gmra.mxu0 %v5301
      %v5537 = vpop.f32.mrf.mxu0
      %v5538 = vadd.f32 0.0, %v5537
      %v5539 = vpop.f32.mrf.mxu0
      %v5540 = vpop.f32.mrf.mxu0
      %v5541 = vadd.f32 0.0, %v5540
      %v5542 = vpop.f32.mrf.mxu0
      %5543 = vdwg.mxu0
      %v5544 = vld [vmem:[#allocation4] sm:$0xff]
      %v5545 = vld [vmem:[#allocation4 + $0x8] sm:$0xff]
      %v5546 = vld [vmem:[#allocation4 + $0x10] sm:$0xff]
      %v5547 = vld [vmem:[#allocation4 + $0x18] sm:$0xff]
      %v5548 = vld [vmem:[#allocation4 + $0x20] sm:$0xff]
      %v5549 = vld [vmem:[#allocation4 + $0x28] sm:$0xff]
      %v5550 = vld [vmem:[#allocation4 + $0x30] sm:$0xff]
      %v5551 = vld [vmem:[#allocation4 + $0x38] sm:$0xff]
      %v5552 = vld [vmem:[#allocation4 + $0x40] sm:$0xff]
      %v5553 = vld [vmem:[#allocation4 + $0x48] sm:$0xff]
      %v5554 = vld [vmem:[#allocation4 + $0x50] sm:$0xff]
      %v5555 = vld [vmem:[#allocation4 + $0x58] sm:$0xff]
      %v5556 = vld [vmem:[#allocation4 + $0x60] sm:$0xff]
      %v5557 = vld [vmem:[#allocation4 + $0x68] sm:$0xff]
      %v5558 = vld [vmem:[#allocation4 + $0x70] sm:$0xff]
      %v5559 = vld [vmem:[#allocation4 + $0x78] sm:$0xff]
      %v5560 = vld [vmem:[#allocation4 + $0x80] sm:$0xff]
      %v5561 = vld [vmem:[#allocation4 + $0x88] sm:$0xff]
      %v5562 = vld [vmem:[#allocation4 + $0x90] sm:$0xff]
      %v5563 = vld [vmem:[#allocation4 + $0x98] sm:$0xff]
      %v5564 = vld [vmem:[#allocation4 + $0xa0] sm:$0xff]
      %v5565 = vld [vmem:[#allocation4 + $0xa8] sm:$0xff]
      %v5566 = vld [vmem:[#allocation4 + $0xb0] sm:$0xff]
      %v5567 = vld [vmem:[#allocation4 + $0xb8] sm:$0xff]
      %v5568 = vld [vmem:[#allocation4 + $0xc0] sm:$0xff]
      %v5569 = vld [vmem:[#allocation4 + $0xc8] sm:$0xff]
      %v5570 = vld [vmem:[#allocation4 + $0xd0] sm:$0xff]
      %v5571 = vld [vmem:[#allocation4 + $0xd8] sm:$0xff]
      %v5572 = vld [vmem:[#allocation4 + $0xe0] sm:$0xff]
      %v5573 = vld [vmem:[#allocation4 + $0xe8] sm:$0xff]
      %v5574 = vld [vmem:[#allocation4 + $0xf0] sm:$0xff]
      %v5575 = vld [vmem:[#allocation4 + $0xf8] sm:$0xff]
      %v5576 = vld [vmem:[#allocation4 + $0x100] sm:$0xff]
      %v5577 = vld [vmem:[#allocation4 + $0x108] sm:$0xff]
      %v5578 = vld [vmem:[#allocation4 + $0x110] sm:$0xff]
      %v5579 = vld [vmem:[#allocation4 + $0x118] sm:$0xff]
      %v5580 = vadd.f32 %v5544, %v5402
      %v5581 = vadd.f32 %v5545, %v5405
      %v5582 = vadd.f32 %v5546, %v5410
      %v5583 = vadd.f32 %v5547, %v5413
      %v5584 = vadd.f32 %v5548, %v5418
      %v5585 = vadd.f32 %v5549, %v5421
      %v5586 = vadd.f32 %v5550, %v5426
      %v5587 = vadd.f32 %v5551, %v5429
      %v5588 = vadd.f32 %v5552, %v5434
      %v5589 = vadd.f32 %v5553, %v5437
      %v5590 = vadd.f32 %v5554, %v5442
      %v5591 = vadd.f32 %v5555, %v5445
      %v5592 = vadd.f32 %v5556, %v5450
      %v5593 = vadd.f32 %v5557, %v5453
      %v5594 = vadd.f32 %v5558, %v5458
      %v5595 = vadd.f32 %v5559, %v5461
      %v5596 = vadd.f32 %v5560, %v5466
      %v5597 = vadd.f32 %v5561, %v5469
      %v5598 = vadd.f32 %v5562, %v5474
      %v5599 = vadd.f32 %v5563, %v5477
      %v5600 = vadd.f32 %v5564, %v5482
      %v5601 = vadd.f32 %v5565, %v5485
      %v5602 = vadd.f32 %v5566, %v5490
      %v5603 = vadd.f32 %v5567, %v5493
      %v5604 = vadd.f32 %v5568, %v5498
      %v5605 = vadd.f32 %v5569, %v5501
      %v5606 = vadd.f32 %v5570, %v5506
      %v5607 = vadd.f32 %v5571, %v5509
      %v5608 = vadd.f32 %v5572, %v5514
      %v5609 = vadd.f32 %v5573, %v5517
      %v5610 = vadd.f32 %v5574, %v5522
      %v5611 = vadd.f32 %v5575, %v5525
      %v5612 = vadd.f32 %v5576, %v5530
      %v5613 = vadd.f32 %v5577, %v5533
      %v5614 = vadd.f32 %v5578, %v5538
      %v5615 = vadd.f32 %v5579, %v5541
      %5616 = vst [vmem:[#allocation4] sm:$0xff] %v5580
      %5617 = vst [vmem:[#allocation4 + $0x8] sm:$0xff] %v5581
      %5618 = vst [vmem:[#allocation4 + $0x10] sm:$0xff] %v5582
      %5619 = vst [vmem:[#allocation4 + $0x18] sm:$0xff] %v5583
      %5620 = vst [vmem:[#allocation4 + $0x20] sm:$0xff] %v5584
      %5621 = vst [vmem:[#allocation4 + $0x28] sm:$0xff] %v5585
      %5622 = vst [vmem:[#allocation4 + $0x30] sm:$0xff] %v5586
      %5623 = vst [vmem:[#allocation4 + $0x38] sm:$0xff] %v5587
      %5624 = vst [vmem:[#allocation4 + $0x40] sm:$0xff] %v5588
      %5625 = vst [vmem:[#allocation4 + $0x48] sm:$0xff] %v5589
      %5626 = vst [vmem:[#allocation4 + $0x50] sm:$0xff] %v5590
      %5627 = vst [vmem:[#allocation4 + $0x58] sm:$0xff] %v5591
      %5628 = vst [vmem:[#allocation4 + $0x60] sm:$0xff] %v5592
      %5629 = vst [vmem:[#allocation4 + $0x68] sm:$0xff] %v5593
      %5630 = vst [vmem:[#allocation4 + $0x70] sm:$0xff] %v5594
      %5631 = vst [vmem:[#allocation4 + $0x78] sm:$0xff] %v5595
      %5632 = vst [vmem:[#allocation4 + $0x80] sm:$0xff] %v5596
      %5633 = vst [vmem:[#allocation4 + $0x88] sm:$0xff] %v5597
      %5634 = vst [vmem:[#allocation4 + $0x90] sm:$0xff] %v5598
      %5635 = vst [vmem:[#allocation4 + $0x98] sm:$0xff] %v5599
      %5636 = vst [vmem:[#allocation4 + $0xa0] sm:$0xff] %v5600
      %5637 = vst [vmem:[#allocation4 + $0xa8] sm:$0xff] %v5601
      %5638 = vst [vmem:[#allocation4 + $0xb0] sm:$0xff] %v5602
      %5639 = vst [vmem:[#allocation4 + $0xb8] sm:$0xff] %v5603
      %5640 = vst [vmem:[#allocation4 + $0xc0] sm:$0xff] %v5604
      %5641 = vst [vmem:[#allocation4 + $0xc8] sm:$0xff] %v5605
      %5642 = vst [vmem:[#allocation4 + $0xd0] sm:$0xff] %v5606
      %5643 = vst [vmem:[#allocation4 + $0xd8] sm:$0xff] %v5607
      %5644 = vst [vmem:[#allocation4 + $0xe0] sm:$0xff] %v5608
      %5645 = vst [vmem:[#allocation4 + $0xe8] sm:$0xff] %v5609
      %5646 = vst [vmem:[#allocation4 + $0xf0] sm:$0xff] %v5610
      %5647 = vst [vmem:[#allocation4 + $0xf8] sm:$0xff] %v5611
      %5648 = vst [vmem:[#allocation4 + $0x100] sm:$0xff] %v5612
      %5649 = vst [vmem:[#allocation4 + $0x108] sm:$0xff] %v5613
      %5650 = vst [vmem:[#allocation4 + $0x110] sm:$0xff] %v5614
      %5651 = vst [vmem:[#allocation4 + $0x118] sm:$0xff] %v5615
      %v5652 = vld [vmem:[#allocation3 + $0x2] sm:$0xff]
      %v5653 = vld [vmem:[#allocation3 + $0xa] sm:$0xff]
      %v5654 = vld [vmem:[#allocation3 + $0x12] sm:$0xff]
      %v5655 = vld [vmem:[#allocation3 + $0x1a] sm:$0xff]
      %v5656 = vld [vmem:[#allocation3 + $0x22] sm:$0xff]
      %v5657 = vld [vmem:[#allocation3 + $0x2a] sm:$0xff]
      %v5658 = vld [vmem:[#allocation3 + $0x32] sm:$0xff]
      %v5659 = vld [vmem:[#allocation3 + $0x3a] sm:$0xff]
      %v5660 = vld [vmem:[#allocation3 + $0x42] sm:$0xff]
      %v5661 = vld [vmem:[#allocation3 + $0x4a] sm:$0xff]
      %v5662 = vld [vmem:[#allocation3 + $0x52] sm:$0xff]
      %v5663 = vld [vmem:[#allocation3 + $0x5a] sm:$0xff]
      %v5664 = vld [vmem:[#allocation3 + $0x62] sm:$0xff]
      %v5665 = vld [vmem:[#allocation3 + $0x6a] sm:$0xff]
      %v5666 = vld [vmem:[#allocation3 + $0x72] sm:$0xff]
      %v5667 = vld [vmem:[#allocation3 + $0x7a] sm:$0xff]
      %v5668 = vld [vmem:[#allocation3 + $0x82] sm:$0xff]
      %v5669 = vld [vmem:[#allocation3 + $0x8a] sm:$0xff]
      %v5670 = vld [vmem:[#allocation3 + $0x92] sm:$0xff]
      %v5671 = vld [vmem:[#allocation3 + $0x9a] sm:$0xff]
      %v5672 = vld [vmem:[#allocation3 + $0xa2] sm:$0xff]
      %v5673 = vld [vmem:[#allocation3 + $0xaa] sm:$0xff]
      %v5674 = vld [vmem:[#allocation3 + $0xb2] sm:$0xff]
      %v5675 = vld [vmem:[#allocation3 + $0xba] sm:$0xff]
      %v5676 = vld [vmem:[#allocation3 + $0xc2] sm:$0xff]
      %v5677 = vld [vmem:[#allocation3 + $0xca] sm:$0xff]
      %v5678 = vld [vmem:[#allocation3 + $0xd2] sm:$0xff]
      %v5679 = vld [vmem:[#allocation3 + $0xda] sm:$0xff]
      %v5680 = vld [vmem:[#allocation3 + $0xe2] sm:$0xff]
      %v5681 = vld [vmem:[#allocation3 + $0xea] sm:$0xff]
      %v5682 = vld [vmem:[#allocation3 + $0xf2] sm:$0xff]
      %v5683 = vld [vmem:[#allocation3 + $0xfa] sm:$0xff]
      %v5684 = vld [vmem:[#allocation3 + $0x102] sm:$0xff]
      %v5685 = vld [vmem:[#allocation3 + $0x10a] sm:$0xff]
      %v5686 = vld [vmem:[#allocation3 + $0x112] sm:$0xff]
      %v5687 = vld [vmem:[#allocation3 + $0x11a] sm:$0xff]
      %v5688 = vpack.c.bf16 %v5653, %v5652
      %v5689 = vpack.c.bf16 %v5655, %v5654
      %v5690 = vpack.c.bf16 %v5657, %v5656
      %v5691 = vpack.c.bf16 %v5659, %v5658
      %v5692 = vpack.c.bf16 %v5661, %v5660
      %v5693 = vpack.c.bf16 %v5663, %v5662
      %v5694 = vpack.c.bf16 %v5665, %v5664
      %v5695 = vpack.c.bf16 %v5667, %v5666
      %v5696 = vpack.c.bf16 %v5669, %v5668
      %v5697 = vpack.c.bf16 %v5671, %v5670
      %v5698 = vpack.c.bf16 %v5673, %v5672
      %v5699 = vpack.c.bf16 %v5675, %v5674
      %v5700 = vpack.c.bf16 %v5677, %v5676
      %v5701 = vpack.c.bf16 %v5679, %v5678
      %v5702 = vpack.c.bf16 %v5681, %v5680
      %v5703 = vpack.c.bf16 %v5683, %v5682
      %v5704 = vpack.c.bf16 %v5685, %v5684
      %v5705 = vpack.c.bf16 %v5687, %v5686
      %s5706 = scalar_lea.vmem %s7, 128
      %v5707 = vld [vmem:[%s5706] sm:$0xf]
      %v5708 = vld [vmem:[%s5706 + $0x4] sm:$0xf]
      %v5709 = vld [vmem:[%s5706 + $0x8] sm:$0xf]
      %v5710 = vld [vmem:[%s5706 + $0xc] sm:$0xf]
      %v5711 = vld [vmem:[%s5706 + $0x10] sm:$0xf]
      %v5712 = vld [vmem:[%s5706 + $0x14] sm:$0xf]
      %v5713 = vld [vmem:[%s5706 + $0x18] sm:$0xf]
      %v5714 = vld [vmem:[%s5706 + $0x1c] sm:$0xf]
      %v5715 = vld [vmem:[%s5706 + $0x20] sm:$0xf]
      %v5716 = vld [vmem:[%s5706 + $0x24] sm:$0xf]
      %v5717 = vld [vmem:[%s5706 + $0x28] sm:$0xf]
      %v5718 = vld [vmem:[%s5706 + $0x2c] sm:$0xf]
      %v5719 = vld [vmem:[%s5706 + $0x30] sm:$0xf]
      %v5720 = vld [vmem:[%s5706 + $0x34] sm:$0xf]
      %v5721 = vld [vmem:[%s5706 + $0x38] sm:$0xf]
      %v5722 = vld [vmem:[%s5706 + $0x3c] sm:$0xf]
      %v5739 = vunpack.c.l.b16 %v5707
      %v5740 = vunpack.c.l.b16 %v5708
      %v5741 = vunpack.c.l.b16 %v5709
      %v5742 = vunpack.c.l.b16 %v5710
      %v5743 = vunpack.c.l.b16 %v5711
      %v5744 = vunpack.c.l.b16 %v5712
      %v5745 = vunpack.c.l.b16 %v5713
      %v5746 = vunpack.c.l.b16 %v5714
      %v5747 = vunpack.c.l.b16 %v5715
      %v5748 = vunpack.c.l.b16 %v5716
      %v5749 = vunpack.c.l.b16 %v5717
      %v5750 = vunpack.c.l.b16 %v5718
      %v5751 = vunpack.c.l.b16 %v5719
      %v5752 = vunpack.c.l.b16 %v5720
      %v5753 = vunpack.c.l.b16 %v5721
      %v5754 = vunpack.c.l.b16 %v5722
      %v5755 = vpack.c.b16 %v5740, %v5739
      %v5756 = vpack.c.b16 %v5742, %v5741
      %v5757 = vpack.c.b16 %v5744, %v5743
      %v5758 = vpack.c.b16 %v5746, %v5745
      %v5759 = vpack.c.b16 %v5748, %v5747
      %v5760 = vpack.c.b16 %v5750, %v5749
      %v5761 = vpack.c.b16 %v5752, %v5751
      %v5762 = vpack.c.b16 %v5754, %v5753
      %5771 = vmatprep.subr.bf16.mxu0 0
      %5772 = vmatpush1.bf16.msra.mxu0 %v5762
      %5773 = vmatprep.subr.bf16.mxu0 0
      %5774 = vmatpush1.bf16.msra.mxu0 %v5761
      %5775 = vmatprep.subr.bf16.mxu0 0
      %5776 = vmatpush1.bf16.msra.mxu0 %v5760
      %5777 = vmatprep.subr.bf16.mxu0 0
      %5778 = vmatpush1.bf16.msra.mxu0 %v5759
      %5779 = vmatprep.subr.bf16.mxu0 0
      %5780 = vmatpush1.bf16.msra.mxu0 %v5758
      %5781 = vmatprep.subr.bf16.mxu0 0
      %5782 = vmatpush1.bf16.msra.mxu0 %v5757
      %5783 = vmatprep.subr.bf16.mxu0 0
      %5784 = vmatpush1.bf16.msra.mxu0 %v5756
      %5785 = vmatprep.subr.bf16.mxu0 0
      %5786 = vmatpush1.bf16.msra.mxu0 %v5755
      %5787 = vmatprep.subr.bf16.mxu0 0
      %5788 = vmatpush2.bf16.msra.mxu0 0
      %5789 = vmatprep.subr.bf16.mxu0 0
      %5790 = vmatpush2.bf16.msra.mxu0 0
      %5791 = vmatprep.subr.bf16.mxu0 0
      %5792 = vmatpush2.bf16.msra.mxu0 0
      %5793 = vmatprep.subr.bf16.mxu0 0
      %5794 = vmatpush2.bf16.msra.mxu0 0
      %5795 = vmatprep.subr.bf16.mxu0 0
      %5796 = vmatpush2.bf16.msra.mxu0 0
      %5797 = vmatprep.subr.bf16.mxu0 0
      %5798 = vmatpush2.bf16.msra.mxu0 0
      %5799 = vmatprep.subr.bf16.mxu0 0
      %5800 = vmatpush2.bf16.msra.mxu0 0
      %5801 = vmatprep.subr.bf16.mxu0 0
      %5802 = vmatpush2.bf16.msra.mxu0 0
      %5803 = vmatprep.mubr.bf16.mxu0 0
      %5804 = vmatmul.mubr.bf16.gmra.mxu0 %v5688
      %v5805 = vpop.f32.mrf.mxu0
      %v5806 = vadd.f32 0.0, %v5805
      %v5807 = vpop.f32.mrf.mxu0
      %v5808 = vpop.f32.mrf.mxu0
      %v5809 = vadd.f32 0.0, %v5808
      %v5810 = vpop.f32.mrf.mxu0
      %5811 = vmatprep.mubr.bf16.mxu0 0
      %5812 = vmatmul.mubr.bf16.gmra.mxu0 %v5689
      %v5813 = vpop.f32.mrf.mxu0
      %v5814 = vadd.f32 0.0, %v5813
      %v5815 = vpop.f32.mrf.mxu0
      %v5816 = vpop.f32.mrf.mxu0
      %v5817 = vadd.f32 0.0, %v5816
      %v5818 = vpop.f32.mrf.mxu0
      %5819 = vmatprep.mubr.bf16.mxu0 0
      %5820 = vmatmul.mubr.bf16.gmra.mxu0 %v5690
      %v5821 = vpop.f32.mrf.mxu0
      %v5822 = vadd.f32 0.0, %v5821
      %v5823 = vpop.f32.mrf.mxu0
      %v5824 = vpop.f32.mrf.mxu0
      %v5825 = vadd.f32 0.0, %v5824
      %v5826 = vpop.f32.mrf.mxu0
      %5827 = vmatprep.mubr.bf16.mxu0 0
      %5828 = vmatmul.mubr.bf16.gmra.mxu0 %v5691
      %v5829 = vpop.f32.mrf.mxu0
      %v5830 = vadd.f32 0.0, %v5829
      %v5831 = vpop.f32.mrf.mxu0
      %v5832 = vpop.f32.mrf.mxu0
      %v5833 = vadd.f32 0.0, %v5832
      %v5834 = vpop.f32.mrf.mxu0
      %5835 = vmatprep.mubr.bf16.mxu0 0
      %5836 = vmatmul.mubr.bf16.gmra.mxu0 %v5692
      %v5837 = vpop.f32.mrf.mxu0
      %v5838 = vadd.f32 0.0, %v5837
      %v5839 = vpop.f32.mrf.mxu0
      %v5840 = vpop.f32.mrf.mxu0
      %v5841 = vadd.f32 0.0, %v5840
      %v5842 = vpop.f32.mrf.mxu0
      %5843 = vmatprep.mubr.bf16.mxu0 0
      %5844 = vmatmul.mubr.bf16.gmra.mxu0 %v5693
      %v5845 = vpop.f32.mrf.mxu0
      %v5846 = vadd.f32 0.0, %v5845
      %v5847 = vpop.f32.mrf.mxu0
      %v5848 = vpop.f32.mrf.mxu0
      %v5849 = vadd.f32 0.0, %v5848
      %v5850 = vpop.f32.mrf.mxu0
      %5851 = vmatprep.mubr.bf16.mxu0 0
      %5852 = vmatmul.mubr.bf16.gmra.mxu0 %v5694
      %v5853 = vpop.f32.mrf.mxu0
      %v5854 = vadd.f32 0.0, %v5853
      %v5855 = vpop.f32.mrf.mxu0
      %v5856 = vpop.f32.mrf.mxu0
      %v5857 = vadd.f32 0.0, %v5856
      %v5858 = vpop.f32.mrf.mxu0
      %5859 = vmatprep.mubr.bf16.mxu0 0
      %5860 = vmatmul.mubr.bf16.gmra.mxu0 %v5695
      %v5861 = vpop.f32.mrf.mxu0
      %v5862 = vadd.f32 0.0, %v5861
      %v5863 = vpop.f32.mrf.mxu0
      %v5864 = vpop.f32.mrf.mxu0
      %v5865 = vadd.f32 0.0, %v5864
      %v5866 = vpop.f32.mrf.mxu0
      %5867 = vmatprep.mubr.bf16.mxu0 0
      %5868 = vmatmul.mubr.bf16.gmra.mxu0 %v5696
      %v5869 = vpop.f32.mrf.mxu0
      %v5870 = vadd.f32 0.0, %v5869
      %v5871 = vpop.f32.mrf.mxu0
      %v5872 = vpop.f32.mrf.mxu0
      %v5873 = vadd.f32 0.0, %v5872
      %v5874 = vpop.f32.mrf.mxu0
      %5875 = vmatprep.mubr.bf16.mxu0 0
      %5876 = vmatmul.mubr.bf16.gmra.mxu0 %v5697
      %v5877 = vpop.f32.mrf.mxu0
      %v5878 = vadd.f32 0.0, %v5877
      %v5879 = vpop.f32.mrf.mxu0
      %v5880 = vpop.f32.mrf.mxu0
      %v5881 = vadd.f32 0.0, %v5880
      %v5882 = vpop.f32.mrf.mxu0
      %5883 = vmatprep.mubr.bf16.mxu0 0
      %5884 = vmatmul.mubr.bf16.gmra.mxu0 %v5698
      %v5885 = vpop.f32.mrf.mxu0
      %v5886 = vadd.f32 0.0, %v5885
      %v5887 = vpop.f32.mrf.mxu0
      %v5888 = vpop.f32.mrf.mxu0
      %v5889 = vadd.f32 0.0, %v5888
      %v5890 = vpop.f32.mrf.mxu0
      %5891 = vmatprep.mubr.bf16.mxu0 0
      %5892 = vmatmul.mubr.bf16.gmra.mxu0 %v5699
      %v5893 = vpop.f32.mrf.mxu0
      %v5894 = vadd.f32 0.0, %v5893
      %v5895 = vpop.f32.mrf.mxu0
      %v5896 = vpop.f32.mrf.mxu0
      %v5897 = vadd.f32 0.0, %v5896
      %v5898 = vpop.f32.mrf.mxu0
      %5899 = vmatprep.mubr.bf16.mxu0 0
      %5900 = vmatmul.mubr.bf16.gmra.mxu0 %v5700
      %v5901 = vpop.f32.mrf.mxu0
      %v5902 = vadd.f32 0.0, %v5901
      %v5903 = vpop.f32.mrf.mxu0
      %v5904 = vpop.f32.mrf.mxu0
      %v5905 = vadd.f32 0.0, %v5904
      %v5906 = vpop.f32.mrf.mxu0
      %5907 = vmatprep.mubr.bf16.mxu0 0
      %5908 = vmatmul.mubr.bf16.gmra.mxu0 %v5701
      %v5909 = vpop.f32.mrf.mxu0
      %v5910 = vadd.f32 0.0, %v5909
      %v5911 = vpop.f32.mrf.mxu0
      %v5912 = vpop.f32.mrf.mxu0
      %v5913 = vadd.f32 0.0, %v5912
      %v5914 = vpop.f32.mrf.mxu0
      %5915 = vmatprep.mubr.bf16.mxu0 0
      %5916 = vmatmul.mubr.bf16.gmra.mxu0 %v5702
      %v5917 = vpop.f32.mrf.mxu0
      %v5918 = vadd.f32 0.0, %v5917
      %v5919 = vpop.f32.mrf.mxu0
      %v5920 = vpop.f32.mrf.mxu0
      %v5921 = vadd.f32 0.0, %v5920
      %v5922 = vpop.f32.mrf.mxu0
      %5923 = vmatprep.mubr.bf16.mxu0 0
      %5924 = vmatmul.mubr.bf16.gmra.mxu0 %v5703
      %v5925 = vpop.f32.mrf.mxu0
      %v5926 = vadd.f32 0.0, %v5925
      %v5927 = vpop.f32.mrf.mxu0
      %v5928 = vpop.f32.mrf.mxu0
      %v5929 = vadd.f32 0.0, %v5928
      %v5930 = vpop.f32.mrf.mxu0
      %5931 = vmatprep.mubr.bf16.mxu0 0
      %5932 = vmatmul.mubr.bf16.gmra.mxu0 %v5704
      %v5933 = vpop.f32.mrf.mxu0
      %v5934 = vadd.f32 0.0, %v5933
      %v5935 = vpop.f32.mrf.mxu0
      %v5936 = vpop.f32.mrf.mxu0
      %v5937 = vadd.f32 0.0, %v5936
      %v5938 = vpop.f32.mrf.mxu0
      %5939 = vmatprep.mubr.bf16.mxu0 0
      %5940 = vmatmul.mubr.bf16.gmra.mxu0 %v5705
      %v5941 = vpop.f32.mrf.mxu0
      %v5942 = vadd.f32 0.0, %v5941
      %v5943 = vpop.f32.mrf.mxu0
      %v5944 = vpop.f32.mrf.mxu0
      %v5945 = vadd.f32 0.0, %v5944
      %v5946 = vpop.f32.mrf.mxu0
      %5947 = vdwg.mxu0
      %v5948 = vld [vmem:[#allocation4] sm:$0xff]
      %v5949 = vld [vmem:[#allocation4 + $0x8] sm:$0xff]
      %v5950 = vld [vmem:[#allocation4 + $0x10] sm:$0xff]
      %v5951 = vld [vmem:[#allocation4 + $0x18] sm:$0xff]
      %v5952 = vld [vmem:[#allocation4 + $0x20] sm:$0xff]
      %v5953 = vld [vmem:[#allocation4 + $0x28] sm:$0xff]
      %v5954 = vld [vmem:[#allocation4 + $0x30] sm:$0xff]
      %v5955 = vld [vmem:[#allocation4 + $0x38] sm:$0xff]
      %v5956 = vld [vmem:[#allocation4 + $0x40] sm:$0xff]
      %v5957 = vld [vmem:[#allocation4 + $0x48] sm:$0xff]
      %v5958 = vld [vmem:[#allocation4 + $0x50] sm:$0xff]
      %v5959 = vld [vmem:[#allocation4 + $0x58] sm:$0xff]
      %v5960 = vld [vmem:[#allocation4 + $0x60] sm:$0xff]
      %v5961 = vld [vmem:[#allocation4 + $0x68] sm:$0xff]
      %v5962 = vld [vmem:[#allocation4 + $0x70] sm:$0xff]
      %v5963 = vld [vmem:[#allocation4 + $0x78] sm:$0xff]
      %v5964 = vld [vmem:[#allocation4 + $0x80] sm:$0xff]
      %v5965 = vld [vmem:[#allocation4 + $0x88] sm:$0xff]
      %v5966 = vld [vmem:[#allocation4 + $0x90] sm:$0xff]
      %v5967 = vld [vmem:[#allocation4 + $0x98] sm:$0xff]
      %v5968 = vld [vmem:[#allocation4 + $0xa0] sm:$0xff]
      %v5969 = vld [vmem:[#allocation4 + $0xa8] sm:$0xff]
      %v5970 = vld [vmem:[#allocation4 + $0xb0] sm:$0xff]
      %v5971 = vld [vmem:[#allocation4 + $0xb8] sm:$0xff]
      %v5972 = vld [vmem:[#allocation4 + $0xc0] sm:$0xff]
      %v5973 = vld [vmem:[#allocation4 + $0xc8] sm:$0xff]
      %v5974 = vld [vmem:[#allocation4 + $0xd0] sm:$0xff]
      %v5975 = vld [vmem:[#allocation4 + $0xd8] sm:$0xff]
      %v5976 = vld [vmem:[#allocation4 + $0xe0] sm:$0xff]
      %v5977 = vld [vmem:[#allocation4 + $0xe8] sm:$0xff]
      %v5978 = vld [vmem:[#allocation4 + $0xf0] sm:$0xff]
      %v5979 = vld [vmem:[#allocation4 + $0xf8] sm:$0xff]
      %v5980 = vld [vmem:[#allocation4 + $0x100] sm:$0xff]
      %v5981 = vld [vmem:[#allocation4 + $0x108] sm:$0xff]
      %v5982 = vld [vmem:[#allocation4 + $0x110] sm:$0xff]
      %v5983 = vld [vmem:[#allocation4 + $0x118] sm:$0xff]
      %v5984 = vadd.f32 %v5948, %v5806
      %v5985 = vadd.f32 %v5949, %v5809
      %v5986 = vadd.f32 %v5950, %v5814
      %v5987 = vadd.f32 %v5951, %v5817
      %v5988 = vadd.f32 %v5952, %v5822
      %v5989 = vadd.f32 %v5953, %v5825
      %v5990 = vadd.f32 %v5954, %v5830
      %v5991 = vadd.f32 %v5955, %v5833
      %v5992 = vadd.f32 %v5956, %v5838
      %v5993 = vadd.f32 %v5957, %v5841
      %v5994 = vadd.f32 %v5958, %v5846
      %v5995 = vadd.f32 %v5959, %v5849
      %v5996 = vadd.f32 %v5960, %v5854
      %v5997 = vadd.f32 %v5961, %v5857
      %v5998 = vadd.f32 %v5962, %v5862
      %v5999 = vadd.f32 %v5963, %v5865
      %v6000 = vadd.f32 %v5964, %v5870
      %v6001 = vadd.f32 %v5965, %v5873
      %v6002 = vadd.f32 %v5966, %v5878
      %v6003 = vadd.f32 %v5967, %v5881
      %v6004 = vadd.f32 %v5968, %v5886
      %v6005 = vadd.f32 %v5969, %v5889
      %v6006 = vadd.f32 %v5970, %v5894
      %v6007 = vadd.f32 %v5971, %v5897
      %v6008 = vadd.f32 %v5972, %v5902
      %v6009 = vadd.f32 %v5973, %v5905
      %v6010 = vadd.f32 %v5974, %v5910
      %v6011 = vadd.f32 %v5975, %v5913
      %v6012 = vadd.f32 %v5976, %v5918
      %v6013 = vadd.f32 %v5977, %v5921
      %v6014 = vadd.f32 %v5978, %v5926
      %v6015 = vadd.f32 %v5979, %v5929
      %v6016 = vadd.f32 %v5980, %v5934
      %v6017 = vadd.f32 %v5981, %v5937
      %v6018 = vadd.f32 %v5982, %v5942
      %v6019 = vadd.f32 %v5983, %v5945
      %6020 = vst [vmem:[#allocation4] sm:$0xff] %v5984
      %6021 = vst [vmem:[#allocation4 + $0x8] sm:$0xff] %v5985
      %6022 = vst [vmem:[#allocation4 + $0x10] sm:$0xff] %v5986
      %6023 = vst [vmem:[#allocation4 + $0x18] sm:$0xff] %v5987
      %6024 = vst [vmem:[#allocation4 + $0x20] sm:$0xff] %v5988
      %6025 = vst [vmem:[#allocation4 + $0x28] sm:$0xff] %v5989
      %6026 = vst [vmem:[#allocation4 + $0x30] sm:$0xff] %v5990
      %6027 = vst [vmem:[#allocation4 + $0x38] sm:$0xff] %v5991
      %6028 = vst [vmem:[#allocation4 + $0x40] sm:$0xff] %v5992
      %6029 = vst [vmem:[#allocation4 + $0x48] sm:$0xff] %v5993
      %6030 = vst [vmem:[#allocation4 + $0x50] sm:$0xff] %v5994
      %6031 = vst [vmem:[#allocation4 + $0x58] sm:$0xff] %v5995
      %6032 = vst [vmem:[#allocation4 + $0x60] sm:$0xff] %v5996
      %6033 = vst [vmem:[#allocation4 + $0x68] sm:$0xff] %v5997
      %6034 = vst [vmem:[#allocation4 + $0x70] sm:$0xff] %v5998
      %6035 = vst [vmem:[#allocation4 + $0x78] sm:$0xff] %v5999
      %6036 = vst [vmem:[#allocation4 + $0x80] sm:$0xff] %v6000
      %6037 = vst [vmem:[#allocation4 + $0x88] sm:$0xff] %v6001
      %6038 = vst [vmem:[#allocation4 + $0x90] sm:$0xff] %v6002
      %6039 = vst [vmem:[#allocation4 + $0x98] sm:$0xff] %v6003
      %6040 = vst [vmem:[#allocation4 + $0xa0] sm:$0xff] %v6004
      %6041 = vst [vmem:[#allocation4 + $0xa8] sm:$0xff] %v6005
      %6042 = vst [vmem:[#allocation4 + $0xb0] sm:$0xff] %v6006
      %6043 = vst [vmem:[#allocation4 + $0xb8] sm:$0xff] %v6007
      %6044 = vst [vmem:[#allocation4 + $0xc0] sm:$0xff] %v6008
      %6045 = vst [vmem:[#allocation4 + $0xc8] sm:$0xff] %v6009
      %6046 = vst [vmem:[#allocation4 + $0xd0] sm:$0xff] %v6010
      %6047 = vst [vmem:[#allocation4 + $0xd8] sm:$0xff] %v6011
      %6048 = vst [vmem:[#allocation4 + $0xe0] sm:$0xff] %v6012
      %6049 = vst [vmem:[#allocation4 + $0xe8] sm:$0xff] %v6013
      %6050 = vst [vmem:[#allocation4 + $0xf0] sm:$0xff] %v6014
      %6051 = vst [vmem:[#allocation4 + $0xf8] sm:$0xff] %v6015
      %6052 = vst [vmem:[#allocation4 + $0x100] sm:$0xff] %v6016
      %6053 = vst [vmem:[#allocation4 + $0x108] sm:$0xff] %v6017
      %6054 = vst [vmem:[#allocation4 + $0x110] sm:$0xff] %v6018
      %6055 = vst [vmem:[#allocation4 + $0x118] sm:$0xff] %v6019
      %v6056 = vld [vmem:[#allocation3 + $0x12] sm:$0xff]
      %v6057 = vld [vmem:[#allocation3 + $0x1a] sm:$0xff]
      %v6058 = vld [vmem:[#allocation3 + $0x22] sm:$0xff]
      %v6059 = vld [vmem:[#allocation3 + $0x2a] sm:$0xff]
      %v6060 = vld [vmem:[#allocation3 + $0x32] sm:$0xff]
      %v6061 = vld [vmem:[#allocation3 + $0x3a] sm:$0xff]
      %v6062 = vld [vmem:[#allocation3 + $0x42] sm:$0xff]
      %v6063 = vld [vmem:[#allocation3 + $0x4a] sm:$0xff]
      %v6064 = vld [vmem:[#allocation3 + $0x52] sm:$0xff]
      %v6065 = vld [vmem:[#allocation3 + $0x5a] sm:$0xff]
      %v6066 = vld [vmem:[#allocation3 + $0x62] sm:$0xff]
      %v6067 = vld [vmem:[#allocation3 + $0x6a] sm:$0xff]
      %v6068 = vld [vmem:[#allocation3 + $0x72] sm:$0xff]
      %v6069 = vld [vmem:[#allocation3 + $0x7a] sm:$0xff]
      %v6070 = vld [vmem:[#allocation3 + $0x82] sm:$0xff]
      %v6071 = vld [vmem:[#allocation3 + $0x8a] sm:$0xff]
      %v6072 = vld [vmem:[#allocation3 + $0x92] sm:$0xff]
      %v6073 = vld [vmem:[#allocation3 + $0x9a] sm:$0xff]
      %v6074 = vld [vmem:[#allocation3 + $0xa2] sm:$0xff]
      %v6075 = vld [vmem:[#allocation3 + $0xaa] sm:$0xff]
      %v6076 = vld [vmem:[#allocation3 + $0xb2] sm:$0xff]
      %v6077 = vld [vmem:[#allocation3 + $0xba] sm:$0xff]
      %v6078 = vld [vmem:[#allocation3 + $0xc2] sm:$0xff]
      %v6079 = vld [vmem:[#allocation3 + $0xca] sm:$0xff]
      %v6080 = vld [vmem:[#allocation3 + $0xd2] sm:$0xff]
      %v6081 = vld [vmem:[#allocation3 + $0xda] sm:$0xff]
      %v6082 = vld [vmem:[#allocation3 + $0xe2] sm:$0xff]
      %v6083 = vld [vmem:[#allocation3 + $0xea] sm:$0xff]
      %v6084 = vld [vmem:[#allocation3 + $0xf2] sm:$0xff]
      %v6085 = vld [vmem:[#allocation3 + $0xfa] sm:$0xff]
      %v6086 = vld [vmem:[#allocation3 + $0x102] sm:$0xff]
      %v6087 = vld [vmem:[#allocation3 + $0x10a] sm:$0xff]
      %v6088 = vld [vmem:[#allocation3 + $0x112] sm:$0xff]
      %v6089 = vld [vmem:[#allocation3 + $0x11a] sm:$0xff]
      %v6090 = vld [vmem:[#allocation3 + $0x122] sm:$0xff]
      %v6091 = vld [vmem:[#allocation3 + $0x12a] sm:$0xff]
      %v6092 = vpack.c.bf16 %v6057, %v6056
      %v6093 = vpack.c.bf16 %v6059, %v6058
      %v6094 = vpack.c.bf16 %v6061, %v6060
      %v6095 = vpack.c.bf16 %v6063, %v6062
      %v6096 = vpack.c.bf16 %v6065, %v6064
      %v6097 = vpack.c.bf16 %v6067, %v6066
      %v6098 = vpack.c.bf16 %v6069, %v6068
      %v6099 = vpack.c.bf16 %v6071, %v6070
      %v6100 = vpack.c.bf16 %v6073, %v6072
      %v6101 = vpack.c.bf16 %v6075, %v6074
      %v6102 = vpack.c.bf16 %v6077, %v6076
      %v6103 = vpack.c.bf16 %v6079, %v6078
      %v6104 = vpack.c.bf16 %v6081, %v6080
      %v6105 = vpack.c.bf16 %v6083, %v6082
      %v6106 = vpack.c.bf16 %v6085, %v6084
      %v6107 = vpack.c.bf16 %v6087, %v6086
      %v6108 = vpack.c.bf16 %v6089, %v6088
      %v6109 = vpack.c.bf16 %v6091, %v6090
      %s6110 = scalar_lea.vmem %s7, 192
      %v6111 = vld [vmem:[%s6110] sm:$0xf]
      %v6112 = vld [vmem:[%s6110 + $0x4] sm:$0xf]
      %v6113 = vld [vmem:[%s6110 + $0x8] sm:$0xf]
      %v6114 = vld [vmem:[%s6110 + $0xc] sm:$0xf]
      %v6115 = vld [vmem:[%s6110 + $0x10] sm:$0xf]
      %v6116 = vld [vmem:[%s6110 + $0x14] sm:$0xf]
      %v6117 = vld [vmem:[%s6110 + $0x18] sm:$0xf]
      %v6118 = vld [vmem:[%s6110 + $0x1c] sm:$0xf]
      %v6119 = vld [vmem:[%s6110 + $0x20] sm:$0xf]
      %v6120 = vld [vmem:[%s6110 + $0x24] sm:$0xf]
      %v6121 = vld [vmem:[%s6110 + $0x28] sm:$0xf]
      %v6122 = vld [vmem:[%s6110 + $0x2c] sm:$0xf]
      %v6123 = vld [vmem:[%s6110 + $0x30] sm:$0xf]
      %v6124 = vld [vmem:[%s6110 + $0x34] sm:$0xf]
      %v6125 = vld [vmem:[%s6110 + $0x38] sm:$0xf]
      %v6126 = vld [vmem:[%s6110 + $0x3c] sm:$0xf]
      %v6143 = vunpack.c.l.b16 %v6111
      %v6144 = vunpack.c.l.b16 %v6112
      %v6145 = vunpack.c.l.b16 %v6113
      %v6146 = vunpack.c.l.b16 %v6114
      %v6147 = vunpack.c.l.b16 %v6115
      %v6148 = vunpack.c.l.b16 %v6116
      %v6149 = vunpack.c.l.b16 %v6117
      %v6150 = vunpack.c.l.b16 %v6118
      %v6151 = vunpack.c.l.b16 %v6119
      %v6152 = vunpack.c.l.b16 %v6120
      %v6153 = vunpack.c.l.b16 %v6121
      %v6154 = vunpack.c.l.b16 %v6122
      %v6155 = vunpack.c.l.b16 %v6123
      %v6156 = vunpack.c.l.b16 %v6124
      %v6157 = vunpack.c.l.b16 %v6125
      %v6158 = vunpack.c.l.b16 %v6126
      %v6159 = vpack.c.b16 %v6144, %v6143
      %v6160 = vpack.c.b16 %v6146, %v6145
      %v6161 = vpack.c.b16 %v6148, %v6147
      %v6162 = vpack.c.b16 %v6150, %v6149
      %v6163 = vpack.c.b16 %v6152, %v6151
      %v6164 = vpack.c.b16 %v6154, %v6153
      %v6165 = vpack.c.b16 %v6156, %v6155
      %v6166 = vpack.c.b16 %v6158, %v6157
      %6175 = vmatprep.subr.bf16.mxu0 0
      %6176 = vmatpush1.bf16.msra.mxu0 %v6166
      %6177 = vmatprep.subr.bf16.mxu0 0
      %6178 = vmatpush1.bf16.msra.mxu0 %v6165
      %6179 = vmatprep.subr.bf16.mxu0 0
      %6180 = vmatpush1.bf16.msra.mxu0 %v6164
      %6181 = vmatprep.subr.bf16.mxu0 0
      %6182 = vmatpush1.bf16.msra.mxu0 %v6163
      %6183 = vmatprep.subr.bf16.mxu0 0
      %6184 = vmatpush1.bf16.msra.mxu0 %v6162
      %6185 = vmatprep.subr.bf16.mxu0 0
      %6186 = vmatpush1.bf16.msra.mxu0 %v6161
      %6187 = vmatprep.subr.bf16.mxu0 0
      %6188 = vmatpush1.bf16.msra.mxu0 %v6160
      %6189 = vmatprep.subr.bf16.mxu0 0
      %6190 = vmatpush1.bf16.msra.mxu0 %v6159
      %6191 = vmatprep.subr.bf16.mxu0 0
      %6192 = vmatpush2.bf16.msra.mxu0 0
      %6193 = vmatprep.subr.bf16.mxu0 0
      %6194 = vmatpush2.bf16.msra.mxu0 0
      %6195 = vmatprep.subr.bf16.mxu0 0
      %6196 = vmatpush2.bf16.msra.mxu0 0
      %6197 = vmatprep.subr.bf16.mxu0 0
      %6198 = vmatpush2.bf16.msra.mxu0 0
      %6199 = vmatprep.subr.bf16.mxu0 0
      %6200 = vmatpush2.bf16.msra.mxu0 0
      %6201 = vmatprep.subr.bf16.mxu0 0
      %6202 = vmatpush2.bf16.msra.mxu0 0
      %6203 = vmatprep.subr.bf16.mxu0 0
      %6204 = vmatpush2.bf16.msra.mxu0 0
      %6205 = vmatprep.subr.bf16.mxu0 0
      %6206 = vmatpush2.bf16.msra.mxu0 0
      %6207 = vmatprep.mubr.bf16.mxu0 0
      %6208 = vmatmul.mubr.bf16.gmra.mxu0 %v6092
      %v6209 = vpop.f32.mrf.mxu0
      %v6210 = vadd.f32 0.0, %v6209
      %v6211 = vpop.f32.mrf.mxu0
      %v6212 = vpop.f32.mrf.mxu0
      %v6213 = vadd.f32 0.0, %v6212
      %v6214 = vpop.f32.mrf.mxu0
      %6215 = vmatprep.mubr.bf16.mxu0 0
      %6216 = vmatmul.mubr.bf16.gmra.mxu0 %v6093
      %v6217 = vpop.f32.mrf.mxu0
      %v6218 = vadd.f32 0.0, %v6217
      %v6219 = vpop.f32.mrf.mxu0
      %v6220 = vpop.f32.mrf.mxu0
      %v6221 = vadd.f32 0.0, %v6220
      %v6222 = vpop.f32.mrf.mxu0
      %6223 = vmatprep.mubr.bf16.mxu0 0
      %6224 = vmatmul.mubr.bf16.gmra.mxu0 %v6094
      %v6225 = vpop.f32.mrf.mxu0
      %v6226 = vadd.f32 0.0, %v6225
      %v6227 = vpop.f32.mrf.mxu0
      %v6228 = vpop.f32.mrf.mxu0
      %v6229 = vadd.f32 0.0, %v6228
      %v6230 = vpop.f32.mrf.mxu0
      %6231 = vmatprep.mubr.bf16.mxu0 0
      %6232 = vmatmul.mubr.bf16.gmra.mxu0 %v6095
      %v6233 = vpop.f32.mrf.mxu0
      %v6234 = vadd.f32 0.0, %v6233
      %v6235 = vpop.f32.mrf.mxu0
      %v6236 = vpop.f32.mrf.mxu0
      %v6237 = vadd.f32 0.0, %v6236
      %v6238 = vpop.f32.mrf.mxu0
      %6239 = vmatprep.mubr.bf16.mxu0 0
      %6240 = vmatmul.mubr.bf16.gmra.mxu0 %v6096
      %v6241 = vpop.f32.mrf.mxu0
      %v6242 = vadd.f32 0.0, %v6241
      %v6243 = vpop.f32.mrf.mxu0
      %v6244 = vpop.f32.mrf.mxu0
      %v6245 = vadd.f32 0.0, %v6244
      %v6246 = vpop.f32.mrf.mxu0
      %6247 = vmatprep.mubr.bf16.mxu0 0
      %6248 = vmatmul.mubr.bf16.gmra.mxu0 %v6097
      %v6249 = vpop.f32.mrf.mxu0
      %v6250 = vadd.f32 0.0, %v6249
      %v6251 = vpop.f32.mrf.mxu0
      %v6252 = vpop.f32.mrf.mxu0
      %v6253 = vadd.f32 0.0, %v6252
      %v6254 = vpop.f32.mrf.mxu0
      %6255 = vmatprep.mubr.bf16.mxu0 0
      %6256 = vmatmul.mubr.bf16.gmra.mxu0 %v6098
      %v6257 = vpop.f32.mrf.mxu0
      %v6258 = vadd.f32 0.0, %v6257
      %v6259 = vpop.f32.mrf.mxu0
      %v6260 = vpop.f32.mrf.mxu0
      %v6261 = vadd.f32 0.0, %v6260
      %v6262 = vpop.f32.mrf.mxu0
      %6263 = vmatprep.mubr.bf16.mxu0 0
      %6264 = vmatmul.mubr.bf16.gmra.mxu0 %v6099
      %v6265 = vpop.f32.mrf.mxu0
      %v6266 = vadd.f32 0.0, %v6265
      %v6267 = vpop.f32.mrf.mxu0
      %v6268 = vpop.f32.mrf.mxu0
      %v6269 = vadd.f32 0.0, %v6268
      %v6270 = vpop.f32.mrf.mxu0
      %6271 = vmatprep.mubr.bf16.mxu0 0
      %6272 = vmatmul.mubr.bf16.gmra.mxu0 %v6100
      %v6273 = vpop.f32.mrf.mxu0
      %v6274 = vadd.f32 0.0, %v6273
      %v6275 = vpop.f32.mrf.mxu0
      %v6276 = vpop.f32.mrf.mxu0
      %v6277 = vadd.f32 0.0, %v6276
      %v6278 = vpop.f32.mrf.mxu0
      %6279 = vmatprep.mubr.bf16.mxu0 0
      %6280 = vmatmul.mubr.bf16.gmra.mxu0 %v6101
      %v6281 = vpop.f32.mrf.mxu0
      %v6282 = vadd.f32 0.0, %v6281
      %v6283 = vpop.f32.mrf.mxu0
      %v6284 = vpop.f32.mrf.mxu0
      %v6285 = vadd.f32 0.0, %v6284
      %v6286 = vpop.f32.mrf.mxu0
      %6287 = vmatprep.mubr.bf16.mxu0 0
      %6288 = vmatmul.mubr.bf16.gmra.mxu0 %v6102
      %v6289 = vpop.f32.mrf.mxu0
      %v6290 = vadd.f32 0.0, %v6289
      %v6291 = vpop.f32.mrf.mxu0
      %v6292 = vpop.f32.mrf.mxu0
      %v6293 = vadd.f32 0.0, %v6292
      %v6294 = vpop.f32.mrf.mxu0
      %6295 = vmatprep.mubr.bf16.mxu0 0
      %6296 = vmatmul.mubr.bf16.gmra.mxu0 %v6103
      %v6297 = vpop.f32.mrf.mxu0
      %v6298 = vadd.f32 0.0, %v6297
      %v6299 = vpop.f32.mrf.mxu0
      %v6300 = vpop.f32.mrf.mxu0
      %v6301 = vadd.f32 0.0, %v6300
      %v6302 = vpop.f32.mrf.mxu0
      %6303 = vmatprep.mubr.bf16.mxu0 0
      %6304 = vmatmul.mubr.bf16.gmra.mxu0 %v6104
      %v6305 = vpop.f32.mrf.mxu0
      %v6306 = vadd.f32 0.0, %v6305
      %v6307 = vpop.f32.mrf.mxu0
      %v6308 = vpop.f32.mrf.mxu0
      %v6309 = vadd.f32 0.0, %v6308
      %v6310 = vpop.f32.mrf.mxu0
      %6311 = vmatprep.mubr.bf16.mxu0 0
      %6312 = vmatmul.mubr.bf16.gmra.mxu0 %v6105
      %v6313 = vpop.f32.mrf.mxu0
      %v6314 = vadd.f32 0.0, %v6313
      %v6315 = vpop.f32.mrf.mxu0
      %v6316 = vpop.f32.mrf.mxu0
      %v6317 = vadd.f32 0.0, %v6316
      %v6318 = vpop.f32.mrf.mxu0
      %6319 = vmatprep.mubr.bf16.mxu0 0
      %6320 = vmatmul.mubr.bf16.gmra.mxu0 %v6106
      %v6321 = vpop.f32.mrf.mxu0
      %v6322 = vadd.f32 0.0, %v6321
      %v6323 = vpop.f32.mrf.mxu0
      %v6324 = vpop.f32.mrf.mxu0
      %v6325 = vadd.f32 0.0, %v6324
      %v6326 = vpop.f32.mrf.mxu0
      %6327 = vmatprep.mubr.bf16.mxu0 0
      %6328 = vmatmul.mubr.bf16.gmra.mxu0 %v6107
      %v6329 = vpop.f32.mrf.mxu0
      %v6330 = vadd.f32 0.0, %v6329
      %v6331 = vpop.f32.mrf.mxu0
      %v6332 = vpop.f32.mrf.mxu0
      %v6333 = vadd.f32 0.0, %v6332
      %v6334 = vpop.f32.mrf.mxu0
      %6335 = vmatprep.mubr.bf16.mxu0 0
      %6336 = vmatmul.mubr.bf16.gmra.mxu0 %v6108
      %v6337 = vpop.f32.mrf.mxu0
      %v6338 = vadd.f32 0.0, %v6337
      %v6339 = vpop.f32.mrf.mxu0
      %v6340 = vpop.f32.mrf.mxu0
      %v6341 = vadd.f32 0.0, %v6340
      %v6342 = vpop.f32.mrf.mxu0
      %6343 = vmatprep.mubr.bf16.mxu0 0
      %6344 = vmatmul.mubr.bf16.gmra.mxu0 %v6109
      %v6345 = vpop.f32.mrf.mxu0
      %v6346 = vadd.f32 0.0, %v6345
      %v6347 = vpop.f32.mrf.mxu0
      %v6348 = vpop.f32.mrf.mxu0
      %v6349 = vadd.f32 0.0, %v6348
      %v6350 = vpop.f32.mrf.mxu0
      %6351 = vdwg.mxu0
      %v6352 = vld [vmem:[#allocation4] sm:$0xff]
      %v6353 = vld [vmem:[#allocation4 + $0x8] sm:$0xff]
      %v6354 = vld [vmem:[#allocation4 + $0x10] sm:$0xff]
      %v6355 = vld [vmem:[#allocation4 + $0x18] sm:$0xff]
      %v6356 = vld [vmem:[#allocation4 + $0x20] sm:$0xff]
      %v6357 = vld [vmem:[#allocation4 + $0x28] sm:$0xff]
      %v6358 = vld [vmem:[#allocation4 + $0x30] sm:$0xff]
      %v6359 = vld [vmem:[#allocation4 + $0x38] sm:$0xff]
      %v6360 = vld [vmem:[#allocation4 + $0x40] sm:$0xff]
      %v6361 = vld [vmem:[#allocation4 + $0x48] sm:$0xff]
      %v6362 = vld [vmem:[#allocation4 + $0x50] sm:$0xff]
      %v6363 = vld [vmem:[#allocation4 + $0x58] sm:$0xff]
      %v6364 = vld [vmem:[#allocation4 + $0x60] sm:$0xff]
      %v6365 = vld [vmem:[#allocation4 + $0x68] sm:$0xff]
      %v6366 = vld [vmem:[#allocation4 + $0x70] sm:$0xff]
      %v6367 = vld [vmem:[#allocation4 + $0x78] sm:$0xff]
      %v6368 = vld [vmem:[#allocation4 + $0x80] sm:$0xff]
      %v6369 = vld [vmem:[#allocation4 + $0x88] sm:$0xff]
      %v6370 = vld [vmem:[#allocation4 + $0x90] sm:$0xff]
      %v6371 = vld [vmem:[#allocation4 + $0x98] sm:$0xff]
      %v6372 = vld [vmem:[#allocation4 + $0xa0] sm:$0xff]
      %v6373 = vld [vmem:[#allocation4 + $0xa8] sm:$0xff]
      %v6374 = vld [vmem:[#allocation4 + $0xb0] sm:$0xff]
      %v6375 = vld [vmem:[#allocation4 + $0xb8] sm:$0xff]
      %v6376 = vld [vmem:[#allocation4 + $0xc0] sm:$0xff]
      %v6377 = vld [vmem:[#allocation4 + $0xc8] sm:$0xff]
      %v6378 = vld [vmem:[#allocation4 + $0xd0] sm:$0xff]
      %v6379 = vld [vmem:[#allocation4 + $0xd8] sm:$0xff]
      %v6380 = vld [vmem:[#allocation4 + $0xe0] sm:$0xff]
      %v6381 = vld [vmem:[#allocation4 + $0xe8] sm:$0xff]
      %v6382 = vld [vmem:[#allocation4 + $0xf0] sm:$0xff]
      %v6383 = vld [vmem:[#allocation4 + $0xf8] sm:$0xff]
      %v6384 = vld [vmem:[#allocation4 + $0x100] sm:$0xff]
      %v6385 = vld [vmem:[#allocation4 + $0x108] sm:$0xff]
      %v6386 = vld [vmem:[#allocation4 + $0x110] sm:$0xff]
      %v6387 = vld [vmem:[#allocation4 + $0x118] sm:$0xff]
      %v6388 = vadd.f32 %v6352, %v6210
      %v6389 = vadd.f32 %v6353, %v6213
      %v6390 = vadd.f32 %v6354, %v6218
      %v6391 = vadd.f32 %v6355, %v6221
      %v6392 = vadd.f32 %v6356, %v6226
      %v6393 = vadd.f32 %v6357, %v6229
      %v6394 = vadd.f32 %v6358, %v6234
      %v6395 = vadd.f32 %v6359, %v6237
      %v6396 = vadd.f32 %v6360, %v6242
      %v6397 = vadd.f32 %v6361, %v6245
      %v6398 = vadd.f32 %v6362, %v6250
      %v6399 = vadd.f32 %v6363, %v6253
      %v6400 = vadd.f32 %v6364, %v6258
      %v6401 = vadd.f32 %v6365, %v6261
      %v6402 = vadd.f32 %v6366, %v6266
      %v6403 = vadd.f32 %v6367, %v6269
      %v6404 = vadd.f32 %v6368, %v6274
      %v6405 = vadd.f32 %v6369, %v6277
      %v6406 = vadd.f32 %v6370, %v6282
      %v6407 = vadd.f32 %v6371, %v6285
      %v6408 = vadd.f32 %v6372, %v6290
      %v6409 = vadd.f32 %v6373, %v6293
      %v6410 = vadd.f32 %v6374, %v6298
      %v6411 = vadd.f32 %v6375, %v6301
      %v6412 = vadd.f32 %v6376, %v6306
      %v6413 = vadd.f32 %v6377, %v6309
      %v6414 = vadd.f32 %v6378, %v6314
      %v6415 = vadd.f32 %v6379, %v6317
      %v6416 = vadd.f32 %v6380, %v6322
      %v6417 = vadd.f32 %v6381, %v6325
      %v6418 = vadd.f32 %v6382, %v6330
      %v6419 = vadd.f32 %v6383, %v6333
      %v6420 = vadd.f32 %v6384, %v6338
      %v6421 = vadd.f32 %v6385, %v6341
      %v6422 = vadd.f32 %v6386, %v6346
      %v6423 = vadd.f32 %v6387, %v6349
      %6424 = vst [vmem:[#allocation4] sm:$0xff] %v6388
      %6425 = vst [vmem:[#allocation4 + $0x8] sm:$0xff] %v6389
      %6426 = vst [vmem:[#allocation4 + $0x10] sm:$0xff] %v6390
      %6427 = vst [vmem:[#allocation4 + $0x18] sm:$0xff] %v6391
      %6428 = vst [vmem:[#allocation4 + $0x20] sm:$0xff] %v6392
      %6429 = vst [vmem:[#allocation4 + $0x28] sm:$0xff] %v6393
      %6430 = vst [vmem:[#allocation4 + $0x30] sm:$0xff] %v6394
      %6431 = vst [vmem:[#allocation4 + $0x38] sm:$0xff] %v6395
      %6432 = vst [vmem:[#allocation4 + $0x40] sm:$0xff] %v6396
      %6433 = vst [vmem:[#allocation4 + $0x48] sm:$0xff] %v6397
      %6434 = vst [vmem:[#allocation4 + $0x50] sm:$0xff] %v6398
      %6435 = vst [vmem:[#allocation4 + $0x58] sm:$0xff] %v6399
      %6436 = vst [vmem:[#allocation4 + $0x60] sm:$0xff] %v6400
      %6437 = vst [vmem:[#allocation4 + $0x68] sm:$0xff] %v6401
      %6438 = vst [vmem:[#allocation4 + $0x70] sm:$0xff] %v6402
      %6439 = vst [vmem:[#allocation4 + $0x78] sm:$0xff] %v6403
      %6440 = vst [vmem:[#allocation4 + $0x80] sm:$0xff] %v6404
      %6441 = vst [vmem:[#allocation4 + $0x88] sm:$0xff] %v6405
      %6442 = vst [vmem:[#allocation4 + $0x90] sm:$0xff] %v6406
      %6443 = vst [vmem:[#allocation4 + $0x98] sm:$0xff] %v6407
      %6444 = vst [vmem:[#allocation4 + $0xa0] sm:$0xff] %v6408
      %6445 = vst [vmem:[#allocation4 + $0xa8] sm:$0xff] %v6409
      %6446 = vst [vmem:[#allocation4 + $0xb0] sm:$0xff] %v6410
      %6447 = vst [vmem:[#allocation4 + $0xb8] sm:$0xff] %v6411
      %6448 = vst [vmem:[#allocation4 + $0xc0] sm:$0xff] %v6412
      %6449 = vst [vmem:[#allocation4 + $0xc8] sm:$0xff] %v6413
      %6450 = vst [vmem:[#allocation4 + $0xd0] sm:$0xff] %v6414
      %6451 = vst [vmem:[#allocation4 + $0xd8] sm:$0xff] %v6415
      %6452 = vst [vmem:[#allocation4 + $0xe0] sm:$0xff] %v6416
      %6453 = vst [vmem:[#allocation4 + $0xe8] sm:$0xff] %v6417
      %6454 = vst [vmem:[#allocation4 + $0xf0] sm:$0xff] %v6418
      %6455 = vst [vmem:[#allocation4 + $0xf8] sm:$0xff] %v6419
      %6456 = vst [vmem:[#allocation4 + $0x100] sm:$0xff] %v6420
      %6457 = vst [vmem:[#allocation4 + $0x108] sm:$0xff] %v6421
      %6458 = vst [vmem:[#allocation4 + $0x110] sm:$0xff] %v6422
      %6459 = vst [vmem:[#allocation4 + $0x118] sm:$0xff] %v6423
      %v6460 = vld [vmem:[#allocation3 + $0x13] sm:$0xff]
      %v6461 = vld [vmem:[#allocation3 + $0x1b] sm:$0xff]
      %v6462 = vld [vmem:[#allocation3 + $0x23] sm:$0xff]
      %v6463 = vld [vmem:[#allocation3 + $0x2b] sm:$0xff]
      %v6464 = vld [vmem:[#allocation3 + $0x33] sm:$0xff]
      %v6465 = vld [vmem:[#allocation3 + $0x3b] sm:$0xff]
      %v6466 = vld [vmem:[#allocation3 + $0x43] sm:$0xff]
      %v6467 = vld [vmem:[#allocation3 + $0x4b] sm:$0xff]
      %v6468 = vld [vmem:[#allocation3 + $0x53] sm:$0xff]
      %v6469 = vld [vmem:[#allocation3 + $0x5b] sm:$0xff]
      %v6470 = vld [vmem:[#allocation3 + $0x63] sm:$0xff]
      %v6471 = vld [vmem:[#allocation3 + $0x6b] sm:$0xff]
      %v6472 = vld [vmem:[#allocation3 + $0x73] sm:$0xff]
      %v6473 = vld [vmem:[#allocation3 + $0x7b] sm:$0xff]
      %v6474 = vld [vmem:[#allocation3 + $0x83] sm:$0xff]
      %v6475 = vld [vmem:[#allocation3 + $0x8b] sm:$0xff]
      %v6476 = vld [vmem:[#allocation3 + $0x93] sm:$0xff]
      %v6477 = vld [vmem:[#allocation3 + $0x9b] sm:$0xff]
      %v6478 = vld [vmem:[#allocation3 + $0xa3] sm:$0xff]
      %v6479 = vld [vmem:[#allocation3 + $0xab] sm:$0xff]
      %v6480 = vld [vmem:[#allocation3 + $0xb3] sm:$0xff]
      %v6481 = vld [vmem:[#allocation3 + $0xbb] sm:$0xff]
      %v6482 = vld [vmem:[#allocation3 + $0xc3] sm:$0xff]
      %v6483 = vld [vmem:[#allocation3 + $0xcb] sm:$0xff]
      %v6484 = vld [vmem:[#allocation3 + $0xd3] sm:$0xff]
      %v6485 = vld [vmem:[#allocation3 + $0xdb] sm:$0xff]
      %v6486 = vld [vmem:[#allocation3 + $0xe3] sm:$0xff]
      %v6487 = vld [vmem:[#allocation3 + $0xeb] sm:$0xff]
      %v6488 = vld [vmem:[#allocation3 + $0xf3] sm:$0xff]
      %v6489 = vld [vmem:[#allocation3 + $0xfb] sm:$0xff]
      %v6490 = vld [vmem:[#allocation3 + $0x103] sm:$0xff]
      %v6491 = vld [vmem:[#allocation3 + $0x10b] sm:$0xff]
      %v6492 = vld [vmem:[#allocation3 + $0x113] sm:$0xff]
      %v6493 = vld [vmem:[#allocation3 + $0x11b] sm:$0xff]
      %v6494 = vld [vmem:[#allocation3 + $0x123] sm:$0xff]
      %v6495 = vld [vmem:[#allocation3 + $0x12b] sm:$0xff]
      %v6496 = vpack.c.bf16 %v6461, %v6460
      %v6497 = vpack.c.bf16 %v6463, %v6462
      %v6498 = vpack.c.bf16 %v6465, %v6464
      %v6499 = vpack.c.bf16 %v6467, %v6466
      %v6500 = vpack.c.bf16 %v6469, %v6468
      %v6501 = vpack.c.bf16 %v6471, %v6470
      %v6502 = vpack.c.bf16 %v6473, %v6472
      %v6503 = vpack.c.bf16 %v6475, %v6474
      %v6504 = vpack.c.bf16 %v6477, %v6476
      %v6505 = vpack.c.bf16 %v6479, %v6478
      %v6506 = vpack.c.bf16 %v6481, %v6480
      %v6507 = vpack.c.bf16 %v6483, %v6482
      %v6508 = vpack.c.bf16 %v6485, %v6484
      %v6509 = vpack.c.bf16 %v6487, %v6486
      %v6510 = vpack.c.bf16 %v6489, %v6488
      %v6511 = vpack.c.bf16 %v6491, %v6490
      %v6512 = vpack.c.bf16 %v6493, %v6492
      %v6513 = vpack.c.bf16 %v6495, %v6494
      %s6514 = scalar_lea.vmem %s7, 256
      %v6515 = vld [vmem:[%s6514] sm:$0xf]
      %v6516 = vld [vmem:[%s6514 + $0x4] sm:$0xf]
      %v6517 = vld [vmem:[%s6514 + $0x8] sm:$0xf]
      %v6518 = vld [vmem:[%s6514 + $0xc] sm:$0xf]
      %v6519 = vld [vmem:[%s6514 + $0x10] sm:$0xf]
      %v6520 = vld [vmem:[%s6514 + $0x14] sm:$0xf]
      %v6521 = vld [vmem:[%s6514 + $0x18] sm:$0xf]
      %v6522 = vld [vmem:[%s6514 + $0x1c] sm:$0xf]
      %v6523 = vld [vmem:[%s6514 + $0x20] sm:$0xf]
      %v6524 = vld [vmem:[%s6514 + $0x24] sm:$0xf]
      %v6525 = vld [vmem:[%s6514 + $0x28] sm:$0xf]
      %v6526 = vld [vmem:[%s6514 + $0x2c] sm:$0xf]
      %v6527 = vld [vmem:[%s6514 + $0x30] sm:$0xf]
      %v6528 = vld [vmem:[%s6514 + $0x34] sm:$0xf]
      %v6529 = vld [vmem:[%s6514 + $0x38] sm:$0xf]
      %v6530 = vld [vmem:[%s6514 + $0x3c] sm:$0xf]
      %v6547 = vunpack.c.l.b16 %v6515
      %v6548 = vunpack.c.l.b16 %v6516
      %v6549 = vunpack.c.l.b16 %v6517
      %v6550 = vunpack.c.l.b16 %v6518
      %v6551 = vunpack.c.l.b16 %v6519
      %v6552 = vunpack.c.l.b16 %v6520
      %v6553 = vunpack.c.l.b16 %v6521
      %v6554 = vunpack.c.l.b16 %v6522
      %v6555 = vunpack.c.l.b16 %v6523
      %v6556 = vunpack.c.l.b16 %v6524
      %v6557 = vunpack.c.l.b16 %v6525
      %v6558 = vunpack.c.l.b16 %v6526
      %v6559 = vunpack.c.l.b16 %v6527
      %v6560 = vunpack.c.l.b16 %v6528
      %v6561 = vunpack.c.l.b16 %v6529
      %v6562 = vunpack.c.l.b16 %v6530
      %v6563 = vpack.c.b16 %v6548, %v6547
      %v6564 = vpack.c.b16 %v6550, %v6549
      %v6565 = vpack.c.b16 %v6552, %v6551
      %v6566 = vpack.c.b16 %v6554, %v6553
      %v6567 = vpack.c.b16 %v6556, %v6555
      %v6568 = vpack.c.b16 %v6558, %v6557
      %v6569 = vpack.c.b16 %v6560, %v6559
      %v6570 = vpack.c.b16 %v6562, %v6561
      %6579 = vmatprep.subr.bf16.mxu0 0
      %6580 = vmatpush1.bf16.msra.mxu0 %v6570
      %6581 = vmatprep.subr.bf16.mxu0 0
      %6582 = vmatpush1.bf16.msra.mxu0 %v6569
      %6583 = vmatprep.subr.bf16.mxu0 0
      %6584 = vmatpush1.bf16.msra.mxu0 %v6568
      %6585 = vmatprep.subr.bf16.mxu0 0
      %6586 = vmatpush1.bf16.msra.mxu0 %v6567
      %6587 = vmatprep.subr.bf16.mxu0 0
      %6588 = vmatpush1.bf16.msra.mxu0 %v6566
      %6589 = vmatprep.subr.bf16.mxu0 0
      %6590 = vmatpush1.bf16.msra.mxu0 %v6565
      %6591 = vmatprep.subr.bf16.mxu0 0
      %6592 = vmatpush1.bf16.msra.mxu0 %v6564
      %6593 = vmatprep.subr.bf16.mxu0 0
      %6594 = vmatpush1.bf16.msra.mxu0 %v6563
      %6595 = vmatprep.subr.bf16.mxu0 0
      %6596 = vmatpush2.bf16.msra.mxu0 0
      %6597 = vmatprep.subr.bf16.mxu0 0
      %6598 = vmatpush2.bf16.msra.mxu0 0
      %6599 = vmatprep.subr.bf16.mxu0 0
      %6600 = vmatpush2.bf16.msra.mxu0 0
      %6601 = vmatprep.subr.bf16.mxu0 0
      %6602 = vmatpush2.bf16.msra.mxu0 0
      %6603 = vmatprep.subr.bf16.mxu0 0
      %6604 = vmatpush2.bf16.msra.mxu0 0
      %6605 = vmatprep.subr.bf16.mxu0 0
      %6606 = vmatpush2.bf16.msra.mxu0 0
      %6607 = vmatprep.subr.bf16.mxu0 0
      %6608 = vmatpush2.bf16.msra.mxu0 0
      %6609 = vmatprep.subr.bf16.mxu0 0
      %6610 = vmatpush2.bf16.msra.mxu0 0
      %6611 = vmatprep.mubr.bf16.mxu0 0
      %6612 = vmatmul.mubr.bf16.gmra.mxu0 %v6496
      %v6613 = vpop.f32.mrf.mxu0
      %v6614 = vadd.f32 0.0, %v6613
      %v6615 = vpop.f32.mrf.mxu0
      %v6616 = vpop.f32.mrf.mxu0
      %v6617 = vadd.f32 0.0, %v6616
      %v6618 = vpop.f32.mrf.mxu0
      %6619 = vmatprep.mubr.bf16.mxu0 0
      %6620 = vmatmul.mubr.bf16.gmra.mxu0 %v6497
      %v6621 = vpop.f32.mrf.mxu0
      %v6622 = vadd.f32 0.0, %v6621
      %v6623 = vpop.f32.mrf.mxu0
      %v6624 = vpop.f32.mrf.mxu0
      %v6625 = vadd.f32 0.0, %v6624
      %v6626 = vpop.f32.mrf.mxu0
      %6627 = vmatprep.mubr.bf16.mxu0 0
      %6628 = vmatmul.mubr.bf16.gmra.mxu0 %v6498
      %v6629 = vpop.f32.mrf.mxu0
      %v6630 = vadd.f32 0.0, %v6629
      %v6631 = vpop.f32.mrf.mxu0
      %v6632 = vpop.f32.mrf.mxu0
      %v6633 = vadd.f32 0.0, %v6632
      %v6634 = vpop.f32.mrf.mxu0
      %6635 = vmatprep.mubr.bf16.mxu0 0
      %6636 = vmatmul.mubr.bf16.gmra.mxu0 %v6499
      %v6637 = vpop.f32.mrf.mxu0
      %v6638 = vadd.f32 0.0, %v6637
      %v6639 = vpop.f32.mrf.mxu0
      %v6640 = vpop.f32.mrf.mxu0
      %v6641 = vadd.f32 0.0, %v6640
      %v6642 = vpop.f32.mrf.mxu0
      %6643 = vmatprep.mubr.bf16.mxu0 0
      %6644 = vmatmul.mubr.bf16.gmra.mxu0 %v6500
      %v6645 = vpop.f32.mrf.mxu0
      %v6646 = vadd.f32 0.0, %v6645
      %v6647 = vpop.f32.mrf.mxu0
      %v6648 = vpop.f32.mrf.mxu0
      %v6649 = vadd.f32 0.0, %v6648
      %v6650 = vpop.f32.mrf.mxu0
      %6651 = vmatprep.mubr.bf16.mxu0 0
      %6652 = vmatmul.mubr.bf16.gmra.mxu0 %v6501
      %v6653 = vpop.f32.mrf.mxu0
      %v6654 = vadd.f32 0.0, %v6653
      %v6655 = vpop.f32.mrf.mxu0
      %v6656 = vpop.f32.mrf.mxu0
      %v6657 = vadd.f32 0.0, %v6656
      %v6658 = vpop.f32.mrf.mxu0
      %6659 = vmatprep.mubr.bf16.mxu0 0
      %6660 = vmatmul.mubr.bf16.gmra.mxu0 %v6502
      %v6661 = vpop.f32.mrf.mxu0
      %v6662 = vadd.f32 0.0, %v6661
      %v6663 = vpop.f32.mrf.mxu0
      %v6664 = vpop.f32.mrf.mxu0
      %v6665 = vadd.f32 0.0, %v6664
      %v6666 = vpop.f32.mrf.mxu0
      %6667 = vmatprep.mubr.bf16.mxu0 0
      %6668 = vmatmul.mubr.bf16.gmra.mxu0 %v6503
      %v6669 = vpop.f32.mrf.mxu0
      %v6670 = vadd.f32 0.0, %v6669
      %v6671 = vpop.f32.mrf.mxu0
      %v6672 = vpop.f32.mrf.mxu0
      %v6673 = vadd.f32 0.0, %v6672
      %v6674 = vpop.f32.mrf.mxu0
      %6675 = vmatprep.mubr.bf16.mxu0 0
      %6676 = vmatmul.mubr.bf16.gmra.mxu0 %v6504
      %v6677 = vpop.f32.mrf.mxu0
      %v6678 = vadd.f32 0.0, %v6677
      %v6679 = vpop.f32.mrf.mxu0
      %v6680 = vpop.f32.mrf.mxu0
      %v6681 = vadd.f32 0.0, %v6680
      %v6682 = vpop.f32.mrf.mxu0
      %6683 = vmatprep.mubr.bf16.mxu0 0
      %6684 = vmatmul.mubr.bf16.gmra.mxu0 %v6505
      %v6685 = vpop.f32.mrf.mxu0
      %v6686 = vadd.f32 0.0, %v6685
      %v6687 = vpop.f32.mrf.mxu0
      %v6688 = vpop.f32.mrf.mxu0
      %v6689 = vadd.f32 0.0, %v6688
      %v6690 = vpop.f32.mrf.mxu0
      %6691 = vmatprep.mubr.bf16.mxu0 0
      %6692 = vmatmul.mubr.bf16.gmra.mxu0 %v6506
      %v6693 = vpop.f32.mrf.mxu0
      %v6694 = vadd.f32 0.0, %v6693
      %v6695 = vpop.f32.mrf.mxu0
      %v6696 = vpop.f32.mrf.mxu0
      %v6697 = vadd.f32 0.0, %v6696
      %v6698 = vpop.f32.mrf.mxu0
      %6699 = vmatprep.mubr.bf16.mxu0 0
      %6700 = vmatmul.mubr.bf16.gmra.mxu0 %v6507
      %v6701 = vpop.f32.mrf.mxu0
      %v6702 = vadd.f32 0.0, %v6701
      %v6703 = vpop.f32.mrf.mxu0
      %v6704 = vpop.f32.mrf.mxu0
      %v6705 = vadd.f32 0.0, %v6704
      %v6706 = vpop.f32.mrf.mxu0
      %6707 = vmatprep.mubr.bf16.mxu0 0
      %6708 = vmatmul.mubr.bf16.gmra.mxu0 %v6508
      %v6709 = vpop.f32.mrf.mxu0
      %v6710 = vadd.f32 0.0, %v6709
      %v6711 = vpop.f32.mrf.mxu0
      %v6712 = vpop.f32.mrf.mxu0
      %v6713 = vadd.f32 0.0, %v6712
      %v6714 = vpop.f32.mrf.mxu0
      %6715 = vmatprep.mubr.bf16.mxu0 0
      %6716 = vmatmul.mubr.bf16.gmra.mxu0 %v6509
      %v6717 = vpop.f32.mrf.mxu0
      %v6718 = vadd.f32 0.0, %v6717
      %v6719 = vpop.f32.mrf.mxu0
      %v6720 = vpop.f32.mrf.mxu0
      %v6721 = vadd.f32 0.0, %v6720
      %v6722 = vpop.f32.mrf.mxu0
      %6723 = vmatprep.mubr.bf16.mxu0 0
      %6724 = vmatmul.mubr.bf16.gmra.mxu0 %v6510
      %v6725 = vpop.f32.mrf.mxu0
      %v6726 = vadd.f32 0.0, %v6725
      %v6727 = vpop.f32.mrf.mxu0
      %v6728 = vpop.f32.mrf.mxu0
      %v6729 = vadd.f32 0.0, %v6728
      %v6730 = vpop.f32.mrf.mxu0
      %6731 = vmatprep.mubr.bf16.mxu0 0
      %6732 = vmatmul.mubr.bf16.gmra.mxu0 %v6511
      %v6733 = vpop.f32.mrf.mxu0
      %v6734 = vadd.f32 0.0, %v6733
      %v6735 = vpop.f32.mrf.mxu0
      %v6736 = vpop.f32.mrf.mxu0
      %v6737 = vadd.f32 0.0, %v6736
      %v6738 = vpop.f32.mrf.mxu0
      %6739 = vmatprep.mubr.bf16.mxu0 0
      %6740 = vmatmul.mubr.bf16.gmra.mxu0 %v6512
      %v6741 = vpop.f32.mrf.mxu0
      %v6742 = vadd.f32 0.0, %v6741
      %v6743 = vpop.f32.mrf.mxu0
      %v6744 = vpop.f32.mrf.mxu0
      %v6745 = vadd.f32 0.0, %v6744
      %v6746 = vpop.f32.mrf.mxu0
      %6747 = vmatprep.mubr.bf16.mxu0 0
      %6748 = vmatmul.mubr.bf16.gmra.mxu0 %v6513
      %v6749 = vpop.f32.mrf.mxu0
      %v6750 = vadd.f32 0.0, %v6749
      %v6751 = vpop.f32.mrf.mxu0
      %v6752 = vpop.f32.mrf.mxu0
      %v6753 = vadd.f32 0.0, %v6752
      %v6754 = vpop.f32.mrf.mxu0
      %6755 = vdwg.mxu0
      %v6756 = vld [vmem:[#allocation4] sm:$0xff]
      %v6757 = vld [vmem:[#allocation4 + $0x8] sm:$0xff]
      %v6758 = vld [vmem:[#allocation4 + $0x10] sm:$0xff]
      %v6759 = vld [vmem:[#allocation4 + $0x18] sm:$0xff]
      %v6760 = vld [vmem:[#allocation4 + $0x20] sm:$0xff]
      %v6761 = vld [vmem:[#allocation4 + $0x28] sm:$0xff]
      %v6762 = vld [vmem:[#allocation4 + $0x30] sm:$0xff]
      %v6763 = vld [vmem:[#allocation4 + $0x38] sm:$0xff]
      %v6764 = vld [vmem:[#allocation4 + $0x40] sm:$0xff]
      %v6765 = vld [vmem:[#allocation4 + $0x48] sm:$0xff]
      %v6766 = vld [vmem:[#allocation4 + $0x50] sm:$0xff]
      %v6767 = vld [vmem:[#allocation4 + $0x58] sm:$0xff]
      %v6768 = vld [vmem:[#allocation4 + $0x60] sm:$0xff]
      %v6769 = vld [vmem:[#allocation4 + $0x68] sm:$0xff]
      %v6770 = vld [vmem:[#allocation4 + $0x70] sm:$0xff]
      %v6771 = vld [vmem:[#allocation4 + $0x78] sm:$0xff]
      %v6772 = vld [vmem:[#allocation4 + $0x80] sm:$0xff]
      %v6773 = vld [vmem:[#allocation4 + $0x88] sm:$0xff]
      %v6774 = vld [vmem:[#allocation4 + $0x90] sm:$0xff]
      %v6775 = vld [vmem:[#allocation4 + $0x98] sm:$0xff]
      %v6776 = vld [vmem:[#allocation4 + $0xa0] sm:$0xff]
      %v6777 = vld [vmem:[#allocation4 + $0xa8] sm:$0xff]
      %v6778 = vld [vmem:[#allocation4 + $0xb0] sm:$0xff]
      %v6779 = vld [vmem:[#allocation4 + $0xb8] sm:$0xff]
      %v6780 = vld [vmem:[#allocation4 + $0xc0] sm:$0xff]
      %v6781 = vld [vmem:[#allocation4 + $0xc8] sm:$0xff]
      %v6782 = vld [vmem:[#allocation4 + $0xd0] sm:$0xff]
      %v6783 = vld [vmem:[#allocation4 + $0xd8] sm:$0xff]
      %v6784 = vld [vmem:[#allocation4 + $0xe0] sm:$0xff]
      %v6785 = vld [vmem:[#allocation4 + $0xe8] sm:$0xff]
      %v6786 = vld [vmem:[#allocation4 + $0xf0] sm:$0xff]
      %v6787 = vld [vmem:[#allocation4 + $0xf8] sm:$0xff]
      %v6788 = vld [vmem:[#allocation4 + $0x100] sm:$0xff]
      %v6789 = vld [vmem:[#allocation4 + $0x108] sm:$0xff]
      %v6790 = vld [vmem:[#allocation4 + $0x110] sm:$0xff]
      %v6791 = vld [vmem:[#allocation4 + $0x118] sm:$0xff]
      %v6792 = vadd.f32 %v6756, %v6614
      %v6793 = vadd.f32 %v6757, %v6617
      %v6794 = vadd.f32 %v6758, %v6622
      %v6795 = vadd.f32 %v6759, %v6625
      %v6796 = vadd.f32 %v6760, %v6630
      %v6797 = vadd.f32 %v6761, %v6633
      %v6798 = vadd.f32 %v6762, %v6638
      %v6799 = vadd.f32 %v6763, %v6641
      %v6800 = vadd.f32 %v6764, %v6646
      %v6801 = vadd.f32 %v6765, %v6649
      %v6802 = vadd.f32 %v6766, %v6654
      %v6803 = vadd.f32 %v6767, %v6657
      %v6804 = vadd.f32 %v6768, %v6662
      %v6805 = vadd.f32 %v6769, %v6665
      %v6806 = vadd.f32 %v6770, %v6670
      %v6807 = vadd.f32 %v6771, %v6673
      %v6808 = vadd.f32 %v6772, %v6678
      %v6809 = vadd.f32 %v6773, %v6681
      %v6810 = vadd.f32 %v6774, %v6686
      %v6811 = vadd.f32 %v6775, %v6689
      %v6812 = vadd.f32 %v6776, %v6694
      %v6813 = vadd.f32 %v6777, %v6697
      %v6814 = vadd.f32 %v6778, %v6702
      %v6815 = vadd.f32 %v6779, %v6705
      %v6816 = vadd.f32 %v6780, %v6710
      %v6817 = vadd.f32 %v6781, %v6713
      %v6818 = vadd.f32 %v6782, %v6718
      %v6819 = vadd.f32 %v6783, %v6721
      %v6820 = vadd.f32 %v6784, %v6726
      %v6821 = vadd.f32 %v6785, %v6729
      %v6822 = vadd.f32 %v6786, %v6734
      %v6823 = vadd.f32 %v6787, %v6737
      %v6824 = vadd.f32 %v6788, %v6742
      %v6825 = vadd.f32 %v6789, %v6745
      %v6826 = vadd.f32 %v6790, %v6750
      %v6827 = vadd.f32 %v6791, %v6753
      %6828 = vst [vmem:[#allocation4] sm:$0xff] %v6792
      %6829 = vst [vmem:[#allocation4 + $0x8] sm:$0xff] %v6793
      %6830 = vst [vmem:[#allocation4 + $0x10] sm:$0xff] %v6794
      %6831 = vst [vmem:[#allocation4 + $0x18] sm:$0xff] %v6795
      %6832 = vst [vmem:[#allocation4 + $0x20] sm:$0xff] %v6796
      %6833 = vst [vmem:[#allocation4 + $0x28] sm:$0xff] %v6797
      %6834 = vst [vmem:[#allocation4 + $0x30] sm:$0xff] %v6798
      %6835 = vst [vmem:[#allocation4 + $0x38] sm:$0xff] %v6799
      %6836 = vst [vmem:[#allocation4 + $0x40] sm:$0xff] %v6800
      %6837 = vst [vmem:[#allocation4 + $0x48] sm:$0xff] %v6801
      %6838 = vst [vmem:[#allocation4 + $0x50] sm:$0xff] %v6802
      %6839 = vst [vmem:[#allocation4 + $0x58] sm:$0xff] %v6803
      %6840 = vst [vmem:[#allocation4 + $0x60] sm:$0xff] %v6804
      %6841 = vst [vmem:[#allocation4 + $0x68] sm:$0xff] %v6805
      %6842 = vst [vmem:[#allocation4 + $0x70] sm:$0xff] %v6806
      %6843 = vst [vmem:[#allocation4 + $0x78] sm:$0xff] %v6807
      %6844 = vst [vmem:[#allocation4 + $0x80] sm:$0xff] %v6808
      %6845 = vst [vmem:[#allocation4 + $0x88] sm:$0xff] %v6809
      %6846 = vst [vmem:[#allocation4 + $0x90] sm:$0xff] %v6810
      %6847 = vst [vmem:[#allocation4 + $0x98] sm:$0xff] %v6811
      %6848 = vst [vmem:[#allocation4 + $0xa0] sm:$0xff] %v6812
      %6849 = vst [vmem:[#allocation4 + $0xa8] sm:$0xff] %v6813
      %6850 = vst [vmem:[#allocation4 + $0xb0] sm:$0xff] %v6814
      %6851 = vst [vmem:[#allocation4 + $0xb8] sm:$0xff] %v6815
      %6852 = vst [vmem:[#allocation4 + $0xc0] sm:$0xff] %v6816
      %6853 = vst [vmem:[#allocation4 + $0xc8] sm:$0xff] %v6817
      %6854 = vst [vmem:[#allocation4 + $0xd0] sm:$0xff] %v6818
      %6855 = vst [vmem:[#allocation4 + $0xd8] sm:$0xff] %v6819
      %6856 = vst [vmem:[#allocation4 + $0xe0] sm:$0xff] %v6820
      %6857 = vst [vmem:[#allocation4 + $0xe8] sm:$0xff] %v6821
      %6858 = vst [vmem:[#allocation4 + $0xf0] sm:$0xff] %v6822
      %6859 = vst [vmem:[#allocation4 + $0xf8] sm:$0xff] %v6823
      %6860 = vst [vmem:[#allocation4 + $0x100] sm:$0xff] %v6824
      %6861 = vst [vmem:[#allocation4 + $0x108] sm:$0xff] %v6825
      %6862 = vst [vmem:[#allocation4 + $0x110] sm:$0xff] %v6826
      %6863 = vst [vmem:[#allocation4 + $0x118] sm:$0xff] %v6827
      %v6864 = vld [vmem:[#allocation3 + $0x14] sm:$0xff]
      %v6865 = vld [vmem:[#allocation3 + $0x1c] sm:$0xff]
      %v6866 = vld [vmem:[#allocation3 + $0x24] sm:$0xff]
      %v6867 = vld [vmem:[#allocation3 + $0x2c] sm:$0xff]
      %v6868 = vld [vmem:[#allocation3 + $0x34] sm:$0xff]
      %v6869 = vld [vmem:[#allocation3 + $0x3c] sm:$0xff]
      %v6870 = vld [vmem:[#allocation3 + $0x44] sm:$0xff]
      %v6871 = vld [vmem:[#allocation3 + $0x4c] sm:$0xff]
      %v6872 = vld [vmem:[#allocation3 + $0x54] sm:$0xff]
      %v6873 = vld [vmem:[#allocation3 + $0x5c] sm:$0xff]
      %v6874 = vld [vmem:[#allocation3 + $0x64] sm:$0xff]
      %v6875 = vld [vmem:[#allocation3 + $0x6c] sm:$0xff]
      %v6876 = vld [vmem:[#allocation3 + $0x74] sm:$0xff]
      %v6877 = vld [vmem:[#allocation3 + $0x7c] sm:$0xff]
      %v6878 = vld [vmem:[#allocation3 + $0x84] sm:$0xff]
      %v6879 = vld [vmem:[#allocation3 + $0x8c] sm:$0xff]
      %v6880 = vld [vmem:[#allocation3 + $0x94] sm:$0xff]
      %v6881 = vld [vmem:[#allocation3 + $0x9c] sm:$0xff]
      %v6882 = vld [vmem:[#allocation3 + $0xa4] sm:$0xff]
      %v6883 = vld [vmem:[#allocation3 + $0xac] sm:$0xff]
      %v6884 = vld [vmem:[#allocation3 + $0xb4] sm:$0xff]
      %v6885 = vld [vmem:[#allocation3 + $0xbc] sm:$0xff]
      %v6886 = vld [vmem:[#allocation3 + $0xc4] sm:$0xff]
      %v6887 = vld [vmem:[#allocation3 + $0xcc] sm:$0xff]
      %v6888 = vld [vmem:[#allocation3 + $0xd4] sm:$0xff]
      %v6889 = vld [vmem:[#allocation3 + $0xdc] sm:$0xff]
      %v6890 = vld [vmem:[#allocation3 + $0xe4] sm:$0xff]
      %v6891 = vld [vmem:[#allocation3 + $0xec] sm:$0xff]
      %v6892 = vld [vmem:[#allocation3 + $0xf4] sm:$0xff]
      %v6893 = vld [vmem:[#allocation3 + $0xfc] sm:$0xff]
      %v6894 = vld [vmem:[#allocation3 + $0x104] sm:$0xff]
      %v6895 = vld [vmem:[#allocation3 + $0x10c] sm:$0xff]
      %v6896 = vld [vmem:[#allocation3 + $0x114] sm:$0xff]
      %v6897 = vld [vmem:[#allocation3 + $0x11c] sm:$0xff]
      %v6898 = vld [vmem:[#allocation3 + $0x124] sm:$0xff]
      %v6899 = vld [vmem:[#allocation3 + $0x12c] sm:$0xff]
      %v6900 = vpack.c.bf16 %v6865, %v6864
      %v6901 = vpack.c.bf16 %v6867, %v6866
      %v6902 = vpack.c.bf16 %v6869, %v6868
      %v6903 = vpack.c.bf16 %v6871, %v6870
      %v6904 = vpack.c.bf16 %v6873, %v6872
      %v6905 = vpack.c.bf16 %v6875, %v6874
      %v6906 = vpack.c.bf16 %v6877, %v6876
      %v6907 = vpack.c.bf16 %v6879, %v6878
      %v6908 = vpack.c.bf16 %v6881, %v6880
      %v6909 = vpack.c.bf16 %v6883, %v6882
      %v6910 = vpack.c.bf16 %v6885, %v6884
      %v6911 = vpack.c.bf16 %v6887, %v6886
      %v6912 = vpack.c.bf16 %v6889, %v6888
      %v6913 = vpack.c.bf16 %v6891, %v6890
      %v6914 = vpack.c.bf16 %v6893, %v6892
      %v6915 = vpack.c.bf16 %v6895, %v6894
      %v6916 = vpack.c.bf16 %v6897, %v6896
      %v6917 = vpack.c.bf16 %v6899, %v6898
      %s6918 = scalar_lea.vmem %s7, 320
      %v6919 = vld [vmem:[%s6918] sm:$0xf]
      %v6920 = vld [vmem:[%s6918 + $0x4] sm:$0xf]
      %v6921 = vld [vmem:[%s6918 + $0x8] sm:$0xf]
      %v6922 = vld [vmem:[%s6918 + $0xc] sm:$0xf]
      %v6923 = vld [vmem:[%s6918 + $0x10] sm:$0xf]
      %v6924 = vld [vmem:[%s6918 + $0x14] sm:$0xf]
      %v6925 = vld [vmem:[%s6918 + $0x18] sm:$0xf]
      %v6926 = vld [vmem:[%s6918 + $0x1c] sm:$0xf]
      %v6927 = vld [vmem:[%s6918 + $0x20] sm:$0xf]
      %v6928 = vld [vmem:[%s6918 + $0x24] sm:$0xf]
      %v6929 = vld [vmem:[%s6918 + $0x28] sm:$0xf]
      %v6930 = vld [vmem:[%s6918 + $0x2c] sm:$0xf]
      %v6931 = vld [vmem:[%s6918 + $0x30] sm:$0xf]
      %v6932 = vld [vmem:[%s6918 + $0x34] sm:$0xf]
      %v6933 = vld [vmem:[%s6918 + $0x38] sm:$0xf]
      %v6934 = vld [vmem:[%s6918 + $0x3c] sm:$0xf]
      %v6951 = vunpack.c.l.b16 %v6919
      %v6952 = vunpack.c.l.b16 %v6920
      %v6953 = vunpack.c.l.b16 %v6921
      %v6954 = vunpack.c.l.b16 %v6922
      %v6955 = vunpack.c.l.b16 %v6923
      %v6956 = vunpack.c.l.b16 %v6924
      %v6957 = vunpack.c.l.b16 %v6925
      %v6958 = vunpack.c.l.b16 %v6926
      %v6959 = vunpack.c.l.b16 %v6927
      %v6960 = vunpack.c.l.b16 %v6928
      %v6961 = vunpack.c.l.b16 %v6929
      %v6962 = vunpack.c.l.b16 %v6930
      %v6963 = vunpack.c.l.b16 %v6931
      %v6964 = vunpack.c.l.b16 %v6932
      %v6965 = vunpack.c.l.b16 %v6933
      %v6966 = vunpack.c.l.b16 %v6934
      %v6967 = vpack.c.b16 %v6952, %v6951
      %v6968 = vpack.c.b16 %v6954, %v6953
      %v6969 = vpack.c.b16 %v6956, %v6955
      %v6970 = vpack.c.b16 %v6958, %v6957
      %v6971 = vpack.c.b16 %v6960, %v6959
      %v6972 = vpack.c.b16 %v6962, %v6961
      %v6973 = vpack.c.b16 %v6964, %v6963
      %v6974 = vpack.c.b16 %v6966, %v6965
      %6983 = vmatprep.subr.bf16.mxu0 0
      %6984 = vmatpush1.bf16.msra.mxu0 %v6974
      %6985 = vmatprep.subr.bf16.mxu0 0
      %6986 = vmatpush1.bf16.msra.mxu0 %v6973
      %6987 = vmatprep.subr.bf16.mxu0 0
      %6988 = vmatpush1.bf16.msra.mxu0 %v6972
      %6989 = vmatprep.subr.bf16.mxu0 0
      %6990 = vmatpush1.bf16.msra.mxu0 %v6971
      %6991 = vmatprep.subr.bf16.mxu0 0
      %6992 = vmatpush1.bf16.msra.mxu0 %v6970
      %6993 = vmatprep.subr.bf16.mxu0 0
      %6994 = vmatpush1.bf16.msra.mxu0 %v6969
      %6995 = vmatprep.subr.bf16.mxu0 0
      %6996 = vmatpush1.bf16.msra.mxu0 %v6968
      %6997 = vmatprep.subr.bf16.mxu0 0
      %6998 = vmatpush1.bf16.msra.mxu0 %v6967
      %6999 = vmatprep.subr.bf16.mxu0 0
      %7000 = vmatpush2.bf16.msra.mxu0 0
      %7001 = vmatprep.subr.bf16.mxu0 0
      %7002 = vmatpush2.bf16.msra.mxu0 0
      %7003 = vmatprep.subr.bf16.mxu0 0
      %7004 = vmatpush2.bf16.msra.mxu0 0
      %7005 = vmatprep.subr.bf16.mxu0 0
      %7006 = vmatpush2.bf16.msra.mxu0 0
      %7007 = vmatprep.subr.bf16.mxu0 0
      %7008 = vmatpush2.bf16.msra.mxu0 0
      %7009 = vmatprep.subr.bf16.mxu0 0
      %7010 = vmatpush2.bf16.msra.mxu0 0
      %7011 = vmatprep.subr.bf16.mxu0 0
      %7012 = vmatpush2.bf16.msra.mxu0 0
      %7013 = vmatprep.subr.bf16.mxu0 0
      %7014 = vmatpush2.bf16.msra.mxu0 0
      %7015 = vmatprep.mubr.bf16.mxu0 0
      %7016 = vmatmul.mubr.bf16.gmra.mxu0 %v6900
      %v7017 = vpop.f32.mrf.mxu0
      %v7018 = vadd.f32 0.0, %v7017
      %v7019 = vpop.f32.mrf.mxu0
      %v7020 = vpop.f32.mrf.mxu0
      %v7021 = vadd.f32 0.0, %v7020
      %v7022 = vpop.f32.mrf.mxu0
      %7023 = vmatprep.mubr.bf16.mxu0 0
      %7024 = vmatmul.mubr.bf16.gmra.mxu0 %v6901
      %v7025 = vpop.f32.mrf.mxu0
      %v7026 = vadd.f32 0.0, %v7025
      %v7027 = vpop.f32.mrf.mxu0
      %v7028 = vpop.f32.mrf.mxu0
      %v7029 = vadd.f32 0.0, %v7028
      %v7030 = vpop.f32.mrf.mxu0
      %7031 = vmatprep.mubr.bf16.mxu0 0
      %7032 = vmatmul.mubr.bf16.gmra.mxu0 %v6902
      %v7033 = vpop.f32.mrf.mxu0
      %v7034 = vadd.f32 0.0, %v7033
      %v7035 = vpop.f32.mrf.mxu0
      %v7036 = vpop.f32.mrf.mxu0
      %v7037 = vadd.f32 0.0, %v7036
      %v7038 = vpop.f32.mrf.mxu0
      %7039 = vmatprep.mubr.bf16.mxu0 0
      %7040 = vmatmul.mubr.bf16.gmra.mxu0 %v6903
      %v7041 = vpop.f32.mrf.mxu0
      %v7042 = vadd.f32 0.0, %v7041
      %v7043 = vpop.f32.mrf.mxu0
      %v7044 = vpop.f32.mrf.mxu0
      %v7045 = vadd.f32 0.0, %v7044
      %v7046 = vpop.f32.mrf.mxu0
      %7047 = vmatprep.mubr.bf16.mxu0 0
      %7048 = vmatmul.mubr.bf16.gmra.mxu0 %v6904
      %v7049 = vpop.f32.mrf.mxu0
      %v7050 = vadd.f32 0.0, %v7049
      %v7051 = vpop.f32.mrf.mxu0
      %v7052 = vpop.f32.mrf.mxu0
      %v7053 = vadd.f32 0.0, %v7052
      %v7054 = vpop.f32.mrf.mxu0
      %7055 = vmatprep.mubr.bf16.mxu0 0
      %7056 = vmatmul.mubr.bf16.gmra.mxu0 %v6905
      %v7057 = vpop.f32.mrf.mxu0
      %v7058 = vadd.f32 0.0, %v7057
      %v7059 = vpop.f32.mrf.mxu0
      %v7060 = vpop.f32.mrf.mxu0
      %v7061 = vadd.f32 0.0, %v7060
      %v7062 = vpop.f32.mrf.mxu0
      %7063 = vmatprep.mubr.bf16.mxu0 0
      %7064 = vmatmul.mubr.bf16.gmra.mxu0 %v6906
      %v7065 = vpop.f32.mrf.mxu0
      %v7066 = vadd.f32 0.0, %v7065
      %v7067 = vpop.f32.mrf.mxu0
      %v7068 = vpop.f32.mrf.mxu0
      %v7069 = vadd.f32 0.0, %v7068
      %v7070 = vpop.f32.mrf.mxu0
      %7071 = vmatprep.mubr.bf16.mxu0 0
      %7072 = vmatmul.mubr.bf16.gmra.mxu0 %v6907
      %v7073 = vpop.f32.mrf.mxu0
      %v7074 = vadd.f32 0.0, %v7073
      %v7075 = vpop.f32.mrf.mxu0
      %v7076 = vpop.f32.mrf.mxu0
      %v7077 = vadd.f32 0.0, %v7076
      %v7078 = vpop.f32.mrf.mxu0
      %7079 = vmatprep.mubr.bf16.mxu0 0
      %7080 = vmatmul.mubr.bf16.gmra.mxu0 %v6908
      %v7081 = vpop.f32.mrf.mxu0
      %v7082 = vadd.f32 0.0, %v7081
      %v7083 = vpop.f32.mrf.mxu0
      %v7084 = vpop.f32.mrf.mxu0
      %v7085 = vadd.f32 0.0, %v7084
      %v7086 = vpop.f32.mrf.mxu0
      %7087 = vmatprep.mubr.bf16.mxu0 0
      %7088 = vmatmul.mubr.bf16.gmra.mxu0 %v6909
      %v7089 = vpop.f32.mrf.mxu0
      %v7090 = vadd.f32 0.0, %v7089
      %v7091 = vpop.f32.mrf.mxu0
      %v7092 = vpop.f32.mrf.mxu0
      %v7093 = vadd.f32 0.0, %v7092
      %v7094 = vpop.f32.mrf.mxu0
      %7095 = vmatprep.mubr.bf16.mxu0 0
      %7096 = vmatmul.mubr.bf16.gmra.mxu0 %v6910
      %v7097 = vpop.f32.mrf.mxu0
      %v7098 = vadd.f32 0.0, %v7097
      %v7099 = vpop.f32.mrf.mxu0
      %v7100 = vpop.f32.mrf.mxu0
      %v7101 = vadd.f32 0.0, %v7100
      %v7102 = vpop.f32.mrf.mxu0
      %7103 = vmatprep.mubr.bf16.mxu0 0
      %7104 = vmatmul.mubr.bf16.gmra.mxu0 %v6911
      %v7105 = vpop.f32.mrf.mxu0
      %v7106 = vadd.f32 0.0, %v7105
      %v7107 = vpop.f32.mrf.mxu0
      %v7108 = vpop.f32.mrf.mxu0
      %v7109 = vadd.f32 0.0, %v7108
      %v7110 = vpop.f32.mrf.mxu0
      %7111 = vmatprep.mubr.bf16.mxu0 0
      %7112 = vmatmul.mubr.bf16.gmra.mxu0 %v6912
      %v7113 = vpop.f32.mrf.mxu0
      %v7114 = vadd.f32 0.0, %v7113
      %v7115 = vpop.f32.mrf.mxu0
      %v7116 = vpop.f32.mrf.mxu0
      %v7117 = vadd.f32 0.0, %v7116
      %v7118 = vpop.f32.mrf.mxu0
      %7119 = vmatprep.mubr.bf16.mxu0 0
      %7120 = vmatmul.mubr.bf16.gmra.mxu0 %v6913
      %v7121 = vpop.f32.mrf.mxu0
      %v7122 = vadd.f32 0.0, %v7121
      %v7123 = vpop.f32.mrf.mxu0
      %v7124 = vpop.f32.mrf.mxu0
      %v7125 = vadd.f32 0.0, %v7124
      %v7126 = vpop.f32.mrf.mxu0
      %7127 = vmatprep.mubr.bf16.mxu0 0
      %7128 = vmatmul.mubr.bf16.gmra.mxu0 %v6914
      %v7129 = vpop.f32.mrf.mxu0
      %v7130 = vadd.f32 0.0, %v7129
      %v7131 = vpop.f32.mrf.mxu0
      %v7132 = vpop.f32.mrf.mxu0
      %v7133 = vadd.f32 0.0, %v7132
      %v7134 = vpop.f32.mrf.mxu0
      %7135 = vmatprep.mubr.bf16.mxu0 0
      %7136 = vmatmul.mubr.bf16.gmra.mxu0 %v6915
      %v7137 = vpop.f32.mrf.mxu0
      %v7138 = vadd.f32 0.0, %v7137
      %v7139 = vpop.f32.mrf.mxu0
      %v7140 = vpop.f32.mrf.mxu0
      %v7141 = vadd.f32 0.0, %v7140
      %v7142 = vpop.f32.mrf.mxu0
      %7143 = vmatprep.mubr.bf16.mxu0 0
      %7144 = vmatmul.mubr.bf16.gmra.mxu0 %v6916
      %v7145 = vpop.f32.mrf.mxu0
      %v7146 = vadd.f32 0.0, %v7145
      %v7147 = vpop.f32.mrf.mxu0
      %v7148 = vpop.f32.mrf.mxu0
      %v7149 = vadd.f32 0.0, %v7148
      %v7150 = vpop.f32.mrf.mxu0
      %7151 = vmatprep.mubr.bf16.mxu0 0
      %7152 = vmatmul.mubr.bf16.gmra.mxu0 %v6917
      %v7153 = vpop.f32.mrf.mxu0
      %v7154 = vadd.f32 0.0, %v7153
      %v7155 = vpop.f32.mrf.mxu0
      %v7156 = vpop.f32.mrf.mxu0
      %v7157 = vadd.f32 0.0, %v7156
      %v7158 = vpop.f32.mrf.mxu0
      %7159 = vdwg.mxu0
      %v7160 = vld [vmem:[#allocation4] sm:$0xff]
      %v7161 = vld [vmem:[#allocation4 + $0x8] sm:$0xff]
      %v7162 = vld [vmem:[#allocation4 + $0x10] sm:$0xff]
      %v7163 = vld [vmem:[#allocation4 + $0x18] sm:$0xff]
      %v7164 = vld [vmem:[#allocation4 + $0x20] sm:$0xff]
      %v7165 = vld [vmem:[#allocation4 + $0x28] sm:$0xff]
      %v7166 = vld [vmem:[#allocation4 + $0x30] sm:$0xff]
      %v7167 = vld [vmem:[#allocation4 + $0x38] sm:$0xff]
      %v7168 = vld [vmem:[#allocation4 + $0x40] sm:$0xff]
      %v7169 = vld [vmem:[#allocation4 + $0x48] sm:$0xff]
      %v7170 = vld [vmem:[#allocation4 + $0x50] sm:$0xff]
      %v7171 = vld [vmem:[#allocation4 + $0x58] sm:$0xff]
      %v7172 = vld [vmem:[#allocation4 + $0x60] sm:$0xff]
      %v7173 = vld [vmem:[#allocation4 + $0x68] sm:$0xff]
      %v7174 = vld [vmem:[#allocation4 + $0x70] sm:$0xff]
      %v7175 = vld [vmem:[#allocation4 + $0x78] sm:$0xff]
      %v7176 = vld [vmem:[#allocation4 + $0x80] sm:$0xff]
      %v7177 = vld [vmem:[#allocation4 + $0x88] sm:$0xff]
      %v7178 = vld [vmem:[#allocation4 + $0x90] sm:$0xff]
      %v7179 = vld [vmem:[#allocation4 + $0x98] sm:$0xff]
      %v7180 = vld [vmem:[#allocation4 + $0xa0] sm:$0xff]
      %v7181 = vld [vmem:[#allocation4 + $0xa8] sm:$0xff]
      %v7182 = vld [vmem:[#allocation4 + $0xb0] sm:$0xff]
      %v7183 = vld [vmem:[#allocation4 + $0xb8] sm:$0xff]
      %v7184 = vld [vmem:[#allocation4 + $0xc0] sm:$0xff]
      %v7185 = vld [vmem:[#allocation4 + $0xc8] sm:$0xff]
      %v7186 = vld [vmem:[#allocation4 + $0xd0] sm:$0xff]
      %v7187 = vld [vmem:[#allocation4 + $0xd8] sm:$0xff]
      %v7188 = vld [vmem:[#allocation4 + $0xe0] sm:$0xff]
      %v7189 = vld [vmem:[#allocation4 + $0xe8] sm:$0xff]
      %v7190 = vld [vmem:[#allocation4 + $0xf0] sm:$0xff]
      %v7191 = vld [vmem:[#allocation4 + $0xf8] sm:$0xff]
      %v7192 = vld [vmem:[#allocation4 + $0x100] sm:$0xff]
      %v7193 = vld [vmem:[#allocation4 + $0x108] sm:$0xff]
      %v7194 = vld [vmem:[#allocation4 + $0x110] sm:$0xff]
      %v7195 = vld [vmem:[#allocation4 + $0x118] sm:$0xff]
      %v7196 = vadd.f32 %v7160, %v7018
      %v7197 = vadd.f32 %v7161, %v7021
      %v7198 = vadd.f32 %v7162, %v7026
      %v7199 = vadd.f32 %v7163, %v7029
      %v7200 = vadd.f32 %v7164, %v7034
      %v7201 = vadd.f32 %v7165, %v7037
      %v7202 = vadd.f32 %v7166, %v7042
      %v7203 = vadd.f32 %v7167, %v7045
      %v7204 = vadd.f32 %v7168, %v7050
      %v7205 = vadd.f32 %v7169, %v7053
      %v7206 = vadd.f32 %v7170, %v7058
      %v7207 = vadd.f32 %v7171, %v7061
      %v7208 = vadd.f32 %v7172, %v7066
      %v7209 = vadd.f32 %v7173, %v7069
      %v7210 = vadd.f32 %v7174, %v7074
      %v7211 = vadd.f32 %v7175, %v7077
      %v7212 = vadd.f32 %v7176, %v7082
      %v7213 = vadd.f32 %v7177, %v7085
      %v7214 = vadd.f32 %v7178, %v7090
      %v7215 = vadd.f32 %v7179, %v7093
      %v7216 = vadd.f32 %v7180, %v7098
      %v7217 = vadd.f32 %v7181, %v7101
      %v7218 = vadd.f32 %v7182, %v7106
      %v7219 = vadd.f32 %v7183, %v7109
      %v7220 = vadd.f32 %v7184, %v7114
      %v7221 = vadd.f32 %v7185, %v7117
      %v7222 = vadd.f32 %v7186, %v7122
      %v7223 = vadd.f32 %v7187, %v7125
      %v7224 = vadd.f32 %v7188, %v7130
      %v7225 = vadd.f32 %v7189, %v7133
      %v7226 = vadd.f32 %v7190, %v7138
      %v7227 = vadd.f32 %v7191, %v7141
      %v7228 = vadd.f32 %v7192, %v7146
      %v7229 = vadd.f32 %v7193, %v7149
      %v7230 = vadd.f32 %v7194, %v7154
      %v7231 = vadd.f32 %v7195, %v7157
      %7232 = vst [vmem:[#allocation4] sm:$0xff] %v7196
      %7233 = vst [vmem:[#allocation4 + $0x8] sm:$0xff] %v7197
      %7234 = vst [vmem:[#allocation4 + $0x10] sm:$0xff] %v7198
      %7235 = vst [vmem:[#allocation4 + $0x18] sm:$0xff] %v7199
      %7236 = vst [vmem:[#allocation4 + $0x20] sm:$0xff] %v7200
      %7237 = vst [vmem:[#allocation4 + $0x28] sm:$0xff] %v7201
      %7238 = vst [vmem:[#allocation4 + $0x30] sm:$0xff] %v7202
      %7239 = vst [vmem:[#allocation4 + $0x38] sm:$0xff] %v7203
      %7240 = vst [vmem:[#allocation4 + $0x40] sm:$0xff] %v7204
      %7241 = vst [vmem:[#allocation4 + $0x48] sm:$0xff] %v7205
      %7242 = vst [vmem:[#allocation4 + $0x50] sm:$0xff] %v7206
      %7243 = vst [vmem:[#allocation4 + $0x58] sm:$0xff] %v7207
      %7244 = vst [vmem:[#allocation4 + $0x60] sm:$0xff] %v7208
      %7245 = vst [vmem:[#allocation4 + $0x68] sm:$0xff] %v7209
      %7246 = vst [vmem:[#allocation4 + $0x70] sm:$0xff] %v7210
      %7247 = vst [vmem:[#allocation4 + $0x78] sm:$0xff] %v7211
      %7248 = vst [vmem:[#allocation4 + $0x80] sm:$0xff] %v7212
      %7249 = vst [vmem:[#allocation4 + $0x88] sm:$0xff] %v7213
      %7250 = vst [vmem:[#allocation4 + $0x90] sm:$0xff] %v7214
      %7251 = vst [vmem:[#allocation4 + $0x98] sm:$0xff] %v7215
      %7252 = vst [vmem:[#allocation4 + $0xa0] sm:$0xff] %v7216
      %7253 = vst [vmem:[#allocation4 + $0xa8] sm:$0xff] %v7217
      %7254 = vst [vmem:[#allocation4 + $0xb0] sm:$0xff] %v7218
      %7255 = vst [vmem:[#allocation4 + $0xb8] sm:$0xff] %v7219
      %7256 = vst [vmem:[#allocation4 + $0xc0] sm:$0xff] %v7220
      %7257 = vst [vmem:[#allocation4 + $0xc8] sm:$0xff] %v7221
      %7258 = vst [vmem:[#allocation4 + $0xd0] sm:$0xff] %v7222
      %7259 = vst [vmem:[#allocation4 + $0xd8] sm:$0xff] %v7223
      %7260 = vst [vmem:[#allocation4 + $0xe0] sm:$0xff] %v7224
      %7261 = vst [vmem:[#allocation4 + $0xe8] sm:$0xff] %v7225
      %7262 = vst [vmem:[#allocation4 + $0xf0] sm:$0xff] %v7226
      %7263 = vst [vmem:[#allocation4 + $0xf8] sm:$0xff] %v7227
      %7264 = vst [vmem:[#allocation4 + $0x100] sm:$0xff] %v7228
      %7265 = vst [vmem:[#allocation4 + $0x108] sm:$0xff] %v7229
      %7266 = vst [vmem:[#allocation4 + $0x110] sm:$0xff] %v7230
      %7267 = vst [vmem:[#allocation4 + $0x118] sm:$0xff] %v7231
      %v7268 = vld [vmem:[#allocation3 + $0x24] sm:$0xff]
      %v7269 = vld [vmem:[#allocation3 + $0x2c] sm:$0xff]
      %v7270 = vld [vmem:[#allocation3 + $0x34] sm:$0xff]
      %v7271 = vld [vmem:[#allocation3 + $0x3c] sm:$0xff]
      %v7272 = vld [vmem:[#allocation3 + $0x44] sm:$0xff]
      %v7273 = vld [vmem:[#allocation3 + $0x4c] sm:$0xff]
      %v7274 = vld [vmem:[#allocation3 + $0x54] sm:$0xff]
      %v7275 = vld [vmem:[#allocation3 + $0x5c] sm:$0xff]
      %v7276 = vld [vmem:[#allocation3 + $0x64] sm:$0xff]
      %v7277 = vld [vmem:[#allocation3 + $0x6c] sm:$0xff]
      %v7278 = vld [vmem:[#allocation3 + $0x74] sm:$0xff]
      %v7279 = vld [vmem:[#allocation3 + $0x7c] sm:$0xff]
      %v7280 = vld [vmem:[#allocation3 + $0x84] sm:$0xff]
      %v7281 = vld [vmem:[#allocation3 + $0x8c] sm:$0xff]
      %v7282 = vld [vmem:[#allocation3 + $0x94] sm:$0xff]
      %v7283 = vld [vmem:[#allocation3 + $0x9c] sm:$0xff]
      %v7284 = vld [vmem:[#allocation3 + $0xa4] sm:$0xff]
      %v7285 = vld [vmem:[#allocation3 + $0xac] sm:$0xff]
      %v7286 = vld [vmem:[#allocation3 + $0xb4] sm:$0xff]
      %v7287 = vld [vmem:[#allocation3 + $0xbc] sm:$0xff]
      %v7288 = vld [vmem:[#allocation3 + $0xc4] sm:$0xff]
      %v7289 = vld [vmem:[#allocation3 + $0xcc] sm:$0xff]
      %v7290 = vld [vmem:[#allocation3 + $0xd4] sm:$0xff]
      %v7291 = vld [vmem:[#allocation3 + $0xdc] sm:$0xff]
      %v7292 = vld [vmem:[#allocation3 + $0xe4] sm:$0xff]
      %v7293 = vld [vmem:[#allocation3 + $0xec] sm:$0xff]
      %v7294 = vld [vmem:[#allocation3 + $0xf4] sm:$0xff]
      %v7295 = vld [vmem:[#allocation3 + $0xfc] sm:$0xff]
      %v7296 = vld [vmem:[#allocation3 + $0x104] sm:$0xff]
      %v7297 = vld [vmem:[#allocation3 + $0x10c] sm:$0xff]
      %v7298 = vld [vmem:[#allocation3 + $0x114] sm:$0xff]
      %v7299 = vld [vmem:[#allocation3 + $0x11c] sm:$0xff]
      %v7300 = vld [vmem:[#allocation3 + $0x124] sm:$0xff]
      %v7301 = vld [vmem:[#allocation3 + $0x12c] sm:$0xff]
      %v7302 = vld [vmem:[#allocation3 + $0x134] sm:$0xff]
      %v7303 = vld [vmem:[#allocation3 + $0x13c] sm:$0xff]
      %v7304 = vpack.c.bf16 %v7269, %v7268
      %v7305 = vpack.c.bf16 %v7271, %v7270
      %v7306 = vpack.c.bf16 %v7273, %v7272
      %v7307 = vpack.c.bf16 %v7275, %v7274
      %v7308 = vpack.c.bf16 %v7277, %v7276
      %v7309 = vpack.c.bf16 %v7279, %v7278
      %v7310 = vpack.c.bf16 %v7281, %v7280
      %v7311 = vpack.c.bf16 %v7283, %v7282
      %v7312 = vpack.c.bf16 %v7285, %v7284
      %v7313 = vpack.c.bf16 %v7287, %v7286
      %v7314 = vpack.c.bf16 %v7289, %v7288
      %v7315 = vpack.c.bf16 %v7291, %v7290
      %v7316 = vpack.c.bf16 %v7293, %v7292
      %v7317 = vpack.c.bf16 %v7295, %v7294
      %v7318 = vpack.c.bf16 %v7297, %v7296
      %v7319 = vpack.c.bf16 %v7299, %v7298
      %v7320 = vpack.c.bf16 %v7301, %v7300
      %v7321 = vpack.c.bf16 %v7303, %v7302
      %s7322 = scalar_lea.vmem %s7, 384
      %v7323 = vld [vmem:[%s7322] sm:$0xf]
      %v7324 = vld [vmem:[%s7322 + $0x4] sm:$0xf]
      %v7325 = vld [vmem:[%s7322 + $0x8] sm:$0xf]
      %v7326 = vld [vmem:[%s7322 + $0xc] sm:$0xf]
      %v7327 = vld [vmem:[%s7322 + $0x10] sm:$0xf]
      %v7328 = vld [vmem:[%s7322 + $0x14] sm:$0xf]
      %v7329 = vld [vmem:[%s7322 + $0x18] sm:$0xf]
      %v7330 = vld [vmem:[%s7322 + $0x1c] sm:$0xf]
      %v7331 = vld [vmem:[%s7322 + $0x20] sm:$0xf]
      %v7332 = vld [vmem:[%s7322 + $0x24] sm:$0xf]
      %v7333 = vld [vmem:[%s7322 + $0x28] sm:$0xf]
      %v7334 = vld [vmem:[%s7322 + $0x2c] sm:$0xf]
      %v7335 = vld [vmem:[%s7322 + $0x30] sm:$0xf]
      %v7336 = vld [vmem:[%s7322 + $0x34] sm:$0xf]
      %v7337 = vld [vmem:[%s7322 + $0x38] sm:$0xf]
      %v7338 = vld [vmem:[%s7322 + $0x3c] sm:$0xf]
      %v7355 = vunpack.c.l.b16 %v7323
      %v7356 = vunpack.c.l.b16 %v7324
      %v7357 = vunpack.c.l.b16 %v7325
      %v7358 = vunpack.c.l.b16 %v7326
      %v7359 = vunpack.c.l.b16 %v7327
      %v7360 = vunpack.c.l.b16 %v7328
      %v7361 = vunpack.c.l.b16 %v7329
      %v7362 = vunpack.c.l.b16 %v7330
      %v7363 = vunpack.c.l.b16 %v7331
      %v7364 = vunpack.c.l.b16 %v7332
      %v7365 = vunpack.c.l.b16 %v7333
      %v7366 = vunpack.c.l.b16 %v7334
      %v7367 = vunpack.c.l.b16 %v7335
      %v7368 = vunpack.c.l.b16 %v7336
      %v7369 = vunpack.c.l.b16 %v7337
      %v7370 = vunpack.c.l.b16 %v7338
      %v7371 = vpack.c.b16 %v7356, %v7355
      %v7372 = vpack.c.b16 %v7358, %v7357
      %v7373 = vpack.c.b16 %v7360, %v7359
      %v7374 = vpack.c.b16 %v7362, %v7361
      %v7375 = vpack.c.b16 %v7364, %v7363
      %v7376 = vpack.c.b16 %v7366, %v7365
      %v7377 = vpack.c.b16 %v7368, %v7367
      %v7378 = vpack.c.b16 %v7370, %v7369
      %7387 = vmatprep.subr.bf16.mxu0 0
      %7388 = vmatpush1.bf16.msra.mxu0 %v7378
      %7389 = vmatprep.subr.bf16.mxu0 0
      %7390 = vmatpush1.bf16.msra.mxu0 %v7377
      %7391 = vmatprep.subr.bf16.mxu0 0
      %7392 = vmatpush1.bf16.msra.mxu0 %v7376
      %7393 = vmatprep.subr.bf16.mxu0 0
      %7394 = vmatpush1.bf16.msra.mxu0 %v7375
      %7395 = vmatprep.subr.bf16.mxu0 0
      %7396 = vmatpush1.bf16.msra.mxu0 %v7374
      %7397 = vmatprep.subr.bf16.mxu0 0
      %7398 = vmatpush1.bf16.msra.mxu0 %v7373
      %7399 = vmatprep.subr.bf16.mxu0 0
      %7400 = vmatpush1.bf16.msra.mxu0 %v7372
      %7401 = vmatprep.subr.bf16.mxu0 0
      %7402 = vmatpush1.bf16.msra.mxu0 %v7371
      %7403 = vmatprep.subr.bf16.mxu0 0
      %7404 = vmatpush2.bf16.msra.mxu0 0
      %7405 = vmatprep.subr.bf16.mxu0 0
      %7406 = vmatpush2.bf16.msra.mxu0 0
      %7407 = vmatprep.subr.bf16.mxu0 0
      %7408 = vmatpush2.bf16.msra.mxu0 0
      %7409 = vmatprep.subr.bf16.mxu0 0
      %7410 = vmatpush2.bf16.msra.mxu0 0
      %7411 = vmatprep.subr.bf16.mxu0 0
      %7412 = vmatpush2.bf16.msra.mxu0 0
      %7413 = vmatprep.subr.bf16.mxu0 0
      %7414 = vmatpush2.bf16.msra.mxu0 0
      %7415 = vmatprep.subr.bf16.mxu0 0
      %7416 = vmatpush2.bf16.msra.mxu0 0
      %7417 = vmatprep.subr.bf16.mxu0 0
      %7418 = vmatpush2.bf16.msra.mxu0 0
      %7419 = vmatprep.mubr.bf16.mxu0 0
      %7420 = vmatmul.mubr.bf16.gmra.mxu0 %v7304
      %v7421 = vpop.f32.mrf.mxu0
      %v7422 = vadd.f32 0.0, %v7421
      %v7423 = vpop.f32.mrf.mxu0
      %v7424 = vpop.f32.mrf.mxu0
      %v7425 = vadd.f32 0.0, %v7424
      %v7426 = vpop.f32.mrf.mxu0
      %7427 = vmatprep.mubr.bf16.mxu0 0
      %7428 = vmatmul.mubr.bf16.gmra.mxu0 %v7305
      %v7429 = vpop.f32.mrf.mxu0
      %v7430 = vadd.f32 0.0, %v7429
      %v7431 = vpop.f32.mrf.mxu0
      %v7432 = vpop.f32.mrf.mxu0
      %v7433 = vadd.f32 0.0, %v7432
      %v7434 = vpop.f32.mrf.mxu0
      %7435 = vmatprep.mubr.bf16.mxu0 0
      %7436 = vmatmul.mubr.bf16.gmra.mxu0 %v7306
      %v7437 = vpop.f32.mrf.mxu0
      %v7438 = vadd.f32 0.0, %v7437
      %v7439 = vpop.f32.mrf.mxu0
      %v7440 = vpop.f32.mrf.mxu0
      %v7441 = vadd.f32 0.0, %v7440
      %v7442 = vpop.f32.mrf.mxu0
      %7443 = vmatprep.mubr.bf16.mxu0 0
      %7444 = vmatmul.mubr.bf16.gmra.mxu0 %v7307
      %v7445 = vpop.f32.mrf.mxu0
      %v7446 = vadd.f32 0.0, %v7445
      %v7447 = vpop.f32.mrf.mxu0
      %v7448 = vpop.f32.mrf.mxu0
      %v7449 = vadd.f32 0.0, %v7448
      %v7450 = vpop.f32.mrf.mxu0
      %7451 = vmatprep.mubr.bf16.mxu0 0
      %7452 = vmatmul.mubr.bf16.gmra.mxu0 %v7308
      %v7453 = vpop.f32.mrf.mxu0
      %v7454 = vadd.f32 0.0, %v7453
      %v7455 = vpop.f32.mrf.mxu0
      %v7456 = vpop.f32.mrf.mxu0
      %v7457 = vadd.f32 0.0, %v7456
      %v7458 = vpop.f32.mrf.mxu0
      %7459 = vmatprep.mubr.bf16.mxu0 0
      %7460 = vmatmul.mubr.bf16.gmra.mxu0 %v7309
      %v7461 = vpop.f32.mrf.mxu0
      %v7462 = vadd.f32 0.0, %v7461
      %v7463 = vpop.f32.mrf.mxu0
      %v7464 = vpop.f32.mrf.mxu0
      %v7465 = vadd.f32 0.0, %v7464
      %v7466 = vpop.f32.mrf.mxu0
      %7467 = vmatprep.mubr.bf16.mxu0 0
      %7468 = vmatmul.mubr.bf16.gmra.mxu0 %v7310
      %v7469 = vpop.f32.mrf.mxu0
      %v7470 = vadd.f32 0.0, %v7469
      %v7471 = vpop.f32.mrf.mxu0
      %v7472 = vpop.f32.mrf.mxu0
      %v7473 = vadd.f32 0.0, %v7472
      %v7474 = vpop.f32.mrf.mxu0
      %7475 = vmatprep.mubr.bf16.mxu0 0
      %7476 = vmatmul.mubr.bf16.gmra.mxu0 %v7311
      %v7477 = vpop.f32.mrf.mxu0
      %v7478 = vadd.f32 0.0, %v7477
      %v7479 = vpop.f32.mrf.mxu0
      %v7480 = vpop.f32.mrf.mxu0
      %v7481 = vadd.f32 0.0, %v7480
      %v7482 = vpop.f32.mrf.mxu0
      %7483 = vmatprep.mubr.bf16.mxu0 0
      %7484 = vmatmul.mubr.bf16.gmra.mxu0 %v7312
      %v7485 = vpop.f32.mrf.mxu0
      %v7486 = vadd.f32 0.0, %v7485
      %v7487 = vpop.f32.mrf.mxu0
      %v7488 = vpop.f32.mrf.mxu0
      %v7489 = vadd.f32 0.0, %v7488
      %v7490 = vpop.f32.mrf.mxu0
      %7491 = vmatprep.mubr.bf16.mxu0 0
      %7492 = vmatmul.mubr.bf16.gmra.mxu0 %v7313
      %v7493 = vpop.f32.mrf.mxu0
      %v7494 = vadd.f32 0.0, %v7493
      %v7495 = vpop.f32.mrf.mxu0
      %v7496 = vpop.f32.mrf.mxu0
      %v7497 = vadd.f32 0.0, %v7496
      %v7498 = vpop.f32.mrf.mxu0
      %7499 = vmatprep.mubr.bf16.mxu0 0
      %7500 = vmatmul.mubr.bf16.gmra.mxu0 %v7314
      %v7501 = vpop.f32.mrf.mxu0
      %v7502 = vadd.f32 0.0, %v7501
      %v7503 = vpop.f32.mrf.mxu0
      %v7504 = vpop.f32.mrf.mxu0
      %v7505 = vadd.f32 0.0, %v7504
      %v7506 = vpop.f32.mrf.mxu0
      %7507 = vmatprep.mubr.bf16.mxu0 0
      %7508 = vmatmul.mubr.bf16.gmra.mxu0 %v7315
      %v7509 = vpop.f32.mrf.mxu0
      %v7510 = vadd.f32 0.0, %v7509
      %v7511 = vpop.f32.mrf.mxu0
      %v7512 = vpop.f32.mrf.mxu0
      %v7513 = vadd.f32 0.0, %v7512
      %v7514 = vpop.f32.mrf.mxu0
      %7515 = vmatprep.mubr.bf16.mxu0 0
      %7516 = vmatmul.mubr.bf16.gmra.mxu0 %v7316
      %v7517 = vpop.f32.mrf.mxu0
      %v7518 = vadd.f32 0.0, %v7517
      %v7519 = vpop.f32.mrf.mxu0
      %v7520 = vpop.f32.mrf.mxu0
      %v7521 = vadd.f32 0.0, %v7520
      %v7522 = vpop.f32.mrf.mxu0
      %7523 = vmatprep.mubr.bf16.mxu0 0
      %7524 = vmatmul.mubr.bf16.gmra.mxu0 %v7317
      %v7525 = vpop.f32.mrf.mxu0
      %v7526 = vadd.f32 0.0, %v7525
      %v7527 = vpop.f32.mrf.mxu0
      %v7528 = vpop.f32.mrf.mxu0
      %v7529 = vadd.f32 0.0, %v7528
      %v7530 = vpop.f32.mrf.mxu0
      %7531 = vmatprep.mubr.bf16.mxu0 0
      %7532 = vmatmul.mubr.bf16.gmra.mxu0 %v7318
      %v7533 = vpop.f32.mrf.mxu0
      %v7534 = vadd.f32 0.0, %v7533
      %v7535 = vpop.f32.mrf.mxu0
      %v7536 = vpop.f32.mrf.mxu0
      %v7537 = vadd.f32 0.0, %v7536
      %v7538 = vpop.f32.mrf.mxu0
      %7539 = vmatprep.mubr.bf16.mxu0 0
      %7540 = vmatmul.mubr.bf16.gmra.mxu0 %v7319
      %v7541 = vpop.f32.mrf.mxu0
      %v7542 = vadd.f32 0.0, %v7541
      %v7543 = vpop.f32.mrf.mxu0
      %v7544 = vpop.f32.mrf.mxu0
      %v7545 = vadd.f32 0.0, %v7544
      %v7546 = vpop.f32.mrf.mxu0
      %7547 = vmatprep.mubr.bf16.mxu0 0
      %7548 = vmatmul.mubr.bf16.gmra.mxu0 %v7320
      %v7549 = vpop.f32.mrf.mxu0
      %v7550 = vadd.f32 0.0, %v7549
      %v7551 = vpop.f32.mrf.mxu0
      %v7552 = vpop.f32.mrf.mxu0
      %v7553 = vadd.f32 0.0, %v7552
      %v7554 = vpop.f32.mrf.mxu0
      %7555 = vmatprep.mubr.bf16.mxu0 0
      %7556 = vmatmul.mubr.bf16.gmra.mxu0 %v7321
      %v7557 = vpop.f32.mrf.mxu0
      %v7558 = vadd.f32 0.0, %v7557
      %v7559 = vpop.f32.mrf.mxu0
      %v7560 = vpop.f32.mrf.mxu0
      %v7561 = vadd.f32 0.0, %v7560
      %v7562 = vpop.f32.mrf.mxu0
      %7563 = vdwg.mxu0
      %v7564 = vld [vmem:[#allocation4] sm:$0xff]
      %v7565 = vld [vmem:[#allocation4 + $0x8] sm:$0xff]
      %v7566 = vld [vmem:[#allocation4 + $0x10] sm:$0xff]
      %v7567 = vld [vmem:[#allocation4 + $0x18] sm:$0xff]
      %v7568 = vld [vmem:[#allocation4 + $0x20] sm:$0xff]
      %v7569 = vld [vmem:[#allocation4 + $0x28] sm:$0xff]
      %v7570 = vld [vmem:[#allocation4 + $0x30] sm:$0xff]
      %v7571 = vld [vmem:[#allocation4 + $0x38] sm:$0xff]
      %v7572 = vld [vmem:[#allocation4 + $0x40] sm:$0xff]
      %v7573 = vld [vmem:[#allocation4 + $0x48] sm:$0xff]
      %v7574 = vld [vmem:[#allocation4 + $0x50] sm:$0xff]
      %v7575 = vld [vmem:[#allocation4 + $0x58] sm:$0xff]
      %v7576 = vld [vmem:[#allocation4 + $0x60] sm:$0xff]
      %v7577 = vld [vmem:[#allocation4 + $0x68] sm:$0xff]
      %v7578 = vld [vmem:[#allocation4 + $0x70] sm:$0xff]
      %v7579 = vld [vmem:[#allocation4 + $0x78] sm:$0xff]
      %v7580 = vld [vmem:[#allocation4 + $0x80] sm:$0xff]
      %v7581 = vld [vmem:[#allocation4 + $0x88] sm:$0xff]
      %v7582 = vld [vmem:[#allocation4 + $0x90] sm:$0xff]
      %v7583 = vld [vmem:[#allocation4 + $0x98] sm:$0xff]
      %v7584 = vld [vmem:[#allocation4 + $0xa0] sm:$0xff]
      %v7585 = vld [vmem:[#allocation4 + $0xa8] sm:$0xff]
      %v7586 = vld [vmem:[#allocation4 + $0xb0] sm:$0xff]
      %v7587 = vld [vmem:[#allocation4 + $0xb8] sm:$0xff]
      %v7588 = vld [vmem:[#allocation4 + $0xc0] sm:$0xff]
      %v7589 = vld [vmem:[#allocation4 + $0xc8] sm:$0xff]
      %v7590 = vld [vmem:[#allocation4 + $0xd0] sm:$0xff]
      %v7591 = vld [vmem:[#allocation4 + $0xd8] sm:$0xff]
      %v7592 = vld [vmem:[#allocation4 + $0xe0] sm:$0xff]
      %v7593 = vld [vmem:[#allocation4 + $0xe8] sm:$0xff]
      %v7594 = vld [vmem:[#allocation4 + $0xf0] sm:$0xff]
      %v7595 = vld [vmem:[#allocation4 + $0xf8] sm:$0xff]
      %v7596 = vld [vmem:[#allocation4 + $0x100] sm:$0xff]
      %v7597 = vld [vmem:[#allocation4 + $0x108] sm:$0xff]
      %v7598 = vld [vmem:[#allocation4 + $0x110] sm:$0xff]
      %v7599 = vld [vmem:[#allocation4 + $0x118] sm:$0xff]
      %v7600 = vadd.f32 %v7564, %v7422
      %v7601 = vadd.f32 %v7565, %v7425
      %v7602 = vadd.f32 %v7566, %v7430
      %v7603 = vadd.f32 %v7567, %v7433
      %v7604 = vadd.f32 %v7568, %v7438
      %v7605 = vadd.f32 %v7569, %v7441
      %v7606 = vadd.f32 %v7570, %v7446
      %v7607 = vadd.f32 %v7571, %v7449
      %v7608 = vadd.f32 %v7572, %v7454
      %v7609 = vadd.f32 %v7573, %v7457
      %v7610 = vadd.f32 %v7574, %v7462
      %v7611 = vadd.f32 %v7575, %v7465
      %v7612 = vadd.f32 %v7576, %v7470
      %v7613 = vadd.f32 %v7577, %v7473
      %v7614 = vadd.f32 %v7578, %v7478
      %v7615 = vadd.f32 %v7579, %v7481
      %v7616 = vadd.f32 %v7580, %v7486
      %v7617 = vadd.f32 %v7581, %v7489
      %v7618 = vadd.f32 %v7582, %v7494
      %v7619 = vadd.f32 %v7583, %v7497
      %v7620 = vadd.f32 %v7584, %v7502
      %v7621 = vadd.f32 %v7585, %v7505
      %v7622 = vadd.f32 %v7586, %v7510
      %v7623 = vadd.f32 %v7587, %v7513
      %v7624 = vadd.f32 %v7588, %v7518
      %v7625 = vadd.f32 %v7589, %v7521
      %v7626 = vadd.f32 %v7590, %v7526
      %v7627 = vadd.f32 %v7591, %v7529
      %v7628 = vadd.f32 %v7592, %v7534
      %v7629 = vadd.f32 %v7593, %v7537
      %v7630 = vadd.f32 %v7594, %v7542
      %v7631 = vadd.f32 %v7595, %v7545
      %v7632 = vadd.f32 %v7596, %v7550
      %v7633 = vadd.f32 %v7597, %v7553
      %v7634 = vadd.f32 %v7598, %v7558
      %v7635 = vadd.f32 %v7599, %v7561
      %7636 = vst [vmem:[#allocation4] sm:$0xff] %v7600
      %7637 = vst [vmem:[#allocation4 + $0x8] sm:$0xff] %v7601
      %7638 = vst [vmem:[#allocation4 + $0x10] sm:$0xff] %v7602
      %7639 = vst [vmem:[#allocation4 + $0x18] sm:$0xff] %v7603
      %7640 = vst [vmem:[#allocation4 + $0x20] sm:$0xff] %v7604
      %7641 = vst [vmem:[#allocation4 + $0x28] sm:$0xff] %v7605
      %7642 = vst [vmem:[#allocation4 + $0x30] sm:$0xff] %v7606
      %7643 = vst [vmem:[#allocation4 + $0x38] sm:$0xff] %v7607
      %7644 = vst [vmem:[#allocation4 + $0x40] sm:$0xff] %v7608
      %7645 = vst [vmem:[#allocation4 + $0x48] sm:$0xff] %v7609
      %7646 = vst [vmem:[#allocation4 + $0x50] sm:$0xff] %v7610
      %7647 = vst [vmem:[#allocation4 + $0x58] sm:$0xff] %v7611
      %7648 = vst [vmem:[#allocation4 + $0x60] sm:$0xff] %v7612
      %7649 = vst [vmem:[#allocation4 + $0x68] sm:$0xff] %v7613
      %7650 = vst [vmem:[#allocation4 + $0x70] sm:$0xff] %v7614
      %7651 = vst [vmem:[#allocation4 + $0x78] sm:$0xff] %v7615
      %7652 = vst [vmem:[#allocation4 + $0x80] sm:$0xff] %v7616
      %7653 = vst [vmem:[#allocation4 + $0x88] sm:$0xff] %v7617
      %7654 = vst [vmem:[#allocation4 + $0x90] sm:$0xff] %v7618
      %7655 = vst [vmem:[#allocation4 + $0x98] sm:$0xff] %v7619
      %7656 = vst [vmem:[#allocation4 + $0xa0] sm:$0xff] %v7620
      %7657 = vst [vmem:[#allocation4 + $0xa8] sm:$0xff] %v7621
      %7658 = vst [vmem:[#allocation4 + $0xb0] sm:$0xff] %v7622
      %7659 = vst [vmem:[#allocation4 + $0xb8] sm:$0xff] %v7623
      %7660 = vst [vmem:[#allocation4 + $0xc0] sm:$0xff] %v7624
      %7661 = vst [vmem:[#allocation4 + $0xc8] sm:$0xff] %v7625
      %7662 = vst [vmem:[#allocation4 + $0xd0] sm:$0xff] %v7626
      %7663 = vst [vmem:[#allocation4 + $0xd8] sm:$0xff] %v7627
      %7664 = vst [vmem:[#allocation4 + $0xe0] sm:$0xff] %v7628
      %7665 = vst [vmem:[#allocation4 + $0xe8] sm:$0xff] %v7629
      %7666 = vst [vmem:[#allocation4 + $0xf0] sm:$0xff] %v7630
      %7667 = vst [vmem:[#allocation4 + $0xf8] sm:$0xff] %v7631
      %7668 = vst [vmem:[#allocation4 + $0x100] sm:$0xff] %v7632
      %7669 = vst [vmem:[#allocation4 + $0x108] sm:$0xff] %v7633
      %7670 = vst [vmem:[#allocation4 + $0x110] sm:$0xff] %v7634
      %7671 = vst [vmem:[#allocation4 + $0x118] sm:$0xff] %v7635
      %v7672 = vld [vmem:[#allocation3 + $0x25] sm:$0xff]
      %v7673 = vld [vmem:[#allocation3 + $0x2d] sm:$0xff]
      %v7674 = vld [vmem:[#allocation3 + $0x35] sm:$0xff]
      %v7675 = vld [vmem:[#allocation3 + $0x3d] sm:$0xff]
      %v7676 = vld [vmem:[#allocation3 + $0x45] sm:$0xff]
      %v7677 = vld [vmem:[#allocation3 + $0x4d] sm:$0xff]
      %v7678 = vld [vmem:[#allocation3 + $0x55] sm:$0xff]
      %v7679 = vld [vmem:[#allocation3 + $0x5d] sm:$0xff]
      %v7680 = vld [vmem:[#allocation3 + $0x65] sm:$0xff]
      %v7681 = vld [vmem:[#allocation3 + $0x6d] sm:$0xff]
      %v7682 = vld [vmem:[#allocation3 + $0x75] sm:$0xff]
      %v7683 = vld [vmem:[#allocation3 + $0x7d] sm:$0xff]
      %v7684 = vld [vmem:[#allocation3 + $0x85] sm:$0xff]
      %v7685 = vld [vmem:[#allocation3 + $0x8d] sm:$0xff]
      %v7686 = vld [vmem:[#allocation3 + $0x95] sm:$0xff]
      %v7687 = vld [vmem:[#allocation3 + $0x9d] sm:$0xff]
      %v7688 = vld [vmem:[#allocation3 + $0xa5] sm:$0xff]
      %v7689 = vld [vmem:[#allocation3 + $0xad] sm:$0xff]
      %v7690 = vld [vmem:[#allocation3 + $0xb5] sm:$0xff]
      %v7691 = vld [vmem:[#allocation3 + $0xbd] sm:$0xff]
      %v7692 = vld [vmem:[#allocation3 + $0xc5] sm:$0xff]
      %v7693 = vld [vmem:[#allocation3 + $0xcd] sm:$0xff]
      %v7694 = vld [vmem:[#allocation3 + $0xd5] sm:$0xff]
      %v7695 = vld [vmem:[#allocation3 + $0xdd] sm:$0xff]
      %v7696 = vld [vmem:[#allocation3 + $0xe5] sm:$0xff]
      %v7697 = vld [vmem:[#allocation3 + $0xed] sm:$0xff]
      %v7698 = vld [vmem:[#allocation3 + $0xf5] sm:$0xff]
      %v7699 = vld [vmem:[#allocation3 + $0xfd] sm:$0xff]
      %v7700 = vld [vmem:[#allocation3 + $0x105] sm:$0xff]
      %v7701 = vld [vmem:[#allocation3 + $0x10d] sm:$0xff]
      %v7702 = vld [vmem:[#allocation3 + $0x115] sm:$0xff]
      %v7703 = vld [vmem:[#allocation3 + $0x11d] sm:$0xff]
      %v7704 = vld [vmem:[#allocation3 + $0x125] sm:$0xff]
      %v7705 = vld [vmem:[#allocation3 + $0x12d] sm:$0xff]
      %v7706 = vld [vmem:[#allocation3 + $0x135] sm:$0xff]
      %v7707 = vld [vmem:[#allocation3 + $0x13d] sm:$0xff]
      %v7708 = vpack.c.bf16 %v7673, %v7672
      %v7709 = vpack.c.bf16 %v7675, %v7674
      %v7710 = vpack.c.bf16 %v7677, %v7676
      %v7711 = vpack.c.bf16 %v7679, %v7678
      %v7712 = vpack.c.bf16 %v7681, %v7680
      %v7713 = vpack.c.bf16 %v7683, %v7682
      %v7714 = vpack.c.bf16 %v7685, %v7684
      %v7715 = vpack.c.bf16 %v7687, %v7686
      %v7716 = vpack.c.bf16 %v7689, %v7688
      %v7717 = vpack.c.bf16 %v7691, %v7690
      %v7718 = vpack.c.bf16 %v7693, %v7692
      %v7719 = vpack.c.bf16 %v7695, %v7694
      %v7720 = vpack.c.bf16 %v7697, %v7696
      %v7721 = vpack.c.bf16 %v7699, %v7698
      %v7722 = vpack.c.bf16 %v7701, %v7700
      %v7723 = vpack.c.bf16 %v7703, %v7702
      %v7724 = vpack.c.bf16 %v7705, %v7704
      %v7725 = vpack.c.bf16 %v7707, %v7706
      %s7726 = scalar_lea.vmem %s7, 448
      %v7727 = vld [vmem:[%s7726] sm:$0xf]
      %v7728 = vld [vmem:[%s7726 + $0x4] sm:$0xf]
      %v7729 = vld [vmem:[%s7726 + $0x8] sm:$0xf]
      %v7730 = vld [vmem:[%s7726 + $0xc] sm:$0xf]
      %v7731 = vld [vmem:[%s7726 + $0x10] sm:$0xf]
      %v7732 = vld [vmem:[%s7726 + $0x14] sm:$0xf]
      %v7733 = vld [vmem:[%s7726 + $0x18] sm:$0xf]
      %v7734 = vld [vmem:[%s7726 + $0x1c] sm:$0xf]
      %v7735 = vld [vmem:[%s7726 + $0x20] sm:$0xf]
      %v7736 = vld [vmem:[%s7726 + $0x24] sm:$0xf]
      %v7737 = vld [vmem:[%s7726 + $0x28] sm:$0xf]
      %v7738 = vld [vmem:[%s7726 + $0x2c] sm:$0xf]
      %v7739 = vld [vmem:[%s7726 + $0x30] sm:$0xf]
      %v7740 = vld [vmem:[%s7726 + $0x34] sm:$0xf]
      %v7741 = vld [vmem:[%s7726 + $0x38] sm:$0xf]
      %v7742 = vld [vmem:[%s7726 + $0x3c] sm:$0xf]
      %v7759 = vunpack.c.l.b16 %v7727
      %v7760 = vunpack.c.l.b16 %v7728
      %v7761 = vunpack.c.l.b16 %v7729
      %v7762 = vunpack.c.l.b16 %v7730
      %v7763 = vunpack.c.l.b16 %v7731
      %v7764 = vunpack.c.l.b16 %v7732
      %v7765 = vunpack.c.l.b16 %v7733
      %v7766 = vunpack.c.l.b16 %v7734
      %v7767 = vunpack.c.l.b16 %v7735
      %v7768 = vunpack.c.l.b16 %v7736
      %v7769 = vunpack.c.l.b16 %v7737
      %v7770 = vunpack.c.l.b16 %v7738
      %v7771 = vunpack.c.l.b16 %v7739
      %v7772 = vunpack.c.l.b16 %v7740
      %v7773 = vunpack.c.l.b16 %v7741
      %v7774 = vunpack.c.l.b16 %v7742
      %v7775 = vpack.c.b16 %v7760, %v7759
      %v7776 = vpack.c.b16 %v7762, %v7761
      %v7777 = vpack.c.b16 %v7764, %v7763
      %v7778 = vpack.c.b16 %v7766, %v7765
      %v7779 = vpack.c.b16 %v7768, %v7767
      %v7780 = vpack.c.b16 %v7770, %v7769
      %v7781 = vpack.c.b16 %v7772, %v7771
      %v7782 = vpack.c.b16 %v7774, %v7773
      %7791 = vmatprep.subr.bf16.mxu0 0
      %7792 = vmatpush1.bf16.msra.mxu0 %v7782
      %7793 = vmatprep.subr.bf16.mxu0 0
      %7794 = vmatpush1.bf16.msra.mxu0 %v7781
      %7795 = vmatprep.subr.bf16.mxu0 0
      %7796 = vmatpush1.bf16.msra.mxu0 %v7780
      %7797 = vmatprep.subr.bf16.mxu0 0
      %7798 = vmatpush1.bf16.msra.mxu0 %v7779
      %7799 = vmatprep.subr.bf16.mxu0 0
      %7800 = vmatpush1.bf16.msra.mxu0 %v7778
      %7801 = vmatprep.subr.bf16.mxu0 0
      %7802 = vmatpush1.bf16.msra.mxu0 %v7777
      %7803 = vmatprep.subr.bf16.mxu0 0
      %7804 = vmatpush1.bf16.msra.mxu0 %v7776
      %7805 = vmatprep.subr.bf16.mxu0 0
      %7806 = vmatpush1.bf16.msra.mxu0 %v7775
      %7807 = vmatprep.subr.bf16.mxu0 0
      %7808 = vmatpush2.bf16.msra.mxu0 0
      %7809 = vmatprep.subr.bf16.mxu0 0
      %7810 = vmatpush2.bf16.msra.mxu0 0
      %7811 = vmatprep.subr.bf16.mxu0 0
      %7812 = vmatpush2.bf16.msra.mxu0 0
      %7813 = vmatprep.subr.bf16.mxu0 0
      %7814 = vmatpush2.bf16.msra.mxu0 0
      %7815 = vmatprep.subr.bf16.mxu0 0
      %7816 = vmatpush2.bf16.msra.mxu0 0
      %7817 = vmatprep.subr.bf16.mxu0 0
      %7818 = vmatpush2.bf16.msra.mxu0 0
      %7819 = vmatprep.subr.bf16.mxu0 0
      %7820 = vmatpush2.bf16.msra.mxu0 0
      %7821 = vmatprep.subr.bf16.mxu0 0
      %7822 = vmatpush2.bf16.msra.mxu0 0
      %7823 = vmatprep.mubr.bf16.mxu0 0
      %7824 = vmatmul.mubr.bf16.gmra.mxu0 %v7708
      %v7825 = vpop.f32.mrf.mxu0
      %v7826 = vadd.f32 0.0, %v7825
      %v7827 = vpop.f32.mrf.mxu0
      %v7828 = vpop.f32.mrf.mxu0
      %v7829 = vadd.f32 0.0, %v7828
      %v7830 = vpop.f32.mrf.mxu0
      %7831 = vmatprep.mubr.bf16.mxu0 0
      %7832 = vmatmul.mubr.bf16.gmra.mxu0 %v7709
      %v7833 = vpop.f32.mrf.mxu0
      %v7834 = vadd.f32 0.0, %v7833
      %v7835 = vpop.f32.mrf.mxu0
      %v7836 = vpop.f32.mrf.mxu0
      %v7837 = vadd.f32 0.0, %v7836
      %v7838 = vpop.f32.mrf.mxu0
      %7839 = vmatprep.mubr.bf16.mxu0 0
      %7840 = vmatmul.mubr.bf16.gmra.mxu0 %v7710
      %v7841 = vpop.f32.mrf.mxu0
      %v7842 = vadd.f32 0.0, %v7841
      %v7843 = vpop.f32.mrf.mxu0
      %v7844 = vpop.f32.mrf.mxu0
      %v7845 = vadd.f32 0.0, %v7844
      %v7846 = vpop.f32.mrf.mxu0
      %7847 = vmatprep.mubr.bf16.mxu0 0
      %7848 = vmatmul.mubr.bf16.gmra.mxu0 %v7711
      %v7849 = vpop.f32.mrf.mxu0
      %v7850 = vadd.f32 0.0, %v7849
      %v7851 = vpop.f32.mrf.mxu0
      %v7852 = vpop.f32.mrf.mxu0
      %v7853 = vadd.f32 0.0, %v7852
      %v7854 = vpop.f32.mrf.mxu0
      %7855 = vmatprep.mubr.bf16.mxu0 0
      %7856 = vmatmul.mubr.bf16.gmra.mxu0 %v7712
      %v7857 = vpop.f32.mrf.mxu0
      %v7858 = vadd.f32 0.0, %v7857
      %v7859 = vpop.f32.mrf.mxu0
      %v7860 = vpop.f32.mrf.mxu0
      %v7861 = vadd.f32 0.0, %v7860
      %v7862 = vpop.f32.mrf.mxu0
      %7863 = vmatprep.mubr.bf16.mxu0 0
      %7864 = vmatmul.mubr.bf16.gmra.mxu0 %v7713
      %v7865 = vpop.f32.mrf.mxu0
      %v7866 = vadd.f32 0.0, %v7865
      %v7867 = vpop.f32.mrf.mxu0
      %v7868 = vpop.f32.mrf.mxu0
      %v7869 = vadd.f32 0.0, %v7868
      %v7870 = vpop.f32.mrf.mxu0
      %7871 = vmatprep.mubr.bf16.mxu0 0
      %7872 = vmatmul.mubr.bf16.gmra.mxu0 %v7714
      %v7873 = vpop.f32.mrf.mxu0
      %v7874 = vadd.f32 0.0, %v7873
      %v7875 = vpop.f32.mrf.mxu0
      %v7876 = vpop.f32.mrf.mxu0
      %v7877 = vadd.f32 0.0, %v7876
      %v7878 = vpop.f32.mrf.mxu0
      %7879 = vmatprep.mubr.bf16.mxu0 0
      %7880 = vmatmul.mubr.bf16.gmra.mxu0 %v7715
      %v7881 = vpop.f32.mrf.mxu0
      %v7882 = vadd.f32 0.0, %v7881
      %v7883 = vpop.f32.mrf.mxu0
      %v7884 = vpop.f32.mrf.mxu0
      %v7885 = vadd.f32 0.0, %v7884
      %v7886 = vpop.f32.mrf.mxu0
      %7887 = vmatprep.mubr.bf16.mxu0 0
      %7888 = vmatmul.mubr.bf16.gmra.mxu0 %v7716
      %v7889 = vpop.f32.mrf.mxu0
      %v7890 = vadd.f32 0.0, %v7889
      %v7891 = vpop.f32.mrf.mxu0
      %v7892 = vpop.f32.mrf.mxu0
      %v7893 = vadd.f32 0.0, %v7892
      %v7894 = vpop.f32.mrf.mxu0
      %7895 = vmatprep.mubr.bf16.mxu0 0
      %7896 = vmatmul.mubr.bf16.gmra.mxu0 %v7717
      %v7897 = vpop.f32.mrf.mxu0
      %v7898 = vadd.f32 0.0, %v7897
      %v7899 = vpop.f32.mrf.mxu0
      %v7900 = vpop.f32.mrf.mxu0
      %v7901 = vadd.f32 0.0, %v7900
      %v7902 = vpop.f32.mrf.mxu0
      %7903 = vmatprep.mubr.bf16.mxu0 0
      %7904 = vmatmul.mubr.bf16.gmra.mxu0 %v7718
      %v7905 = vpop.f32.mrf.mxu0
      %v7906 = vadd.f32 0.0, %v7905
      %v7907 = vpop.f32.mrf.mxu0
      %v7908 = vpop.f32.mrf.mxu0
      %v7909 = vadd.f32 0.0, %v7908
      %v7910 = vpop.f32.mrf.mxu0
      %7911 = vmatprep.mubr.bf16.mxu0 0
      %7912 = vmatmul.mubr.bf16.gmra.mxu0 %v7719
      %v7913 = vpop.f32.mrf.mxu0
      %v7914 = vadd.f32 0.0, %v7913
      %v7915 = vpop.f32.mrf.mxu0
      %v7916 = vpop.f32.mrf.mxu0
      %v7917 = vadd.f32 0.0, %v7916
      %v7918 = vpop.f32.mrf.mxu0
      %7919 = vmatprep.mubr.bf16.mxu0 0
      %7920 = vmatmul.mubr.bf16.gmra.mxu0 %v7720
      %v7921 = vpop.f32.mrf.mxu0
      %v7922 = vadd.f32 0.0, %v7921
      %v7923 = vpop.f32.mrf.mxu0
      %v7924 = vpop.f32.mrf.mxu0
      %v7925 = vadd.f32 0.0, %v7924
      %v7926 = vpop.f32.mrf.mxu0
      %7927 = vmatprep.mubr.bf16.mxu0 0
      %7928 = vmatmul.mubr.bf16.gmra.mxu0 %v7721
      %v7929 = vpop.f32.mrf.mxu0
      %v7930 = vadd.f32 0.0, %v7929
      %v7931 = vpop.f32.mrf.mxu0
      %v7932 = vpop.f32.mrf.mxu0
      %v7933 = vadd.f32 0.0, %v7932
      %v7934 = vpop.f32.mrf.mxu0
      %7935 = vmatprep.mubr.bf16.mxu0 0
      %7936 = vmatmul.mubr.bf16.gmra.mxu0 %v7722
      %v7937 = vpop.f32.mrf.mxu0
      %v7938 = vadd.f32 0.0, %v7937
      %v7939 = vpop.f32.mrf.mxu0
      %v7940 = vpop.f32.mrf.mxu0
      %v7941 = vadd.f32 0.0, %v7940
      %v7942 = vpop.f32.mrf.mxu0
      %7943 = vmatprep.mubr.bf16.mxu0 0
      %7944 = vmatmul.mubr.bf16.gmra.mxu0 %v7723
      %v7945 = vpop.f32.mrf.mxu0
      %v7946 = vadd.f32 0.0, %v7945
      %v7947 = vpop.f32.mrf.mxu0
      %v7948 = vpop.f32.mrf.mxu0
      %v7949 = vadd.f32 0.0, %v7948
      %v7950 = vpop.f32.mrf.mxu0
      %7951 = vmatprep.mubr.bf16.mxu0 0
      %7952 = vmatmul.mubr.bf16.gmra.mxu0 %v7724
      %v7953 = vpop.f32.mrf.mxu0
      %v7954 = vadd.f32 0.0, %v7953
      %v7955 = vpop.f32.mrf.mxu0
      %v7956 = vpop.f32.mrf.mxu0
      %v7957 = vadd.f32 0.0, %v7956
      %v7958 = vpop.f32.mrf.mxu0
      %7959 = vmatprep.mubr.bf16.mxu0 0
      %7960 = vmatmul.mubr.bf16.gmra.mxu0 %v7725
      %v7961 = vpop.f32.mrf.mxu0
      %v7962 = vadd.f32 0.0, %v7961
      %v7963 = vpop.f32.mrf.mxu0
      %v7964 = vpop.f32.mrf.mxu0
      %v7965 = vadd.f32 0.0, %v7964
      %v7966 = vpop.f32.mrf.mxu0
      %7967 = vdwg.mxu0
      %v7968 = vld [vmem:[#allocation4] sm:$0xff]
      %v7969 = vld [vmem:[#allocation4 + $0x8] sm:$0xff]
      %v7970 = vld [vmem:[#allocation4 + $0x10] sm:$0xff]
      %v7971 = vld [vmem:[#allocation4 + $0x18] sm:$0xff]
      %v7972 = vld [vmem:[#allocation4 + $0x20] sm:$0xff]
      %v7973 = vld [vmem:[#allocation4 + $0x28] sm:$0xff]
      %v7974 = vld [vmem:[#allocation4 + $0x30] sm:$0xff]
      %v7975 = vld [vmem:[#allocation4 + $0x38] sm:$0xff]
      %v7976 = vld [vmem:[#allocation4 + $0x40] sm:$0xff]
      %v7977 = vld [vmem:[#allocation4 + $0x48] sm:$0xff]
      %v7978 = vld [vmem:[#allocation4 + $0x50] sm:$0xff]
      %v7979 = vld [vmem:[#allocation4 + $0x58] sm:$0xff]
      %v7980 = vld [vmem:[#allocation4 + $0x60] sm:$0xff]
      %v7981 = vld [vmem:[#allocation4 + $0x68] sm:$0xff]
      %v7982 = vld [vmem:[#allocation4 + $0x70] sm:$0xff]
      %v7983 = vld [vmem:[#allocation4 + $0x78] sm:$0xff]
      %v7984 = vld [vmem:[#allocation4 + $0x80] sm:$0xff]
      %v7985 = vld [vmem:[#allocation4 + $0x88] sm:$0xff]
      %v7986 = vld [vmem:[#allocation4 + $0x90] sm:$0xff]
      %v7987 = vld [vmem:[#allocation4 + $0x98] sm:$0xff]
      %v7988 = vld [vmem:[#allocation4 + $0xa0] sm:$0xff]
      %v7989 = vld [vmem:[#allocation4 + $0xa8] sm:$0xff]
      %v7990 = vld [vmem:[#allocation4 + $0xb0] sm:$0xff]
      %v7991 = vld [vmem:[#allocation4 + $0xb8] sm:$0xff]
      %v7992 = vld [vmem:[#allocation4 + $0xc0] sm:$0xff]
      %v7993 = vld [vmem:[#allocation4 + $0xc8] sm:$0xff]
      %v7994 = vld [vmem:[#allocation4 + $0xd0] sm:$0xff]
      %v7995 = vld [vmem:[#allocation4 + $0xd8] sm:$0xff]
      %v7996 = vld [vmem:[#allocation4 + $0xe0] sm:$0xff]
      %v7997 = vld [vmem:[#allocation4 + $0xe8] sm:$0xff]
      %v7998 = vld [vmem:[#allocation4 + $0xf0] sm:$0xff]
      %v7999 = vld [vmem:[#allocation4 + $0xf8] sm:$0xff]
      %v8000 = vld [vmem:[#allocation4 + $0x100] sm:$0xff]
      %v8001 = vld [vmem:[#allocation4 + $0x108] sm:$0xff]
      %v8002 = vld [vmem:[#allocation4 + $0x110] sm:$0xff]
      %v8003 = vld [vmem:[#allocation4 + $0x118] sm:$0xff]
      %v8004 = vadd.f32 %v7968, %v7826
      %v8005 = vadd.f32 %v7969, %v7829
      %v8006 = vadd.f32 %v7970, %v7834
      %v8007 = vadd.f32 %v7971, %v7837
      %v8008 = vadd.f32 %v7972, %v7842
      %v8009 = vadd.f32 %v7973, %v7845
      %v8010 = vadd.f32 %v7974, %v7850
      %v8011 = vadd.f32 %v7975, %v7853
      %v8012 = vadd.f32 %v7976, %v7858
      %v8013 = vadd.f32 %v7977, %v7861
      %v8014 = vadd.f32 %v7978, %v7866
      %v8015 = vadd.f32 %v7979, %v7869
      %v8016 = vadd.f32 %v7980, %v7874
      %v8017 = vadd.f32 %v7981, %v7877
      %v8018 = vadd.f32 %v7982, %v7882
      %v8019 = vadd.f32 %v7983, %v7885
      %v8020 = vadd.f32 %v7984, %v7890
      %v8021 = vadd.f32 %v7985, %v7893
      %v8022 = vadd.f32 %v7986, %v7898
      %v8023 = vadd.f32 %v7987, %v7901
      %v8024 = vadd.f32 %v7988, %v7906
      %v8025 = vadd.f32 %v7989, %v7909
      %v8026 = vadd.f32 %v7990, %v7914
      %v8027 = vadd.f32 %v7991, %v7917
      %v8028 = vadd.f32 %v7992, %v7922
      %v8029 = vadd.f32 %v7993, %v7925
      %v8030 = vadd.f32 %v7994, %v7930
      %v8031 = vadd.f32 %v7995, %v7933
      %v8032 = vadd.f32 %v7996, %v7938
      %v8033 = vadd.f32 %v7997, %v7941
      %v8034 = vadd.f32 %v7998, %v7946
      %v8035 = vadd.f32 %v7999, %v7949
      %v8036 = vadd.f32 %v8000, %v7954
      %v8037 = vadd.f32 %v8001, %v7957
      %v8038 = vadd.f32 %v8002, %v7962
      %v8039 = vadd.f32 %v8003, %v7965
      %8040 = vst [vmem:[#allocation4] sm:$0xff] %v8004
      %8041 = vst [vmem:[#allocation4 + $0x8] sm:$0xff] %v8005
      %8042 = vst [vmem:[#allocation4 + $0x10] sm:$0xff] %v8006
      %8043 = vst [vmem:[#allocation4 + $0x18] sm:$0xff] %v8007
      %8044 = vst [vmem:[#allocation4 + $0x20] sm:$0xff] %v8008
      %8045 = vst [vmem:[#allocation4 + $0x28] sm:$0xff] %v8009
      %8046 = vst [vmem:[#allocation4 + $0x30] sm:$0xff] %v8010
      %8047 = vst [vmem:[#allocation4 + $0x38] sm:$0xff] %v8011
      %8048 = vst [vmem:[#allocation4 + $0x40] sm:$0xff] %v8012
      %8049 = vst [vmem:[#allocation4 + $0x48] sm:$0xff] %v8013
      %8050 = vst [vmem:[#allocation4 + $0x50] sm:$0xff] %v8014
      %8051 = vst [vmem:[#allocation4 + $0x58] sm:$0xff] %v8015
      %8052 = vst [vmem:[#allocation4 + $0x60] sm:$0xff] %v8016
      %8053 = vst [vmem:[#allocation4 + $0x68] sm:$0xff] %v8017
      %8054 = vst [vmem:[#allocation4 + $0x70] sm:$0xff] %v8018
      %8055 = vst [vmem:[#allocation4 + $0x78] sm:$0xff] %v8019
      %8056 = vst [vmem:[#allocation4 + $0x80] sm:$0xff] %v8020
      %8057 = vst [vmem:[#allocation4 + $0x88] sm:$0xff] %v8021
      %8058 = vst [vmem:[#allocation4 + $0x90] sm:$0xff] %v8022
      %8059 = vst [vmem:[#allocation4 + $0x98] sm:$0xff] %v8023
      %8060 = vst [vmem:[#allocation4 + $0xa0] sm:$0xff] %v8024
      %8061 = vst [vmem:[#allocation4 + $0xa8] sm:$0xff] %v8025
      %8062 = vst [vmem:[#allocation4 + $0xb0] sm:$0xff] %v8026
      %8063 = vst [vmem:[#allocation4 + $0xb8] sm:$0xff] %v8027
      %8064 = vst [vmem:[#allocation4 + $0xc0] sm:$0xff] %v8028
      %8065 = vst [vmem:[#allocation4 + $0xc8] sm:$0xff] %v8029
      %8066 = vst [vmem:[#allocation4 + $0xd0] sm:$0xff] %v8030
      %8067 = vst [vmem:[#allocation4 + $0xd8] sm:$0xff] %v8031
      %8068 = vst [vmem:[#allocation4 + $0xe0] sm:$0xff] %v8032
      %8069 = vst [vmem:[#allocation4 + $0xe8] sm:$0xff] %v8033
      %8070 = vst [vmem:[#allocation4 + $0xf0] sm:$0xff] %v8034
      %8071 = vst [vmem:[#allocation4 + $0xf8] sm:$0xff] %v8035
      %8072 = vst [vmem:[#allocation4 + $0x100] sm:$0xff] %v8036
      %8073 = vst [vmem:[#allocation4 + $0x108] sm:$0xff] %v8037
      %8074 = vst [vmem:[#allocation4 + $0x110] sm:$0xff] %v8038
      %8075 = vst [vmem:[#allocation4 + $0x118] sm:$0xff] %v8039
      %v8076 = vld [vmem:[#allocation3 + $0x26] sm:$0xff]
      %v8077 = vld [vmem:[#allocation3 + $0x2e] sm:$0xff]
      %v8078 = vld [vmem:[#allocation3 + $0x36] sm:$0xff]
      %v8079 = vld [vmem:[#allocation3 + $0x3e] sm:$0xff]
      %v8080 = vld [vmem:[#allocation3 + $0x46] sm:$0xff]
      %v8081 = vld [vmem:[#allocation3 + $0x4e] sm:$0xff]
      %v8082 = vld [vmem:[#allocation3 + $0x56] sm:$0xff]
      %v8083 = vld [vmem:[#allocation3 + $0x5e] sm:$0xff]
      %v8084 = vld [vmem:[#allocation3 + $0x66] sm:$0xff]
      %v8085 = vld [vmem:[#allocation3 + $0x6e] sm:$0xff]
      %v8086 = vld [vmem:[#allocation3 + $0x76] sm:$0xff]
      %v8087 = vld [vmem:[#allocation3 + $0x7e] sm:$0xff]
      %v8088 = vld [vmem:[#allocation3 + $0x86] sm:$0xff]
      %v8089 = vld [vmem:[#allocation3 + $0x8e] sm:$0xff]
      %v8090 = vld [vmem:[#allocation3 + $0x96] sm:$0xff]
      %v8091 = vld [vmem:[#allocation3 + $0x9e] sm:$0xff]
      %v8092 = vld [vmem:[#allocation3 + $0xa6] sm:$0xff]
      %v8093 = vld [vmem:[#allocation3 + $0xae] sm:$0xff]
      %v8094 = vld [vmem:[#allocation3 + $0xb6] sm:$0xff]
      %v8095 = vld [vmem:[#allocation3 + $0xbe] sm:$0xff]
      %v8096 = vld [vmem:[#allocation3 + $0xc6] sm:$0xff]
      %v8097 = vld [vmem:[#allocation3 + $0xce] sm:$0xff]
      %v8098 = vld [vmem:[#allocation3 + $0xd6] sm:$0xff]
      %v8099 = vld [vmem:[#allocation3 + $0xde] sm:$0xff]
      %v8100 = vld [vmem:[#allocation3 + $0xe6] sm:$0xff]
      %v8101 = vld [vmem:[#allocation3 + $0xee] sm:$0xff]
      %v8102 = vld [vmem:[#allocation3 + $0xf6] sm:$0xff]
      %v8103 = vld [vmem:[#allocation3 + $0xfe] sm:$0xff]
      %v8104 = vld [vmem:[#allocation3 + $0x106] sm:$0xff]
      %v8105 = vld [vmem:[#allocation3 + $0x10e] sm:$0xff]
      %v8106 = vld [vmem:[#allocation3 + $0x116] sm:$0xff]
      %v8107 = vld [vmem:[#allocation3 + $0x11e] sm:$0xff]
      %v8108 = vld [vmem:[#allocation3 + $0x126] sm:$0xff]
      %v8109 = vld [vmem:[#allocation3 + $0x12e] sm:$0xff]
      %v8110 = vld [vmem:[#allocation3 + $0x136] sm:$0xff]
      %v8111 = vld [vmem:[#allocation3 + $0x13e] sm:$0xff]
      %v8112 = vpack.c.bf16 %v8077, %v8076
      %v8113 = vpack.c.bf16 %v8079, %v8078
      %v8114 = vpack.c.bf16 %v8081, %v8080
      %v8115 = vpack.c.bf16 %v8083, %v8082
      %v8116 = vpack.c.bf16 %v8085, %v8084
      %v8117 = vpack.c.bf16 %v8087, %v8086
      %v8118 = vpack.c.bf16 %v8089, %v8088
      %v8119 = vpack.c.bf16 %v8091, %v8090
      %v8120 = vpack.c.bf16 %v8093, %v8092
      %v8121 = vpack.c.bf16 %v8095, %v8094
      %v8122 = vpack.c.bf16 %v8097, %v8096
      %v8123 = vpack.c.bf16 %v8099, %v8098
      %v8124 = vpack.c.bf16 %v8101, %v8100
      %v8125 = vpack.c.bf16 %v8103, %v8102
      %v8126 = vpack.c.bf16 %v8105, %v8104
      %v8127 = vpack.c.bf16 %v8107, %v8106
      %v8128 = vpack.c.bf16 %v8109, %v8108
      %v8129 = vpack.c.bf16 %v8111, %v8110
      %s8130 = scalar_lea.vmem %s7, 512
      %v8131 = vld [vmem:[%s8130] sm:$0xf]
      %v8132 = vld [vmem:[%s8130 + $0x4] sm:$0xf]
      %v8133 = vld [vmem:[%s8130 + $0x8] sm:$0xf]
      %v8134 = vld [vmem:[%s8130 + $0xc] sm:$0xf]
      %v8135 = vld [vmem:[%s8130 + $0x10] sm:$0xf]
      %v8136 = vld [vmem:[%s8130 + $0x14] sm:$0xf]
      %v8137 = vld [vmem:[%s8130 + $0x18] sm:$0xf]
      %v8138 = vld [vmem:[%s8130 + $0x1c] sm:$0xf]
      %v8139 = vld [vmem:[%s8130 + $0x20] sm:$0xf]
      %v8140 = vld [vmem:[%s8130 + $0x24] sm:$0xf]
      %v8141 = vld [vmem:[%s8130 + $0x28] sm:$0xf]
      %v8142 = vld [vmem:[%s8130 + $0x2c] sm:$0xf]
      %v8143 = vld [vmem:[%s8130 + $0x30] sm:$0xf]
      %v8144 = vld [vmem:[%s8130 + $0x34] sm:$0xf]
      %v8145 = vld [vmem:[%s8130 + $0x38] sm:$0xf]
      %v8146 = vld [vmem:[%s8130 + $0x3c] sm:$0xf]
      %v8163 = vunpack.c.l.b16 %v8131
      %v8164 = vunpack.c.l.b16 %v8132
      %v8165 = vunpack.c.l.b16 %v8133
      %v8166 = vunpack.c.l.b16 %v8134
      %v8167 = vunpack.c.l.b16 %v8135
      %v8168 = vunpack.c.l.b16 %v8136
      %v8169 = vunpack.c.l.b16 %v8137
      %v8170 = vunpack.c.l.b16 %v8138
      %v8171 = vunpack.c.l.b16 %v8139
      %v8172 = vunpack.c.l.b16 %v8140
      %v8173 = vunpack.c.l.b16 %v8141
      %v8174 = vunpack.c.l.b16 %v8142
      %v8175 = vunpack.c.l.b16 %v8143
      %v8176 = vunpack.c.l.b16 %v8144
      %v8177 = vunpack.c.l.b16 %v8145
      %v8178 = vunpack.c.l.b16 %v8146
      %v8179 = vpack.c.b16 %v8164, %v8163
      %v8180 = vpack.c.b16 %v8166, %v8165
      %v8181 = vpack.c.b16 %v8168, %v8167
      %v8182 = vpack.c.b16 %v8170, %v8169
      %v8183 = vpack.c.b16 %v8172, %v8171
      %v8184 = vpack.c.b16 %v8174, %v8173
      %v8185 = vpack.c.b16 %v8176, %v8175
      %v8186 = vpack.c.b16 %v8178, %v8177
      %8195 = vmatprep.subr.bf16.mxu0 0
      %8196 = vmatpush1.bf16.msra.mxu0 %v8186
      %8197 = vmatprep.subr.bf16.mxu0 0
      %8198 = vmatpush1.bf16.msra.mxu0 %v8185
      %8199 = vmatprep.subr.bf16.mxu0 0
      %8200 = vmatpush1.bf16.msra.mxu0 %v8184
      %8201 = vmatprep.subr.bf16.mxu0 0
      %8202 = vmatpush1.bf16.msra.mxu0 %v8183
      %8203 = vmatprep.subr.bf16.mxu0 0
      %8204 = vmatpush1.bf16.msra.mxu0 %v8182
      %8205 = vmatprep.subr.bf16.mxu0 0
      %8206 = vmatpush1.bf16.msra.mxu0 %v8181
      %8207 = vmatprep.subr.bf16.mxu0 0
      %8208 = vmatpush1.bf16.msra.mxu0 %v8180
      %8209 = vmatprep.subr.bf16.mxu0 0
      %8210 = vmatpush1.bf16.msra.mxu0 %v8179
      %8211 = vmatprep.subr.bf16.mxu0 0
      %8212 = vmatpush2.bf16.msra.mxu0 0
      %8213 = vmatprep.subr.bf16.mxu0 0
      %8214 = vmatpush2.bf16.msra.mxu0 0
      %8215 = vmatprep.subr.bf16.mxu0 0
      %8216 = vmatpush2.bf16.msra.mxu0 0
      %8217 = vmatprep.subr.bf16.mxu0 0
      %8218 = vmatpush2.bf16.msra.mxu0 0
      %8219 = vmatprep.subr.bf16.mxu0 0
      %8220 = vmatpush2.bf16.msra.mxu0 0
      %8221 = vmatprep.subr.bf16.mxu0 0
      %8222 = vmatpush2.bf16.msra.mxu0 0
      %8223 = vmatprep.subr.bf16.mxu0 0
      %8224 = vmatpush2.bf16.msra.mxu0 0
      %8225 = vmatprep.subr.bf16.mxu0 0
      %8226 = vmatpush2.bf16.msra.mxu0 0
      %8227 = vmatprep.mubr.bf16.mxu0 0
      %8228 = vmatmul.mubr.bf16.gmra.mxu0 %v8112
      %v8229 = vpop.f32.mrf.mxu0
      %v8230 = vadd.f32 0.0, %v8229
      %v8231 = vpop.f32.mrf.mxu0
      %v8232 = vpop.f32.mrf.mxu0
      %v8233 = vadd.f32 0.0, %v8232
      %v8234 = vpop.f32.mrf.mxu0
      %8235 = vmatprep.mubr.bf16.mxu0 0
      %8236 = vmatmul.mubr.bf16.gmra.mxu0 %v8113
      %v8237 = vpop.f32.mrf.mxu0
      %v8238 = vadd.f32 0.0, %v8237
      %v8239 = vpop.f32.mrf.mxu0
      %v8240 = vpop.f32.mrf.mxu0
      %v8241 = vadd.f32 0.0, %v8240
      %v8242 = vpop.f32.mrf.mxu0
      %8243 = vmatprep.mubr.bf16.mxu0 0
      %8244 = vmatmul.mubr.bf16.gmra.mxu0 %v8114
      %v8245 = vpop.f32.mrf.mxu0
      %v8246 = vadd.f32 0.0, %v8245
      %v8247 = vpop.f32.mrf.mxu0
      %v8248 = vpop.f32.mrf.mxu0
      %v8249 = vadd.f32 0.0, %v8248
      %v8250 = vpop.f32.mrf.mxu0
      %8251 = vmatprep.mubr.bf16.mxu0 0
      %8252 = vmatmul.mubr.bf16.gmra.mxu0 %v8115
      %v8253 = vpop.f32.mrf.mxu0
      %v8254 = vadd.f32 0.0, %v8253
      %v8255 = vpop.f32.mrf.mxu0
      %v8256 = vpop.f32.mrf.mxu0
      %v8257 = vadd.f32 0.0, %v8256
      %v8258 = vpop.f32.mrf.mxu0
      %8259 = vmatprep.mubr.bf16.mxu0 0
      %8260 = vmatmul.mubr.bf16.gmra.mxu0 %v8116
      %v8261 = vpop.f32.mrf.mxu0
      %v8262 = vadd.f32 0.0, %v8261
      %v8263 = vpop.f32.mrf.mxu0
      %v8264 = vpop.f32.mrf.mxu0
      %v8265 = vadd.f32 0.0, %v8264
      %v8266 = vpop.f32.mrf.mxu0
      %8267 = vmatprep.mubr.bf16.mxu0 0
      %8268 = vmatmul.mubr.bf16.gmra.mxu0 %v8117
      %v8269 = vpop.f32.mrf.mxu0
      %v8270 = vadd.f32 0.0, %v8269
      %v8271 = vpop.f32.mrf.mxu0
      %v8272 = vpop.f32.mrf.mxu0
      %v8273 = vadd.f32 0.0, %v8272
      %v8274 = vpop.f32.mrf.mxu0
      %8275 = vmatprep.mubr.bf16.mxu0 0
      %8276 = vmatmul.mubr.bf16.gmra.mxu0 %v8118
      %v8277 = vpop.f32.mrf.mxu0
      %v8278 = vadd.f32 0.0, %v8277
      %v8279 = vpop.f32.mrf.mxu0
      %v8280 = vpop.f32.mrf.mxu0
      %v8281 = vadd.f32 0.0, %v8280
      %v8282 = vpop.f32.mrf.mxu0
      %8283 = vmatprep.mubr.bf16.mxu0 0
      %8284 = vmatmul.mubr.bf16.gmra.mxu0 %v8119
      %v8285 = vpop.f32.mrf.mxu0
      %v8286 = vadd.f32 0.0, %v8285
      %v8287 = vpop.f32.mrf.mxu0
      %v8288 = vpop.f32.mrf.mxu0
      %v8289 = vadd.f32 0.0, %v8288
      %v8290 = vpop.f32.mrf.mxu0
      %8291 = vmatprep.mubr.bf16.mxu0 0
      %8292 = vmatmul.mubr.bf16.gmra.mxu0 %v8120
      %v8293 = vpop.f32.mrf.mxu0
      %v8294 = vadd.f32 0.0, %v8293
      %v8295 = vpop.f32.mrf.mxu0
      %v8296 = vpop.f32.mrf.mxu0
      %v8297 = vadd.f32 0.0, %v8296
      %v8298 = vpop.f32.mrf.mxu0
      %8299 = vmatprep.mubr.bf16.mxu0 0
      %8300 = vmatmul.mubr.bf16.gmra.mxu0 %v8121
      %v8301 = vpop.f32.mrf.mxu0
      %v8302 = vadd.f32 0.0, %v8301
      %v8303 = vpop.f32.mrf.mxu0
      %v8304 = vpop.f32.mrf.mxu0
      %v8305 = vadd.f32 0.0, %v8304
      %v8306 = vpop.f32.mrf.mxu0
      %8307 = vmatprep.mubr.bf16.mxu0 0
      %8308 = vmatmul.mubr.bf16.gmra.mxu0 %v8122
      %v8309 = vpop.f32.mrf.mxu0
      %v8310 = vadd.f32 0.0, %v8309
      %v8311 = vpop.f32.mrf.mxu0
      %v8312 = vpop.f32.mrf.mxu0
      %v8313 = vadd.f32 0.0, %v8312
      %v8314 = vpop.f32.mrf.mxu0
      %8315 = vmatprep.mubr.bf16.mxu0 0
      %8316 = vmatmul.mubr.bf16.gmra.mxu0 %v8123
      %v8317 = vpop.f32.mrf.mxu0
      %v8318 = vadd.f32 0.0, %v8317
      %v8319 = vpop.f32.mrf.mxu0
      %v8320 = vpop.f32.mrf.mxu0
      %v8321 = vadd.f32 0.0, %v8320
      %v8322 = vpop.f32.mrf.mxu0
      %8323 = vmatprep.mubr.bf16.mxu0 0
      %8324 = vmatmul.mubr.bf16.gmra.mxu0 %v8124
      %v8325 = vpop.f32.mrf.mxu0
      %v8326 = vadd.f32 0.0, %v8325
      %v8327 = vpop.f32.mrf.mxu0
      %v8328 = vpop.f32.mrf.mxu0
      %v8329 = vadd.f32 0.0, %v8328
      %v8330 = vpop.f32.mrf.mxu0
      %8331 = vmatprep.mubr.bf16.mxu0 0
      %8332 = vmatmul.mubr.bf16.gmra.mxu0 %v8125
      %v8333 = vpop.f32.mrf.mxu0
      %v8334 = vadd.f32 0.0, %v8333
      %v8335 = vpop.f32.mrf.mxu0
      %v8336 = vpop.f32.mrf.mxu0
      %v8337 = vadd.f32 0.0, %v8336
      %v8338 = vpop.f32.mrf.mxu0
      %8339 = vmatprep.mubr.bf16.mxu0 0
      %8340 = vmatmul.mubr.bf16.gmra.mxu0 %v8126
      %v8341 = vpop.f32.mrf.mxu0
      %v8342 = vadd.f32 0.0, %v8341
      %v8343 = vpop.f32.mrf.mxu0
      %v8344 = vpop.f32.mrf.mxu0
      %v8345 = vadd.f32 0.0, %v8344
      %v8346 = vpop.f32.mrf.mxu0
      %8347 = vmatprep.mubr.bf16.mxu0 0
      %8348 = vmatmul.mubr.bf16.gmra.mxu0 %v8127
      %v8349 = vpop.f32.mrf.mxu0
      %v8350 = vadd.f32 0.0, %v8349
      %v8351 = vpop.f32.mrf.mxu0
      %v8352 = vpop.f32.mrf.mxu0
      %v8353 = vadd.f32 0.0, %v8352
      %v8354 = vpop.f32.mrf.mxu0
      %8355 = vmatprep.mubr.bf16.mxu0 0
      %8356 = vmatmul.mubr.bf16.gmra.mxu0 %v8128
      %v8357 = vpop.f32.mrf.mxu0
      %v8358 = vadd.f32 0.0, %v8357
      %v8359 = vpop.f32.mrf.mxu0
      %v8360 = vpop.f32.mrf.mxu0
      %v8361 = vadd.f32 0.0, %v8360
      %v8362 = vpop.f32.mrf.mxu0
      %8363 = vmatprep.mubr.bf16.mxu0 0
      %8364 = vmatmul.mubr.bf16.gmra.mxu0 %v8129
      %v8365 = vpop.f32.mrf.mxu0
      %v8366 = vadd.f32 0.0, %v8365
      %v8367 = vpop.f32.mrf.mxu0
      %v8368 = vpop.f32.mrf.mxu0
      %v8369 = vadd.f32 0.0, %v8368
      %v8370 = vpop.f32.mrf.mxu0
      %8371 = vdwg.mxu0
      %v8372 = vld [vmem:[#allocation4] sm:$0xff]
      %v8373 = vld [vmem:[#allocation4 + $0x8] sm:$0xff]
      %v8374 = vld [vmem:[#allocation4 + $0x10] sm:$0xff]
      %v8375 = vld [vmem:[#allocation4 + $0x18] sm:$0xff]
      %v8376 = vld [vmem:[#allocation4 + $0x20] sm:$0xff]
      %v8377 = vld [vmem:[#allocation4 + $0x28] sm:$0xff]
      %v8378 = vld [vmem:[#allocation4 + $0x30] sm:$0xff]
      %v8379 = vld [vmem:[#allocation4 + $0x38] sm:$0xff]
      %v8380 = vld [vmem:[#allocation4 + $0x40] sm:$0xff]
      %v8381 = vld [vmem:[#allocation4 + $0x48] sm:$0xff]
      %v8382 = vld [vmem:[#allocation4 + $0x50] sm:$0xff]
      %v8383 = vld [vmem:[#allocation4 + $0x58] sm:$0xff]
      %v8384 = vld [vmem:[#allocation4 + $0x60] sm:$0xff]
      %v8385 = vld [vmem:[#allocation4 + $0x68] sm:$0xff]
      %v8386 = vld [vmem:[#allocation4 + $0x70] sm:$0xff]
      %v8387 = vld [vmem:[#allocation4 + $0x78] sm:$0xff]
      %v8388 = vld [vmem:[#allocation4 + $0x80] sm:$0xff]
      %v8389 = vld [vmem:[#allocation4 + $0x88] sm:$0xff]
      %v8390 = vld [vmem:[#allocation4 + $0x90] sm:$0xff]
      %v8391 = vld [vmem:[#allocation4 + $0x98] sm:$0xff]
      %v8392 = vld [vmem:[#allocation4 + $0xa0] sm:$0xff]
      %v8393 = vld [vmem:[#allocation4 + $0xa8] sm:$0xff]
      %v8394 = vld [vmem:[#allocation4 + $0xb0] sm:$0xff]
      %v8395 = vld [vmem:[#allocation4 + $0xb8] sm:$0xff]
      %v8396 = vld [vmem:[#allocation4 + $0xc0] sm:$0xff]
      %v8397 = vld [vmem:[#allocation4 + $0xc8] sm:$0xff]
      %v8398 = vld [vmem:[#allocation4 + $0xd0] sm:$0xff]
      %v8399 = vld [vmem:[#allocation4 + $0xd8] sm:$0xff]
      %v8400 = vld [vmem:[#allocation4 + $0xe0] sm:$0xff]
      %v8401 = vld [vmem:[#allocation4 + $0xe8] sm:$0xff]
      %v8402 = vld [vmem:[#allocation4 + $0xf0] sm:$0xff]
      %v8403 = vld [vmem:[#allocation4 + $0xf8] sm:$0xff]
      %v8404 = vld [vmem:[#allocation4 + $0x100] sm:$0xff]
      %v8405 = vld [vmem:[#allocation4 + $0x108] sm:$0xff]
      %v8406 = vld [vmem:[#allocation4 + $0x110] sm:$0xff]
      %v8407 = vld [vmem:[#allocation4 + $0x118] sm:$0xff]
      %v8408 = vadd.f32 %v8372, %v8230
      %v8409 = vadd.f32 %v8373, %v8233
      %v8410 = vadd.f32 %v8374, %v8238
      %v8411 = vadd.f32 %v8375, %v8241
      %v8412 = vadd.f32 %v8376, %v8246
      %v8413 = vadd.f32 %v8377, %v8249
      %v8414 = vadd.f32 %v8378, %v8254
      %v8415 = vadd.f32 %v8379, %v8257
      %v8416 = vadd.f32 %v8380, %v8262
      %v8417 = vadd.f32 %v8381, %v8265
      %v8418 = vadd.f32 %v8382, %v8270
      %v8419 = vadd.f32 %v8383, %v8273
      %v8420 = vadd.f32 %v8384, %v8278
      %v8421 = vadd.f32 %v8385, %v8281
      %v8422 = vadd.f32 %v8386, %v8286
      %v8423 = vadd.f32 %v8387, %v8289
      %v8424 = vadd.f32 %v8388, %v8294
      %v8425 = vadd.f32 %v8389, %v8297
      %v8426 = vadd.f32 %v8390, %v8302
      %v8427 = vadd.f32 %v8391, %v8305
      %v8428 = vadd.f32 %v8392, %v8310
      %v8429 = vadd.f32 %v8393, %v8313
      %v8430 = vadd.f32 %v8394, %v8318
      %v8431 = vadd.f32 %v8395, %v8321
      %v8432 = vadd.f32 %v8396, %v8326
      %v8433 = vadd.f32 %v8397, %v8329
      %v8434 = vadd.f32 %v8398, %v8334
      %v8435 = vadd.f32 %v8399, %v8337
      %v8436 = vadd.f32 %v8400, %v8342
      %v8437 = vadd.f32 %v8401, %v8345
      %v8438 = vadd.f32 %v8402, %v8350
      %v8439 = vadd.f32 %v8403, %v8353
      %v8440 = vadd.f32 %v8404, %v8358
      %v8441 = vadd.f32 %v8405, %v8361
      %v8442 = vadd.f32 %v8406, %v8366
      %v8443 = vadd.f32 %v8407, %v8369
      %8444 = vst [vmem:[#allocation4] sm:$0xff] %v8408
      %8445 = vst [vmem:[#allocation4 + $0x8] sm:$0xff] %v8409
      %8446 = vst [vmem:[#allocation4 + $0x10] sm:$0xff] %v8410
      %8447 = vst [vmem:[#allocation4 + $0x18] sm:$0xff] %v8411
      %8448 = vst [vmem:[#allocation4 + $0x20] sm:$0xff] %v8412
      %8449 = vst [vmem:[#allocation4 + $0x28] sm:$0xff] %v8413
      %8450 = vst [vmem:[#allocation4 + $0x30] sm:$0xff] %v8414
      %8451 = vst [vmem:[#allocation4 + $0x38] sm:$0xff] %v8415
      %8452 = vst [vmem:[#allocation4 + $0x40] sm:$0xff] %v8416
      %8453 = vst [vmem:[#allocation4 + $0x48] sm:$0xff] %v8417
      %8454 = vst [vmem:[#allocation4 + $0x50] sm:$0xff] %v8418
      %8455 = vst [vmem:[#allocation4 + $0x58] sm:$0xff] %v8419
      %8456 = vst [vmem:[#allocation4 + $0x60] sm:$0xff] %v8420
      %8457 = vst [vmem:[#allocation4 + $0x68] sm:$0xff] %v8421
      %8458 = vst [vmem:[#allocation4 + $0x70] sm:$0xff] %v8422
      %8459 = vst [vmem:[#allocation4 + $0x78] sm:$0xff] %v8423
      %8460 = vst [vmem:[#allocation4 + $0x80] sm:$0xff] %v8424
      %8461 = vst [vmem:[#allocation4 + $0x88] sm:$0xff] %v8425
      %8462 = vst [vmem:[#allocation4 + $0x90] sm:$0xff] %v8426
      %8463 = vst [vmem:[#allocation4 + $0x98] sm:$0xff] %v8427
      %8464 = vst [vmem:[#allocation4 + $0xa0] sm:$0xff] %v8428
      %8465 = vst [vmem:[#allocation4 + $0xa8] sm:$0xff] %v8429
      %8466 = vst [vmem:[#allocation4 + $0xb0] sm:$0xff] %v8430
      %8467 = vst [vmem:[#allocation4 + $0xb8] sm:$0xff] %v8431
      %8468 = vst [vmem:[#allocation4 + $0xc0] sm:$0xff] %v8432
      %8469 = vst [vmem:[#allocation4 + $0xc8] sm:$0xff] %v8433
      %8470 = vst [vmem:[#allocation4 + $0xd0] sm:$0xff] %v8434
      %8471 = vst [vmem:[#allocation4 + $0xd8] sm:$0xff] %v8435
      %8472 = vst [vmem:[#allocation4 + $0xe0] sm:$0xff] %v8436
      %8473 = vst [vmem:[#allocation4 + $0xe8] sm:$0xff] %v8437
      %8474 = vst [vmem:[#allocation4 + $0xf0] sm:$0xff] %v8438
      %8475 = vst [vmem:[#allocation4 + $0xf8] sm:$0xff] %v8439
      %8476 = vst [vmem:[#allocation4 + $0x100] sm:$0xff] %v8440
      %8477 = vst [vmem:[#allocation4 + $0x108] sm:$0xff] %v8441
      %8478 = vst [vmem:[#allocation4 + $0x110] sm:$0xff] %v8442
      %8479 = vst [vmem:[#allocation4 + $0x118] sm:$0xff] %v8443
      %v8480 = vld [vmem:[#allocation4] sm:$0xff]
      %v8481 = vld [vmem:[#allocation4 + $0x8] sm:$0xff]
      %v8482 = vld [vmem:[#allocation4 + $0x10] sm:$0xff]
      %v8483 = vld [vmem:[#allocation4 + $0x18] sm:$0xff]
      %v8484 = vld [vmem:[#allocation4 + $0x20] sm:$0xff]
      %v8485 = vld [vmem:[#allocation4 + $0x28] sm:$0xff]
      %v8486 = vld [vmem:[#allocation4 + $0x30] sm:$0xff]
      %v8487 = vld [vmem:[#allocation4 + $0x38] sm:$0xff]
      %v8488 = vld [vmem:[#allocation4 + $0x40] sm:$0xff]
      %v8489 = vld [vmem:[#allocation4 + $0x48] sm:$0xff]
      %v8490 = vld [vmem:[#allocation4 + $0x50] sm:$0xff]
      %v8491 = vld [vmem:[#allocation4 + $0x58] sm:$0xff]
      %v8492 = vld [vmem:[#allocation4 + $0x60] sm:$0xff]
      %v8493 = vld [vmem:[#allocation4 + $0x68] sm:$0xff]
      %v8494 = vld [vmem:[#allocation4 + $0x70] sm:$0xff]
      %v8495 = vld [vmem:[#allocation4 + $0x78] sm:$0xff]
      %v8496 = vld [vmem:[#allocation4 + $0x80] sm:$0xff]
      %v8497 = vld [vmem:[#allocation4 + $0x88] sm:$0xff]
      %v8498 = vld [vmem:[#allocation4 + $0x90] sm:$0xff]
      %v8499 = vld [vmem:[#allocation4 + $0x98] sm:$0xff]
      %v8500 = vld [vmem:[#allocation4 + $0xa0] sm:$0xff]
      %v8501 = vld [vmem:[#allocation4 + $0xa8] sm:$0xff]
      %v8502 = vld [vmem:[#allocation4 + $0xb0] sm:$0xff]
      %v8503 = vld [vmem:[#allocation4 + $0xb8] sm:$0xff]
      %v8504 = vld [vmem:[#allocation4 + $0xc0] sm:$0xff]
      %v8505 = vld [vmem:[#allocation4 + $0xc8] sm:$0xff]
      %v8506 = vld [vmem:[#allocation4 + $0xd0] sm:$0xff]
      %v8507 = vld [vmem:[#allocation4 + $0xd8] sm:$0xff]
      %v8508 = vld [vmem:[#allocation4 + $0xe0] sm:$0xff]
      %v8509 = vld [vmem:[#allocation4 + $0xe8] sm:$0xff]
      %v8510 = vld [vmem:[#allocation4 + $0xf0] sm:$0xff]
      %v8511 = vld [vmem:[#allocation4 + $0xf8] sm:$0xff]
      %v8512 = vld [vmem:[#allocation4 + $0x100] sm:$0xff]
      %v8513 = vld [vmem:[#allocation4 + $0x108] sm:$0xff]
      %v8514 = vld [vmem:[#allocation4 + $0x110] sm:$0xff]
      %v8515 = vld [vmem:[#allocation4 + $0x118] sm:$0xff]
      %v8516 = vld [vmem:[%s8] sm:$0x1]
      %v8518 = vlaneseq
      %v8519 = vshrl.u32 %v8518, 7
      %v8520 = vsub.s32 0, %v8519
      %v8521 = vrot.slane %v8516, %v8520
      %v8523 = vmul.f32 %v8480, %v8521
      %v8524 = vmul.f32 %v8481, %v8521
      %v8525 = vmul.f32 %v8482, %v8521
      %v8526 = vmul.f32 %v8483, %v8521
      %v8527 = vmul.f32 %v8484, %v8521
      %v8528 = vmul.f32 %v8485, %v8521
      %v8529 = vmul.f32 %v8486, %v8521
      %v8530 = vmul.f32 %v8487, %v8521
      %v8531 = vmul.f32 %v8488, %v8521
      %v8532 = vmul.f32 %v8489, %v8521
      %v8533 = vmul.f32 %v8490, %v8521
      %v8534 = vmul.f32 %v8491, %v8521
      %v8535 = vmul.f32 %v8492, %v8521
      %v8536 = vmul.f32 %v8493, %v8521
      %v8537 = vmul.f32 %v8494, %v8521
      %v8538 = vmul.f32 %v8495, %v8521
      %v8539 = vmul.f32 %v8496, %v8521
      %v8540 = vmul.f32 %v8497, %v8521
      %v8541 = vmul.f32 %v8498, %v8521
      %v8542 = vmul.f32 %v8499, %v8521
      %v8543 = vmul.f32 %v8500, %v8521
      %v8544 = vmul.f32 %v8501, %v8521
      %v8545 = vmul.f32 %v8502, %v8521
      %v8546 = vmul.f32 %v8503, %v8521
      %v8547 = vmul.f32 %v8504, %v8521
      %v8548 = vmul.f32 %v8505, %v8521
      %v8549 = vmul.f32 %v8506, %v8521
      %v8550 = vmul.f32 %v8507, %v8521
      %v8551 = vmul.f32 %v8508, %v8521
      %v8552 = vmul.f32 %v8509, %v8521
      %v8553 = vmul.f32 %v8510, %v8521
      %v8554 = vmul.f32 %v8511, %v8521
      %v8555 = vmul.f32 %v8512, %v8521
      %v8556 = vmul.f32 %v8513, %v8521
      %v8557 = vmul.f32 %v8514, %v8521
      %v8558 = vmul.f32 %v8515, %v8521
      %v8559 = vld [vmem:[%s9] sm:$0x1]
      %v8561 = vlaneseq
      %v8562 = vshrl.u32 %v8561, 7
      %v8563 = vsub.s32 0, %v8562
      %v8564 = vrot.slane %v8559, %v8563
      %v8566 = vadd.f32 %v8523, %v8564
      %v8567 = vadd.f32 %v8524, %v8564
      %v8568 = vadd.f32 %v8525, %v8564
      %v8569 = vadd.f32 %v8526, %v8564
      %v8570 = vadd.f32 %v8527, %v8564
      %v8571 = vadd.f32 %v8528, %v8564
      %v8572 = vadd.f32 %v8529, %v8564
      %v8573 = vadd.f32 %v8530, %v8564
      %v8574 = vadd.f32 %v8531, %v8564
      %v8575 = vadd.f32 %v8532, %v8564
      %v8576 = vadd.f32 %v8533, %v8564
      %v8577 = vadd.f32 %v8534, %v8564
      %v8578 = vadd.f32 %v8535, %v8564
      %v8579 = vadd.f32 %v8536, %v8564
      %v8580 = vadd.f32 %v8537, %v8564
      %v8581 = vadd.f32 %v8538, %v8564
      %v8582 = vadd.f32 %v8539, %v8564
      %v8583 = vadd.f32 %v8540, %v8564
      %v8584 = vadd.f32 %v8541, %v8564
      %v8585 = vadd.f32 %v8542, %v8564
      %v8586 = vadd.f32 %v8543, %v8564
      %v8587 = vadd.f32 %v8544, %v8564
      %v8588 = vadd.f32 %v8545, %v8564
      %v8589 = vadd.f32 %v8546, %v8564
      %v8590 = vadd.f32 %v8547, %v8564
      %v8591 = vadd.f32 %v8548, %v8564
      %v8592 = vadd.f32 %v8549, %v8564
      %v8593 = vadd.f32 %v8550, %v8564
      %v8594 = vadd.f32 %v8551, %v8564
      %v8595 = vadd.f32 %v8552, %v8564
      %v8596 = vadd.f32 %v8553, %v8564
      %v8597 = vadd.f32 %v8554, %v8564
      %v8598 = vadd.f32 %v8555, %v8564
      %v8599 = vadd.f32 %v8556, %v8564
      %v8600 = vadd.f32 %v8557, %v8564
      %v8601 = vadd.f32 %v8558, %v8564
      %v8602 = vmax.f32 %v8566, 0.0
      %v8603 = vmax.f32 %v8567, 0.0
      %v8604 = vmax.f32 %v8568, 0.0
      %v8605 = vmax.f32 %v8569, 0.0
      %v8606 = vmax.f32 %v8570, 0.0
      %v8607 = vmax.f32 %v8571, 0.0
      %v8608 = vmax.f32 %v8572, 0.0
      %v8609 = vmax.f32 %v8573, 0.0
      %v8610 = vmax.f32 %v8574, 0.0
      %v8611 = vmax.f32 %v8575, 0.0
      %v8612 = vmax.f32 %v8576, 0.0
      %v8613 = vmax.f32 %v8577, 0.0
      %v8614 = vmax.f32 %v8578, 0.0
      %v8615 = vmax.f32 %v8579, 0.0
      %v8616 = vmax.f32 %v8580, 0.0
      %v8617 = vmax.f32 %v8581, 0.0
      %v8618 = vmax.f32 %v8582, 0.0
      %v8619 = vmax.f32 %v8583, 0.0
      %v8620 = vmax.f32 %v8584, 0.0
      %v8621 = vmax.f32 %v8585, 0.0
      %v8622 = vmax.f32 %v8586, 0.0
      %v8623 = vmax.f32 %v8587, 0.0
      %v8624 = vmax.f32 %v8588, 0.0
      %v8625 = vmax.f32 %v8589, 0.0
      %v8626 = vmax.f32 %v8590, 0.0
      %v8627 = vmax.f32 %v8591, 0.0
      %v8628 = vmax.f32 %v8592, 0.0
      %v8629 = vmax.f32 %v8593, 0.0
      %v8630 = vmax.f32 %v8594, 0.0
      %v8631 = vmax.f32 %v8595, 0.0
      %v8632 = vmax.f32 %v8596, 0.0
      %v8633 = vmax.f32 %v8597, 0.0
      %v8634 = vmax.f32 %v8598, 0.0
      %v8635 = vmax.f32 %v8599, 0.0
      %v8636 = vmax.f32 %v8600, 0.0
      %v8637 = vmax.f32 %v8601, 0.0
      %8638 = vst [vmem:[%s359] sm:$0xff] %v8602
      %8639 = vst [vmem:[%s359 + $0x8] sm:$0xff] %v8603
      %8640 = vst [vmem:[%s359 + $0x10] sm:$0xff] %v8604
      %8641 = vst [vmem:[%s359 + $0x18] sm:$0xff] %v8605
      %8642 = vst [vmem:[%s359 + $0x20] sm:$0xff] %v8606
      %8643 = vst [vmem:[%s359 + $0x28] sm:$0xff] %v8607
      %8644 = vst [vmem:[%s359 + $0x30] sm:$0xff] %v8608
      %8645 = vst [vmem:[%s359 + $0x38] sm:$0xff] %v8609
      %8646 = vst [vmem:[%s359 + $0x40] sm:$0xff] %v8610
      %8647 = vst [vmem:[%s359 + $0x48] sm:$0xff] %v8611
      %8648 = vst [vmem:[%s359 + $0x50] sm:$0xff] %v8612
      %8649 = vst [vmem:[%s359 + $0x58] sm:$0xff] %v8613
      %8650 = vst [vmem:[%s359 + $0x60] sm:$0xff] %v8614
      %8651 = vst [vmem:[%s359 + $0x68] sm:$0xff] %v8615
      %8652 = vst [vmem:[%s359 + $0x70] sm:$0xff] %v8616
      %8653 = vst [vmem:[%s359 + $0x78] sm:$0xff] %v8617
      %8654 = vst [vmem:[%s359 + $0x80] sm:$0xff] %v8618
      %8655 = vst [vmem:[%s359 + $0x88] sm:$0xff] %v8619
      %8656 = vst [vmem:[%s359 + $0x90] sm:$0xff] %v8620
      %8657 = vst [vmem:[%s359 + $0x98] sm:$0xff] %v8621
      %8658 = vst [vmem:[%s359 + $0xa0] sm:$0xff] %v8622
      %8659 = vst [vmem:[%s359 + $0xa8] sm:$0xff] %v8623
      %8660 = vst [vmem:[%s359 + $0xb0] sm:$0xff] %v8624
      %8661 = vst [vmem:[%s359 + $0xb8] sm:$0xff] %v8625
      %8662 = vst [vmem:[%s359 + $0xc0] sm:$0xff] %v8626
      %8663 = vst [vmem:[%s359 + $0xc8] sm:$0xff] %v8627
      %8664 = vst [vmem:[%s359 + $0xd0] sm:$0xff] %v8628
      %8665 = vst [vmem:[%s359 + $0xd8] sm:$0xff] %v8629
      %8666 = vst [vmem:[%s359 + $0xe0] sm:$0xff] %v8630
      %8667 = vst [vmem:[%s359 + $0xe8] sm:$0xff] %v8631
      %8668 = vst [vmem:[%s359 + $0xf0] sm:$0xff] %v8632
      %8669 = vst [vmem:[%s359 + $0xf8] sm:$0xff] %v8633
      %8670 = vst [vmem:[%s359 + $0x100] sm:$0xff] %v8634
      %8671 = vst [vmem:[%s359 + $0x108] sm:$0xff] %v8635
      %8672 = vst [vmem:[%s359 + $0x110] sm:$0xff] %v8636
      %8673 = vst [vmem:[%s359 + $0x118] sm:$0xff] %v8637
      %p8674 = scmp.lt.s32.totalorder %s21, 1
      %s8675 = scalar_select %p8674, %s21, 1
      %s8676 = smul.addr %s8675, 36
      %s8677 = smul.addr %s8676, 8
      %s8678 = scalar_lea.vmem %s10, %s8677
      // Predicated region
      $region61: #{decoder_block_forward.1} parent=59 // pred_check
        %p8679 = pneg %p254
      $region62: #{decoder_block_forward.1} parent=59 // pred_check_branch
        %8681 = sbr.rel (%p8679) target = $region64
      $region63: #{decoder_block_forward.1} parent=59 // pred_region
        _
      $region64: #{decoder_block_forward.1} parent=59 // pred_fallthru
        _
    $region60: #{decoder_block_forward.1} parent=5 // pred_fallthru
      _
    %p8682 = scmp.le.s32.totalorder 2, %s16
    // Predicated region
    $region65: #{decoder_block_forward.1} parent=5 // pred_check
      %p8683 = pneg %p8682
    $region66: #{decoder_block_forward.1} parent=5 // pred_check_branch
      %8685 = sbr.rel (%p8683) target = $region68
    $region67: #{decoder_block_forward.1} parent=5 // pred_region
      %s8686 = ssub.s32 %s16, 2
      // Predicated region
      $region69: #{decoder_block_forward.1} parent=67 // pred_check
        %p8687 = pneg %p260
      $region70: #{decoder_block_forward.1} parent=67 // pred_check_branch
        %8689 = sbr.rel (%p8687) target = $region72
      $region71: #{decoder_block_forward.1} parent=67 // pred_region
        %p8690 = scmp.lt.s32.totalorder %s22, 1
        %s8691 = scalar_select %p8690, %s22, 1
        %s8692 = smul.addr %s8691, 36
        %s8693 = smul.addr %s8692, 8
        %s8694 = scalar_lea.vmem %s10, %s8693
      $region72: #{decoder_block_forward.1} parent=67 // pred_fallthru
        _
    $region68: #{decoder_block_forward.1} parent=5 // pred_fallthru
      _
  $region6: #{decoder_block_forward.1} parent=0 // loop_footer
    %s20 = sadd.s32 1, %s16
  $region7: #{decoder_block_forward.1} parent=0 // loop_footer_branch
    %15 = sbr.rel target = $region3
  $region8: #{decoder_block_forward.1} parent=0 // loop_exit
    _

</llo_original>
